<compile_context>
chip_gen: v7x
topology: tpu7x:2x2x1
jax: 0.10.0
libtpu: 0.0.40
codegen_flags: <defaults>
</compile_context>

<pallas_src>
import jax
import jax.numpy as jnp
from jax.experimental import pallas as pl
from jax.experimental.pallas import tpu as pltpu

MXU_DTYPE = jnp.bfloat16   # matmul-operand dtype (f32 accumulation + f32 epilogues)
ACT_DTYPE = jnp.bfloat16   # inter-stage activation dtype (halves HBM between stages)


# ----------------------------------------------------------------------------
# BatchNorm folding helpers (inference mode)
# ----------------------------------------------------------------------------
def _bn_scale_shift(bn, eps=1e-5):
    scale = bn["gamma"] * jax.lax.rsqrt(bn["var"] + eps)
    shift = bn["beta"] - bn["mean"] * scale
    return scale, shift


def _pre_bn(bn):
    """BN applied before a conv -> (2, C): row 0 = scale, row 1 = shift."""
    s, t = _bn_scale_shift(bn)
    return jnp.stack([s, t]).astype(jnp.float32)


def _post_bn(bn, conv_bias):
    """conv(+bias) followed by BN: fold the conv bias into the BN shift."""
    s, t = _bn_scale_shift(bn)
    return jnp.stack([s, conv_bias * s + t]).astype(jnp.float32)


# ----------------------------------------------------------------------------
# Stem: Conv2d(k=7, s=2, p=3) -> BN -> ReLU, fully fused, one grid step per image
# ----------------------------------------------------------------------------
def stem_conv(x_nhwc, p):
    """Returns (y, (Ho, Wo)) with y of shape (B, Ho*Wo, 64) in ACT_DTYPE."""
    B, H, W, Cin = x_nhwc.shape
    assert H % 2 == 0 and W % 2 == 0, (H, W)
    Ho, Wo = H // 2, W // 2
    Hph, Wph = Ho + 3, Wo + 3   # rows/cols each stride-2 phase must provide

    # Zero-pad (pad=3) and split into the four stride-2 phases so every tap inside
    # the kernel is a *contiguous* slice (the four phases together are ~1x the input
    # bytes, and they are already bf16).
    xb = x_nhwc.astype(MXU_DTYPE)
    xp = jnp.pad(xb, ((0, 0), (3, 3), (3, 3), (0, 0)))
    phases = [xp[:, a::2, b::2, :][:, :Hph, :Wph, :]
              for a in range(2) for b in range(2)]

    # Weight flattened to (49*Cin, 64): row index = (kh*7 + kw)*Cin + c, matching the
    # im2col concat order built inside the kernel.
    w = p["w"].reshape(7 * 7 * Cin, 64).astype(MXU_DTYPE)
    bn = _post_bn(p["bn"], p["b"])          # (2, 64), conv bias folded in

    def kernel(p00_ref, p01_ref, p10_ref, p11_ref, w_ref, bn_ref, o_ref):
        ph = ((p00_ref[0], p01_ref[0]), (p10_ref[0], p11_ref[0]))
        # In-VMEM im2col: concat the 49 (Ho, Wo, Cin) taps along channels and do ONE
        # MXU matmul with K = 49*Cin (instead of 49 matmuls with K = Cin).
        kh_pieces = []
        for kh in range(7):
            kw_pieces = [
                ph[kh % 2][kw % 2][kh // 2:kh // 2 + Ho, kw // 2:kw // 2 + Wo, :]
                for kw in range(7)]
            kh_pieces.append(jnp.concatenate(kw_pieces, axis=-1))
        im2col = jnp.concatenate(kh_pieces, axis=-1).reshape(Ho * Wo, 49 * Cin)
        acc = jnp.dot(im2col, w_ref[...], preferred_element_type=jnp.float32)
        y = jnp.maximum(acc * bn_ref[0:1, :] + bn_ref[1:2, :], 0.0)
        o_ref[0] = y.astype(o_ref.dtype)

    phase_spec = pl.BlockSpec((1, Hph, Wph, Cin), lambda b: (b, 0, 0, 0))
    y = pl.pallas_call(
        kernel,
        out_shape=jax.ShapeDtypeStruct((B, Ho * Wo, 64), ACT_DTYPE),
        grid=(B,),
        in_specs=[phase_spec] * 4 + [
            pl.BlockSpec((7 * 7 * Cin, 64), lambda b: (0, 0)),
            pl.BlockSpec((2, 64), lambda b: (0, 0)),
        ],
        out_specs=pl.BlockSpec((1, Ho * Wo, 64), lambda b: (b, 0, 0)),
        compiler_params=pltpu.CompilerParams(
            dimension_semantics=("parallel",)),
    )(*phases, w, bn)
    return y, (Ho, Wo)


# ----------------------------------------------------------------------------
# Fused pre-activation Residual block (+ optional fused MaxPool2d(2,2) epilogue)
# ----------------------------------------------------------------------------
def _make_residual_kernel(H, W, Cin, mid, Cout, has_skip, pool):
    Wp = W + 2
    Ho, Wo = H // 2, W // 2

    def kernel(*refs):
        it = iter(refs)
        x_ref = next(it); bn1_ref = next(it); w1_ref = next(it); bn2_ref = next(it)
        w2_ref = next(it); bn3_ref = next(it); w3_ref = next(it); b3_ref = next(it)
        wskip_ref = bskip_ref = None
        if has_skip:
            wskip_ref = next(it); bskip_ref = next(it)
        o_ref = next(it)

        x = x_ref[0]                                   # (H*W, Cin), ACT_DTYPE
        xf = x.astype(jnp.float32)
        # BN1 + ReLU (pre-activation; the skip path uses the raw input, as in PyTorch)
        a = jnp.maximum(xf * bn1_ref[0:1, :] + bn1_ref[1:2, :], 0.0)
        # conv1 (1x1) -> BN2 + ReLU  (conv1 bias folded into the BN2 shift)
        h1 = jnp.dot(a.astype(MXU_DTYPE), w1_ref[...],
                     preferred_element_type=jnp.float32)
        h1 = jnp.maximum(h1 * bn2_ref[0:1, :] + bn2_ref[1:2, :], 0.0)   # (H*W, mid)

        # Zero-pad h1 (pad=1) as a bf16 VMEM value: no scratch buffer, no per-row
        # scatter loop, no per-step buffer zeroing.
        h1b = h1.astype(MXU_DTYPE).reshape(H, W, mid)
        zc = jnp.zeros((H, 1, mid), MXU_DTYPE)
        zr = jnp.zeros((1, Wp, mid), MXU_DTYPE)
        hp = jnp.concatenate(
            [zr, jnp.concatenate([zc, h1b, zc], axis=1), zr], axis=0)   # (H+2, Wp, mid)

        # conv2 (3x3, pad 1): merge the 3 kw taps along channels (built once) so the
        # conv is 3 matmuls with K = 3*mid instead of 9 with K = mid.
        trip = jnp.concatenate(
            [hp[:, 0:W, :], hp[:, 1:W + 1, :], hp[:, 2:W + 2, :]],
            axis=-1)                                                    # (H+2, W, 3*mid)
        acc = jnp.zeros((H * W, mid), jnp.float32)
        for kh in range(3):
            acc = acc + jnp.dot(trip[kh:kh + H].reshape(H * W, 3 * mid),
                                w2_ref[kh],                             # (3*mid, mid)
                                preferred_element_type=jnp.float32)

        # BN3 + ReLU (conv2 bias folded in), then conv3 (1x1) + bias
        h2 = jnp.maximum(acc * bn3_ref[0:1, :] + bn3_ref[1:2, :], 0.0)
        h3 = jnp.dot(h2.astype(MXU_DTYPE), w3_ref[...],
                     preferred_element_type=jnp.float32) + b3_ref[...]

        # skip path (1x1 conv on the raw input, or identity when Cin == Cout)
        if has_skip:
            r = jnp.dot(x.astype(MXU_DTYPE), wskip_ref[...],
                        preferred_element_type=jnp.float32) + bskip_ref[...]
        else:
            r = xf
        y = h3 + r                                                      # (H*W, Cout)

        if pool:
            # fused MaxPool2d(2,2), fully vectorized: pool along W via the even/odd
            # split of the flat pixel index, then along H, then one dense store.
            y3 = y.reshape(H * Wo, 2, Cout)
            yc = jnp.maximum(y3[:, 0, :], y3[:, 1, :])                  # (H*Wo, Cout)
            yr = yc.reshape(Ho, 2 * Wo, Cout)
            yp = jnp.maximum(yr[:, :Wo, :], yr[:, Wo:, :])              # (Ho, Wo, Cout)
            o_ref[0] = yp.reshape(Ho * Wo, Cout).astype(o_ref.dtype)
        else:
            o_ref[0] = y.astype(o_ref.dtype)                            # one dense store

    return kernel


def residual_block(x_flat, spatial, p, pool=False, out_dtype=ACT_DTYPE):
    """x_flat: (B, H*W, Cin).  Returns (y, (H', W')) with y (B, H'*W', Cout)."""
    H, W = spatial
    B, P, Cin = x_flat.shape
    assert P == H * W, (P, H, W)
    mid = p["w1"].shape[1]
    Cout = p["w3"].shape[1]
    has_skip = p["wskip"] is not None
    if not has_skip:
        assert Cin == Cout, (Cin, Cout)
    if pool:
        assert H % 2 == 0 and W % 2 == 0, (H, W)

    bn1 = _pre_bn(p["bn1"])                     # (2, Cin)
    bn2 = _post_bn(p["bn2"], p["b1"])           # (2, mid)  conv1 bias folded in
    bn3 = _post_bn(p["bn3"], p["b2"])           # (2, mid)  conv2 bias folded in
    w1 = p["w1"].astype(MXU_DTYPE)
    w2 = p["w2"].reshape(3, 3 * mid, mid).astype(MXU_DTYPE)   # (kh, kw*cin, cout)
    w3 = p["w3"].astype(MXU_DTYPE)
    b3 = p["b3"].reshape(1, Cout).astype(jnp.float32)

    args = [x_flat, bn1, w1, bn2, w2, bn3, w3, b3]
    in_specs = [
        pl.BlockSpec((1, P, Cin), lambda b: (b, 0, 0)),
        pl.BlockSpec((2, Cin), lambda b: (0, 0)),
        pl.BlockSpec((Cin, mid), lambda b: (0, 0)),
        pl.BlockSpec((2, mid), lambda b: (0, 0)),
        pl.BlockSpec((3, 3 * mid, mid), lambda b: (0, 0, 0)),
        pl.BlockSpec((2, mid), lambda b: (0, 0)),
        pl.BlockSpec((mid, Cout), lambda b: (0, 0)),
        pl.BlockSpec((1, Cout), lambda b: (0, 0)),
    ]
    if has_skip:
        args += [p["wskip"].astype(MXU_DTYPE),
                 p["bskip"].reshape(1, Cout).astype(jnp.float32)]
        in_specs += [pl.BlockSpec((Cin, Cout), lambda b: (0, 0)),
                     pl.BlockSpec((1, Cout), lambda b: (0, 0))]

    if pool:
        Ho, Wo = H // 2, W // 2
        out_shape = jax.ShapeDtypeStruct((B, Ho * Wo, Cout), out_dtype)
        out_spec = pl.BlockSpec((1, Ho * Wo, Cout), lambda b: (b, 0, 0))
    else:
        out_shape = jax.ShapeDtypeStruct((B, P, Cout), out_dtype)
        out_spec = pl.BlockSpec((1, P, Cout), lambda b: (b, 0, 0))

    kernel = _make_residual_kernel(H, W, Cin, mid, Cout, has_skip, pool)
    # TODO(synk): for large inputs (e.g. 256^2 images) add a second grid axis over row
    #             bands with a 1-row halo and set vmem_limit_bytes explicitly; a whole
    #             plane per grid step does not fit VMEM at realistic hourglass
    #             resolutions (especially v7x's 64 MiB), and the band axis also keeps
    #             both v7x TensorCores busy when B is small/odd.
    y = pl.pallas_call(
        kernel,
        out_shape=out_shape,
        grid=(B,),
        in_specs=in_specs,
        out_specs=out_spec,
        compiler_params=pltpu.CompilerParams(
            dimension_semantics=("parallel",)),
    )(*args)

    if pool:
        return y, (H // 2, W // 2)
    return y, (H, W)


# ----------------------------------------------------------------------------
# Module forward (NCHW / f32 boundary, flat channels-last bf16 inside)
# ----------------------------------------------------------------------------
@jax.jit
def hourglass_forward(x_nchw, params):
    # TODO(synk): at very small spatial sizes all four stages could be fused into a
    #             single pallas_call to avoid the three HBM round-trips entirely.
    x = jnp.transpose(x_nchw, (0, 2, 3, 1)).astype(jnp.float32)   # NHWC
    B = x.shape[0]

    y, (H, W) = stem_conv(x, params["stem"])                          # (B, H/2*W/2, 64)
    y, (H, W) = residual_block(y, (H, W), params["res1"], pool=True)  # + MaxPool2d(2,2)
    y, (H, W) = residual_block(y, (H, W), params["res2"], pool=False)
    y, (H, W) = residual_block(y, (H, W), params["res3"], pool=False,
                               out_dtype=jnp.float32)

    Cout = y.shape[-1]
    return jnp.transpose(y.reshape(B, H, W, Cout), (0, 3, 1, 2))      # back to NCHW


# ----------------------------------------------------------------------------
# Deterministic synthetic parameters (PyTorch-module-shaped)
# ----------------------------------------------------------------------------
def init_params(key, in_channels, out_channels):
    keys = iter(jax.random.split(key, 128))

    def nrm(shape, s=0.05):
        return s * jax.random.normal(next(keys), shape, jnp.float32)

    def bn_params(c):
        return {
            "gamma": 1.0 + 0.1 * jax.random.normal(next(keys), (c,), jnp.float32),
            "beta": 0.1 * jax.random.normal(next(keys), (c,), jnp.float32),
            "mean": 0.1 * jax.random.normal(next(keys), (c,), jnp.float32),
            "var": 1.0 + 0.1 * jnp.abs(jax.random.normal(next(keys), (c,), jnp.float32)),
        }

    def residual(cin, cout):
        mid = cout // 2
        p = {
            "bn1": bn_params(cin),
            "w1": nrm((cin, mid)), "b1": nrm((mid,)),
            "bn2": bn_params(mid),
            "w2": nrm((3, 3, mid, mid)), "b2": nrm((mid,)),
            "bn3": bn_params(mid),
            "w3": nrm((mid, cout)), "b3": nrm((cout,)),
        }
        if cin != cout:
            p["wskip"] = nrm((cin, cout))
            p["bskip"] = nrm((cout,))
        else:
            p["wskip"] = None
            p["bskip"] = None
        return p

    return {
        "stem": {"w": nrm((7, 7, in_channels, 64)), "b": nrm((64,)),
                 "bn": bn_params(64)},
        "res1": residual(64, 128),
        "res2": residual(128, 128),
        "res3": residual(128, out_channels),
    }


if __name__ == "__main__":
    B, Cin, H, W = 2, 4, 16, 16
    out_channels = 128

    key = jax.random.PRNGKey(0)
    kx, kp = jax.random.split(key)
    x = jax.random.normal(kx, (B, Cin, H, W), jnp.float32)
    params = init_params(kp, Cin, out_channels)

    out = jax.block_until_ready(hourglass_forward(x, params))

    expected = (B, out_channels, H // 4, W // 4)
    assert out.shape == expected, (out.shape, expected)
    assert out.dtype == jnp.float32
    assert bool(jnp.all(jnp.isfinite(out)))
    print("KERNEL_OK")
</pallas_src>

<mosaic_0001>
module attributes {stable_mosaic.version = 11 : i64} {
  func.func @kernel(%arg0: i32, %arg1: memref<1x11x11x4xbf16, #tpu.memory_space<vmem>>, %arg2: memref<1x11x11x4xbf16, #tpu.memory_space<vmem>>, %arg3: memref<1x11x11x4xbf16, #tpu.memory_space<vmem>>, %arg4: memref<1x11x11x4xbf16, #tpu.memory_space<vmem>>, %arg5: memref<196x64xbf16, #tpu.memory_space<vmem>>, %arg6: memref<2x64xf32, #tpu.memory_space<vmem>>, %arg7: memref<1x64x64xbf16, #tpu.memory_space<vmem>>) attributes {dimension_semantics = [#tpu.dimension_semantics<parallel>], iteration_bounds = array<i64: 2>, scalar_prefetch = 0 : i64, scratch_operands = 0 : i64, tpu.core_type = #tpu.core_type<tc>, window_params = [{transform_indices = @transform_0, window_bounds = array<i64: 1, 11, 11, 4>}, {transform_indices = @transform_1, window_bounds = array<i64: 1, 11, 11, 4>}, {transform_indices = @transform_2, window_bounds = array<i64: 1, 11, 11, 4>}, {transform_indices = @transform_3, window_bounds = array<i64: 1, 11, 11, 4>}, {pipeline_mode = #tpu.pipeline_mode<synchronous>, transform_indices = @transform_4, window_bounds = array<i64: 196, 64>}, {pipeline_mode = #tpu.pipeline_mode<synchronous>, transform_indices = @transform_5, window_bounds = array<i64: 2, 64>}, {transform_indices = @transform_6, window_bounds = array<i64: 1, 64, 64>}]} {
    %c0 = arith.constant 0 : index
    %c0_0 = arith.constant 0 : index
    %c0_1 = arith.constant 0 : index
    %c0_2 = arith.constant 0 : index
    %0 = vector.load %arg1[%c0, %c0_0, %c0_1, %c0_2] : memref<1x11x11x4xbf16, #tpu.memory_space<vmem>>, vector<1x11x11x4xbf16>
    %1 = vector.shape_cast %0 : vector<1x11x11x4xbf16> to vector<11x11x4xbf16>
    %c0_3 = arith.constant 0 : index
    %c0_4 = arith.constant 0 : index
    %c0_5 = arith.constant 0 : index
    %c0_6 = arith.constant 0 : index
    %2 = vector.load %arg2[%c0_3, %c0_4, %c0_5, %c0_6] : memref<1x11x11x4xbf16, #tpu.memory_space<vmem>>, vector<1x11x11x4xbf16>
    %3 = vector.shape_cast %2 : vector<1x11x11x4xbf16> to vector<11x11x4xbf16>
    %c0_7 = arith.constant 0 : index
    %c0_8 = arith.constant 0 : index
    %c0_9 = arith.constant 0 : index
    %c0_10 = arith.constant 0 : index
    %4 = vector.load %arg3[%c0_7, %c0_8, %c0_9, %c0_10] : memref<1x11x11x4xbf16, #tpu.memory_space<vmem>>, vector<1x11x11x4xbf16>
    %5 = vector.shape_cast %4 : vector<1x11x11x4xbf16> to vector<11x11x4xbf16>
    %c0_11 = arith.constant 0 : index
    %c0_12 = arith.constant 0 : index
    %c0_13 = arith.constant 0 : index
    %c0_14 = arith.constant 0 : index
    %6 = vector.load %arg4[%c0_11, %c0_12, %c0_13, %c0_14] : memref<1x11x11x4xbf16, #tpu.memory_space<vmem>>, vector<1x11x11x4xbf16>
    %7 = vector.shape_cast %6 : vector<1x11x11x4xbf16> to vector<11x11x4xbf16>
    %8 = vector.extract_strided_slice %1 {offsets = [0, 0, 0], sizes = [8, 8, 4], strides = [1, 1, 1]} : vector<11x11x4xbf16> to vector<8x8x4xbf16>
    %9 = vector.extract_strided_slice %3 {offsets = [0, 0, 0], sizes = [8, 8, 4], strides = [1, 1, 1]} : vector<11x11x4xbf16> to vector<8x8x4xbf16>
    %10 = vector.extract_strided_slice %1 {offsets = [0, 1, 0], sizes = [8, 8, 4], strides = [1, 1, 1]} : vector<11x11x4xbf16> to vector<8x8x4xbf16>
    %11 = vector.extract_strided_slice %3 {offsets = [0, 1, 0], sizes = [8, 8, 4], strides = [1, 1, 1]} : vector<11x11x4xbf16> to vector<8x8x4xbf16>
    %12 = vector.extract_strided_slice %1 {offsets = [0, 2, 0], sizes = [8, 8, 4], strides = [1, 1, 1]} : vector<11x11x4xbf16> to vector<8x8x4xbf16>
    %13 = vector.extract_strided_slice %3 {offsets = [0, 2, 0], sizes = [8, 8, 4], strides = [1, 1, 1]} : vector<11x11x4xbf16> to vector<8x8x4xbf16>
    %14 = vector.extract_strided_slice %1 {offsets = [0, 3, 0], sizes = [8, 8, 4], strides = [1, 1, 1]} : vector<11x11x4xbf16> to vector<8x8x4xbf16>
    %15 = tpu.concatenate %8, %9, %10, %11, %12, %13, %14 in 2 : vector<8x8x4xbf16>, vector<8x8x4xbf16>, vector<8x8x4xbf16>, vector<8x8x4xbf16>, vector<8x8x4xbf16>, vector<8x8x4xbf16>, vector<8x8x4xbf16> -> vector<8x8x28xbf16>
    %16 = vector.extract_strided_slice %5 {offsets = [0, 0, 0], sizes = [8, 8, 4], strides = [1, 1, 1]} : vector<11x11x4xbf16> to vector<8x8x4xbf16>
    %17 = vector.extract_strided_slice %7 {offsets = [0, 0, 0], sizes = [8, 8, 4], strides = [1, 1, 1]} : vector<11x11x4xbf16> to vector<8x8x4xbf16>
    %18 = vector.extract_strided_slice %5 {offsets = [0, 1, 0], sizes = [8, 8, 4], strides = [1, 1, 1]} : vector<11x11x4xbf16> to vector<8x8x4xbf16>
    %19 = vector.extract_strided_slice %7 {offsets = [0, 1, 0], sizes = [8, 8, 4], strides = [1, 1, 1]} : vector<11x11x4xbf16> to vector<8x8x4xbf16>
    %20 = vector.extract_strided_slice %5 {offsets = [0, 2, 0], sizes = [8, 8, 4], strides = [1, 1, 1]} : vector<11x11x4xbf16> to vector<8x8x4xbf16>
    %21 = vector.extract_strided_slice %7 {offsets = [0, 2, 0], sizes = [8, 8, 4], strides = [1, 1, 1]} : vector<11x11x4xbf16> to vector<8x8x4xbf16>
    %22 = vector.extract_strided_slice %5 {offsets = [0, 3, 0], sizes = [8, 8, 4], strides = [1, 1, 1]} : vector<11x11x4xbf16> to vector<8x8x4xbf16>
    %23 = tpu.concatenate %16, %17, %18, %19, %20, %21, %22 in 2 : vector<8x8x4xbf16>, vector<8x8x4xbf16>, vector<8x8x4xbf16>, vector<8x8x4xbf16>, vector<8x8x4xbf16>, vector<8x8x4xbf16>, vector<8x8x4xbf16> -> vector<8x8x28xbf16>
    %24 = vector.extract_strided_slice %1 {offsets = [1, 0, 0], sizes = [8, 8, 4], strides = [1, 1, 1]} : vector<11x11x4xbf16> to vector<8x8x4xbf16>
    %25 = vector.extract_strided_slice %3 {offsets = [1, 0, 0], sizes = [8, 8, 4], strides = [1, 1, 1]} : vector<11x11x4xbf16> to vector<8x8x4xbf16>
    %26 = vector.extract_strided_slice %1 {offsets = [1, 1, 0], sizes = [8, 8, 4], strides = [1, 1, 1]} : vector<11x11x4xbf16> to vector<8x8x4xbf16>
    %27 = vector.extract_strided_slice %3 {offsets = [1, 1, 0], sizes = [8, 8, 4], strides = [1, 1, 1]} : vector<11x11x4xbf16> to vector<8x8x4xbf16>
    %28 = vector.extract_strided_slice %1 {offsets = [1, 2, 0], sizes = [8, 8, 4], strides = [1, 1, 1]} : vector<11x11x4xbf16> to vector<8x8x4xbf16>
    %29 = vector.extract_strided_slice %3 {offsets = [1, 2, 0], sizes = [8, 8, 4], strides = [1, 1, 1]} : vector<11x11x4xbf16> to vector<8x8x4xbf16>
    %30 = vector.extract_strided_slice %1 {offsets = [1, 3, 0], sizes = [8, 8, 4], strides = [1, 1, 1]} : vector<11x11x4xbf16> to vector<8x8x4xbf16>
    %31 = tpu.concatenate %24, %25, %26, %27, %28, %29, %30 in 2 : vector<8x8x4xbf16>, vector<8x8x4xbf16>, vector<8x8x4xbf16>, vector<8x8x4xbf16>, vector<8x8x4xbf16>, vector<8x8x4xbf16>, vector<8x8x4xbf16> -> vector<8x8x28xbf16>
    %32 = vector.extract_strided_slice %5 {offsets = [1, 0, 0], sizes = [8, 8, 4], strides = [1, 1, 1]} : vector<11x11x4xbf16> to vector<8x8x4xbf16>
    %33 = vector.extract_strided_slice %7 {offsets = [1, 0, 0], sizes = [8, 8, 4], strides = [1, 1, 1]} : vector<11x11x4xbf16> to vector<8x8x4xbf16>
    %34 = vector.extract_strided_slice %5 {offsets = [1, 1, 0], sizes = [8, 8, 4], strides = [1, 1, 1]} : vector<11x11x4xbf16> to vector<8x8x4xbf16>
    %35 = vector.extract_strided_slice %7 {offsets = [1, 1, 0], sizes = [8, 8, 4], strides = [1, 1, 1]} : vector<11x11x4xbf16> to vector<8x8x4xbf16>
    %36 = vector.extract_strided_slice %5 {offsets = [1, 2, 0], sizes = [8, 8, 4], strides = [1, 1, 1]} : vector<11x11x4xbf16> to vector<8x8x4xbf16>
    %37 = vector.extract_strided_slice %7 {offsets = [1, 2, 0], sizes = [8, 8, 4], strides = [1, 1, 1]} : vector<11x11x4xbf16> to vector<8x8x4xbf16>
    %38 = vector.extract_strided_slice %5 {offsets = [1, 3, 0], sizes = [8, 8, 4], strides = [1, 1, 1]} : vector<11x11x4xbf16> to vector<8x8x4xbf16>
    %39 = tpu.concatenate %32, %33, %34, %35, %36, %37, %38 in 2 : vector<8x8x4xbf16>, vector<8x8x4xbf16>, vector<8x8x4xbf16>, vector<8x8x4xbf16>, vector<8x8x4xbf16>, vector<8x8x4xbf16>, vector<8x8x4xbf16> -> vector<8x8x28xbf16>
    %40 = vector.extract_strided_slice %1 {offsets = [2, 0, 0], sizes = [8, 8, 4], strides = [1, 1, 1]} : vector<11x11x4xbf16> to vector<8x8x4xbf16>
    %41 = vector.extract_strided_slice %3 {offsets = [2, 0, 0], sizes = [8, 8, 4], strides = [1, 1, 1]} : vector<11x11x4xbf16> to vector<8x8x4xbf16>
    %42 = vector.extract_strided_slice %1 {offsets = [2, 1, 0], sizes = [8, 8, 4], strides = [1, 1, 1]} : vector<11x11x4xbf16> to vector<8x8x4xbf16>
    %43 = vector.extract_strided_slice %3 {offsets = [2, 1, 0], sizes = [8, 8, 4], strides = [1, 1, 1]} : vector<11x11x4xbf16> to vector<8x8x4xbf16>
    %44 = vector.extract_strided_slice %1 {offsets = [2, 2, 0], sizes = [8, 8, 4], strides = [1, 1, 1]} : vector<11x11x4xbf16> to vector<8x8x4xbf16>
    %45 = vector.extract_strided_slice %3 {offsets = [2, 2, 0], sizes = [8, 8, 4], strides = [1, 1, 1]} : vector<11x11x4xbf16> to vector<8x8x4xbf16>
    %46 = vector.extract_strided_slice %1 {offsets = [2, 3, 0], sizes = [8, 8, 4], strides = [1, 1, 1]} : vector<11x11x4xbf16> to vector<8x8x4xbf16>
    %47 = tpu.concatenate %40, %41, %42, %43, %44, %45, %46 in 2 : vector<8x8x4xbf16>, vector<8x8x4xbf16>, vector<8x8x4xbf16>, vector<8x8x4xbf16>, vector<8x8x4xbf16>, vector<8x8x4xbf16>, vector<8x8x4xbf16> -> vector<8x8x28xbf16>
    %48 = vector.extract_strided_slice %5 {offsets = [2, 0, 0], sizes = [8, 8, 4], strides = [1, 1, 1]} : vector<11x11x4xbf16> to vector<8x8x4xbf16>
    %49 = vector.extract_strided_slice %7 {offsets = [2, 0, 0], sizes = [8, 8, 4], strides = [1, 1, 1]} : vector<11x11x4xbf16> to vector<8x8x4xbf16>
    %50 = vector.extract_strided_slice %5 {offsets = [2, 1, 0], sizes = [8, 8, 4], strides = [1, 1, 1]} : vector<11x11x4xbf16> to vector<8x8x4xbf16>
    %51 = vector.extract_strided_slice %7 {offsets = [2, 1, 0], sizes = [8, 8, 4], strides = [1, 1, 1]} : vector<11x11x4xbf16> to vector<8x8x4xbf16>
    %52 = vector.extract_strided_slice %5 {offsets = [2, 2, 0], sizes = [8, 8, 4], strides = [1, 1, 1]} : vector<11x11x4xbf16> to vector<8x8x4xbf16>
    %53 = vector.extract_strided_slice %7 {offsets = [2, 2, 0], sizes = [8, 8, 4], strides = [1, 1, 1]} : vector<11x11x4xbf16> to vector<8x8x4xbf16>
    %54 = vector.extract_strided_slice %5 {offsets = [2, 3, 0], sizes = [8, 8, 4], strides = [1, 1, 1]} : vector<11x11x4xbf16> to vector<8x8x4xbf16>
    %55 = tpu.concatenate %48, %49, %50, %51, %52, %53, %54 in 2 : vector<8x8x4xbf16>, vector<8x8x4xbf16>, vector<8x8x4xbf16>, vector<8x8x4xbf16>, vector<8x8x4xbf16>, vector<8x8x4xbf16>, vector<8x8x4xbf16> -> vector<8x8x28xbf16>
    %56 = vector.extract_strided_slice %1 {offsets = [3, 0, 0], sizes = [8, 8, 4], strides = [1, 1, 1]} : vector<11x11x4xbf16> to vector<8x8x4xbf16>
    %57 = vector.extract_strided_slice %3 {offsets = [3, 0, 0], sizes = [8, 8, 4], strides = [1, 1, 1]} : vector<11x11x4xbf16> to vector<8x8x4xbf16>
    %58 = vector.extract_strided_slice %1 {offsets = [3, 1, 0], sizes = [8, 8, 4], strides = [1, 1, 1]} : vector<11x11x4xbf16> to vector<8x8x4xbf16>
    %59 = vector.extract_strided_slice %3 {offsets = [3, 1, 0], sizes = [8, 8, 4], strides = [1, 1, 1]} : vector<11x11x4xbf16> to vector<8x8x4xbf16>
    %60 = vector.extract_strided_slice %1 {offsets = [3, 2, 0], sizes = [8, 8, 4], strides = [1, 1, 1]} : vector<11x11x4xbf16> to vector<8x8x4xbf16>
    %61 = vector.extract_strided_slice %3 {offsets = [3, 2, 0], sizes = [8, 8, 4], strides = [1, 1, 1]} : vector<11x11x4xbf16> to vector<8x8x4xbf16>
    %62 = vector.extract_strided_slice %1 {offsets = [3, 3, 0], sizes = [8, 8, 4], strides = [1, 1, 1]} : vector<11x11x4xbf16> to vector<8x8x4xbf16>
    %63 = tpu.concatenate %56, %57, %58, %59, %60, %61, %62 in 2 : vector<8x8x4xbf16>, vector<8x8x4xbf16>, vector<8x8x4xbf16>, vector<8x8x4xbf16>, vector<8x8x4xbf16>, vector<8x8x4xbf16>, vector<8x8x4xbf16> -> vector<8x8x28xbf16>
    %64 = tpu.concatenate %15, %23, %31, %39, %47, %55, %63 in 2 : vector<8x8x28xbf16>, vector<8x8x28xbf16>, vector<8x8x28xbf16>, vector<8x8x28xbf16>, vector<8x8x28xbf16>, vector<8x8x28xbf16>, vector<8x8x28xbf16> -> vector<8x8x196xbf16>
    %65 = vector.shape_cast %64 : vector<8x8x196xbf16> to vector<64x196xbf16>
    %c0_15 = arith.constant 0 : index
    %c0_16 = arith.constant 0 : index
    %66 = vector.load %arg5[%c0_15, %c0_16] : memref<196x64xbf16, #tpu.memory_space<vmem>>, vector<196x64xbf16>
    %cst = arith.constant dense<0.000000e+00> : vector<64x64xf32>
    %67 = tpu.matmul %65, %66, %cst {dimension_numbers = #tpu.dot_dimension_numbers<[1], [0], [0], [1], [0, 0, 1, 1], [], []>} : vector<64x196xbf16>, vector<196x64xbf16>, vector<64x64xf32> -> vector<64x64xf32>
    %c0_17 = arith.constant 0 : index
    %c0_18 = arith.constant 0 : index
    %68 = vector.load %arg6[%c0_17, %c0_18] : memref<2x64xf32, #tpu.memory_space<vmem>>, vector<1x64xf32>
    %69 = vector.broadcast %68 : vector<1x64xf32> to vector<64x64xf32>
    %70 = arith.mulf %67, %69 : vector<64x64xf32>
    %c1 = arith.constant 1 : index
    %c0_19 = arith.constant 0 : index
    %71 = vector.load %arg6[%c1, %c0_19] : memref<2x64xf32, #tpu.memory_space<vmem>>, vector<1x64xf32>
    %72 = vector.broadcast %71 : vector<1x64xf32> to vector<64x64xf32>
    %73 = arith.addf %70, %72 : vector<64x64xf32>
    %cst_20 = arith.constant 0.000000e+00 : f32
    %74 = vector.broadcast %cst_20 : f32 to vector<64x64xf32>
    %75 = arith.maximumf %73, %74 : vector<64x64xf32>
    %76 = arith.truncf %75 : vector<64x64xf32> to vector<64x64xbf16>
    %c0_21 = arith.constant 0 : index
    %c0_22 = arith.constant 0 : index
    %c0_23 = arith.constant 0 : index
    %77 = vector.load %arg7[%c0_21, %c0_22, %c0_23] : memref<1x64x64xbf16, #tpu.memory_space<vmem>>, vector<1x64x64xbf16>
    %78 = vector.shape_cast %77 : vector<1x64x64xbf16> to vector<64x64xbf16>
    %79 = vector.shape_cast %76 : vector<64x64xbf16> to vector<1x64x64xbf16>
    tpu.vector_store %arg7[%c0_21, %c0_22, %c0_23], %79 {strides = array<i32>} : memref<1x64x64xbf16, #tpu.memory_space<vmem>>, vector<1x64x64xbf16>,
    return
  }
  func.func @transform_0(%arg0: i32) -> (i32, i32, i32, i32) {
    %c0_i32 = arith.constant 0 : i32
    %c0_i32_0 = arith.constant 0 : i32
    %c0_i32_1 = arith.constant 0 : i32
    %c0_i32_2 = arith.constant 0 : i32
    return %arg0, %c0_i32, %c0_i32_0, %c0_i32_1 : i32, i32, i32, i32
  }
  func.func @transform_1(%arg0: i32) -> (i32, i32, i32, i32) {
    %c0_i32 = arith.constant 0 : i32
    %c0_i32_0 = arith.constant 0 : i32
    %c0_i32_1 = arith.constant 0 : i32
    %c0_i32_2 = arith.constant 0 : i32
    return %arg0, %c0_i32, %c0_i32_0, %c0_i32_1 : i32, i32, i32, i32
  }
  func.func @transform_2(%arg0: i32) -> (i32, i32, i32, i32) {
    %c0_i32 = arith.constant 0 : i32
    %c0_i32_0 = arith.constant 0 : i32
    %c0_i32_1 = arith.constant 0 : i32
    %c0_i32_2 = arith.constant 0 : i32
    return %arg0, %c0_i32, %c0_i32_0, %c0_i32_1 : i32, i32, i32, i32
  }
  func.func @transform_3(%arg0: i32) -> (i32, i32, i32, i32) {
    %c0_i32 = arith.constant 0 : i32
    %c0_i32_0 = arith.constant 0 : i32
    %c0_i32_1 = arith.constant 0 : i32
    %c0_i32_2 = arith.constant 0 : i32
    return %arg0, %c0_i32, %c0_i32_0, %c0_i32_1 : i32, i32, i32, i32
  }
  func.func @transform_4(%arg0: i32) -> (i32, i32) {
    %c0_i32 = arith.constant 0 : i32
    %c0_i32_0 = arith.constant 0 : i32
    %c0_i32_1 = arith.constant 0 : i32
    return %c0_i32, %c0_i32_0 : i32, i32
  }
  func.func @transform_5(%arg0: i32) -> (i32, i32) {
    %c0_i32 = arith.constant 0 : i32
    %c0_i32_0 = arith.constant 0 : i32
    %c0_i32_1 = arith.constant 0 : i32
    return %c0_i32, %c0_i32_0 : i32, i32
  }
  func.func @transform_6(%arg0: i32) -> (i32, i32, i32) {
    %c0_i32 = arith.constant 0 : i32
    %c0_i32_0 = arith.constant 0 : i32
    %c0_i32_1 = arith.constant 0 : i32
    return %arg0, %c0_i32, %c0_i32_0 : i32, i32, i32
  }
}

module attributes {stable_mosaic.version = 11 : i64} {
  func.func @kernel(%arg0: i32, %arg1: memref<1x16x128xbf16, #tpu.memory_space<vmem>>, %arg2: memref<2x128xf32, #tpu.memory_space<vmem>>, %arg3: memref<128x64xbf16, #tpu.memory_space<vmem>>, %arg4: memref<2x64xf32, #tpu.memory_space<vmem>>, %arg5: memref<3x192x64xbf16, #tpu.memory_space<vmem>>, %arg6: memref<2x64xf32, #tpu.memory_space<vmem>>, %arg7: memref<64x128xbf16, #tpu.memory_space<vmem>>, %arg8: memref<1x128xf32, #tpu.memory_space<vmem>>, %arg9: memref<1x16x128xbf16, #tpu.memory_space<vmem>>) attributes {dimension_semantics = [#tpu.dimension_semantics<parallel>], iteration_bounds = array<i64: 2>, scalar_prefetch = 0 : i64, scratch_operands = 0 : i64, tpu.core_type = #tpu.core_type<tc>, window_params = [{transform_indices = @transform_0, window_bounds = array<i64: 1, 16, 128>}, {pipeline_mode = #tpu.pipeline_mode<synchronous>, transform_indices = @transform_1, window_bounds = array<i64: 2, 128>}, {pipeline_mode = #tpu.pipeline_mode<synchronous>, transform_indices = @transform_2, window_bounds = array<i64: 128, 64>}, {pipeline_mode = #tpu.pipeline_mode<synchronous>, transform_indices = @transform_3, window_bounds = array<i64: 2, 64>}, {pipeline_mode = #tpu.pipeline_mode<synchronous>, transform_indices = @transform_4, window_bounds = array<i64: 3, 192, 64>}, {pipeline_mode = #tpu.pipeline_mode<synchronous>, transform_indices = @transform_5, window_bounds = array<i64: 2, 64>}, {pipeline_mode = #tpu.pipeline_mode<synchronous>, transform_indices = @transform_6, window_bounds = array<i64: 64, 128>}, {pipeline_mode = #tpu.pipeline_mode<synchronous>, transform_indices = @transform_7, window_bounds = array<i64: 1, 128>}, {transform_indices = @transform_8, window_bounds = array<i64: 1, 16, 128>}]} {
    %c0 = arith.constant 0 : index
    %c0_0 = arith.constant 0 : index
    %c0_1 = arith.constant 0 : index
    %0 = vector.load %arg1[%c0, %c0_0, %c0_1] : memref<1x16x128xbf16, #tpu.memory_space<vmem>>, vector<1x16x128xbf16>
    %1 = vector.shape_cast %0 : vector<1x16x128xbf16> to vector<16x128xbf16>
    %2 = arith.extf %1 : vector<16x128xbf16> to vector<16x128xf32>
    %c0_2 = arith.constant 0 : index
    %c0_3 = arith.constant 0 : index
    %3 = vector.load %arg2[%c0_2, %c0_3] : memref<2x128xf32, #tpu.memory_space<vmem>>, vector<1x128xf32>
    %4 = vector.broadcast %3 : vector<1x128xf32> to vector<16x128xf32>
    %5 = arith.mulf %2, %4 : vector<16x128xf32>
    %c1 = arith.constant 1 : index
    %c0_4 = arith.constant 0 : index
    %6 = vector.load %arg2[%c1, %c0_4] : memref<2x128xf32, #tpu.memory_space<vmem>>, vector<1x128xf32>
    %7 = vector.broadcast %6 : vector<1x128xf32> to vector<16x128xf32>
    %8 = arith.addf %5, %7 : vector<16x128xf32>
    %cst = arith.constant 0.000000e+00 : f32
    %9 = vector.broadcast %cst : f32 to vector<16x128xf32>
    %10 = arith.maximumf %8, %9 : vector<16x128xf32>
    %11 = arith.truncf %10 : vector<16x128xf32> to vector<16x128xbf16>
    %c0_5 = arith.constant 0 : index
    %c0_6 = arith.constant 0 : index
    %12 = vector.load %arg3[%c0_5, %c0_6] : memref<128x64xbf16, #tpu.memory_space<vmem>>, vector<128x64xbf16>
    %cst_7 = arith.constant dense<0.000000e+00> : vector<16x64xf32>
    %13 = tpu.matmul %11, %12, %cst_7 {dimension_numbers = #tpu.dot_dimension_numbers<[1], [0], [0], [1], [0, 0, 1, 1], [], []>} : vector<16x128xbf16>, vector<128x64xbf16>, vector<16x64xf32> -> vector<16x64xf32>
    %c0_8 = arith.constant 0 : index
    %c0_9 = arith.constant 0 : index
    %14 = vector.load %arg4[%c0_8, %c0_9] : memref<2x64xf32, #tpu.memory_space<vmem>>, vector<1x64xf32>
    %15 = vector.broadcast %14 : vector<1x64xf32> to vector<16x64xf32>
    %16 = arith.mulf %13, %15 : vector<16x64xf32>
    %c1_10 = arith.constant 1 : index
    %c0_11 = arith.constant 0 : index
    %17 = vector.load %arg4[%c1_10, %c0_11] : memref<2x64xf32, #tpu.memory_space<vmem>>, vector<1x64xf32>
    %18 = vector.broadcast %17 : vector<1x64xf32> to vector<16x64xf32>
    %19 = arith.addf %16, %18 : vector<16x64xf32>
    %cst_12 = arith.constant 0.000000e+00 : f32
    %20 = vector.broadcast %cst_12 : f32 to vector<16x64xf32>
    %21 = arith.maximumf %19, %20 : vector<16x64xf32>
    %22 = arith.truncf %21 : vector<16x64xf32> to vector<16x64xbf16>
    %23 = vector.shape_cast %22 : vector<16x64xbf16> to vector<4x4x64xbf16>
    %cst_13 = arith.constant 0.000000e+00 : bf16
    %24 = vector.broadcast %cst_13 : bf16 to vector<4x1x64xbf16>
    %cst_14 = arith.constant 0.000000e+00 : bf16
    %25 = vector.broadcast %cst_14 : bf16 to vector<1x6x64xbf16>
    %26 = tpu.concatenate %24, %23, %24 in 1 : vector<4x1x64xbf16>, vector<4x4x64xbf16>, vector<4x1x64xbf16> -> vector<4x6x64xbf16>
    %27 = tpu.concatenate %25, %26, %25 in 0 : vector<1x6x64xbf16>, vector<4x6x64xbf16>, vector<1x6x64xbf16> -> vector<6x6x64xbf16>
    %28 = vector.extract_strided_slice %27 {offsets = [0, 0, 0], sizes = [6, 4, 64], strides = [1, 1, 1]} : vector<6x6x64xbf16> to vector<6x4x64xbf16>
    %29 = vector.extract_strided_slice %27 {offsets = [0, 1, 0], sizes = [6, 4, 64], strides = [1, 1, 1]} : vector<6x6x64xbf16> to vector<6x4x64xbf16>
    %30 = vector.extract_strided_slice %27 {offsets = [0, 2, 0], sizes = [6, 4, 64], strides = [1, 1, 1]} : vector<6x6x64xbf16> to vector<6x4x64xbf16>
    %31 = tpu.concatenate %28, %29, %30 in 2 : vector<6x4x64xbf16>, vector<6x4x64xbf16>, vector<6x4x64xbf16> -> vector<6x4x192xbf16>
    %cst_15 = arith.constant 0.000000e+00 : f32
    %32 = vector.broadcast %cst_15 : f32 to vector<16x64xf32>
    %33 = vector.extract_strided_slice %31 {offsets = [0, 0, 0], sizes = [4, 4, 192], strides = [1, 1, 1]} : vector<6x4x192xbf16> to vector<4x4x192xbf16>
    %34 = vector.shape_cast %33 : vector<4x4x192xbf16> to vector<16x192xbf16>
    %c0_16 = arith.constant 0 : index
    %c0_17 = arith.constant 0 : index
    %c0_18 = arith.constant 0 : index
    %35 = vector.load %arg5[%c0_16, %c0_17, %c0_18] : memref<3x192x64xbf16, #tpu.memory_space<vmem>>, vector<1x192x64xbf16>
    %36 = vector.shape_cast %35 : vector<1x192x64xbf16> to vector<192x64xbf16>
    %cst_19 = arith.constant dense<0.000000e+00> : vector<16x64xf32>
    %37 = tpu.matmul %34, %36, %cst_19 {dimension_numbers = #tpu.dot_dimension_numbers<[1], [0], [0], [1], [0, 0, 1, 1], [], []>} : vector<16x192xbf16>, vector<192x64xbf16>, vector<16x64xf32> -> vector<16x64xf32>
    %38 = arith.addf %32, %37 : vector<16x64xf32>
    %39 = vector.extract_strided_slice %31 {offsets = [1, 0, 0], sizes = [4, 4, 192], strides = [1, 1, 1]} : vector<6x4x192xbf16> to vector<4x4x192xbf16>
    %40 = vector.shape_cast %39 : vector<4x4x192xbf16> to vector<16x192xbf16>
    %c1_20 = arith.constant 1 : index
    %c0_21 = arith.constant 0 : index
    %c0_22 = arith.constant 0 : index
    %41 = vector.load %arg5[%c1_20, %c0_21, %c0_22] : memref<3x192x64xbf16, #tpu.memory_space<vmem>>, vector<1x192x64xbf16>
    %42 = vector.shape_cast %41 : vector<1x192x64xbf16> to vector<192x64xbf16>
    %cst_23 = arith.constant dense<0.000000e+00> : vector<16x64xf32>
    %43 = tpu.matmul %40, %42, %cst_23 {dimension_numbers = #tpu.dot_dimension_numbers<[1], [0], [0], [1], [0, 0, 1, 1], [], []>} : vector<16x192xbf16>, vector<192x64xbf16>, vector<16x64xf32> -> vector<16x64xf32>
    %44 = arith.addf %38, %43 : vector<16x64xf32>
    %45 = vector.extract_strided_slice %31 {offsets = [2, 0, 0], sizes = [4, 4, 192], strides = [1, 1, 1]} : vector<6x4x192xbf16> to vector<4x4x192xbf16>
    %46 = vector.shape_cast %45 : vector<4x4x192xbf16> to vector<16x192xbf16>
    %c2 = arith.constant 2 : index
    %c0_24 = arith.constant 0 : index
    %c0_25 = arith.constant 0 : index
    %47 = vector.load %arg5[%c2, %c0_24, %c0_25] : memref<3x192x64xbf16, #tpu.memory_space<vmem>>, vector<1x192x64xbf16>
    %48 = vector.shape_cast %47 : vector<1x192x64xbf16> to vector<192x64xbf16>
    %cst_26 = arith.constant dense<0.000000e+00> : vector<16x64xf32>
    %49 = tpu.matmul %46, %48, %cst_26 {dimension_numbers = #tpu.dot_dimension_numbers<[1], [0], [0], [1], [0, 0, 1, 1], [], []>} : vector<16x192xbf16>, vector<192x64xbf16>, vector<16x64xf32> -> vector<16x64xf32>
    %50 = arith.addf %44, %49 : vector<16x64xf32>
    %c0_27 = arith.constant 0 : index
    %c0_28 = arith.constant 0 : index
    %51 = vector.load %arg6[%c0_27, %c0_28] : memref<2x64xf32, #tpu.memory_space<vmem>>, vector<1x64xf32>
    %52 = vector.broadcast %51 : vector<1x64xf32> to vector<16x64xf32>
    %53 = arith.mulf %50, %52 : vector<16x64xf32>
    %c1_29 = arith.constant 1 : index
    %c0_30 = arith.constant 0 : index
    %54 = vector.load %arg6[%c1_29, %c0_30] : memref<2x64xf32, #tpu.memory_space<vmem>>, vector<1x64xf32>
    %55 = vector.broadcast %54 : vector<1x64xf32> to vector<16x64xf32>
    %56 = arith.addf %53, %55 : vector<16x64xf32>
    %cst_31 = arith.constant 0.000000e+00 : f32
    %57 = vector.broadcast %cst_31 : f32 to vector<16x64xf32>
    %58 = arith.maximumf %56, %57 : vector<16x64xf32>
    %59 = arith.truncf %58 : vector<16x64xf32> to vector<16x64xbf16>
    %c0_32 = arith.constant 0 : index
    %c0_33 = arith.constant 0 : index
    %60 = vector.load %arg7[%c0_32, %c0_33] : memref<64x128xbf16, #tpu.memory_space<vmem>>, vector<64x128xbf16>
    %cst_34 = arith.constant dense<0.000000e+00> : vector<16x128xf32>
    %61 = tpu.matmul %59, %60, %cst_34 {dimension_numbers = #tpu.dot_dimension_numbers<[1], [0], [0], [1], [0, 0, 1, 1], [], []>} : vector<16x64xbf16>, vector<64x128xbf16>, vector<16x128xf32> -> vector<16x128xf32>
    %c0_35 = arith.constant 0 : index
    %c0_36 = arith.constant 0 : index
    %62 = vector.load %arg8[%c0_35, %c0_36] : memref<1x128xf32, #tpu.memory_space<vmem>>, vector<1x128xf32>
    %63 = vector.broadcast %62 : vector<1x128xf32> to vector<16x128xf32>
    %64 = arith.addf %61, %63 : vector<16x128xf32>
    %65 = arith.addf %64, %2 : vector<16x128xf32>
    %66 = arith.truncf %65 : vector<16x128xf32> to vector<16x128xbf16>
    %c0_37 = arith.constant 0 : index
    %c0_38 = arith.constant 0 : index
    %c0_39 = arith.constant 0 : index
    %67 = vector.load %arg9[%c0_37, %c0_38, %c0_39] : memref<1x16x128xbf16, #tpu.memory_space<vmem>>, vector<1x16x128xbf16>
    %68 = vector.shape_cast %67 : vector<1x16x128xbf16> to vector<16x128xbf16>
    %69 = vector.shape_cast %66 : vector<16x128xbf16> to vector<1x16x128xbf16>
    tpu.vector_store %arg9[%c0_37, %c0_38, %c0_39], %69 {strides = array<i32>} : memref<1x16x128xbf16, #tpu.memory_space<vmem>>, vector<1x16x128xbf16>,
    return
  }
  func.func @transform_0(%arg0: i32) -> (i32, i32, i32) {
    %c0_i32 = arith.constant 0 : i32
    %c0_i32_0 = arith.constant 0 : i32
    %c0_i32_1 = arith.constant 0 : i32
    return %arg0, %c0_i32, %c0_i32_0 : i32, i32, i32
  }
  func.func @transform_1(%arg0: i32) -> (i32, i32) {
    %c0_i32 = arith.constant 0 : i32
    %c0_i32_0 = arith.constant 0 : i32
    %c0_i32_1 = arith.constant 0 : i32
    return %c0_i32, %c0_i32_0 : i32, i32
  }
  func.func @transform_2(%arg0: i32) -> (i32, i32) {
    %c0_i32 = arith.constant 0 : i32
    %c0_i32_0 = arith.constant 0 : i32
    %c0_i32_1 = arith.constant 0 : i32
    return %c0_i32, %c0_i32_0 : i32, i32
  }
  func.func @transform_3(%arg0: i32) -> (i32, i32) {
    %c0_i32 = arith.constant 0 : i32
    %c0_i32_0 = arith.constant 0 : i32
    %c0_i32_1 = arith.constant 0 : i32
    return %c0_i32, %c0_i32_0 : i32, i32
  }
  func.func @transform_4(%arg0: i32) -> (i32, i32, i32) {
    %c0_i32 = arith.constant 0 : i32
    %c0_i32_0 = arith.constant 0 : i32
    %c0_i32_1 = arith.constant 0 : i32
    %c0_i32_2 = arith.constant 0 : i32
    return %c0_i32, %c0_i32_0, %c0_i32_1 : i32, i32, i32
  }
  func.func @transform_5(%arg0: i32) -> (i32, i32) {
    %c0_i32 = arith.constant 0 : i32
    %c0_i32_0 = arith.constant 0 : i32
    %c0_i32_1 = arith.constant 0 : i32
    return %c0_i32, %c0_i32_0 : i32, i32
  }
  func.func @transform_6(%arg0: i32) -> (i32, i32) {
    %c0_i32 = arith.constant 0 : i32
    %c0_i32_0 = arith.constant 0 : i32
    %c0_i32_1 = arith.constant 0 : i32
    return %c0_i32, %c0_i32_0 : i32, i32
  }
  func.func @transform_7(%arg0: i32) -> (i32, i32) {
    %c0_i32 = arith.constant 0 : i32
    %c0_i32_0 = arith.constant 0 : i32
    %c0_i32_1 = arith.constant 0 : i32
    return %c0_i32, %c0_i32_0 : i32, i32
  }
  func.func @transform_8(%arg0: i32) -> (i32, i32, i32) {
    %c0_i32 = arith.constant 0 : i32
    %c0_i32_0 = arith.constant 0 : i32
    %c0_i32_1 = arith.constant 0 : i32
    return %arg0, %c0_i32, %c0_i32_0 : i32, i32, i32
  }
}

module attributes {stable_mosaic.version = 11 : i64} {
  func.func @kernel(%arg0: i32, %arg1: memref<1x64x64xbf16, #tpu.memory_space<vmem>>, %arg2: memref<2x64xf32, #tpu.memory_space<vmem>>, %arg3: memref<64x64xbf16, #tpu.memory_space<vmem>>, %arg4: memref<2x64xf32, #tpu.memory_space<vmem>>, %arg5: memref<3x192x64xbf16, #tpu.memory_space<vmem>>, %arg6: memref<2x64xf32, #tpu.memory_space<vmem>>, %arg7: memref<64x128xbf16, #tpu.memory_space<vmem>>, %arg8: memref<1x128xf32, #tpu.memory_space<vmem>>, %arg9: memref<64x128xbf16, #tpu.memory_space<vmem>>, %arg10: memref<1x128xf32, #tpu.memory_space<vmem>>, %arg11: memref<1x16x128xbf16, #tpu.memory_space<vmem>>) attributes {dimension_semantics = [#tpu.dimension_semantics<parallel>], iteration_bounds = array<i64: 2>, scalar_prefetch = 0 : i64, scratch_operands = 0 : i64, tpu.core_type = #tpu.core_type<tc>, window_params = [{transform_indices = @transform_0, window_bounds = array<i64: 1, 64, 64>}, {pipeline_mode = #tpu.pipeline_mode<synchronous>, transform_indices = @transform_1, window_bounds = array<i64: 2, 64>}, {pipeline_mode = #tpu.pipeline_mode<synchronous>, transform_indices = @transform_2, window_bounds = array<i64: 64, 64>}, {pipeline_mode = #tpu.pipeline_mode<synchronous>, transform_indices = @transform_3, window_bounds = array<i64: 2, 64>}, {pipeline_mode = #tpu.pipeline_mode<synchronous>, transform_indices = @transform_4, window_bounds = array<i64: 3, 192, 64>}, {pipeline_mode = #tpu.pipeline_mode<synchronous>, transform_indices = @transform_5, window_bounds = array<i64: 2, 64>}, {pipeline_mode = #tpu.pipeline_mode<synchronous>, transform_indices = @transform_6, window_bounds = array<i64: 64, 128>}, {pipeline_mode = #tpu.pipeline_mode<synchronous>, transform_indices = @transform_7, window_bounds = array<i64: 1, 128>}, {pipeline_mode = #tpu.pipeline_mode<synchronous>, transform_indices = @transform_8, window_bounds = array<i64: 64, 128>}, {pipeline_mode = #tpu.pipeline_mode<synchronous>, transform_indices = @transform_9, window_bounds = array<i64: 1, 128>}, {transform_indices = @transform_10, window_bounds = array<i64: 1, 16, 128>}]} {
    %c0 = arith.constant 0 : index
    %c0_0 = arith.constant 0 : index
    %c0_1 = arith.constant 0 : index
    %0 = vector.load %arg1[%c0, %c0_0, %c0_1] : memref<1x64x64xbf16, #tpu.memory_space<vmem>>, vector<1x64x64xbf16>
    %1 = vector.shape_cast %0 : vector<1x64x64xbf16> to vector<64x64xbf16>
    %2 = arith.extf %1 : vector<64x64xbf16> to vector<64x64xf32>
    %c0_2 = arith.constant 0 : index
    %c0_3 = arith.constant 0 : index
    %3 = vector.load %arg2[%c0_2, %c0_3] : memref<2x64xf32, #tpu.memory_space<vmem>>, vector<1x64xf32>
    %4 = vector.broadcast %3 : vector<1x64xf32> to vector<64x64xf32>
    %5 = arith.mulf %2, %4 : vector<64x64xf32>
    %c1 = arith.constant 1 : index
    %c0_4 = arith.constant 0 : index
    %6 = vector.load %arg2[%c1, %c0_4] : memref<2x64xf32, #tpu.memory_space<vmem>>, vector<1x64xf32>
    %7 = vector.broadcast %6 : vector<1x64xf32> to vector<64x64xf32>
    %8 = arith.addf %5, %7 : vector<64x64xf32>
    %cst = arith.constant 0.000000e+00 : f32
    %9 = vector.broadcast %cst : f32 to vector<64x64xf32>
    %10 = arith.maximumf %8, %9 : vector<64x64xf32>
    %11 = arith.truncf %10 : vector<64x64xf32> to vector<64x64xbf16>
    %c0_5 = arith.constant 0 : index
    %c0_6 = arith.constant 0 : index
    %12 = vector.load %arg3[%c0_5, %c0_6] : memref<64x64xbf16, #tpu.memory_space<vmem>>, vector<64x64xbf16>
    %cst_7 = arith.constant dense<0.000000e+00> : vector<64x64xf32>
    %13 = tpu.matmul %11, %12, %cst_7 {dimension_numbers = #tpu.dot_dimension_numbers<[1], [0], [0], [1], [0, 0, 1, 1], [], []>} : vector<64x64xbf16>, vector<64x64xbf16>, vector<64x64xf32> -> vector<64x64xf32>
    %c0_8 = arith.constant 0 : index
    %c0_9 = arith.constant 0 : index
    %14 = vector.load %arg4[%c0_8, %c0_9] : memref<2x64xf32, #tpu.memory_space<vmem>>, vector<1x64xf32>
    %15 = vector.broadcast %14 : vector<1x64xf32> to vector<64x64xf32>
    %16 = arith.mulf %13, %15 : vector<64x64xf32>
    %c1_10 = arith.constant 1 : index
    %c0_11 = arith.constant 0 : index
    %17 = vector.load %arg4[%c1_10, %c0_11] : memref<2x64xf32, #tpu.memory_space<vmem>>, vector<1x64xf32>
    %18 = vector.broadcast %17 : vector<1x64xf32> to vector<64x64xf32>
    %19 = arith.addf %16, %18 : vector<64x64xf32>
    %cst_12 = arith.constant 0.000000e+00 : f32
    %20 = vector.broadcast %cst_12 : f32 to vector<64x64xf32>
    %21 = arith.maximumf %19, %20 : vector<64x64xf32>
    %22 = arith.truncf %21 : vector<64x64xf32> to vector<64x64xbf16>
    %23 = vector.shape_cast %22 : vector<64x64xbf16> to vector<8x8x64xbf16>
    %cst_13 = arith.constant 0.000000e+00 : bf16
    %24 = vector.broadcast %cst_13 : bf16 to vector<8x1x64xbf16>
    %cst_14 = arith.constant 0.000000e+00 : bf16
    %25 = vector.broadcast %cst_14 : bf16 to vector<1x10x64xbf16>
    %26 = tpu.concatenate %24, %23, %24 in 1 : vector<8x1x64xbf16>, vector<8x8x64xbf16>, vector<8x1x64xbf16> -> vector<8x10x64xbf16>
    %27 = tpu.concatenate %25, %26, %25 in 0 : vector<1x10x64xbf16>, vector<8x10x64xbf16>, vector<1x10x64xbf16> -> vector<10x10x64xbf16>
    %28 = vector.extract_strided_slice %27 {offsets = [0, 0, 0], sizes = [10, 8, 64], strides = [1, 1, 1]} : vector<10x10x64xbf16> to vector<10x8x64xbf16>
    %29 = vector.extract_strided_slice %27 {offsets = [0, 1, 0], sizes = [10, 8, 64], strides = [1, 1, 1]} : vector<10x10x64xbf16> to vector<10x8x64xbf16>
    %30 = vector.extract_strided_slice %27 {offsets = [0, 2, 0], sizes = [10, 8, 64], strides = [1, 1, 1]} : vector<10x10x64xbf16> to vector<10x8x64xbf16>
    %31 = tpu.concatenate %28, %29, %30 in 2 : vector<10x8x64xbf16>, vector<10x8x64xbf16>, vector<10x8x64xbf16> -> vector<10x8x192xbf16>
    %cst_15 = arith.constant 0.000000e+00 : f32
    %32 = vector.broadcast %cst_15 : f32 to vector<64x64xf32>
    %33 = vector.extract_strided_slice %31 {offsets = [0, 0, 0], sizes = [8, 8, 192], strides = [1, 1, 1]} : vector<10x8x192xbf16> to vector<8x8x192xbf16>
    %34 = vector.shape_cast %33 : vector<8x8x192xbf16> to vector<64x192xbf16>
    %c0_16 = arith.constant 0 : index
    %c0_17 = arith.constant 0 : index
    %c0_18 = arith.constant 0 : index
    %35 = vector.load %arg5[%c0_16, %c0_17, %c0_18] : memref<3x192x64xbf16, #tpu.memory_space<vmem>>, vector<1x192x64xbf16>
    %36 = vector.shape_cast %35 : vector<1x192x64xbf16> to vector<192x64xbf16>
    %cst_19 = arith.constant dense<0.000000e+00> : vector<64x64xf32>
    %37 = tpu.matmul %34, %36, %cst_19 {dimension_numbers = #tpu.dot_dimension_numbers<[1], [0], [0], [1], [0, 0, 1, 1], [], []>} : vector<64x192xbf16>, vector<192x64xbf16>, vector<64x64xf32> -> vector<64x64xf32>
    %38 = arith.addf %32, %37 : vector<64x64xf32>
    %39 = vector.extract_strided_slice %31 {offsets = [1, 0, 0], sizes = [8, 8, 192], strides = [1, 1, 1]} : vector<10x8x192xbf16> to vector<8x8x192xbf16>
    %40 = vector.shape_cast %39 : vector<8x8x192xbf16> to vector<64x192xbf16>
    %c1_20 = arith.constant 1 : index
    %c0_21 = arith.constant 0 : index
    %c0_22 = arith.constant 0 : index
    %41 = vector.load %arg5[%c1_20, %c0_21, %c0_22] : memref<3x192x64xbf16, #tpu.memory_space<vmem>>, vector<1x192x64xbf16>
    %42 = vector.shape_cast %41 : vector<1x192x64xbf16> to vector<192x64xbf16>
    %cst_23 = arith.constant dense<0.000000e+00> : vector<64x64xf32>
    %43 = tpu.matmul %40, %42, %cst_23 {dimension_numbers = #tpu.dot_dimension_numbers<[1], [0], [0], [1], [0, 0, 1, 1], [], []>} : vector<64x192xbf16>, vector<192x64xbf16>, vector<64x64xf32> -> vector<64x64xf32>
    %44 = arith.addf %38, %43 : vector<64x64xf32>
    %45 = vector.extract_strided_slice %31 {offsets = [2, 0, 0], sizes = [8, 8, 192], strides = [1, 1, 1]} : vector<10x8x192xbf16> to vector<8x8x192xbf16>
    %46 = vector.shape_cast %45 : vector<8x8x192xbf16> to vector<64x192xbf16>
    %c2 = arith.constant 2 : index
    %c0_24 = arith.constant 0 : index
    %c0_25 = arith.constant 0 : index
    %47 = vector.load %arg5[%c2, %c0_24, %c0_25] : memref<3x192x64xbf16, #tpu.memory_space<vmem>>, vector<1x192x64xbf16>
    %48 = vector.shape_cast %47 : vector<1x192x64xbf16> to vector<192x64xbf16>
    %cst_26 = arith.constant dense<0.000000e+00> : vector<64x64xf32>
    %49 = tpu.matmul %46, %48, %cst_26 {dimension_numbers = #tpu.dot_dimension_numbers<[1], [0], [0], [1], [0, 0, 1, 1], [], []>} : vector<64x192xbf16>, vector<192x64xbf16>, vector<64x64xf32> -> vector<64x64xf32>
    %50 = arith.addf %44, %49 : vector<64x64xf32>
    %c0_27 = arith.constant 0 : index
    %c0_28 = arith.constant 0 : index
    %51 = vector.load %arg6[%c0_27, %c0_28] : memref<2x64xf32, #tpu.memory_space<vmem>>, vector<1x64xf32>
    %52 = vector.broadcast %51 : vector<1x64xf32> to vector<64x64xf32>
    %53 = arith.mulf %50, %52 : vector<64x64xf32>
    %c1_29 = arith.constant 1 : index
    %c0_30 = arith.constant 0 : index
    %54 = vector.load %arg6[%c1_29, %c0_30] : memref<2x64xf32, #tpu.memory_space<vmem>>, vector<1x64xf32>
    %55 = vector.broadcast %54 : vector<1x64xf32> to vector<64x64xf32>
    %56 = arith.addf %53, %55 : vector<64x64xf32>
    %cst_31 = arith.constant 0.000000e+00 : f32
    %57 = vector.broadcast %cst_31 : f32 to vector<64x64xf32>
    %58 = arith.maximumf %56, %57 : vector<64x64xf32>
    %59 = arith.truncf %58 : vector<64x64xf32> to vector<64x64xbf16>
    %c0_32 = arith.constant 0 : index
    %c0_33 = arith.constant 0 : index
    %60 = vector.load %arg7[%c0_32, %c0_33] : memref<64x128xbf16, #tpu.memory_space<vmem>>, vector<64x128xbf16>
    %cst_34 = arith.constant dense<0.000000e+00> : vector<64x128xf32>
    %61 = tpu.matmul %59, %60, %cst_34 {dimension_numbers = #tpu.dot_dimension_numbers<[1], [0], [0], [1], [0, 0, 1, 1], [], []>} : vector<64x64xbf16>, vector<64x128xbf16>, vector<64x128xf32> -> vector<64x128xf32>
    %c0_35 = arith.constant 0 : index
    %c0_36 = arith.constant 0 : index
    %62 = vector.load %arg8[%c0_35, %c0_36] : memref<1x128xf32, #tpu.memory_space<vmem>>, vector<1x128xf32>
    %63 = vector.broadcast %62 : vector<1x128xf32> to vector<64x128xf32>
    %64 = arith.addf %61, %63 : vector<64x128xf32>
    %c0_37 = arith.constant 0 : index
    %c0_38 = arith.constant 0 : index
    %65 = vector.load %arg9[%c0_37, %c0_38] : memref<64x128xbf16, #tpu.memory_space<vmem>>, vector<64x128xbf16>
    %cst_39 = arith.constant dense<0.000000e+00> : vector<64x128xf32>
    %66 = tpu.matmul %1, %65, %cst_39 {dimension_numbers = #tpu.dot_dimension_numbers<[1], [0], [0], [1], [0, 0, 1, 1], [], []>} : vector<64x64xbf16>, vector<64x128xbf16>, vector<64x128xf32> -> vector<64x128xf32>
    %c0_40 = arith.constant 0 : index
    %c0_41 = arith.constant 0 : index
    %67 = vector.load %arg10[%c0_40, %c0_41] : memref<1x128xf32, #tpu.memory_space<vmem>>, vector<1x128xf32>
    %68 = vector.broadcast %67 : vector<1x128xf32> to vector<64x128xf32>
    %69 = arith.addf %66, %68 : vector<64x128xf32>
    %70 = arith.addf %64, %69 : vector<64x128xf32>
    %71 = vector.shape_cast %70 : vector<64x128xf32> to vector<32x2x128xf32>
    %72 = vector.extract_strided_slice %71 {offsets = [0, 0, 0], sizes = [32, 1, 128], strides = [1, 1, 1]} : vector<32x2x128xf32> to vector<32x1x128xf32>
    %73 = vector.shape_cast %72 : vector<32x1x128xf32> to vector<32x128xf32>
    %74 = vector.extract_strided_slice %71 {offsets = [0, 1, 0], sizes = [32, 1, 128], strides = [1, 1, 1]} : vector<32x2x128xf32> to vector<32x1x128xf32>
    %75 = vector.shape_cast %74 : vector<32x1x128xf32> to vector<32x128xf32>
    %76 = arith.maximumf %73, %75 : vector<32x128xf32>
    %77 = vector.shape_cast %76 : vector<32x128xf32> to vector<4x8x128xf32>
    %78 = vector.extract_strided_slice %77 {offsets = [0, 0, 0], sizes = [4, 4, 128], strides = [1, 1, 1]} : vector<4x8x128xf32> to vector<4x4x128xf32>
    %79 = vector.extract_strided_slice %77 {offsets = [0, 4, 0], sizes = [4, 4, 128], strides = [1, 1, 1]} : vector<4x8x128xf32> to vector<4x4x128xf32>
    %80 = arith.maximumf %78, %79 : vector<4x4x128xf32>
    %81 = vector.shape_cast %80 : vector<4x4x128xf32> to vector<16x128xf32>
    %82 = arith.truncf %81 : vector<16x128xf32> to vector<16x128xbf16>
    %c0_42 = arith.constant 0 : index
    %c0_43 = arith.constant 0 : index
    %c0_44 = arith.constant 0 : index
    %83 = vector.load %arg11[%c0_42, %c0_43, %c0_44] : memref<1x16x128xbf16, #tpu.memory_space<vmem>>, vector<1x16x128xbf16>
    %84 = vector.shape_cast %83 : vector<1x16x128xbf16> to vector<16x128xbf16>
    %85 = vector.shape_cast %82 : vector<16x128xbf16> to vector<1x16x128xbf16>
    tpu.vector_store %arg11[%c0_42, %c0_43, %c0_44], %85 {strides = array<i32>} : memref<1x16x128xbf16, #tpu.memory_space<vmem>>, vector<1x16x128xbf16>,
    return
  }
  func.func @transform_0(%arg0: i32) -> (i32, i32, i32) {
    %c0_i32 = arith.constant 0 : i32
    %c0_i32_0 = arith.constant 0 : i32
    %c0_i32_1 = arith.constant 0 : i32
    return %arg0, %c0_i32, %c0_i32_0 : i32, i32, i32
  }
  func.func @transform_1(%arg0: i32) -> (i32, i32) {
    %c0_i32 = arith.constant 0 : i32
    %c0_i32_0 = arith.constant 0 : i32
    %c0_i32_1 = arith.constant 0 : i32
    return %c0_i32, %c0_i32_0 : i32, i32
  }
  func.func @transform_2(%arg0: i32) -> (i32, i32) {
    %c0_i32 = arith.constant 0 : i32
    %c0_i32_0 = arith.constant 0 : i32
    %c0_i32_1 = arith.constant 0 : i32
    return %c0_i32, %c0_i32_0 : i32, i32
  }
  func.func @transform_3(%arg0: i32) -> (i32, i32) {
    %c0_i32 = arith.constant 0 : i32
    %c0_i32_0 = arith.constant 0 : i32
    %c0_i32_1 = arith.constant 0 : i32
    return %c0_i32, %c0_i32_0 : i32, i32
  }
  func.func @transform_4(%arg0: i32) -> (i32, i32, i32) {
    %c0_i32 = arith.constant 0 : i32
    %c0_i32_0 = arith.constant 0 : i32
    %c0_i32_1 = arith.constant 0 : i32
    %c0_i32_2 = arith.constant 0 : i32
    return %c0_i32, %c0_i32_0, %c0_i32_1 : i32, i32, i32
  }
  func.func @transform_5(%arg0: i32) -> (i32, i32) {
    %c0_i32 = arith.constant 0 : i32
    %c0_i32_0 = arith.constant 0 : i32
    %c0_i32_1 = arith.constant 0 : i32
    return %c0_i32, %c0_i32_0 : i32, i32
  }
  func.func @transform_6(%arg0: i32) -> (i32, i32) {
    %c0_i32 = arith.constant 0 : i32
    %c0_i32_0 = arith.constant 0 : i32
    %c0_i32_1 = arith.constant 0 : i32
    return %c0_i32, %c0_i32_0 : i32, i32
  }
  func.func @transform_7(%arg0: i32) -> (i32, i32) {
    %c0_i32 = arith.constant 0 : i32
    %c0_i32_0 = arith.constant 0 : i32
    %c0_i32_1 = arith.constant 0 : i32
    return %c0_i32, %c0_i32_0 : i32, i32
  }
  func.func @transform_8(%arg0: i32) -> (i32, i32) {
    %c0_i32 = arith.constant 0 : i32
    %c0_i32_0 = arith.constant 0 : i32
    %c0_i32_1 = arith.constant 0 : i32
    return %c0_i32, %c0_i32_0 : i32, i32
  }
  func.func @transform_9(%arg0: i32) -> (i32, i32) {
    %c0_i32 = arith.constant 0 : i32
    %c0_i32_0 = arith.constant 0 : i32
    %c0_i32_1 = arith.constant 0 : i32
    return %c0_i32, %c0_i32_0 : i32, i32
  }
  func.func @transform_10(%arg0: i32) -> (i32, i32, i32) {
    %c0_i32 = arith.constant 0 : i32
    %c0_i32_0 = arith.constant 0 : i32
    %c0_i32_1 = arith.constant 0 : i32
    return %arg0, %c0_i32, %c0_i32_0 : i32, i32, i32
  }
}

module attributes {stable_mosaic.version = 11 : i64} {
  func.func @kernel(%arg0: i32, %arg1: memref<1x16x128xbf16, #tpu.memory_space<vmem>>, %arg2: memref<2x128xf32, #tpu.memory_space<vmem>>, %arg3: memref<128x64xbf16, #tpu.memory_space<vmem>>, %arg4: memref<2x64xf32, #tpu.memory_space<vmem>>, %arg5: memref<3x192x64xbf16, #tpu.memory_space<vmem>>, %arg6: memref<2x64xf32, #tpu.memory_space<vmem>>, %arg7: memref<64x128xbf16, #tpu.memory_space<vmem>>, %arg8: memref<1x128xf32, #tpu.memory_space<vmem>>, %arg9: memref<1x16x128xf32, #tpu.memory_space<vmem>>) attributes {dimension_semantics = [#tpu.dimension_semantics<parallel>], iteration_bounds = array<i64: 2>, scalar_prefetch = 0 : i64, scratch_operands = 0 : i64, tpu.core_type = #tpu.core_type<tc>, window_params = [{transform_indices = @transform_0, window_bounds = array<i64: 1, 16, 128>}, {pipeline_mode = #tpu.pipeline_mode<synchronous>, transform_indices = @transform_1, window_bounds = array<i64: 2, 128>}, {pipeline_mode = #tpu.pipeline_mode<synchronous>, transform_indices = @transform_2, window_bounds = array<i64: 128, 64>}, {pipeline_mode = #tpu.pipeline_mode<synchronous>, transform_indices = @transform_3, window_bounds = array<i64: 2, 64>}, {pipeline_mode = #tpu.pipeline_mode<synchronous>, transform_indices = @transform_4, window_bounds = array<i64: 3, 192, 64>}, {pipeline_mode = #tpu.pipeline_mode<synchronous>, transform_indices = @transform_5, window_bounds = array<i64: 2, 64>}, {pipeline_mode = #tpu.pipeline_mode<synchronous>, transform_indices = @transform_6, window_bounds = array<i64: 64, 128>}, {pipeline_mode = #tpu.pipeline_mode<synchronous>, transform_indices = @transform_7, window_bounds = array<i64: 1, 128>}, {transform_indices = @transform_8, window_bounds = array<i64: 1, 16, 128>}]} {
    %c0 = arith.constant 0 : index
    %c0_0 = arith.constant 0 : index
    %c0_1 = arith.constant 0 : index
    %0 = vector.load %arg1[%c0, %c0_0, %c0_1] : memref<1x16x128xbf16, #tpu.memory_space<vmem>>, vector<1x16x128xbf16>
    %1 = vector.shape_cast %0 : vector<1x16x128xbf16> to vector<16x128xbf16>
    %2 = arith.extf %1 : vector<16x128xbf16> to vector<16x128xf32>
    %c0_2 = arith.constant 0 : index
    %c0_3 = arith.constant 0 : index
    %3 = vector.load %arg2[%c0_2, %c0_3] : memref<2x128xf32, #tpu.memory_space<vmem>>, vector<1x128xf32>
    %4 = vector.broadcast %3 : vector<1x128xf32> to vector<16x128xf32>
    %5 = arith.mulf %2, %4 : vector<16x128xf32>
    %c1 = arith.constant 1 : index
    %c0_4 = arith.constant 0 : index
    %6 = vector.load %arg2[%c1, %c0_4] : memref<2x128xf32, #tpu.memory_space<vmem>>, vector<1x128xf32>
    %7 = vector.broadcast %6 : vector<1x128xf32> to vector<16x128xf32>
    %8 = arith.addf %5, %7 : vector<16x128xf32>
    %cst = arith.constant 0.000000e+00 : f32
    %9 = vector.broadcast %cst : f32 to vector<16x128xf32>
    %10 = arith.maximumf %8, %9 : vector<16x128xf32>
    %11 = arith.truncf %10 : vector<16x128xf32> to vector<16x128xbf16>
    %c0_5 = arith.constant 0 : index
    %c0_6 = arith.constant 0 : index
    %12 = vector.load %arg3[%c0_5, %c0_6] : memref<128x64xbf16, #tpu.memory_space<vmem>>, vector<128x64xbf16>
    %cst_7 = arith.constant dense<0.000000e+00> : vector<16x64xf32>
    %13 = tpu.matmul %11, %12, %cst_7 {dimension_numbers = #tpu.dot_dimension_numbers<[1], [0], [0], [1], [0, 0, 1, 1], [], []>} : vector<16x128xbf16>, vector<128x64xbf16>, vector<16x64xf32> -> vector<16x64xf32>
    %c0_8 = arith.constant 0 : index
    %c0_9 = arith.constant 0 : index
    %14 = vector.load %arg4[%c0_8, %c0_9] : memref<2x64xf32, #tpu.memory_space<vmem>>, vector<1x64xf32>
    %15 = vector.broadcast %14 : vector<1x64xf32> to vector<16x64xf32>
    %16 = arith.mulf %13, %15 : vector<16x64xf32>
    %c1_10 = arith.constant 1 : index
    %c0_11 = arith.constant 0 : index
    %17 = vector.load %arg4[%c1_10, %c0_11] : memref<2x64xf32, #tpu.memory_space<vmem>>, vector<1x64xf32>
    %18 = vector.broadcast %17 : vector<1x64xf32> to vector<16x64xf32>
    %19 = arith.addf %16, %18 : vector<16x64xf32>
    %cst_12 = arith.constant 0.000000e+00 : f32
    %20 = vector.broadcast %cst_12 : f32 to vector<16x64xf32>
    %21 = arith.maximumf %19, %20 : vector<16x64xf32>
    %22 = arith.truncf %21 : vector<16x64xf32> to vector<16x64xbf16>
    %23 = vector.shape_cast %22 : vector<16x64xbf16> to vector<4x4x64xbf16>
    %cst_13 = arith.constant 0.000000e+00 : bf16
    %24 = vector.broadcast %cst_13 : bf16 to vector<4x1x64xbf16>
    %cst_14 = arith.constant 0.000000e+00 : bf16
    %25 = vector.broadcast %cst_14 : bf16 to vector<1x6x64xbf16>
    %26 = tpu.concatenate %24, %23, %24 in 1 : vector<4x1x64xbf16>, vector<4x4x64xbf16>, vector<4x1x64xbf16> -> vector<4x6x64xbf16>
    %27 = tpu.concatenate %25, %26, %25 in 0 : vector<1x6x64xbf16>, vector<4x6x64xbf16>, vector<1x6x64xbf16> -> vector<6x6x64xbf16>
    %28 = vector.extract_strided_slice %27 {offsets = [0, 0, 0], sizes = [6, 4, 64], strides = [1, 1, 1]} : vector<6x6x64xbf16> to vector<6x4x64xbf16>
    %29 = vector.extract_strided_slice %27 {offsets = [0, 1, 0], sizes = [6, 4, 64], strides = [1, 1, 1]} : vector<6x6x64xbf16> to vector<6x4x64xbf16>
    %30 = vector.extract_strided_slice %27 {offsets = [0, 2, 0], sizes = [6, 4, 64], strides = [1, 1, 1]} : vector<6x6x64xbf16> to vector<6x4x64xbf16>
    %31 = tpu.concatenate %28, %29, %30 in 2 : vector<6x4x64xbf16>, vector<6x4x64xbf16>, vector<6x4x64xbf16> -> vector<6x4x192xbf16>
    %cst_15 = arith.constant 0.000000e+00 : f32
    %32 = vector.broadcast %cst_15 : f32 to vector<16x64xf32>
    %33 = vector.extract_strided_slice %31 {offsets = [0, 0, 0], sizes = [4, 4, 192], strides = [1, 1, 1]} : vector<6x4x192xbf16> to vector<4x4x192xbf16>
    %34 = vector.shape_cast %33 : vector<4x4x192xbf16> to vector<16x192xbf16>
    %c0_16 = arith.constant 0 : index
    %c0_17 = arith.constant 0 : index
    %c0_18 = arith.constant 0 : index
    %35 = vector.load %arg5[%c0_16, %c0_17, %c0_18] : memref<3x192x64xbf16, #tpu.memory_space<vmem>>, vector<1x192x64xbf16>
    %36 = vector.shape_cast %35 : vector<1x192x64xbf16> to vector<192x64xbf16>
    %cst_19 = arith.constant dense<0.000000e+00> : vector<16x64xf32>
    %37 = tpu.matmul %34, %36, %cst_19 {dimension_numbers = #tpu.dot_dimension_numbers<[1], [0], [0], [1], [0, 0, 1, 1], [], []>} : vector<16x192xbf16>, vector<192x64xbf16>, vector<16x64xf32> -> vector<16x64xf32>
    %38 = arith.addf %32, %37 : vector<16x64xf32>
    %39 = vector.extract_strided_slice %31 {offsets = [1, 0, 0], sizes = [4, 4, 192], strides = [1, 1, 1]} : vector<6x4x192xbf16> to vector<4x4x192xbf16>
    %40 = vector.shape_cast %39 : vector<4x4x192xbf16> to vector<16x192xbf16>
    %c1_20 = arith.constant 1 : index
    %c0_21 = arith.constant 0 : index
    %c0_22 = arith.constant 0 : index
    %41 = vector.load %arg5[%c1_20, %c0_21, %c0_22] : memref<3x192x64xbf16, #tpu.memory_space<vmem>>, vector<1x192x64xbf16>
    %42 = vector.shape_cast %41 : vector<1x192x64xbf16> to vector<192x64xbf16>
    %cst_23 = arith.constant dense<0.000000e+00> : vector<16x64xf32>
    %43 = tpu.matmul %40, %42, %cst_23 {dimension_numbers = #tpu.dot_dimension_numbers<[1], [0], [0], [1], [0, 0, 1, 1], [], []>} : vector<16x192xbf16>, vector<192x64xbf16>, vector<16x64xf32> -> vector<16x64xf32>
    %44 = arith.addf %38, %43 : vector<16x64xf32>
    %45 = vector.extract_strided_slice %31 {offsets = [2, 0, 0], sizes = [4, 4, 192], strides = [1, 1, 1]} : vector<6x4x192xbf16> to vector<4x4x192xbf16>
    %46 = vector.shape_cast %45 : vector<4x4x192xbf16> to vector<16x192xbf16>
    %c2 = arith.constant 2 : index
    %c0_24 = arith.constant 0 : index
    %c0_25 = arith.constant 0 : index
    %47 = vector.load %arg5[%c2, %c0_24, %c0_25] : memref<3x192x64xbf16, #tpu.memory_space<vmem>>, vector<1x192x64xbf16>
    %48 = vector.shape_cast %47 : vector<1x192x64xbf16> to vector<192x64xbf16>
    %cst_26 = arith.constant dense<0.000000e+00> : vector<16x64xf32>
    %49 = tpu.matmul %46, %48, %cst_26 {dimension_numbers = #tpu.dot_dimension_numbers<[1], [0], [0], [1], [0, 0, 1, 1], [], []>} : vector<16x192xbf16>, vector<192x64xbf16>, vector<16x64xf32> -> vector<16x64xf32>
    %50 = arith.addf %44, %49 : vector<16x64xf32>
    %c0_27 = arith.constant 0 : index
    %c0_28 = arith.constant 0 : index
    %51 = vector.load %arg6[%c0_27, %c0_28] : memref<2x64xf32, #tpu.memory_space<vmem>>, vector<1x64xf32>
    %52 = vector.broadcast %51 : vector<1x64xf32> to vector<16x64xf32>
    %53 = arith.mulf %50, %52 : vector<16x64xf32>
    %c1_29 = arith.constant 1 : index
    %c0_30 = arith.constant 0 : index
    %54 = vector.load %arg6[%c1_29, %c0_30] : memref<2x64xf32, #tpu.memory_space<vmem>>, vector<1x64xf32>
    %55 = vector.broadcast %54 : vector<1x64xf32> to vector<16x64xf32>
    %56 = arith.addf %53, %55 : vector<16x64xf32>
    %cst_31 = arith.constant 0.000000e+00 : f32
    %57 = vector.broadcast %cst_31 : f32 to vector<16x64xf32>
    %58 = arith.maximumf %56, %57 : vector<16x64xf32>
    %59 = arith.truncf %58 : vector<16x64xf32> to vector<16x64xbf16>
    %c0_32 = arith.constant 0 : index
    %c0_33 = arith.constant 0 : index
    %60 = vector.load %arg7[%c0_32, %c0_33] : memref<64x128xbf16, #tpu.memory_space<vmem>>, vector<64x128xbf16>
    %cst_34 = arith.constant dense<0.000000e+00> : vector<16x128xf32>
    %61 = tpu.matmul %59, %60, %cst_34 {dimension_numbers = #tpu.dot_dimension_numbers<[1], [0], [0], [1], [0, 0, 1, 1], [], []>} : vector<16x64xbf16>, vector<64x128xbf16>, vector<16x128xf32> -> vector<16x128xf32>
    %c0_35 = arith.constant 0 : index
    %c0_36 = arith.constant 0 : index
    %62 = vector.load %arg8[%c0_35, %c0_36] : memref<1x128xf32, #tpu.memory_space<vmem>>, vector<1x128xf32>
    %63 = vector.broadcast %62 : vector<1x128xf32> to vector<16x128xf32>
    %64 = arith.addf %61, %63 : vector<16x128xf32>
    %65 = arith.addf %64, %2 : vector<16x128xf32>
    %c0_37 = arith.constant 0 : index
    %c0_38 = arith.constant 0 : index
    %c0_39 = arith.constant 0 : index
    %66 = vector.load %arg9[%c0_37, %c0_38, %c0_39] : memref<1x16x128xf32, #tpu.memory_space<vmem>>, vector<1x16x128xf32>
    %67 = vector.shape_cast %66 : vector<1x16x128xf32> to vector<16x128xf32>
    %68 = vector.shape_cast %65 : vector<16x128xf32> to vector<1x16x128xf32>
    tpu.vector_store %arg9[%c0_37, %c0_38, %c0_39], %68 {strides = array<i32>} : memref<1x16x128xf32, #tpu.memory_space<vmem>>, vector<1x16x128xf32>,
    return
  }
  func.func @transform_0(%arg0: i32) -> (i32, i32, i32) {
    %c0_i32 = arith.constant 0 : i32
    %c0_i32_0 = arith.constant 0 : i32
    %c0_i32_1 = arith.constant 0 : i32
    return %arg0, %c0_i32, %c0_i32_0 : i32, i32, i32
  }
  func.func @transform_1(%arg0: i32) -> (i32, i32) {
    %c0_i32 = arith.constant 0 : i32
    %c0_i32_0 = arith.constant 0 : i32
    %c0_i32_1 = arith.constant 0 : i32
    return %c0_i32, %c0_i32_0 : i32, i32
  }
  func.func @transform_2(%arg0: i32) -> (i32, i32) {
    %c0_i32 = arith.constant 0 : i32
    %c0_i32_0 = arith.constant 0 : i32
    %c0_i32_1 = arith.constant 0 : i32
    return %c0_i32, %c0_i32_0 : i32, i32
  }
  func.func @transform_3(%arg0: i32) -> (i32, i32) {
    %c0_i32 = arith.constant 0 : i32
    %c0_i32_0 = arith.constant 0 : i32
    %c0_i32_1 = arith.constant 0 : i32
    return %c0_i32, %c0_i32_0 : i32, i32
  }
  func.func @transform_4(%arg0: i32) -> (i32, i32, i32) {
    %c0_i32 = arith.constant 0 : i32
    %c0_i32_0 = arith.constant 0 : i32
    %c0_i32_1 = arith.constant 0 : i32
    %c0_i32_2 = arith.constant 0 : i32
    return %c0_i32, %c0_i32_0, %c0_i32_1 : i32, i32, i32
  }
  func.func @transform_5(%arg0: i32) -> (i32, i32) {
    %c0_i32 = arith.constant 0 : i32
    %c0_i32_0 = arith.constant 0 : i32
    %c0_i32_1 = arith.constant 0 : i32
    return %c0_i32, %c0_i32_0 : i32, i32
  }
  func.func @transform_6(%arg0: i32) -> (i32, i32) {
    %c0_i32 = arith.constant 0 : i32
    %c0_i32_0 = arith.constant 0 : i32
    %c0_i32_1 = arith.constant 0 : i32
    return %c0_i32, %c0_i32_0 : i32, i32
  }
  func.func @transform_7(%arg0: i32) -> (i32, i32) {
    %c0_i32 = arith.constant 0 : i32
    %c0_i32_0 = arith.constant 0 : i32
    %c0_i32_1 = arith.constant 0 : i32
    return %c0_i32, %c0_i32_0 : i32, i32
  }
  func.func @transform_8(%arg0: i32) -> (i32, i32, i32) {
    %c0_i32 = arith.constant 0 : i32
    %c0_i32_0 = arith.constant 0 : i32
    %c0_i32_1 = arith.constant 0 : i32
    return %arg0, %c0_i32, %c0_i32_0 : i32, i32, i32
  }
}

</mosaic_0001>

<llo_original>
// kernel: hourglass_forward.7
$region0: #{hourglass_forward.7}
  #allocation0 [shape = 'u32[]', space=smem, size = 0x4, offset = 0x4, fixed_abs, tag = 'smem constant byte address 0x4 - core index']
  #allocation1 [shape = 'u32[144,128]{1,0:T(1,128)}', space=vmem, size = 0x12000, scoped, tag = 'internal scratch']
  %s0 = inlined_call_operand.vmem [shape: bf16[2,16,128], index: 0, kind: input, shape index: {}]
  %s1 = inlined_call_operand.vmem [shape: f32[2,128], index: 1, kind: input, shape index: {}]
  %s2 = inlined_call_operand.vmem [shape: bf16[128,64], index: 2, kind: input, shape index: {}]
  %s3 = inlined_call_operand.vmem [shape: f32[2,64], index: 3, kind: input, shape index: {}]
  %s4 = inlined_call_operand.vmem [shape: bf16[3,192,64], index: 4, kind: input, shape index: {}]
  %s5 = inlined_call_operand.vmem [shape: f32[2,64], index: 5, kind: input, shape index: {}]
  %s6 = inlined_call_operand.vmem [shape: bf16[64,128], index: 6, kind: input, shape index: {}]
  %s7 = inlined_call_operand.vmem [shape: f32[1,128], index: 7, kind: input, shape index: {}]
  %s8 = inlined_call_operand.hbm [shape: f32[2,16,128], index: 8, kind: output, shape index: {}]
  %s9 = sld [smem:[#allocation0]]
  $region65: #{hourglass_forward.7} parent=0
    _
  %s11 = ssub.s32 1, %s9
  %s12 = scalar_select 0, %s11, %s9
  $region1: #{hourglass_forward.7} parent=0
    #allocation2 [shape = 'u8[16384]{0}', space=vmem, size = 0x4000, scoped, tag = 'output window, operand 0']
    #allocation3 [shape = 's32[2]{0}', space=sflag, size = 0x8, scoped, tag = 'scoped memory for hourglass_forward.7']
    %13 = vsyncpa [#allocation3], 0
    %s14 = scalar_lea.sflag [#allocation3], 1
    %15 = vsyncpa %s14, 0
    loop: start=0, step=1, limit=4
    $region2: #{hourglass_forward.7} parent=1 // loop_pre_header
      _
    $region3: #{hourglass_forward.7} parent=1 // loop_header
      %s17 = sphi 0, %s21
      %p18 = scmp.ge.s32.totalorder %s17, 4
      %s27 = sphi 0, %s29
      %s30 = sphi 0, %s27
      %s31 = sphi 0, %s30
      %s47 = sphi 0, %s31
      %s51 = sphi 0, %s51
      %s53 = sphi 0, %s51
      %s54 = sphi 0, %s53
      %s68 = sphi 0, %s54
      %s72 = sphi 0, %s72
      %s74 = sphi 0, %s72
      %s75 = sphi 0, %s74
      %s89 = sphi 0, %s75
      %s93 = sphi 0, %s93
      %s95 = sphi 0, %s93
      %s96 = sphi 0, %s95
      %s110 = sphi 0, %s96
      %s114 = sphi 0, %s114
      %s116 = sphi 0, %s114
      %s117 = sphi 0, %s116
      %s131 = sphi 0, %s117
      %s135 = sphi 0, %s135
      %s137 = sphi 0, %s135
      %s138 = sphi 0, %s137
      %s152 = sphi 0, %s138
      %s156 = sphi 0, %s156
      %s158 = sphi 0, %s156
      %s159 = sphi 0, %s158
      %s173 = sphi 0, %s159
      %s177 = sphi 0, %s177
      %s179 = sphi 0, %s177
      %s180 = sphi 0, %s179
      %s194 = sphi 0, %s180
      %s200 = sphi 0, %s202
      %s203 = sphi 0, %s200
      %s204 = sphi 0, %s203
      %s220 = sphi 0, %s204
    $region4: #{hourglass_forward.7} parent=1 // loop_header_branch
      %20 = sbr.rel (%p18) target = $region8
    $region5: #{hourglass_forward.7} parent=1 // loop_body
      %s22 = ssub.s32 %s17, 1
      %s23 = ssub.s32 %s17, 2
      %s24 = sadd.s32 %s17, 1
      %s25 = ssub.s32 %s17, %s24
      %p26 = scmp.eq.s32.totalorder %s25, 0
      %s28 = sadd.s32 %s27, 1
      %s29 = scalar_select %p26, %s27, %s28
      %p32 = pneg %p26
      %p33 = scmp.eq.s32.totalorder %s17, 1
      %p34 = por %p32, %p33
      %p35 = scmp.ne.s32.totalorder %s27, %s30
      %p36 = scmp.eq.s32.totalorder %s17, 0
      %p37 = por %p35, %p36
      %p38 = scmp.ne.s32.totalorder %s27, %s30
      %p39 = scmp.eq.s32.totalorder %s22, 1
      %p40 = por %p38, %p39
      %p41 = scmp.ne.s32.totalorder %s30, %s31
      %p42 = scmp.eq.s32.totalorder %s22, 0
      %p43 = por %p41, %p42
      %p44 = scmp.ne.s32.totalorder %s30, %s31
      %p45 = scmp.eq.s32.totalorder %s23, 1
      %p46 = por %p44, %p45
      %p48 = scmp.ne.s32.totalorder %s31, %s47
      %p49 = scmp.eq.s32.totalorder %s23, 0
      %p50 = por %p48, %p49
      %s52 = sadd.s32 %s51, 1
      %p55 = scmp.eq.s32.totalorder %s17, 1
      %p56 = scmp.ne.s32.totalorder %s51, %s53
      %p57 = scmp.eq.s32.totalorder %s17, 0
      %p58 = por %p56, %p57
      %p59 = scmp.ne.s32.totalorder %s51, %s53
      %p60 = scmp.eq.s32.totalorder %s22, 1
      %p61 = por %p59, %p60
      %p62 = scmp.ne.s32.totalorder %s53, %s54
      %p63 = scmp.eq.s32.totalorder %s22, 0
      %p64 = por %p62, %p63
      %p65 = scmp.ne.s32.totalorder %s53, %s54
      %p66 = scmp.eq.s32.totalorder %s23, 1
      %p67 = por %p65, %p66
      %p69 = scmp.ne.s32.totalorder %s54, %s68
      %p70 = scmp.eq.s32.totalorder %s23, 0
      %p71 = por %p69, %p70
      %s73 = sadd.s32 %s72, 1
      %p76 = scmp.eq.s32.totalorder %s17, 1
      %p77 = scmp.ne.s32.totalorder %s72, %s74
      %p78 = scmp.eq.s32.totalorder %s17, 0
      %p79 = por %p77, %p78
      %p80 = scmp.ne.s32.totalorder %s72, %s74
      %p81 = scmp.eq.s32.totalorder %s22, 1
      %p82 = por %p80, %p81
      %p83 = scmp.ne.s32.totalorder %s74, %s75
      %p84 = scmp.eq.s32.totalorder %s22, 0
      %p85 = por %p83, %p84
      %p86 = scmp.ne.s32.totalorder %s74, %s75
      %p87 = scmp.eq.s32.totalorder %s23, 1
      %p88 = por %p86, %p87
      %p90 = scmp.ne.s32.totalorder %s75, %s89
      %p91 = scmp.eq.s32.totalorder %s23, 0
      %p92 = por %p90, %p91
      %s94 = sadd.s32 %s93, 1
      %p97 = scmp.eq.s32.totalorder %s17, 1
      %p98 = scmp.ne.s32.totalorder %s93, %s95
      %p99 = scmp.eq.s32.totalorder %s17, 0
      %p100 = por %p98, %p99
      %p101 = scmp.ne.s32.totalorder %s93, %s95
      %p102 = scmp.eq.s32.totalorder %s22, 1
      %p103 = por %p101, %p102
      %p104 = scmp.ne.s32.totalorder %s95, %s96
      %p105 = scmp.eq.s32.totalorder %s22, 0
      %p106 = por %p104, %p105
      %p107 = scmp.ne.s32.totalorder %s95, %s96
      %p108 = scmp.eq.s32.totalorder %s23, 1
      %p109 = por %p107, %p108
      %p111 = scmp.ne.s32.totalorder %s96, %s110
      %p112 = scmp.eq.s32.totalorder %s23, 0
      %p113 = por %p111, %p112
      %s115 = sadd.s32 %s114, 1
      %p118 = scmp.eq.s32.totalorder %s17, 1
      %p119 = scmp.ne.s32.totalorder %s114, %s116
      %p120 = scmp.eq.s32.totalorder %s17, 0
      %p121 = por %p119, %p120
      %p122 = scmp.ne.s32.totalorder %s114, %s116
      %p123 = scmp.eq.s32.totalorder %s22, 1
      %p124 = por %p122, %p123
      %p125 = scmp.ne.s32.totalorder %s116, %s117
      %p126 = scmp.eq.s32.totalorder %s22, 0
      %p127 = por %p125, %p126
      %p128 = scmp.ne.s32.totalorder %s116, %s117
      %p129 = scmp.eq.s32.totalorder %s23, 1
      %p130 = por %p128, %p129
      %p132 = scmp.ne.s32.totalorder %s117, %s131
      %p133 = scmp.eq.s32.totalorder %s23, 0
      %p134 = por %p132, %p133
      %s136 = sadd.s32 %s135, 1
      %p139 = scmp.eq.s32.totalorder %s17, 1
      %p140 = scmp.ne.s32.totalorder %s135, %s137
      %p141 = scmp.eq.s32.totalorder %s17, 0
      %p142 = por %p140, %p141
      %p143 = scmp.ne.s32.totalorder %s135, %s137
      %p144 = scmp.eq.s32.totalorder %s22, 1
      %p145 = por %p143, %p144
      %p146 = scmp.ne.s32.totalorder %s137, %s138
      %p147 = scmp.eq.s32.totalorder %s22, 0
      %p148 = por %p146, %p147
      %p149 = scmp.ne.s32.totalorder %s137, %s138
      %p150 = scmp.eq.s32.totalorder %s23, 1
      %p151 = por %p149, %p150
      %p153 = scmp.ne.s32.totalorder %s138, %s152
      %p154 = scmp.eq.s32.totalorder %s23, 0
      %p155 = por %p153, %p154
      %s157 = sadd.s32 %s156, 1
      %p160 = scmp.eq.s32.totalorder %s17, 1
      %p161 = scmp.ne.s32.totalorder %s156, %s158
      %p162 = scmp.eq.s32.totalorder %s17, 0
      %p163 = por %p161, %p162
      %p164 = scmp.ne.s32.totalorder %s156, %s158
      %p165 = scmp.eq.s32.totalorder %s22, 1
      %p166 = por %p164, %p165
      %p167 = scmp.ne.s32.totalorder %s158, %s159
      %p168 = scmp.eq.s32.totalorder %s22, 0
      %p169 = por %p167, %p168
      %p170 = scmp.ne.s32.totalorder %s158, %s159
      %p171 = scmp.eq.s32.totalorder %s23, 1
      %p172 = por %p170, %p171
      %p174 = scmp.ne.s32.totalorder %s159, %s173
      %p175 = scmp.eq.s32.totalorder %s23, 0
      %p176 = por %p174, %p175
      %s178 = sadd.s32 %s177, 1
      %p181 = scmp.eq.s32.totalorder %s17, 1
      %p182 = scmp.ne.s32.totalorder %s177, %s179
      %p183 = scmp.eq.s32.totalorder %s17, 0
      %p184 = por %p182, %p183
      %p185 = scmp.ne.s32.totalorder %s177, %s179
      %p186 = scmp.eq.s32.totalorder %s22, 1
      %p187 = por %p185, %p186
      %p188 = scmp.ne.s32.totalorder %s179, %s180
      %p189 = scmp.eq.s32.totalorder %s22, 0
      %p190 = por %p188, %p189
      %p191 = scmp.ne.s32.totalorder %s179, %s180
      %p192 = scmp.eq.s32.totalorder %s23, 1
      %p193 = por %p191, %p192
      %p195 = scmp.ne.s32.totalorder %s180, %s194
      %p196 = scmp.eq.s32.totalorder %s23, 0
      %p197 = por %p195, %p196
      %s198 = ssub.s32 %s17, %s24
      %p199 = scmp.eq.s32.totalorder %s198, 0
      %s201 = sadd.s32 %s200, 1
      %s202 = scalar_select %p199, %s200, %s201
      %p205 = pneg %p199
      %p206 = scmp.eq.s32.totalorder %s17, 1
      %p207 = por %p205, %p206
      %p208 = scmp.ne.s32.totalorder %s200, %s203
      %p209 = scmp.eq.s32.totalorder %s17, 0
      %p210 = por %p208, %p209
      %p211 = scmp.ne.s32.totalorder %s200, %s203
      %p212 = scmp.eq.s32.totalorder %s22, 1
      %p213 = por %p211, %p212
      %p214 = scmp.ne.s32.totalorder %s203, %s204
      %p215 = scmp.eq.s32.totalorder %s22, 0
      %p216 = por %p214, %p215
      %p217 = scmp.ne.s32.totalorder %s203, %s204
      %p218 = scmp.eq.s32.totalorder %s23, 1
      %p219 = por %p217, %p218
      %p221 = scmp.ne.s32.totalorder %s204, %s220
      %p222 = scmp.eq.s32.totalorder %s23, 0
      %p223 = por %p221, %p222
      %p224 = scmp.le.s32.totalorder 1, %s17
      %p225 = scmp.lt.s32.totalorder %s17, 3
      %p226 = pnand %p224, %p225
      %p227 = pneg %p226
      // Predicated region
      $region9: #{hourglass_forward.7} parent=5 // pred_check
        _
      $region10: #{hourglass_forward.7} parent=5 // pred_check_branch
        %229 = sbr.rel (%p226) target = $region12
      $region11: #{hourglass_forward.7} parent=5 // pred_region
        %s230 = ssub.s32 %s17, 1
        // Predicated region
        $region13: #{hourglass_forward.7} parent=11 // pred_check
          %p231 = pneg %p64
        $region14: #{hourglass_forward.7} parent=11 // pred_check_branch
          %233 = sbr.rel (%p231) target = $region16
        $region15: #{hourglass_forward.7} parent=11 // pred_region
          _
        $region16: #{hourglass_forward.7} parent=11 // pred_fallthru
          _
        // Predicated region
        $region17: #{hourglass_forward.7} parent=11 // pred_check
          %p234 = pneg %p85
        $region18: #{hourglass_forward.7} parent=11 // pred_check_branch
          %236 = sbr.rel (%p234) target = $region20
        $region19: #{hourglass_forward.7} parent=11 // pred_region
          _
        $region20: #{hourglass_forward.7} parent=11 // pred_fallthru
          _
        // Predicated region
        $region21: #{hourglass_forward.7} parent=11 // pred_check
          %p237 = pneg %p106
        $region22: #{hourglass_forward.7} parent=11 // pred_check_branch
          %239 = sbr.rel (%p237) target = $region24
        $region23: #{hourglass_forward.7} parent=11 // pred_region
          _
        $region24: #{hourglass_forward.7} parent=11 // pred_fallthru
          _
        // Predicated region
        $region25: #{hourglass_forward.7} parent=11 // pred_check
          %p240 = pneg %p127
        $region26: #{hourglass_forward.7} parent=11 // pred_check_branch
          %242 = sbr.rel (%p240) target = $region28
        $region27: #{hourglass_forward.7} parent=11 // pred_region
          _
        $region28: #{hourglass_forward.7} parent=11 // pred_fallthru
          _
        // Predicated region
        $region29: #{hourglass_forward.7} parent=11 // pred_check
          %p243 = pneg %p148
        $region30: #{hourglass_forward.7} parent=11 // pred_check_branch
          %245 = sbr.rel (%p243) target = $region32
        $region31: #{hourglass_forward.7} parent=11 // pred_region
          _
        $region32: #{hourglass_forward.7} parent=11 // pred_fallthru
          _
        // Predicated region
        $region33: #{hourglass_forward.7} parent=11 // pred_check
          %p246 = pneg %p169
        $region34: #{hourglass_forward.7} parent=11 // pred_check_branch
          %248 = sbr.rel (%p246) target = $region36
        $region35: #{hourglass_forward.7} parent=11 // pred_region
          _
        $region36: #{hourglass_forward.7} parent=11 // pred_fallthru
          _
        // Predicated region
        $region37: #{hourglass_forward.7} parent=11 // pred_check
          %p249 = pneg %p190
        $region38: #{hourglass_forward.7} parent=11 // pred_check_branch
          %251 = sbr.rel (%p249) target = $region40
        $region39: #{hourglass_forward.7} parent=11 // pred_region
          _
        $region40: #{hourglass_forward.7} parent=11 // pred_fallthru
          _
      $region12: #{hourglass_forward.7} parent=5 // pred_fallthru
        _
      %p252 = scmp.lt.s32.totalorder %s17, 2
      // Predicated region
      $region41: #{hourglass_forward.7} parent=5 // pred_check
        %p253 = pneg %p252
      $region42: #{hourglass_forward.7} parent=5 // pred_check_branch
        %255 = sbr.rel (%p253) target = $region44
      $region43: #{hourglass_forward.7} parent=5 // pred_region
        // Predicated region
        $region45: #{hourglass_forward.7} parent=43 // pred_check
          %p256 = pneg %p37
        $region46: #{hourglass_forward.7} parent=43 // pred_check_branch
          %258 = sbr.rel (%p256) target = $region48
        $region47: #{hourglass_forward.7} parent=43 // pred_region
          %p259 = scmp.lt.s32.totalorder %s17, 1
          %s260 = scalar_select %p259, %s17, 1
          %s261 = smul.addr %s260, 2
          %s262 = smul.addr %s261, 4
          %s263 = scalar_lea.vmem %s0, %s262
        $region48: #{hourglass_forward.7} parent=43 // pred_fallthru
          _
      $region44: #{hourglass_forward.7} parent=5 // pred_fallthru
        _
      %p264 = scmp.le.s32.totalorder 1, %s17
      %p265 = scmp.lt.s32.totalorder %s17, 3
      %p266 = pnand %p264, %p265
      %p267 = pneg %p266
      // Predicated region
      $region49: #{hourglass_forward.7} parent=5 // pred_check
        _
      $region50: #{hourglass_forward.7} parent=5 // pred_check_branch
        %269 = sbr.rel (%p266) target = $region52
      $region51: #{hourglass_forward.7} parent=5 // pred_region
        %s270 = ssub.s32 %s17, 1
        %p271 = scmp.lt.s32.totalorder %s22, 1
        %s272 = scalar_select %p271, %s22, 1
        %s273 = smul.addr %s272, 2
        %s274 = smul.addr %s273, 4
        %s275 = scalar_lea.vmem %s0, %s274
        %p276 = pneg %p43
        %p277 = pneg %p40
        %p278 = pneg %p64
        %p279 = pneg %p61
        %p280 = pneg %p85
        %p281 = pneg %p82
        %p282 = pneg %p106
        %p283 = pneg %p103
        %p284 = pneg %p127
        %p285 = pneg %p124
        %p286 = pneg %p148
        %p287 = pneg %p145
        %p288 = pneg %p169
        %p289 = pneg %p166
        %p290 = pneg %p190
        %p291 = pneg %p187
        %p292 = pneg %p216
        %p293 = pneg %p213
        %s294 = sand.u32 %s203, 1
        %s295 = scalar_lea.sflag [#allocation3], %s294
        %s296 = sand.u32 %s203, 1
        %s297 = smul.addr %s296, 16
        %s298 = scalar_lea.vmem [#allocation2], %s297
        %p299 = scmp.lt.s32.totalorder %s22, 1
        %s300 = scalar_select %p299, %s22, 1
        %s301 = smul.addr %s300, 2
        %s302 = smul.addr %s301, 4
        %s303 = scalar_lea.vmem %s0, %s302
        %v305 = vld [vmem:[%s303] sm:$0xf]
        %v306 = vld [vmem:[%s303 + $0x4] sm:$0xf]
        %v307 = vunpack.c.l.bf16 %v305
        %v308 = vunpack.c.l.bf16 %v306
        %v309 = vld [vmem:[%s1] sm:$0x1]
        %v310 = vlaneseq
        %v311 = vshrl.u32 %v310, 7
        %v312 = vsub.s32 0, %v311
        %v313 = vrot.slane %v309, %v312
        %v314 = vmul.f32 %v307, %v313
        %v315 = vmul.f32 %v308, %v313
        %v316 = vld [vmem:[%s1 + $0x1] sm:$0x1]
        %v317 = vlaneseq
        %v318 = vshrl.u32 %v317, 7
        %v319 = vsub.s32 0, %v318
        %v320 = vrot.slane %v316, %v319
        %v321 = vadd.f32 %v314, %v320
        %v322 = vadd.f32 %v315, %v320
        %v323 = vmax.f32 %v321, 0.0
        %v324 = vmax.f32 %v322, 0.0
        %v325 = vpack.c.bf16 %v324, %v323
        %v326 = vld [vmem:[%s2] sm:$0xf]
        %v327 = vld [vmem:[%s2 + $0x4] sm:$0xf]
        %v328 = vld [vmem:[%s2 + $0x8] sm:$0xf]
        %v329 = vld [vmem:[%s2 + $0xc] sm:$0xf]
        %v330 = vld [vmem:[%s2 + $0x10] sm:$0xf]
        %v331 = vld [vmem:[%s2 + $0x14] sm:$0xf]
        %v332 = vld [vmem:[%s2 + $0x18] sm:$0xf]
        %v333 = vld [vmem:[%s2 + $0x1c] sm:$0xf]
        %v334 = vld [vmem:[%s2 + $0x20] sm:$0xf]
        %v335 = vld [vmem:[%s2 + $0x24] sm:$0xf]
        %v336 = vld [vmem:[%s2 + $0x28] sm:$0xf]
        %v337 = vld [vmem:[%s2 + $0x2c] sm:$0xf]
        %v338 = vld [vmem:[%s2 + $0x30] sm:$0xf]
        %v339 = vld [vmem:[%s2 + $0x34] sm:$0xf]
        %v340 = vld [vmem:[%s2 + $0x38] sm:$0xf]
        %v341 = vld [vmem:[%s2 + $0x3c] sm:$0xf]
        %v358 = vunpack.c.l.b16 %v326
        %v359 = vunpack.c.l.b16 %v327
        %v360 = vunpack.c.l.b16 %v328
        %v361 = vunpack.c.l.b16 %v329
        %v362 = vunpack.c.l.b16 %v330
        %v363 = vunpack.c.l.b16 %v331
        %v364 = vunpack.c.l.b16 %v332
        %v365 = vunpack.c.l.b16 %v333
        %v366 = vunpack.c.l.b16 %v334
        %v367 = vunpack.c.l.b16 %v335
        %v368 = vunpack.c.l.b16 %v336
        %v369 = vunpack.c.l.b16 %v337
        %v370 = vunpack.c.l.b16 %v338
        %v371 = vunpack.c.l.b16 %v339
        %v372 = vunpack.c.l.b16 %v340
        %v373 = vunpack.c.l.b16 %v341
        %v374 = vpack.c.b16 %v359, %v358
        %v375 = vpack.c.b16 %v361, %v360
        %v376 = vpack.c.b16 %v363, %v362
        %v377 = vpack.c.b16 %v365, %v364
        %v378 = vpack.c.b16 %v367, %v366
        %v379 = vpack.c.b16 %v369, %v368
        %v380 = vpack.c.b16 %v371, %v370
        %v381 = vpack.c.b16 %v373, %v372
        %390 = vmatprep.subr.bf16.mxu0 0
        %391 = vmatpush1.bf16.msra.mxu0 %v374
        %392 = vmatprep.subr.bf16.mxu0 0
        %393 = vmatpush1.bf16.msra.mxu0 %v375
        %394 = vmatprep.subr.bf16.mxu0 0
        %395 = vmatpush1.bf16.msra.mxu0 %v376
        %396 = vmatprep.subr.bf16.mxu0 0
        %397 = vmatpush1.bf16.msra.mxu0 %v377
        %398 = vmatprep.subr.bf16.mxu0 0
        %399 = vmatpush1.bf16.msra.mxu0 %v378
        %400 = vmatprep.subr.bf16.mxu0 0
        %401 = vmatpush1.bf16.msra.mxu0 %v379
        %402 = vmatprep.subr.bf16.mxu0 0
        %403 = vmatpush1.bf16.msra.mxu0 %v380
        %404 = vmatprep.subr.bf16.mxu0 0
        %405 = vmatpush1.bf16.msra.mxu0 %v381
        %406 = vmatprep.subr.bf16.mxu0 0
        %407 = vmatpush1.bf16.msra.mxu0 0
        %408 = vmatprep.subr.bf16.mxu0 0
        %409 = vmatpush1.bf16.msra.mxu0 0
        %410 = vmatprep.subr.bf16.mxu0 0
        %411 = vmatpush1.bf16.msra.mxu0 0
        %412 = vmatprep.subr.bf16.mxu0 0
        %413 = vmatpush1.bf16.msra.mxu0 0
        %414 = vmatprep.subr.bf16.mxu0 0
        %415 = vmatpush1.bf16.msra.mxu0 0
        %416 = vmatprep.subr.bf16.mxu0 0
        %417 = vmatpush1.bf16.msra.mxu0 0
        %418 = vmatprep.subr.bf16.mxu0 0
        %419 = vmatpush1.bf16.msra.mxu0 0
        %420 = vmatprep.subr.bf16.mxu0 0
        %421 = vmatpush1.bf16.msra.mxu0 0
        %422 = vmatprep.mubr.bf16.mxu0 0
        %423 = vmatmul.mubr.bf16.gmra.mrb[0].mxu0 %v325
        %v424 = vpop.f32.mrb[0].mxu0
        %v425 = vadd.f32 0.0, %v424
        %v426 = vpop.f32.mrb[0].mxu0
        %v427 = vpop.f32.mrb[0].mxu0
        %v428 = vadd.f32 0.0, %v427
        %v429 = vpop.f32.mrb[0].mxu0
        %430 = vdwg.mxu0
        %v431 = vld [vmem:[%s3] sm:$0x1]
        %v432 = vlaneseq
        %v433 = vshrl.u32 %v432, 7
        %v434 = vsub.s32 0, %v433
        %v435 = vrot.slane %v431, %v434
        %v436 = vmul.f32 %v425, %v435
        %v437 = vmul.f32 %v428, %v435
        %v438 = vld [vmem:[%s3 + $0x1] sm:$0x1]
        %v439 = vlaneseq
        %v440 = vshrl.u32 %v439, 7
        %v441 = vsub.s32 0, %v440
        %v442 = vrot.slane %v438, %v441
        %v443 = vadd.f32 %v436, %v442
        %v444 = vadd.f32 %v437, %v442
        %v445 = vmax.f32 %v443, 0.0
        %v446 = vmax.f32 %v444, 0.0
        %v447 = vpack.c.bf16 %v446, %v445
        %v449 = vcombine.high %v447, %v447
        %v451 = vunpack.c.l.s4 1983009808
        %v452 = vunpack.c.0.s8 %v451
        %v453 = vlaneseq
        %v454 = vshrl.u32 %v453, 7
        %v455 = vsub.s32 %v452, %v454
        %v456 = vrot.slane %v447, %v455
        %v458 = vunpack.c.l.s4 1983009808
        %v459 = vunpack.c.0.s8 %v458
        %v460 = vlaneseq
        %v461 = vshrl.u32 %v460, 7
        %v462 = vsub.s32 %v459, %v461
        %v463 = vrot.slane %v449, %v462
        %v464 = vcombine.high %v456, %v456
        %v465 = vcombine.high %v463, %v463
        %v467 = vunpack.c.l.s4 1983009808
        %v468 = vunpack.c.0.s8 %v467
        %v469 = vlaneseq
        %v470 = vshrl.u32 %v469, 7
        %v471 = vsub.s32 %v468, %v470
        %v472 = vrot.slane %v456, %v471
        %v474 = vunpack.c.l.s4 1983009808
        %v475 = vunpack.c.0.s8 %v474
        %v476 = vlaneseq
        %v477 = vshrl.u32 %v476, 7
        %v478 = vsub.s32 %v475, %v477
        %v479 = vrot.slane %v464, %v478
        %v481 = vunpack.c.l.s4 1983009808
        %v482 = vunpack.c.0.s8 %v481
        %v483 = vlaneseq
        %v484 = vshrl.u32 %v483, 7
        %v485 = vsub.s32 %v482, %v484
        %v486 = vrot.slane %v463, %v485
        %v488 = vunpack.c.l.s4 1983009808
        %v489 = vunpack.c.0.s8 %v488
        %v490 = vlaneseq
        %v491 = vshrl.u32 %v490, 7
        %v492 = vsub.s32 %v489, %v491
        %v493 = vrot.slane %v465, %v492
        %v495 = vshrl.u32 %v472, 16
        %v497 = vrot.slane %v495, 7
        %v498 = vshll.u32 %v472, 16
        %v500 = vor.u32 %v497, %v498
        %v502 = vshrl.u32 %v479, 16
        %v504 = vrot.slane %v502, 7
        %v505 = vshll.u32 %v479, 16
        %v507 = vor.u32 %v504, %v505
        %v509 = vshrl.u32 %v486, 16
        %v511 = vrot.slane %v509, 7
        %v512 = vshll.u32 %v486, 16
        %v514 = vor.u32 %v511, %v512
        %v516 = vshrl.u32 %v493, 16
        %v518 = vrot.slane %v516, 7
        %v519 = vshll.u32 %v493, 16
        %v521 = vor.u32 %v518, %v519
        %vm526 = vcmask 1040384
        %vm527 = vsmask.f32 256
        %vm528 = vmand %vm526, %vm527
        %v529 = vsel %vm528, 0, %v500
        %v530 = vsel %vm528, 0, %v507
        %v531 = vsel %vm528, 0, %v514
        %v532 = vsel %vm528, 0, %v521
        %vm533 = vcmask 1042432
        %vm534 = vsmask.f32 2304
        %vm535 = vmand %vm533, %vm534
        %v536 = vsel %vm535, %v529, 0
        %v537 = vsel %vm535, %v530, 0
        %v538 = vsel %vm535, %v531, 0
        %v539 = vsel %vm535, %v532, 0
        %v541 = vshrl.u32 0, 16
        %v543 = vshll.u32 0, 16
        %v545 = vrot.slane %v543, 1
        %v546 = vor.u32 %v541, %v545
        %v548 = vshrl.u32 %v536, 16
        %v550 = vshll.u32 %v536, 16
        %v552 = vrot.slane %v550, 1
        %v553 = vor.u32 %v548, %v552
        %v555 = vshrl.u32 %v537, 16
        %v557 = vshll.u32 %v537, 16
        %v559 = vrot.slane %v557, 1
        %v560 = vor.u32 %v555, %v559
        %v562 = vshrl.u32 %v538, 16
        %v564 = vshll.u32 %v538, 16
        %v566 = vrot.slane %v564, 1
        %v567 = vor.u32 %v562, %v566
        %v569 = vshrl.u32 %v539, 16
        %v571 = vshll.u32 %v539, 16
        %v573 = vrot.slane %v571, 1
        %v574 = vor.u32 %v569, %v573
        %575 = vrot.lane.b32.xlu0 %v546, 64
        %v576 = vpop.permute.xlu0 %575
        %577 = vrot.lane.b32.xlu0 %v553, 64
        %v578 = vpop.permute.xlu0 %577
        %579 = vrot.lane.b32.xlu0 %v560, 64
        %v580 = vpop.permute.xlu0 %579
        %581 = vrot.lane.b32.xlu0 %v567, 64
        %v582 = vpop.permute.xlu0 %581
        %583 = vrot.lane.b32.xlu0 %v574, 64
        %v584 = vpop.permute.xlu0 %583
        %v590 = vrot.slane 0, 1
        %v591 = vrot.slane %v536, 1
        %v592 = vrot.slane %v537, 1
        %v593 = vrot.slane %v538, 1
        %v594 = vrot.slane %v539, 1
        %vm595 = vcmask 523264
        %v597 = vsel %vm595, 0, %v576
        %v599 = vsel %vm595, %v536, %v578
        %v601 = vsel %vm595, %v537, %v580
        %v603 = vsel %vm595, %v538, %v582
        %v605 = vsel %vm595, %v539, %v584
        %v610 = vcombine.low %v597, %v590
        %v612 = vunpack.c.l.s4 1983009808
        %v613 = vunpack.c.0.s8 %v612
        %v614 = vlaneseq
        %v615 = vshrl.u32 %v614, 7
        %v616 = vsub.s32 %v613, %v615
        %v617 = vrot.slane %v610, %v616
        %v618 = vcombine.low %v599, %v591
        %v620 = vunpack.c.l.s4 1983009808
        %v621 = vunpack.c.0.s8 %v620
        %v622 = vlaneseq
        %v623 = vshrl.u32 %v622, 7
        %v624 = vsub.s32 %v621, %v623
        %v625 = vrot.slane %v618, %v624
        %v626 = vcombine.low %v601, %v592
        %v628 = vunpack.c.l.s4 1983009808
        %v629 = vunpack.c.0.s8 %v628
        %v630 = vlaneseq
        %v631 = vshrl.u32 %v630, 7
        %v632 = vsub.s32 %v629, %v631
        %v633 = vrot.slane %v626, %v632
        %v634 = vcombine.low %v603, %v593
        %v636 = vunpack.c.l.s4 1983009808
        %v637 = vunpack.c.0.s8 %v636
        %v638 = vlaneseq
        %v639 = vshrl.u32 %v638, 7
        %v640 = vsub.s32 %v637, %v639
        %v641 = vrot.slane %v634, %v640
        %v642 = vld [vmem:[%s4] sm:$0xf]
        %v643 = vld [vmem:[%s4 + $0x4] sm:$0xf]
        %v644 = vld [vmem:[%s4 + $0x8] sm:$0xf]
        %v645 = vld [vmem:[%s4 + $0xc] sm:$0xf]
        %v646 = vld [vmem:[%s4 + $0x10] sm:$0xf]
        %v647 = vld [vmem:[%s4 + $0x14] sm:$0xf]
        %v648 = vld [vmem:[%s4 + $0x18] sm:$0xf]
        %v649 = vld [vmem:[%s4 + $0x1c] sm:$0xf]
        %v650 = vld [vmem:[%s4 + $0x20] sm:$0xf]
        %v651 = vld [vmem:[%s4 + $0x24] sm:$0xf]
        %v652 = vld [vmem:[%s4 + $0x28] sm:$0xf]
        %v653 = vld [vmem:[%s4 + $0x2c] sm:$0xf]
        %v654 = vld [vmem:[%s4 + $0x30] sm:$0xf]
        %v655 = vld [vmem:[%s4 + $0x34] sm:$0xf]
        %v656 = vld [vmem:[%s4 + $0x38] sm:$0xf]
        %v657 = vld [vmem:[%s4 + $0x3c] sm:$0xf]
        %v658 = vld [vmem:[%s4 + $0x40] sm:$0xf]
        %v659 = vld [vmem:[%s4 + $0x44] sm:$0xf]
        %v660 = vld [vmem:[%s4 + $0x48] sm:$0xf]
        %v661 = vld [vmem:[%s4 + $0x4c] sm:$0xf]
        %v662 = vld [vmem:[%s4 + $0x50] sm:$0xf]
        %v663 = vld [vmem:[%s4 + $0x54] sm:$0xf]
        %v664 = vld [vmem:[%s4 + $0x58] sm:$0xf]
        %v665 = vld [vmem:[%s4 + $0x5c] sm:$0xf]
        %v667 = vcombine.low %v605, %v594
        %v669 = vunpack.c.l.s4 1983009808
        %v670 = vunpack.c.0.s8 %v669
        %v671 = vlaneseq
        %v672 = vshrl.u32 %v671, 7
        %v673 = vsub.s32 %v670, %v672
        %v674 = vrot.slane %v667, %v673
        %s675 = scalar_lea.vmem %s4, 96
        %v676 = vld [vmem:[%s675] sm:$0xf]
        %v677 = vld [vmem:[%s675 + $0x4] sm:$0xf]
        %v678 = vld [vmem:[%s675 + $0x8] sm:$0xf]
        %v679 = vld [vmem:[%s675 + $0xc] sm:$0xf]
        %v680 = vld [vmem:[%s675 + $0x10] sm:$0xf]
        %v681 = vld [vmem:[%s675 + $0x14] sm:$0xf]
        %v682 = vld [vmem:[%s675 + $0x18] sm:$0xf]
        %v683 = vld [vmem:[%s675 + $0x1c] sm:$0xf]
        %v684 = vld [vmem:[%s675 + $0x20] sm:$0xf]
        %v685 = vld [vmem:[%s675 + $0x24] sm:$0xf]
        %v686 = vld [vmem:[%s675 + $0x28] sm:$0xf]
        %v687 = vld [vmem:[%s675 + $0x2c] sm:$0xf]
        %v688 = vld [vmem:[%s675 + $0x30] sm:$0xf]
        %v689 = vld [vmem:[%s675 + $0x34] sm:$0xf]
        %v690 = vld [vmem:[%s675 + $0x38] sm:$0xf]
        %v691 = vld [vmem:[%s675 + $0x3c] sm:$0xf]
        %v692 = vld [vmem:[%s675 + $0x40] sm:$0xf]
        %v693 = vld [vmem:[%s675 + $0x44] sm:$0xf]
        %v694 = vld [vmem:[%s675 + $0x48] sm:$0xf]
        %v695 = vld [vmem:[%s675 + $0x4c] sm:$0xf]
        %v696 = vld [vmem:[%s675 + $0x50] sm:$0xf]
        %v697 = vld [vmem:[%s675 + $0x54] sm:$0xf]
        %v698 = vld [vmem:[%s675 + $0x58] sm:$0xf]
        %v699 = vld [vmem:[%s675 + $0x5c] sm:$0xf]
        %v700 = vcombine.low %v625, %v633
        %v701 = vcombine.low %v641, %v674
        %v703 = vunpack.c.l.s4 1983009808
        %v704 = vunpack.c.0.s8 %v703
        %v705 = vlaneseq
        %v706 = vshrl.u32 %v705, 7
        %v707 = vsub.s32 %v704, %v706
        %v708 = vrot.slane %v700, %v707
        %v710 = vunpack.c.l.s4 1983009808
        %v711 = vunpack.c.0.s8 %v710
        %v712 = vlaneseq
        %v713 = vshrl.u32 %v712, 7
        %v714 = vsub.s32 %v711, %v713
        %v715 = vrot.slane %v701, %v714
        %v716 = vcombine.low %v708, %v715
        %v717 = vcombine.high %v708, %v715
        %v743 = vunpack.c.l.b16 %v676
        %v744 = vunpack.c.l.b16 %v677
        %v745 = vunpack.c.l.b16 %v678
        %v746 = vunpack.c.l.b16 %v679
        %v747 = vunpack.c.l.b16 %v680
        %v748 = vunpack.c.l.b16 %v681
        %v749 = vunpack.c.l.b16 %v682
        %v750 = vunpack.c.l.b16 %v683
        %v751 = vunpack.c.l.b16 %v684
        %v752 = vunpack.c.l.b16 %v685
        %v753 = vunpack.c.l.b16 %v686
        %v754 = vunpack.c.l.b16 %v687
        %v755 = vunpack.c.l.b16 %v688
        %v756 = vunpack.c.l.b16 %v689
        %v757 = vunpack.c.l.b16 %v690
        %v758 = vunpack.c.l.b16 %v691
        %v759 = vunpack.c.l.b16 %v692
        %v760 = vunpack.c.l.b16 %v693
        %v761 = vunpack.c.l.b16 %v694
        %v762 = vunpack.c.l.b16 %v695
        %v763 = vunpack.c.l.b16 %v696
        %v764 = vunpack.c.l.b16 %v697
        %v765 = vunpack.c.l.b16 %v698
        %v766 = vunpack.c.l.b16 %v699
        %v767 = vpack.c.b16 %v744, %v743
        %v768 = vpack.c.b16 %v746, %v745
        %v769 = vpack.c.b16 %v748, %v747
        %v770 = vpack.c.b16 %v750, %v749
        %v771 = vpack.c.b16 %v752, %v751
        %v772 = vpack.c.b16 %v754, %v753
        %v773 = vpack.c.b16 %v756, %v755
        %v774 = vpack.c.b16 %v758, %v757
        %v775 = vpack.c.b16 %v760, %v759
        %v776 = vpack.c.b16 %v762, %v761
        %v777 = vpack.c.b16 %v764, %v763
        %v778 = vpack.c.b16 %v766, %v765
        %v792 = vsel %vm595, %v717, 0
        %794 = vmatprep.subr.bf16.mxu0 0
        %795 = vmatpush1.bf16.msra.mxu0 %v767
        %796 = vmatprep.subr.bf16.mxu0 0
        %797 = vmatpush1.bf16.msra.mxu0 %v768
        %798 = vmatprep.subr.bf16.mxu0 0
        %799 = vmatpush1.bf16.msra.mxu0 %v769
        %800 = vmatprep.subr.bf16.mxu0 0
        %801 = vmatpush1.bf16.msra.mxu0 %v770
        %802 = vmatprep.subr.bf16.mxu0 0
        %803 = vmatpush1.bf16.msra.mxu0 %v771
        %804 = vmatprep.subr.bf16.mxu0 0
        %805 = vmatpush1.bf16.msra.mxu0 %v772
        %806 = vmatprep.subr.bf16.mxu0 0
        %807 = vmatpush1.bf16.msra.mxu0 %v773
        %808 = vmatprep.subr.bf16.mxu0 0
        %809 = vmatpush1.bf16.msra.mxu0 %v774
        %810 = vmatprep.subr.bf16.mxu0 0
        %811 = vmatpush1.bf16.msra.mxu0 %v775
        %812 = vmatprep.subr.bf16.mxu0 0
        %813 = vmatpush1.bf16.msra.mxu0 %v776
        %814 = vmatprep.subr.bf16.mxu0 0
        %815 = vmatpush1.bf16.msra.mxu0 %v777
        %816 = vmatprep.subr.bf16.mxu0 0
        %817 = vmatpush1.bf16.msra.mxu0 %v778
        %818 = vmatprep.subr.bf16.mxu0 0
        %819 = vmatpush1.bf16.msra.mxu0 0
        %820 = vmatprep.subr.bf16.mxu0 0
        %821 = vmatpush1.bf16.msra.mxu0 0
        %822 = vmatprep.subr.bf16.mxu0 0
        %823 = vmatpush1.bf16.msra.mxu0 0
        %824 = vmatprep.subr.bf16.mxu0 0
        %825 = vmatpush1.bf16.msra.mxu0 0
        %826 = vmatprep.mubr.bf16.mxu0 %v792
        %827 = vmatmul.mubr.bf16.gmra.mrb[0].mxu0 %v716
        %v828 = vpop.f32.mrb[0].mxu0
        %v829 = vadd.f32 0.0, %v828
        %v830 = vpop.f32.mrb[0].mxu0
        %v831 = vpop.f32.mrb[0].mxu0
        %v832 = vadd.f32 0.0, %v831
        %v833 = vpop.f32.mrb[0].mxu0
        %834 = vdwg.mxu0
        %v835 = vcombine.low %v617, %v625
        %v836 = vcombine.low %v633, %v641
        %v838 = vunpack.c.l.s4 1983009808
        %v839 = vunpack.c.0.s8 %v838
        %v840 = vlaneseq
        %v841 = vshrl.u32 %v840, 7
        %v842 = vsub.s32 %v839, %v841
        %v843 = vrot.slane %v835, %v842
        %v845 = vunpack.c.l.s4 1983009808
        %v846 = vunpack.c.0.s8 %v845
        %v847 = vlaneseq
        %v848 = vshrl.u32 %v847, 7
        %v849 = vsub.s32 %v846, %v848
        %v850 = vrot.slane %v836, %v849
        %v851 = vcombine.low %v843, %v850
        %v852 = vcombine.high %v843, %v850
        %v878 = vunpack.c.l.b16 %v642
        %v879 = vunpack.c.l.b16 %v643
        %v880 = vunpack.c.l.b16 %v644
        %v881 = vunpack.c.l.b16 %v645
        %v882 = vunpack.c.l.b16 %v646
        %v883 = vunpack.c.l.b16 %v647
        %v884 = vunpack.c.l.b16 %v648
        %v885 = vunpack.c.l.b16 %v649
        %v886 = vunpack.c.l.b16 %v650
        %v887 = vunpack.c.l.b16 %v651
        %v888 = vunpack.c.l.b16 %v652
        %v889 = vunpack.c.l.b16 %v653
        %v890 = vunpack.c.l.b16 %v654
        %v891 = vunpack.c.l.b16 %v655
        %v892 = vunpack.c.l.b16 %v656
        %v893 = vunpack.c.l.b16 %v657
        %v894 = vunpack.c.l.b16 %v658
        %v895 = vunpack.c.l.b16 %v659
        %v896 = vunpack.c.l.b16 %v660
        %v897 = vunpack.c.l.b16 %v661
        %v898 = vunpack.c.l.b16 %v662
        %v899 = vunpack.c.l.b16 %v663
        %v900 = vunpack.c.l.b16 %v664
        %v901 = vunpack.c.l.b16 %v665
        %v902 = vpack.c.b16 %v879, %v878
        %v903 = vpack.c.b16 %v881, %v880
        %v904 = vpack.c.b16 %v883, %v882
        %v905 = vpack.c.b16 %v885, %v884
        %v906 = vpack.c.b16 %v887, %v886
        %v907 = vpack.c.b16 %v889, %v888
        %v908 = vpack.c.b16 %v891, %v890
        %v909 = vpack.c.b16 %v893, %v892
        %v910 = vpack.c.b16 %v895, %v894
        %v911 = vpack.c.b16 %v897, %v896
        %v912 = vpack.c.b16 %v899, %v898
        %v913 = vpack.c.b16 %v901, %v900
        %v927 = vsel %vm595, %v852, 0
        %929 = vmatprep.subr.bf16.mxu0 0
        %930 = vmatpush1.bf16.msra.mxu0 %v902
        %931 = vmatprep.subr.bf16.mxu0 0
        %932 = vmatpush1.bf16.msra.mxu0 %v903
        %933 = vmatprep.subr.bf16.mxu0 0
        %934 = vmatpush1.bf16.msra.mxu0 %v904
        %935 = vmatprep.subr.bf16.mxu0 0
        %936 = vmatpush1.bf16.msra.mxu0 %v905
        %937 = vmatprep.subr.bf16.mxu0 0
        %938 = vmatpush1.bf16.msra.mxu0 %v906
        %939 = vmatprep.subr.bf16.mxu0 0
        %940 = vmatpush1.bf16.msra.mxu0 %v907
        %941 = vmatprep.subr.bf16.mxu0 0
        %942 = vmatpush1.bf16.msra.mxu0 %v908
        %943 = vmatprep.subr.bf16.mxu0 0
        %944 = vmatpush1.bf16.msra.mxu0 %v909
        %945 = vmatprep.subr.bf16.mxu0 0
        %946 = vmatpush1.bf16.msra.mxu0 %v910
        %947 = vmatprep.subr.bf16.mxu0 0
        %948 = vmatpush1.bf16.msra.mxu0 %v911
        %949 = vmatprep.subr.bf16.mxu0 0
        %950 = vmatpush1.bf16.msra.mxu0 %v912
        %951 = vmatprep.subr.bf16.mxu0 0
        %952 = vmatpush1.bf16.msra.mxu0 %v913
        %953 = vmatprep.subr.bf16.mxu0 0
        %954 = vmatpush1.bf16.msra.mxu0 0
        %955 = vmatprep.subr.bf16.mxu0 0
        %956 = vmatpush1.bf16.msra.mxu0 0
        %957 = vmatprep.subr.bf16.mxu0 0
        %958 = vmatpush1.bf16.msra.mxu0 0
        %959 = vmatprep.subr.bf16.mxu0 0
        %960 = vmatpush1.bf16.msra.mxu0 0
        %961 = vmatprep.mubr.bf16.mxu0 %v927
        %962 = vmatmul.mubr.bf16.gmra.mrb[0].mxu0 %v851
        %v963 = vpop.f32.mrb[0].mxu0
        %v964 = vadd.f32 %v829, %v963
        %v965 = vpop.f32.mrb[0].mxu0
        %v966 = vpop.f32.mrb[0].mxu0
        %v967 = vadd.f32 %v832, %v966
        %v968 = vpop.f32.mrb[0].mxu0
        %969 = vdwg.mxu0
        %s970 = scalar_lea.vmem %s4, 192
        %v971 = vld [vmem:[%s970] sm:$0xf]
        %v972 = vld [vmem:[%s970 + $0x4] sm:$0xf]
        %v973 = vld [vmem:[%s970 + $0x8] sm:$0xf]
        %v974 = vld [vmem:[%s970 + $0xc] sm:$0xf]
        %v975 = vld [vmem:[%s970 + $0x10] sm:$0xf]
        %v976 = vld [vmem:[%s970 + $0x14] sm:$0xf]
        %v977 = vld [vmem:[%s970 + $0x18] sm:$0xf]
        %v978 = vld [vmem:[%s970 + $0x1c] sm:$0xf]
        %v979 = vld [vmem:[%s970 + $0x20] sm:$0xf]
        %v980 = vld [vmem:[%s970 + $0x24] sm:$0xf]
        %v981 = vld [vmem:[%s970 + $0x28] sm:$0xf]
        %v982 = vld [vmem:[%s970 + $0x2c] sm:$0xf]
        %v983 = vld [vmem:[%s970 + $0x30] sm:$0xf]
        %v984 = vld [vmem:[%s970 + $0x34] sm:$0xf]
        %v985 = vld [vmem:[%s970 + $0x38] sm:$0xf]
        %v986 = vld [vmem:[%s970 + $0x3c] sm:$0xf]
        %v987 = vld [vmem:[%s970 + $0x40] sm:$0xf]
        %v988 = vld [vmem:[%s970 + $0x44] sm:$0xf]
        %v989 = vld [vmem:[%s970 + $0x48] sm:$0xf]
        %v990 = vld [vmem:[%s970 + $0x4c] sm:$0xf]
        %v991 = vld [vmem:[%s970 + $0x50] sm:$0xf]
        %v992 = vld [vmem:[%s970 + $0x54] sm:$0xf]
        %v993 = vld [vmem:[%s970 + $0x58] sm:$0xf]
        %v994 = vld [vmem:[%s970 + $0x5c] sm:$0xf]
        %v995 = vcombine.low %v674, %v617
        %v997 = vunpack.c.l.s4 1983009808
        %v998 = vunpack.c.0.s8 %v997
        %v999 = vlaneseq
        %v1000 = vshrl.u32 %v999, 7
        %v1001 = vsub.s32 %v998, %v1000
        %v1002 = vrot.slane %v995, %v1001
        %v1003 = vcombine.low %v850, %v1002
        %v1004 = vcombine.high %v850, %v1002
        %v1030 = vunpack.c.l.b16 %v971
        %v1031 = vunpack.c.l.b16 %v972
        %v1032 = vunpack.c.l.b16 %v973
        %v1033 = vunpack.c.l.b16 %v974
        %v1034 = vunpack.c.l.b16 %v975
        %v1035 = vunpack.c.l.b16 %v976
        %v1036 = vunpack.c.l.b16 %v977
        %v1037 = vunpack.c.l.b16 %v978
        %v1038 = vunpack.c.l.b16 %v979
        %v1039 = vunpack.c.l.b16 %v980
        %v1040 = vunpack.c.l.b16 %v981
        %v1041 = vunpack.c.l.b16 %v982
        %v1042 = vunpack.c.l.b16 %v983
        %v1043 = vunpack.c.l.b16 %v984
        %v1044 = vunpack.c.l.b16 %v985
        %v1045 = vunpack.c.l.b16 %v986
        %v1046 = vunpack.c.l.b16 %v987
        %v1047 = vunpack.c.l.b16 %v988
        %v1048 = vunpack.c.l.b16 %v989
        %v1049 = vunpack.c.l.b16 %v990
        %v1050 = vunpack.c.l.b16 %v991
        %v1051 = vunpack.c.l.b16 %v992
        %v1052 = vunpack.c.l.b16 %v993
        %v1053 = vunpack.c.l.b16 %v994
        %v1054 = vpack.c.b16 %v1031, %v1030
        %v1055 = vpack.c.b16 %v1033, %v1032
        %v1056 = vpack.c.b16 %v1035, %v1034
        %v1057 = vpack.c.b16 %v1037, %v1036
        %v1058 = vpack.c.b16 %v1039, %v1038
        %v1059 = vpack.c.b16 %v1041, %v1040
        %v1060 = vpack.c.b16 %v1043, %v1042
        %v1061 = vpack.c.b16 %v1045, %v1044
        %v1062 = vpack.c.b16 %v1047, %v1046
        %v1063 = vpack.c.b16 %v1049, %v1048
        %v1064 = vpack.c.b16 %v1051, %v1050
        %v1065 = vpack.c.b16 %v1053, %v1052
        %v1079 = vsel %vm595, %v1004, 0
        %1081 = vmatprep.subr.bf16.mxu0 0
        %1082 = vmatpush1.bf16.msra.mxu0 %v1054
        %1083 = vmatprep.subr.bf16.mxu0 0
        %1084 = vmatpush1.bf16.msra.mxu0 %v1055
        %1085 = vmatprep.subr.bf16.mxu0 0
        %1086 = vmatpush1.bf16.msra.mxu0 %v1056
        %1087 = vmatprep.subr.bf16.mxu0 0
        %1088 = vmatpush1.bf16.msra.mxu0 %v1057
        %1089 = vmatprep.subr.bf16.mxu0 0
        %1090 = vmatpush1.bf16.msra.mxu0 %v1058
        %1091 = vmatprep.subr.bf16.mxu0 0
        %1092 = vmatpush1.bf16.msra.mxu0 %v1059
        %1093 = vmatprep.subr.bf16.mxu0 0
        %1094 = vmatpush1.bf16.msra.mxu0 %v1060
        %1095 = vmatprep.subr.bf16.mxu0 0
        %1096 = vmatpush1.bf16.msra.mxu0 %v1061
        %1097 = vmatprep.subr.bf16.mxu0 0
        %1098 = vmatpush1.bf16.msra.mxu0 %v1062
        %1099 = vmatprep.subr.bf16.mxu0 0
        %1100 = vmatpush1.bf16.msra.mxu0 %v1063
        %1101 = vmatprep.subr.bf16.mxu0 0
        %1102 = vmatpush1.bf16.msra.mxu0 %v1064
        %1103 = vmatprep.subr.bf16.mxu0 0
        %1104 = vmatpush1.bf16.msra.mxu0 %v1065
        %1105 = vmatprep.subr.bf16.mxu0 0
        %1106 = vmatpush1.bf16.msra.mxu0 0
        %1107 = vmatprep.subr.bf16.mxu0 0
        %1108 = vmatpush1.bf16.msra.mxu0 0
        %1109 = vmatprep.subr.bf16.mxu0 0
        %1110 = vmatpush1.bf16.msra.mxu0 0
        %1111 = vmatprep.subr.bf16.mxu0 0
        %1112 = vmatpush1.bf16.msra.mxu0 0
        %1113 = vmatprep.mubr.bf16.mxu0 %v1079
        %1114 = vmatmul.mubr.bf16.gmra.mrb[0].mxu0 %v1003
        %v1115 = vpop.f32.mrb[0].mxu0
        %v1116 = vadd.f32 0.0, %v1115
        %v1117 = vpop.f32.mrb[0].mxu0
        %v1118 = vpop.f32.mrb[0].mxu0
        %v1119 = vadd.f32 0.0, %v1118
        %v1120 = vpop.f32.mrb[0].mxu0
        %1121 = vdwg.mxu0
        %v1122 = vadd.f32 %v964, %v1116
        %v1123 = vadd.f32 %v967, %v1119
        %v1124 = vld [vmem:[%s5] sm:$0x1]
        %v1125 = vlaneseq
        %v1126 = vshrl.u32 %v1125, 7
        %v1127 = vsub.s32 0, %v1126
        %v1128 = vrot.slane %v1124, %v1127
        %v1129 = vmul.f32 %v1122, %v1128
        %v1130 = vmul.f32 %v1123, %v1128
        %v1131 = vld [vmem:[%s5 + $0x1] sm:$0x1]
        %v1132 = vlaneseq
        %v1133 = vshrl.u32 %v1132, 7
        %v1134 = vsub.s32 0, %v1133
        %v1135 = vrot.slane %v1131, %v1134
        %v1136 = vadd.f32 %v1129, %v1135
        %v1137 = vadd.f32 %v1130, %v1135
        %v1138 = vmax.f32 %v1136, 0.0
        %v1139 = vmax.f32 %v1137, 0.0
        %v1140 = vpack.c.bf16 %v1139, %v1138
        %v1141 = vld [vmem:[%s6] sm:$0xf]
        %v1142 = vld [vmem:[%s6 + $0x4] sm:$0xf]
        %v1143 = vld [vmem:[%s6 + $0x8] sm:$0xf]
        %v1144 = vld [vmem:[%s6 + $0xc] sm:$0xf]
        %v1145 = vld [vmem:[%s6 + $0x10] sm:$0xf]
        %v1146 = vld [vmem:[%s6 + $0x14] sm:$0xf]
        %v1147 = vld [vmem:[%s6 + $0x18] sm:$0xf]
        %v1148 = vld [vmem:[%s6 + $0x1c] sm:$0xf]
        %v1149 = vld [vmem:[%s7] sm:$0x1]
        %v1151 = vlaneseq
        %v1152 = vshrl.u32 %v1151, 7
        %v1153 = vsub.s32 0, %v1152
        %v1154 = vrot.slane %v1149, %v1153
        %v1164 = vunpack.c.l.b16 %v1141
        %v1165 = vunpack.c.l.b16 %v1142
        %v1166 = vunpack.c.l.b16 %v1143
        %v1167 = vunpack.c.l.b16 %v1144
        %v1168 = vunpack.c.l.b16 %v1145
        %v1169 = vunpack.c.l.b16 %v1146
        %v1170 = vunpack.c.l.b16 %v1147
        %v1171 = vunpack.c.l.b16 %v1148
        %v1172 = vpack.c.b16 %v1165, %v1164
        %v1173 = vpack.c.b16 %v1167, %v1166
        %v1174 = vpack.c.b16 %v1169, %v1168
        %v1175 = vpack.c.b16 %v1171, %v1170
        %v1181 = vsel %vm595, %v1140, 0
        %1183 = vmatprep.subr.bf16.mxu0 0
        %1184 = vmatpush1.bf16.msra.mxu0 %v1172
        %1185 = vmatprep.subr.bf16.mxu0 0
        %1186 = vmatpush1.bf16.msra.mxu0 %v1173
        %1187 = vmatprep.subr.bf16.mxu0 0
        %1188 = vmatpush1.bf16.msra.mxu0 %v1174
        %1189 = vmatprep.subr.bf16.mxu0 0
        %1190 = vmatpush1.bf16.msra.mxu0 %v1175
        %1191 = vmatprep.subr.bf16.mxu0 0
        %1192 = vmatpush1.bf16.msra.mxu0 0
        %1193 = vmatprep.subr.bf16.mxu0 0
        %1194 = vmatpush1.bf16.msra.mxu0 0
        %1195 = vmatprep.subr.bf16.mxu0 0
        %1196 = vmatpush1.bf16.msra.mxu0 0
        %1197 = vmatprep.subr.bf16.mxu0 0
        %1198 = vmatpush1.bf16.msra.mxu0 0
        %1199 = vmatprep.subr.bf16.mxu0 0
        %1200 = vmatpush1.bf16.msra.mxu0 0
        %1201 = vmatprep.subr.bf16.mxu0 0
        %1202 = vmatpush1.bf16.msra.mxu0 0
        %1203 = vmatprep.subr.bf16.mxu0 0
        %1204 = vmatpush1.bf16.msra.mxu0 0
        %1205 = vmatprep.subr.bf16.mxu0 0
        %1206 = vmatpush1.bf16.msra.mxu0 0
        %1207 = vmatprep.subr.bf16.mxu0 0
        %1208 = vmatpush1.bf16.msra.mxu0 0
        %1209 = vmatprep.subr.bf16.mxu0 0
        %1210 = vmatpush1.bf16.msra.mxu0 0
        %1211 = vmatprep.subr.bf16.mxu0 0
        %1212 = vmatpush1.bf16.msra.mxu0 0
        %1213 = vmatprep.subr.bf16.mxu0 0
        %1214 = vmatpush1.bf16.msra.mxu0 0
        %1215 = vmatprep.mubr.bf16.mxu0 0
        %1216 = vmatmul.mubr.bf16.gmra.mrb[0].mxu0 %v1181
        %v1217 = vpop.f32.mrb[0].mxu0
        %v1218 = vadd.f32 %v1154, %v1217
        %v1219 = vpop.f32.mrb[0].mxu0
        %v1220 = vpop.f32.mrb[0].mxu0
        %v1221 = vadd.f32 %v1154, %v1220
        %v1222 = vpop.f32.mrb[0].mxu0
        %1223 = vdwg.mxu0
        %v1224 = vadd.f32 %v1218, %v307
        %v1225 = vadd.f32 %v1221, %v308
        %1226 = vst [vmem:[%s298] sm:$0xff] %v1224
        %1227 = vst [vmem:[%s298 + $0x8] sm:$0xff] %v1225
        %s1228 = sand.u32 %s203, 1
        %s1229 = scalar_lea.sflag [#allocation3], %s1228
        %s1230 = sand.u32 %s203, 1
        %s1231 = smul.addr %s1230, 16
        %s1232 = scalar_lea.vmem [#allocation2], %s1231
        // Predicated region
        $region53: #{hourglass_forward.7} parent=51 // pred_check
          %p1233 = pneg %p213
        $region54: #{hourglass_forward.7} parent=51 // pred_check_branch
          %1235 = sbr.rel (%p1233) target = $region56
        $region55: #{hourglass_forward.7} parent=51 // pred_region
          %s1237 = ssub.s32 256, 256
          %1238 = vsyncadd %s1229, %s1237
          %s1239 = smul.addr %s22, 2
          %s1240 = smul.addr %s1239, 128
          %s1241 = scalar_lea.hbm %s8, %s1240
          %s1242 = sshll.u32 %s1232, 4
          %s1243 = int_to_ptr.vmem [resolvable:$true] %s1242
          %1248 = dma.vmem_to_hbm [thread:$0]  %s1243, 256, %s1241, %s1229, 128, 128, 8
        $region56: #{hourglass_forward.7} parent=51 // pred_fallthru
          _
      $region52: #{hourglass_forward.7} parent=5 // pred_fallthru
        _
      %p1249 = scmp.le.s32.totalorder 2, %s17
      // Predicated region
      $region57: #{hourglass_forward.7} parent=5 // pred_check
        %p1250 = pneg %p1249
      $region58: #{hourglass_forward.7} parent=5 // pred_check_branch
        %1252 = sbr.rel (%p1250) target = $region60
      $region59: #{hourglass_forward.7} parent=5 // pred_region
        %s1253 = ssub.s32 %s17, 2
        // Predicated region
        $region61: #{hourglass_forward.7} parent=59 // pred_check
          %p1254 = pneg %p219
        $region62: #{hourglass_forward.7} parent=59 // pred_check_branch
          %1256 = sbr.rel (%p1254) target = $region64
        $region63: #{hourglass_forward.7} parent=59 // pred_region
          %s1257 = sand.u32 %s204, 1
          %s1258 = scalar_lea.sflag [#allocation3], %s1257
          %s1259 = sand.u32 %s204, 1
          %s1260 = smul.addr %s1259, 16
          %s1261 = scalar_lea.vmem [#allocation2], %s1260
          %1262 = dma.done %s1258, 256
        $region64: #{hourglass_forward.7} parent=59 // pred_fallthru
          _
      $region60: #{hourglass_forward.7} parent=5 // pred_fallthru
        _
    $region6: #{hourglass_forward.7} parent=1 // loop_footer
      %s21 = sadd.s32 1, %s17
    $region7: #{hourglass_forward.7} parent=1 // loop_footer_branch
      %16 = sbr.rel target = $region3
    $region8: #{hourglass_forward.7} parent=1 // loop_exit
      _
    %1263 = vsyncpa [#allocation3], 1
    %s1264 = scalar_lea.sflag [#allocation3], 1
    %1265 = vsyncpa %s1264, 1

// kernel: hourglass_forward.6
$region0: #{hourglass_forward.6}
  #allocation0 [shape = 'u32[]', space=smem, size = 0x4, offset = 0x4, fixed_abs, tag = 'smem constant byte address 0x4 - core index']
  #allocation1 [shape = 'u32[144,128]{1,0:T(1,128)}', space=vmem, size = 0x12000, scoped, tag = 'internal scratch']
  %s0 = inlined_call_operand.vmem [shape: bf16[2,16,128], index: 0, kind: input, shape index: {}]
  %s1 = inlined_call_operand.vmem [shape: f32[2,128], index: 1, kind: input, shape index: {}]
  %s2 = inlined_call_operand.vmem [shape: bf16[128,64], index: 2, kind: input, shape index: {}]
  %s3 = inlined_call_operand.vmem [shape: f32[2,64], index: 3, kind: input, shape index: {}]
  %s4 = inlined_call_operand.vmem [shape: bf16[3,192,64], index: 4, kind: input, shape index: {}]
  %s5 = inlined_call_operand.vmem [shape: f32[2,64], index: 5, kind: input, shape index: {}]
  %s6 = inlined_call_operand.vmem [shape: bf16[64,128], index: 6, kind: input, shape index: {}]
  %s7 = inlined_call_operand.vmem [shape: f32[1,128], index: 7, kind: input, shape index: {}]
  %s8 = inlined_call_operand.vmem [shape: bf16[2,16,128], index: 8, kind: output, shape index: {}]
  %s9 = sld [smem:[#allocation0]]
  $region65: #{hourglass_forward.6} parent=0
    _
  %s11 = ssub.s32 1, %s9
  %s12 = scalar_select 0, %s11, %s9
  loop: start=0, step=1, limit=4
  $region2: #{hourglass_forward.6} parent=0 // loop_pre_header
    _
  $region3: #{hourglass_forward.6} parent=0 // loop_header
    %s14 = sphi 0, %s18
    %p15 = scmp.ge.s32.totalorder %s14, 4
    %s24 = sphi 0, %s26
    %s27 = sphi 0, %s24
    %s28 = sphi 0, %s27
    %s44 = sphi 0, %s28
    %s48 = sphi 0, %s48
    %s50 = sphi 0, %s48
    %s51 = sphi 0, %s50
    %s65 = sphi 0, %s51
    %s69 = sphi 0, %s69
    %s71 = sphi 0, %s69
    %s72 = sphi 0, %s71
    %s86 = sphi 0, %s72
    %s90 = sphi 0, %s90
    %s92 = sphi 0, %s90
    %s93 = sphi 0, %s92
    %s107 = sphi 0, %s93
    %s111 = sphi 0, %s111
    %s113 = sphi 0, %s111
    %s114 = sphi 0, %s113
    %s128 = sphi 0, %s114
    %s132 = sphi 0, %s132
    %s134 = sphi 0, %s132
    %s135 = sphi 0, %s134
    %s149 = sphi 0, %s135
    %s153 = sphi 0, %s153
    %s155 = sphi 0, %s153
    %s156 = sphi 0, %s155
    %s170 = sphi 0, %s156
    %s174 = sphi 0, %s174
    %s176 = sphi 0, %s174
    %s177 = sphi 0, %s176
    %s191 = sphi 0, %s177
    %s197 = sphi 0, %s199
    %s200 = sphi 0, %s197
    %s201 = sphi 0, %s200
    %s217 = sphi 0, %s201
  $region4: #{hourglass_forward.6} parent=0 // loop_header_branch
    %17 = sbr.rel (%p15) target = $region8
  $region5: #{hourglass_forward.6} parent=0 // loop_body
    %s19 = ssub.s32 %s14, 1
    %s20 = ssub.s32 %s14, 2
    %s21 = sadd.s32 %s14, 1
    %s22 = ssub.s32 %s14, %s21
    %p23 = scmp.eq.s32.totalorder %s22, 0
    %s25 = sadd.s32 %s24, 1
    %s26 = scalar_select %p23, %s24, %s25
    %p29 = pneg %p23
    %p30 = scmp.eq.s32.totalorder %s14, 1
    %p31 = por %p29, %p30
    %p32 = scmp.ne.s32.totalorder %s24, %s27
    %p33 = scmp.eq.s32.totalorder %s14, 0
    %p34 = por %p32, %p33
    %p35 = scmp.ne.s32.totalorder %s24, %s27
    %p36 = scmp.eq.s32.totalorder %s19, 1
    %p37 = por %p35, %p36
    %p38 = scmp.ne.s32.totalorder %s27, %s28
    %p39 = scmp.eq.s32.totalorder %s19, 0
    %p40 = por %p38, %p39
    %p41 = scmp.ne.s32.totalorder %s27, %s28
    %p42 = scmp.eq.s32.totalorder %s20, 1
    %p43 = por %p41, %p42
    %p45 = scmp.ne.s32.totalorder %s28, %s44
    %p46 = scmp.eq.s32.totalorder %s20, 0
    %p47 = por %p45, %p46
    %s49 = sadd.s32 %s48, 1
    %p52 = scmp.eq.s32.totalorder %s14, 1
    %p53 = scmp.ne.s32.totalorder %s48, %s50
    %p54 = scmp.eq.s32.totalorder %s14, 0
    %p55 = por %p53, %p54
    %p56 = scmp.ne.s32.totalorder %s48, %s50
    %p57 = scmp.eq.s32.totalorder %s19, 1
    %p58 = por %p56, %p57
    %p59 = scmp.ne.s32.totalorder %s50, %s51
    %p60 = scmp.eq.s32.totalorder %s19, 0
    %p61 = por %p59, %p60
    %p62 = scmp.ne.s32.totalorder %s50, %s51
    %p63 = scmp.eq.s32.totalorder %s20, 1
    %p64 = por %p62, %p63
    %p66 = scmp.ne.s32.totalorder %s51, %s65
    %p67 = scmp.eq.s32.totalorder %s20, 0
    %p68 = por %p66, %p67
    %s70 = sadd.s32 %s69, 1
    %p73 = scmp.eq.s32.totalorder %s14, 1
    %p74 = scmp.ne.s32.totalorder %s69, %s71
    %p75 = scmp.eq.s32.totalorder %s14, 0
    %p76 = por %p74, %p75
    %p77 = scmp.ne.s32.totalorder %s69, %s71
    %p78 = scmp.eq.s32.totalorder %s19, 1
    %p79 = por %p77, %p78
    %p80 = scmp.ne.s32.totalorder %s71, %s72
    %p81 = scmp.eq.s32.totalorder %s19, 0
    %p82 = por %p80, %p81
    %p83 = scmp.ne.s32.totalorder %s71, %s72
    %p84 = scmp.eq.s32.totalorder %s20, 1
    %p85 = por %p83, %p84
    %p87 = scmp.ne.s32.totalorder %s72, %s86
    %p88 = scmp.eq.s32.totalorder %s20, 0
    %p89 = por %p87, %p88
    %s91 = sadd.s32 %s90, 1
    %p94 = scmp.eq.s32.totalorder %s14, 1
    %p95 = scmp.ne.s32.totalorder %s90, %s92
    %p96 = scmp.eq.s32.totalorder %s14, 0
    %p97 = por %p95, %p96
    %p98 = scmp.ne.s32.totalorder %s90, %s92
    %p99 = scmp.eq.s32.totalorder %s19, 1
    %p100 = por %p98, %p99
    %p101 = scmp.ne.s32.totalorder %s92, %s93
    %p102 = scmp.eq.s32.totalorder %s19, 0
    %p103 = por %p101, %p102
    %p104 = scmp.ne.s32.totalorder %s92, %s93
    %p105 = scmp.eq.s32.totalorder %s20, 1
    %p106 = por %p104, %p105
    %p108 = scmp.ne.s32.totalorder %s93, %s107
    %p109 = scmp.eq.s32.totalorder %s20, 0
    %p110 = por %p108, %p109
    %s112 = sadd.s32 %s111, 1
    %p115 = scmp.eq.s32.totalorder %s14, 1
    %p116 = scmp.ne.s32.totalorder %s111, %s113
    %p117 = scmp.eq.s32.totalorder %s14, 0
    %p118 = por %p116, %p117
    %p119 = scmp.ne.s32.totalorder %s111, %s113
    %p120 = scmp.eq.s32.totalorder %s19, 1
    %p121 = por %p119, %p120
    %p122 = scmp.ne.s32.totalorder %s113, %s114
    %p123 = scmp.eq.s32.totalorder %s19, 0
    %p124 = por %p122, %p123
    %p125 = scmp.ne.s32.totalorder %s113, %s114
    %p126 = scmp.eq.s32.totalorder %s20, 1
    %p127 = por %p125, %p126
    %p129 = scmp.ne.s32.totalorder %s114, %s128
    %p130 = scmp.eq.s32.totalorder %s20, 0
    %p131 = por %p129, %p130
    %s133 = sadd.s32 %s132, 1
    %p136 = scmp.eq.s32.totalorder %s14, 1
    %p137 = scmp.ne.s32.totalorder %s132, %s134
    %p138 = scmp.eq.s32.totalorder %s14, 0
    %p139 = por %p137, %p138
    %p140 = scmp.ne.s32.totalorder %s132, %s134
    %p141 = scmp.eq.s32.totalorder %s19, 1
    %p142 = por %p140, %p141
    %p143 = scmp.ne.s32.totalorder %s134, %s135
    %p144 = scmp.eq.s32.totalorder %s19, 0
    %p145 = por %p143, %p144
    %p146 = scmp.ne.s32.totalorder %s134, %s135
    %p147 = scmp.eq.s32.totalorder %s20, 1
    %p148 = por %p146, %p147
    %p150 = scmp.ne.s32.totalorder %s135, %s149
    %p151 = scmp.eq.s32.totalorder %s20, 0
    %p152 = por %p150, %p151
    %s154 = sadd.s32 %s153, 1
    %p157 = scmp.eq.s32.totalorder %s14, 1
    %p158 = scmp.ne.s32.totalorder %s153, %s155
    %p159 = scmp.eq.s32.totalorder %s14, 0
    %p160 = por %p158, %p159
    %p161 = scmp.ne.s32.totalorder %s153, %s155
    %p162 = scmp.eq.s32.totalorder %s19, 1
    %p163 = por %p161, %p162
    %p164 = scmp.ne.s32.totalorder %s155, %s156
    %p165 = scmp.eq.s32.totalorder %s19, 0
    %p166 = por %p164, %p165
    %p167 = scmp.ne.s32.totalorder %s155, %s156
    %p168 = scmp.eq.s32.totalorder %s20, 1
    %p169 = por %p167, %p168
    %p171 = scmp.ne.s32.totalorder %s156, %s170
    %p172 = scmp.eq.s32.totalorder %s20, 0
    %p173 = por %p171, %p172
    %s175 = sadd.s32 %s174, 1
    %p178 = scmp.eq.s32.totalorder %s14, 1
    %p179 = scmp.ne.s32.totalorder %s174, %s176
    %p180 = scmp.eq.s32.totalorder %s14, 0
    %p181 = por %p179, %p180
    %p182 = scmp.ne.s32.totalorder %s174, %s176
    %p183 = scmp.eq.s32.totalorder %s19, 1
    %p184 = por %p182, %p183
    %p185 = scmp.ne.s32.totalorder %s176, %s177
    %p186 = scmp.eq.s32.totalorder %s19, 0
    %p187 = por %p185, %p186
    %p188 = scmp.ne.s32.totalorder %s176, %s177
    %p189 = scmp.eq.s32.totalorder %s20, 1
    %p190 = por %p188, %p189
    %p192 = scmp.ne.s32.totalorder %s177, %s191
    %p193 = scmp.eq.s32.totalorder %s20, 0
    %p194 = por %p192, %p193
    %s195 = ssub.s32 %s14, %s21
    %p196 = scmp.eq.s32.totalorder %s195, 0
    %s198 = sadd.s32 %s197, 1
    %s199 = scalar_select %p196, %s197, %s198
    %p202 = pneg %p196
    %p203 = scmp.eq.s32.totalorder %s14, 1
    %p204 = por %p202, %p203
    %p205 = scmp.ne.s32.totalorder %s197, %s200
    %p206 = scmp.eq.s32.totalorder %s14, 0
    %p207 = por %p205, %p206
    %p208 = scmp.ne.s32.totalorder %s197, %s200
    %p209 = scmp.eq.s32.totalorder %s19, 1
    %p210 = por %p208, %p209
    %p211 = scmp.ne.s32.totalorder %s200, %s201
    %p212 = scmp.eq.s32.totalorder %s19, 0
    %p213 = por %p211, %p212
    %p214 = scmp.ne.s32.totalorder %s200, %s201
    %p215 = scmp.eq.s32.totalorder %s20, 1
    %p216 = por %p214, %p215
    %p218 = scmp.ne.s32.totalorder %s201, %s217
    %p219 = scmp.eq.s32.totalorder %s20, 0
    %p220 = por %p218, %p219
    %p221 = scmp.le.s32.totalorder 1, %s14
    %p222 = scmp.lt.s32.totalorder %s14, 3
    %p223 = pnand %p221, %p222
    %p224 = pneg %p223
    // Predicated region
    $region9: #{hourglass_forward.6} parent=5 // pred_check
      _
    $region10: #{hourglass_forward.6} parent=5 // pred_check_branch
      %226 = sbr.rel (%p223) target = $region12
    $region11: #{hourglass_forward.6} parent=5 // pred_region
      %s227 = ssub.s32 %s14, 1
      // Predicated region
      $region13: #{hourglass_forward.6} parent=11 // pred_check
        %p228 = pneg %p61
      $region14: #{hourglass_forward.6} parent=11 // pred_check_branch
        %230 = sbr.rel (%p228) target = $region16
      $region15: #{hourglass_forward.6} parent=11 // pred_region
        _
      $region16: #{hourglass_forward.6} parent=11 // pred_fallthru
        _
      // Predicated region
      $region17: #{hourglass_forward.6} parent=11 // pred_check
        %p231 = pneg %p82
      $region18: #{hourglass_forward.6} parent=11 // pred_check_branch
        %233 = sbr.rel (%p231) target = $region20
      $region19: #{hourglass_forward.6} parent=11 // pred_region
        _
      $region20: #{hourglass_forward.6} parent=11 // pred_fallthru
        _
      // Predicated region
      $region21: #{hourglass_forward.6} parent=11 // pred_check
        %p234 = pneg %p103
      $region22: #{hourglass_forward.6} parent=11 // pred_check_branch
        %236 = sbr.rel (%p234) target = $region24
      $region23: #{hourglass_forward.6} parent=11 // pred_region
        _
      $region24: #{hourglass_forward.6} parent=11 // pred_fallthru
        _
      // Predicated region
      $region25: #{hourglass_forward.6} parent=11 // pred_check
        %p237 = pneg %p124
      $region26: #{hourglass_forward.6} parent=11 // pred_check_branch
        %239 = sbr.rel (%p237) target = $region28
      $region27: #{hourglass_forward.6} parent=11 // pred_region
        _
      $region28: #{hourglass_forward.6} parent=11 // pred_fallthru
        _
      // Predicated region
      $region29: #{hourglass_forward.6} parent=11 // pred_check
        %p240 = pneg %p145
      $region30: #{hourglass_forward.6} parent=11 // pred_check_branch
        %242 = sbr.rel (%p240) target = $region32
      $region31: #{hourglass_forward.6} parent=11 // pred_region
        _
      $region32: #{hourglass_forward.6} parent=11 // pred_fallthru
        _
      // Predicated region
      $region33: #{hourglass_forward.6} parent=11 // pred_check
        %p243 = pneg %p166
      $region34: #{hourglass_forward.6} parent=11 // pred_check_branch
        %245 = sbr.rel (%p243) target = $region36
      $region35: #{hourglass_forward.6} parent=11 // pred_region
        _
      $region36: #{hourglass_forward.6} parent=11 // pred_fallthru
        _
      // Predicated region
      $region37: #{hourglass_forward.6} parent=11 // pred_check
        %p246 = pneg %p187
      $region38: #{hourglass_forward.6} parent=11 // pred_check_branch
        %248 = sbr.rel (%p246) target = $region40
      $region39: #{hourglass_forward.6} parent=11 // pred_region
        _
      $region40: #{hourglass_forward.6} parent=11 // pred_fallthru
        _
    $region12: #{hourglass_forward.6} parent=5 // pred_fallthru
      _
    %p249 = scmp.lt.s32.totalorder %s14, 2
    // Predicated region
    $region41: #{hourglass_forward.6} parent=5 // pred_check
      %p250 = pneg %p249
    $region42: #{hourglass_forward.6} parent=5 // pred_check_branch
      %252 = sbr.rel (%p250) target = $region44
    $region43: #{hourglass_forward.6} parent=5 // pred_region
      // Predicated region
      $region45: #{hourglass_forward.6} parent=43 // pred_check
        %p253 = pneg %p34
      $region46: #{hourglass_forward.6} parent=43 // pred_check_branch
        %255 = sbr.rel (%p253) target = $region48
      $region47: #{hourglass_forward.6} parent=43 // pred_region
        %p256 = scmp.lt.s32.totalorder %s14, 1
        %s257 = scalar_select %p256, %s14, 1
        %s258 = smul.addr %s257, 2
        %s259 = smul.addr %s258, 4
        %s260 = scalar_lea.vmem %s0, %s259
      $region48: #{hourglass_forward.6} parent=43 // pred_fallthru
        _
    $region44: #{hourglass_forward.6} parent=5 // pred_fallthru
      _
    %p261 = scmp.le.s32.totalorder 1, %s14
    %p262 = scmp.lt.s32.totalorder %s14, 3
    %p263 = pnand %p261, %p262
    %p264 = pneg %p263
    // Predicated region
    $region49: #{hourglass_forward.6} parent=5 // pred_check
      _
    $region50: #{hourglass_forward.6} parent=5 // pred_check_branch
      %266 = sbr.rel (%p263) target = $region52
    $region51: #{hourglass_forward.6} parent=5 // pred_region
      %s267 = ssub.s32 %s14, 1
      %p268 = scmp.lt.s32.totalorder %s19, 1
      %s269 = scalar_select %p268, %s19, 1
      %s270 = smul.addr %s269, 2
      %s271 = smul.addr %s270, 4
      %s272 = scalar_lea.vmem %s0, %s271
      %p273 = pneg %p40
      %p274 = pneg %p37
      %p275 = pneg %p61
      %p276 = pneg %p58
      %p277 = pneg %p82
      %p278 = pneg %p79
      %p279 = pneg %p103
      %p280 = pneg %p100
      %p281 = pneg %p124
      %p282 = pneg %p121
      %p283 = pneg %p145
      %p284 = pneg %p142
      %p285 = pneg %p166
      %p286 = pneg %p163
      %p287 = pneg %p187
      %p288 = pneg %p184
      %p289 = pneg %p213
      %p290 = pneg %p210
      %p291 = scmp.lt.s32.totalorder %s19, 1
      %s292 = scalar_select %p291, %s19, 1
      %s293 = smul.addr %s292, 2
      %s294 = smul.addr %s293, 4
      %s295 = scalar_lea.vmem %s8, %s294
      %p296 = scmp.lt.s32.totalorder %s19, 1
      %s297 = scalar_select %p296, %s19, 1
      %s298 = smul.addr %s297, 2
      %s299 = smul.addr %s298, 4
      %s300 = scalar_lea.vmem %s0, %s299
      %p301 = scmp.lt.s32.totalorder %s19, 1
      %s302 = scalar_select %p301, %s19, 1
      %s303 = smul.addr %s302, 2
      %s304 = smul.addr %s303, 4
      %s305 = scalar_lea.vmem %s8, %s304
      %v307 = vld [vmem:[%s300] sm:$0xf]
      %v308 = vld [vmem:[%s300 + $0x4] sm:$0xf]
      %v309 = vunpack.c.l.bf16 %v307
      %v310 = vunpack.c.l.bf16 %v308
      %v311 = vld [vmem:[%s1] sm:$0x1]
      %v312 = vlaneseq
      %v313 = vshrl.u32 %v312, 7
      %v314 = vsub.s32 0, %v313
      %v315 = vrot.slane %v311, %v314
      %v316 = vmul.f32 %v309, %v315
      %v317 = vmul.f32 %v310, %v315
      %v318 = vld [vmem:[%s1 + $0x1] sm:$0x1]
      %v319 = vlaneseq
      %v320 = vshrl.u32 %v319, 7
      %v321 = vsub.s32 0, %v320
      %v322 = vrot.slane %v318, %v321
      %v323 = vadd.f32 %v316, %v322
      %v324 = vadd.f32 %v317, %v322
      %v325 = vmax.f32 %v323, 0.0
      %v326 = vmax.f32 %v324, 0.0
      %v327 = vpack.c.bf16 %v326, %v325
      %v328 = vld [vmem:[%s2] sm:$0xf]
      %v329 = vld [vmem:[%s2 + $0x4] sm:$0xf]
      %v330 = vld [vmem:[%s2 + $0x8] sm:$0xf]
      %v331 = vld [vmem:[%s2 + $0xc] sm:$0xf]
      %v332 = vld [vmem:[%s2 + $0x10] sm:$0xf]
      %v333 = vld [vmem:[%s2 + $0x14] sm:$0xf]
      %v334 = vld [vmem:[%s2 + $0x18] sm:$0xf]
      %v335 = vld [vmem:[%s2 + $0x1c] sm:$0xf]
      %v336 = vld [vmem:[%s2 + $0x20] sm:$0xf]
      %v337 = vld [vmem:[%s2 + $0x24] sm:$0xf]
      %v338 = vld [vmem:[%s2 + $0x28] sm:$0xf]
      %v339 = vld [vmem:[%s2 + $0x2c] sm:$0xf]
      %v340 = vld [vmem:[%s2 + $0x30] sm:$0xf]
      %v341 = vld [vmem:[%s2 + $0x34] sm:$0xf]
      %v342 = vld [vmem:[%s2 + $0x38] sm:$0xf]
      %v343 = vld [vmem:[%s2 + $0x3c] sm:$0xf]
      %v360 = vunpack.c.l.b16 %v328
      %v361 = vunpack.c.l.b16 %v329
      %v362 = vunpack.c.l.b16 %v330
      %v363 = vunpack.c.l.b16 %v331
      %v364 = vunpack.c.l.b16 %v332
      %v365 = vunpack.c.l.b16 %v333
      %v366 = vunpack.c.l.b16 %v334
      %v367 = vunpack.c.l.b16 %v335
      %v368 = vunpack.c.l.b16 %v336
      %v369 = vunpack.c.l.b16 %v337
      %v370 = vunpack.c.l.b16 %v338
      %v371 = vunpack.c.l.b16 %v339
      %v372 = vunpack.c.l.b16 %v340
      %v373 = vunpack.c.l.b16 %v341
      %v374 = vunpack.c.l.b16 %v342
      %v375 = vunpack.c.l.b16 %v343
      %v376 = vpack.c.b16 %v361, %v360
      %v377 = vpack.c.b16 %v363, %v362
      %v378 = vpack.c.b16 %v365, %v364
      %v379 = vpack.c.b16 %v367, %v366
      %v380 = vpack.c.b16 %v369, %v368
      %v381 = vpack.c.b16 %v371, %v370
      %v382 = vpack.c.b16 %v373, %v372
      %v383 = vpack.c.b16 %v375, %v374
      %392 = vmatprep.subr.bf16.mxu0 0
      %393 = vmatpush1.bf16.msra.mxu0 %v376
      %394 = vmatprep.subr.bf16.mxu0 0
      %395 = vmatpush1.bf16.msra.mxu0 %v377
      %396 = vmatprep.subr.bf16.mxu0 0
      %397 = vmatpush1.bf16.msra.mxu0 %v378
      %398 = vmatprep.subr.bf16.mxu0 0
      %399 = vmatpush1.bf16.msra.mxu0 %v379
      %400 = vmatprep.subr.bf16.mxu0 0
      %401 = vmatpush1.bf16.msra.mxu0 %v380
      %402 = vmatprep.subr.bf16.mxu0 0
      %403 = vmatpush1.bf16.msra.mxu0 %v381
      %404 = vmatprep.subr.bf16.mxu0 0
      %405 = vmatpush1.bf16.msra.mxu0 %v382
      %406 = vmatprep.subr.bf16.mxu0 0
      %407 = vmatpush1.bf16.msra.mxu0 %v383
      %408 = vmatprep.subr.bf16.mxu0 0
      %409 = vmatpush1.bf16.msra.mxu0 0
      %410 = vmatprep.subr.bf16.mxu0 0
      %411 = vmatpush1.bf16.msra.mxu0 0
      %412 = vmatprep.subr.bf16.mxu0 0
      %413 = vmatpush1.bf16.msra.mxu0 0
      %414 = vmatprep.subr.bf16.mxu0 0
      %415 = vmatpush1.bf16.msra.mxu0 0
      %416 = vmatprep.subr.bf16.mxu0 0
      %417 = vmatpush1.bf16.msra.mxu0 0
      %418 = vmatprep.subr.bf16.mxu0 0
      %419 = vmatpush1.bf16.msra.mxu0 0
      %420 = vmatprep.subr.bf16.mxu0 0
      %421 = vmatpush1.bf16.msra.mxu0 0
      %422 = vmatprep.subr.bf16.mxu0 0
      %423 = vmatpush1.bf16.msra.mxu0 0
      %424 = vmatprep.mubr.bf16.mxu0 0
      %425 = vmatmul.mubr.bf16.gmra.mrb[0].mxu0 %v327
      %v426 = vpop.f32.mrb[0].mxu0
      %v427 = vadd.f32 0.0, %v426
      %v428 = vpop.f32.mrb[0].mxu0
      %v429 = vpop.f32.mrb[0].mxu0
      %v430 = vadd.f32 0.0, %v429
      %v431 = vpop.f32.mrb[0].mxu0
      %432 = vdwg.mxu0
      %v433 = vld [vmem:[%s3] sm:$0x1]
      %v434 = vlaneseq
      %v435 = vshrl.u32 %v434, 7
      %v436 = vsub.s32 0, %v435
      %v437 = vrot.slane %v433, %v436
      %v438 = vmul.f32 %v427, %v437
      %v439 = vmul.f32 %v430, %v437
      %v440 = vld [vmem:[%s3 + $0x1] sm:$0x1]
      %v441 = vlaneseq
      %v442 = vshrl.u32 %v441, 7
      %v443 = vsub.s32 0, %v442
      %v444 = vrot.slane %v440, %v443
      %v445 = vadd.f32 %v438, %v444
      %v446 = vadd.f32 %v439, %v444
      %v447 = vmax.f32 %v445, 0.0
      %v448 = vmax.f32 %v446, 0.0
      %v449 = vpack.c.bf16 %v448, %v447
      %v451 = vcombine.high %v449, %v449
      %v453 = vunpack.c.l.s4 1983009808
      %v454 = vunpack.c.0.s8 %v453
      %v455 = vlaneseq
      %v456 = vshrl.u32 %v455, 7
      %v457 = vsub.s32 %v454, %v456
      %v458 = vrot.slane %v449, %v457
      %v460 = vunpack.c.l.s4 1983009808
      %v461 = vunpack.c.0.s8 %v460
      %v462 = vlaneseq
      %v463 = vshrl.u32 %v462, 7
      %v464 = vsub.s32 %v461, %v463
      %v465 = vrot.slane %v451, %v464
      %v466 = vcombine.high %v458, %v458
      %v467 = vcombine.high %v465, %v465
      %v469 = vunpack.c.l.s4 1983009808
      %v470 = vunpack.c.0.s8 %v469
      %v471 = vlaneseq
      %v472 = vshrl.u32 %v471, 7
      %v473 = vsub.s32 %v470, %v472
      %v474 = vrot.slane %v458, %v473
      %v476 = vunpack.c.l.s4 1983009808
      %v477 = vunpack.c.0.s8 %v476
      %v478 = vlaneseq
      %v479 = vshrl.u32 %v478, 7
      %v480 = vsub.s32 %v477, %v479
      %v481 = vrot.slane %v466, %v480
      %v483 = vunpack.c.l.s4 1983009808
      %v484 = vunpack.c.0.s8 %v483
      %v485 = vlaneseq
      %v486 = vshrl.u32 %v485, 7
      %v487 = vsub.s32 %v484, %v486
      %v488 = vrot.slane %v465, %v487
      %v490 = vunpack.c.l.s4 1983009808
      %v491 = vunpack.c.0.s8 %v490
      %v492 = vlaneseq
      %v493 = vshrl.u32 %v492, 7
      %v494 = vsub.s32 %v491, %v493
      %v495 = vrot.slane %v467, %v494
      %v497 = vshrl.u32 %v474, 16
      %v499 = vrot.slane %v497, 7
      %v500 = vshll.u32 %v474, 16
      %v502 = vor.u32 %v499, %v500
      %v504 = vshrl.u32 %v481, 16
      %v506 = vrot.slane %v504, 7
      %v507 = vshll.u32 %v481, 16
      %v509 = vor.u32 %v506, %v507
      %v511 = vshrl.u32 %v488, 16
      %v513 = vrot.slane %v511, 7
      %v514 = vshll.u32 %v488, 16
      %v516 = vor.u32 %v513, %v514
      %v518 = vshrl.u32 %v495, 16
      %v520 = vrot.slane %v518, 7
      %v521 = vshll.u32 %v495, 16
      %v523 = vor.u32 %v520, %v521
      %vm528 = vcmask 1040384
      %vm529 = vsmask.f32 256
      %vm530 = vmand %vm528, %vm529
      %v531 = vsel %vm530, 0, %v502
      %v532 = vsel %vm530, 0, %v509
      %v533 = vsel %vm530, 0, %v516
      %v534 = vsel %vm530, 0, %v523
      %vm535 = vcmask 1042432
      %vm536 = vsmask.f32 2304
      %vm537 = vmand %vm535, %vm536
      %v538 = vsel %vm537, %v531, 0
      %v539 = vsel %vm537, %v532, 0
      %v540 = vsel %vm537, %v533, 0
      %v541 = vsel %vm537, %v534, 0
      %v543 = vshrl.u32 0, 16
      %v545 = vshll.u32 0, 16
      %v547 = vrot.slane %v545, 1
      %v548 = vor.u32 %v543, %v547
      %v550 = vshrl.u32 %v538, 16
      %v552 = vshll.u32 %v538, 16
      %v554 = vrot.slane %v552, 1
      %v555 = vor.u32 %v550, %v554
      %v557 = vshrl.u32 %v539, 16
      %v559 = vshll.u32 %v539, 16
      %v561 = vrot.slane %v559, 1
      %v562 = vor.u32 %v557, %v561
      %v564 = vshrl.u32 %v540, 16
      %v566 = vshll.u32 %v540, 16
      %v568 = vrot.slane %v566, 1
      %v569 = vor.u32 %v564, %v568
      %v571 = vshrl.u32 %v541, 16
      %v573 = vshll.u32 %v541, 16
      %v575 = vrot.slane %v573, 1
      %v576 = vor.u32 %v571, %v575
      %577 = vrot.lane.b32.xlu0 %v548, 64
      %v578 = vpop.permute.xlu0 %577
      %579 = vrot.lane.b32.xlu0 %v555, 64
      %v580 = vpop.permute.xlu0 %579
      %581 = vrot.lane.b32.xlu0 %v562, 64
      %v582 = vpop.permute.xlu0 %581
      %583 = vrot.lane.b32.xlu0 %v569, 64
      %v584 = vpop.permute.xlu0 %583
      %585 = vrot.lane.b32.xlu0 %v576, 64
      %v586 = vpop.permute.xlu0 %585
      %v592 = vrot.slane 0, 1
      %v593 = vrot.slane %v538, 1
      %v594 = vrot.slane %v539, 1
      %v595 = vrot.slane %v540, 1
      %v596 = vrot.slane %v541, 1
      %vm597 = vcmask 523264
      %v599 = vsel %vm597, 0, %v578
      %v601 = vsel %vm597, %v538, %v580
      %v603 = vsel %vm597, %v539, %v582
      %v605 = vsel %vm597, %v540, %v584
      %v607 = vsel %vm597, %v541, %v586
      %v612 = vcombine.low %v599, %v592
      %v614 = vunpack.c.l.s4 1983009808
      %v615 = vunpack.c.0.s8 %v614
      %v616 = vlaneseq
      %v617 = vshrl.u32 %v616, 7
      %v618 = vsub.s32 %v615, %v617
      %v619 = vrot.slane %v612, %v618
      %v620 = vcombine.low %v601, %v593
      %v622 = vunpack.c.l.s4 1983009808
      %v623 = vunpack.c.0.s8 %v622
      %v624 = vlaneseq
      %v625 = vshrl.u32 %v624, 7
      %v626 = vsub.s32 %v623, %v625
      %v627 = vrot.slane %v620, %v626
      %v628 = vcombine.low %v603, %v594
      %v630 = vunpack.c.l.s4 1983009808
      %v631 = vunpack.c.0.s8 %v630
      %v632 = vlaneseq
      %v633 = vshrl.u32 %v632, 7
      %v634 = vsub.s32 %v631, %v633
      %v635 = vrot.slane %v628, %v634
      %v636 = vcombine.low %v605, %v595
      %v638 = vunpack.c.l.s4 1983009808
      %v639 = vunpack.c.0.s8 %v638
      %v640 = vlaneseq
      %v641 = vshrl.u32 %v640, 7
      %v642 = vsub.s32 %v639, %v641
      %v643 = vrot.slane %v636, %v642
      %v644 = vld [vmem:[%s4] sm:$0xf]
      %v645 = vld [vmem:[%s4 + $0x4] sm:$0xf]
      %v646 = vld [vmem:[%s4 + $0x8] sm:$0xf]
      %v647 = vld [vmem:[%s4 + $0xc] sm:$0xf]
      %v648 = vld [vmem:[%s4 + $0x10] sm:$0xf]
      %v649 = vld [vmem:[%s4 + $0x14] sm:$0xf]
      %v650 = vld [vmem:[%s4 + $0x18] sm:$0xf]
      %v651 = vld [vmem:[%s4 + $0x1c] sm:$0xf]
      %v652 = vld [vmem:[%s4 + $0x20] sm:$0xf]
      %v653 = vld [vmem:[%s4 + $0x24] sm:$0xf]
      %v654 = vld [vmem:[%s4 + $0x28] sm:$0xf]
      %v655 = vld [vmem:[%s4 + $0x2c] sm:$0xf]
      %v656 = vld [vmem:[%s4 + $0x30] sm:$0xf]
      %v657 = vld [vmem:[%s4 + $0x34] sm:$0xf]
      %v658 = vld [vmem:[%s4 + $0x38] sm:$0xf]
      %v659 = vld [vmem:[%s4 + $0x3c] sm:$0xf]
      %v660 = vld [vmem:[%s4 + $0x40] sm:$0xf]
      %v661 = vld [vmem:[%s4 + $0x44] sm:$0xf]
      %v662 = vld [vmem:[%s4 + $0x48] sm:$0xf]
      %v663 = vld [vmem:[%s4 + $0x4c] sm:$0xf]
      %v664 = vld [vmem:[%s4 + $0x50] sm:$0xf]
      %v665 = vld [vmem:[%s4 + $0x54] sm:$0xf]
      %v666 = vld [vmem:[%s4 + $0x58] sm:$0xf]
      %v667 = vld [vmem:[%s4 + $0x5c] sm:$0xf]
      %v669 = vcombine.low %v607, %v596
      %v671 = vunpack.c.l.s4 1983009808
      %v672 = vunpack.c.0.s8 %v671
      %v673 = vlaneseq
      %v674 = vshrl.u32 %v673, 7
      %v675 = vsub.s32 %v672, %v674
      %v676 = vrot.slane %v669, %v675
      %s677 = scalar_lea.vmem %s4, 96
      %v678 = vld [vmem:[%s677] sm:$0xf]
      %v679 = vld [vmem:[%s677 + $0x4] sm:$0xf]
      %v680 = vld [vmem:[%s677 + $0x8] sm:$0xf]
      %v681 = vld [vmem:[%s677 + $0xc] sm:$0xf]
      %v682 = vld [vmem:[%s677 + $0x10] sm:$0xf]
      %v683 = vld [vmem:[%s677 + $0x14] sm:$0xf]
      %v684 = vld [vmem:[%s677 + $0x18] sm:$0xf]
      %v685 = vld [vmem:[%s677 + $0x1c] sm:$0xf]
      %v686 = vld [vmem:[%s677 + $0x20] sm:$0xf]
      %v687 = vld [vmem:[%s677 + $0x24] sm:$0xf]
      %v688 = vld [vmem:[%s677 + $0x28] sm:$0xf]
      %v689 = vld [vmem:[%s677 + $0x2c] sm:$0xf]
      %v690 = vld [vmem:[%s677 + $0x30] sm:$0xf]
      %v691 = vld [vmem:[%s677 + $0x34] sm:$0xf]
      %v692 = vld [vmem:[%s677 + $0x38] sm:$0xf]
      %v693 = vld [vmem:[%s677 + $0x3c] sm:$0xf]
      %v694 = vld [vmem:[%s677 + $0x40] sm:$0xf]
      %v695 = vld [vmem:[%s677 + $0x44] sm:$0xf]
      %v696 = vld [vmem:[%s677 + $0x48] sm:$0xf]
      %v697 = vld [vmem:[%s677 + $0x4c] sm:$0xf]
      %v698 = vld [vmem:[%s677 + $0x50] sm:$0xf]
      %v699 = vld [vmem:[%s677 + $0x54] sm:$0xf]
      %v700 = vld [vmem:[%s677 + $0x58] sm:$0xf]
      %v701 = vld [vmem:[%s677 + $0x5c] sm:$0xf]
      %v702 = vcombine.low %v627, %v635
      %v703 = vcombine.low %v643, %v676
      %v705 = vunpack.c.l.s4 1983009808
      %v706 = vunpack.c.0.s8 %v705
      %v707 = vlaneseq
      %v708 = vshrl.u32 %v707, 7
      %v709 = vsub.s32 %v706, %v708
      %v710 = vrot.slane %v702, %v709
      %v712 = vunpack.c.l.s4 1983009808
      %v713 = vunpack.c.0.s8 %v712
      %v714 = vlaneseq
      %v715 = vshrl.u32 %v714, 7
      %v716 = vsub.s32 %v713, %v715
      %v717 = vrot.slane %v703, %v716
      %v718 = vcombine.low %v710, %v717
      %v719 = vcombine.high %v710, %v717
      %v745 = vunpack.c.l.b16 %v678
      %v746 = vunpack.c.l.b16 %v679
      %v747 = vunpack.c.l.b16 %v680
      %v748 = vunpack.c.l.b16 %v681
      %v749 = vunpack.c.l.b16 %v682
      %v750 = vunpack.c.l.b16 %v683
      %v751 = vunpack.c.l.b16 %v684
      %v752 = vunpack.c.l.b16 %v685
      %v753 = vunpack.c.l.b16 %v686
      %v754 = vunpack.c.l.b16 %v687
      %v755 = vunpack.c.l.b16 %v688
      %v756 = vunpack.c.l.b16 %v689
      %v757 = vunpack.c.l.b16 %v690
      %v758 = vunpack.c.l.b16 %v691
      %v759 = vunpack.c.l.b16 %v692
      %v760 = vunpack.c.l.b16 %v693
      %v761 = vunpack.c.l.b16 %v694
      %v762 = vunpack.c.l.b16 %v695
      %v763 = vunpack.c.l.b16 %v696
      %v764 = vunpack.c.l.b16 %v697
      %v765 = vunpack.c.l.b16 %v698
      %v766 = vunpack.c.l.b16 %v699
      %v767 = vunpack.c.l.b16 %v700
      %v768 = vunpack.c.l.b16 %v701
      %v769 = vpack.c.b16 %v746, %v745
      %v770 = vpack.c.b16 %v748, %v747
      %v771 = vpack.c.b16 %v750, %v749
      %v772 = vpack.c.b16 %v752, %v751
      %v773 = vpack.c.b16 %v754, %v753
      %v774 = vpack.c.b16 %v756, %v755
      %v775 = vpack.c.b16 %v758, %v757
      %v776 = vpack.c.b16 %v760, %v759
      %v777 = vpack.c.b16 %v762, %v761
      %v778 = vpack.c.b16 %v764, %v763
      %v779 = vpack.c.b16 %v766, %v765
      %v780 = vpack.c.b16 %v768, %v767
      %v794 = vsel %vm597, %v719, 0
      %796 = vmatprep.subr.bf16.mxu0 0
      %797 = vmatpush1.bf16.msra.mxu0 %v769
      %798 = vmatprep.subr.bf16.mxu0 0
      %799 = vmatpush1.bf16.msra.mxu0 %v770
      %800 = vmatprep.subr.bf16.mxu0 0
      %801 = vmatpush1.bf16.msra.mxu0 %v771
      %802 = vmatprep.subr.bf16.mxu0 0
      %803 = vmatpush1.bf16.msra.mxu0 %v772
      %804 = vmatprep.subr.bf16.mxu0 0
      %805 = vmatpush1.bf16.msra.mxu0 %v773
      %806 = vmatprep.subr.bf16.mxu0 0
      %807 = vmatpush1.bf16.msra.mxu0 %v774
      %808 = vmatprep.subr.bf16.mxu0 0
      %809 = vmatpush1.bf16.msra.mxu0 %v775
      %810 = vmatprep.subr.bf16.mxu0 0
      %811 = vmatpush1.bf16.msra.mxu0 %v776
      %812 = vmatprep.subr.bf16.mxu0 0
      %813 = vmatpush1.bf16.msra.mxu0 %v777
      %814 = vmatprep.subr.bf16.mxu0 0
      %815 = vmatpush1.bf16.msra.mxu0 %v778
      %816 = vmatprep.subr.bf16.mxu0 0
      %817 = vmatpush1.bf16.msra.mxu0 %v779
      %818 = vmatprep.subr.bf16.mxu0 0
      %819 = vmatpush1.bf16.msra.mxu0 %v780
      %820 = vmatprep.subr.bf16.mxu0 0
      %821 = vmatpush1.bf16.msra.mxu0 0
      %822 = vmatprep.subr.bf16.mxu0 0
      %823 = vmatpush1.bf16.msra.mxu0 0
      %824 = vmatprep.subr.bf16.mxu0 0
      %825 = vmatpush1.bf16.msra.mxu0 0
      %826 = vmatprep.subr.bf16.mxu0 0
      %827 = vmatpush1.bf16.msra.mxu0 0
      %828 = vmatprep.mubr.bf16.mxu0 %v794
      %829 = vmatmul.mubr.bf16.gmra.mrb[0].mxu0 %v718
      %v830 = vpop.f32.mrb[0].mxu0
      %v831 = vadd.f32 0.0, %v830
      %v832 = vpop.f32.mrb[0].mxu0
      %v833 = vpop.f32.mrb[0].mxu0
      %v834 = vadd.f32 0.0, %v833
      %v835 = vpop.f32.mrb[0].mxu0
      %836 = vdwg.mxu0
      %v837 = vcombine.low %v619, %v627
      %v838 = vcombine.low %v635, %v643
      %v840 = vunpack.c.l.s4 1983009808
      %v841 = vunpack.c.0.s8 %v840
      %v842 = vlaneseq
      %v843 = vshrl.u32 %v842, 7
      %v844 = vsub.s32 %v841, %v843
      %v845 = vrot.slane %v837, %v844
      %v847 = vunpack.c.l.s4 1983009808
      %v848 = vunpack.c.0.s8 %v847
      %v849 = vlaneseq
      %v850 = vshrl.u32 %v849, 7
      %v851 = vsub.s32 %v848, %v850
      %v852 = vrot.slane %v838, %v851
      %v853 = vcombine.low %v845, %v852
      %v854 = vcombine.high %v845, %v852
      %v880 = vunpack.c.l.b16 %v644
      %v881 = vunpack.c.l.b16 %v645
      %v882 = vunpack.c.l.b16 %v646
      %v883 = vunpack.c.l.b16 %v647
      %v884 = vunpack.c.l.b16 %v648
      %v885 = vunpack.c.l.b16 %v649
      %v886 = vunpack.c.l.b16 %v650
      %v887 = vunpack.c.l.b16 %v651
      %v888 = vunpack.c.l.b16 %v652
      %v889 = vunpack.c.l.b16 %v653
      %v890 = vunpack.c.l.b16 %v654
      %v891 = vunpack.c.l.b16 %v655
      %v892 = vunpack.c.l.b16 %v656
      %v893 = vunpack.c.l.b16 %v657
      %v894 = vunpack.c.l.b16 %v658
      %v895 = vunpack.c.l.b16 %v659
      %v896 = vunpack.c.l.b16 %v660
      %v897 = vunpack.c.l.b16 %v661
      %v898 = vunpack.c.l.b16 %v662
      %v899 = vunpack.c.l.b16 %v663
      %v900 = vunpack.c.l.b16 %v664
      %v901 = vunpack.c.l.b16 %v665
      %v902 = vunpack.c.l.b16 %v666
      %v903 = vunpack.c.l.b16 %v667
      %v904 = vpack.c.b16 %v881, %v880
      %v905 = vpack.c.b16 %v883, %v882
      %v906 = vpack.c.b16 %v885, %v884
      %v907 = vpack.c.b16 %v887, %v886
      %v908 = vpack.c.b16 %v889, %v888
      %v909 = vpack.c.b16 %v891, %v890
      %v910 = vpack.c.b16 %v893, %v892
      %v911 = vpack.c.b16 %v895, %v894
      %v912 = vpack.c.b16 %v897, %v896
      %v913 = vpack.c.b16 %v899, %v898
      %v914 = vpack.c.b16 %v901, %v900
      %v915 = vpack.c.b16 %v903, %v902
      %v929 = vsel %vm597, %v854, 0
      %931 = vmatprep.subr.bf16.mxu0 0
      %932 = vmatpush1.bf16.msra.mxu0 %v904
      %933 = vmatprep.subr.bf16.mxu0 0
      %934 = vmatpush1.bf16.msra.mxu0 %v905
      %935 = vmatprep.subr.bf16.mxu0 0
      %936 = vmatpush1.bf16.msra.mxu0 %v906
      %937 = vmatprep.subr.bf16.mxu0 0
      %938 = vmatpush1.bf16.msra.mxu0 %v907
      %939 = vmatprep.subr.bf16.mxu0 0
      %940 = vmatpush1.bf16.msra.mxu0 %v908
      %941 = vmatprep.subr.bf16.mxu0 0
      %942 = vmatpush1.bf16.msra.mxu0 %v909
      %943 = vmatprep.subr.bf16.mxu0 0
      %944 = vmatpush1.bf16.msra.mxu0 %v910
      %945 = vmatprep.subr.bf16.mxu0 0
      %946 = vmatpush1.bf16.msra.mxu0 %v911
      %947 = vmatprep.subr.bf16.mxu0 0
      %948 = vmatpush1.bf16.msra.mxu0 %v912
      %949 = vmatprep.subr.bf16.mxu0 0
      %950 = vmatpush1.bf16.msra.mxu0 %v913
      %951 = vmatprep.subr.bf16.mxu0 0
      %952 = vmatpush1.bf16.msra.mxu0 %v914
      %953 = vmatprep.subr.bf16.mxu0 0
      %954 = vmatpush1.bf16.msra.mxu0 %v915
      %955 = vmatprep.subr.bf16.mxu0 0
      %956 = vmatpush1.bf16.msra.mxu0 0
      %957 = vmatprep.subr.bf16.mxu0 0
      %958 = vmatpush1.bf16.msra.mxu0 0
      %959 = vmatprep.subr.bf16.mxu0 0
      %960 = vmatpush1.bf16.msra.mxu0 0
      %961 = vmatprep.subr.bf16.mxu0 0
      %962 = vmatpush1.bf16.msra.mxu0 0
      %963 = vmatprep.mubr.bf16.mxu0 %v929
      %964 = vmatmul.mubr.bf16.gmra.mrb[0].mxu0 %v853
      %v965 = vpop.f32.mrb[0].mxu0
      %v966 = vadd.f32 %v831, %v965
      %v967 = vpop.f32.mrb[0].mxu0
      %v968 = vpop.f32.mrb[0].mxu0
      %v969 = vadd.f32 %v834, %v968
      %v970 = vpop.f32.mrb[0].mxu0
      %971 = vdwg.mxu0
      %s972 = scalar_lea.vmem %s4, 192
      %v973 = vld [vmem:[%s972] sm:$0xf]
      %v974 = vld [vmem:[%s972 + $0x4] sm:$0xf]
      %v975 = vld [vmem:[%s972 + $0x8] sm:$0xf]
      %v976 = vld [vmem:[%s972 + $0xc] sm:$0xf]
      %v977 = vld [vmem:[%s972 + $0x10] sm:$0xf]
      %v978 = vld [vmem:[%s972 + $0x14] sm:$0xf]
      %v979 = vld [vmem:[%s972 + $0x18] sm:$0xf]
      %v980 = vld [vmem:[%s972 + $0x1c] sm:$0xf]
      %v981 = vld [vmem:[%s972 + $0x20] sm:$0xf]
      %v982 = vld [vmem:[%s972 + $0x24] sm:$0xf]
      %v983 = vld [vmem:[%s972 + $0x28] sm:$0xf]
      %v984 = vld [vmem:[%s972 + $0x2c] sm:$0xf]
      %v985 = vld [vmem:[%s972 + $0x30] sm:$0xf]
      %v986 = vld [vmem:[%s972 + $0x34] sm:$0xf]
      %v987 = vld [vmem:[%s972 + $0x38] sm:$0xf]
      %v988 = vld [vmem:[%s972 + $0x3c] sm:$0xf]
      %v989 = vld [vmem:[%s972 + $0x40] sm:$0xf]
      %v990 = vld [vmem:[%s972 + $0x44] sm:$0xf]
      %v991 = vld [vmem:[%s972 + $0x48] sm:$0xf]
      %v992 = vld [vmem:[%s972 + $0x4c] sm:$0xf]
      %v993 = vld [vmem:[%s972 + $0x50] sm:$0xf]
      %v994 = vld [vmem:[%s972 + $0x54] sm:$0xf]
      %v995 = vld [vmem:[%s972 + $0x58] sm:$0xf]
      %v996 = vld [vmem:[%s972 + $0x5c] sm:$0xf]
      %v997 = vcombine.low %v676, %v619
      %v999 = vunpack.c.l.s4 1983009808
      %v1000 = vunpack.c.0.s8 %v999
      %v1001 = vlaneseq
      %v1002 = vshrl.u32 %v1001, 7
      %v1003 = vsub.s32 %v1000, %v1002
      %v1004 = vrot.slane %v997, %v1003
      %v1005 = vcombine.low %v852, %v1004
      %v1006 = vcombine.high %v852, %v1004
      %v1032 = vunpack.c.l.b16 %v973
      %v1033 = vunpack.c.l.b16 %v974
      %v1034 = vunpack.c.l.b16 %v975
      %v1035 = vunpack.c.l.b16 %v976
      %v1036 = vunpack.c.l.b16 %v977
      %v1037 = vunpack.c.l.b16 %v978
      %v1038 = vunpack.c.l.b16 %v979
      %v1039 = vunpack.c.l.b16 %v980
      %v1040 = vunpack.c.l.b16 %v981
      %v1041 = vunpack.c.l.b16 %v982
      %v1042 = vunpack.c.l.b16 %v983
      %v1043 = vunpack.c.l.b16 %v984
      %v1044 = vunpack.c.l.b16 %v985
      %v1045 = vunpack.c.l.b16 %v986
      %v1046 = vunpack.c.l.b16 %v987
      %v1047 = vunpack.c.l.b16 %v988
      %v1048 = vunpack.c.l.b16 %v989
      %v1049 = vunpack.c.l.b16 %v990
      %v1050 = vunpack.c.l.b16 %v991
      %v1051 = vunpack.c.l.b16 %v992
      %v1052 = vunpack.c.l.b16 %v993
      %v1053 = vunpack.c.l.b16 %v994
      %v1054 = vunpack.c.l.b16 %v995
      %v1055 = vunpack.c.l.b16 %v996
      %v1056 = vpack.c.b16 %v1033, %v1032
      %v1057 = vpack.c.b16 %v1035, %v1034
      %v1058 = vpack.c.b16 %v1037, %v1036
      %v1059 = vpack.c.b16 %v1039, %v1038
      %v1060 = vpack.c.b16 %v1041, %v1040
      %v1061 = vpack.c.b16 %v1043, %v1042
      %v1062 = vpack.c.b16 %v1045, %v1044
      %v1063 = vpack.c.b16 %v1047, %v1046
      %v1064 = vpack.c.b16 %v1049, %v1048
      %v1065 = vpack.c.b16 %v1051, %v1050
      %v1066 = vpack.c.b16 %v1053, %v1052
      %v1067 = vpack.c.b16 %v1055, %v1054
      %v1081 = vsel %vm597, %v1006, 0
      %1083 = vmatprep.subr.bf16.mxu0 0
      %1084 = vmatpush1.bf16.msra.mxu0 %v1056
      %1085 = vmatprep.subr.bf16.mxu0 0
      %1086 = vmatpush1.bf16.msra.mxu0 %v1057
      %1087 = vmatprep.subr.bf16.mxu0 0
      %1088 = vmatpush1.bf16.msra.mxu0 %v1058
      %1089 = vmatprep.subr.bf16.mxu0 0
      %1090 = vmatpush1.bf16.msra.mxu0 %v1059
      %1091 = vmatprep.subr.bf16.mxu0 0
      %1092 = vmatpush1.bf16.msra.mxu0 %v1060
      %1093 = vmatprep.subr.bf16.mxu0 0
      %1094 = vmatpush1.bf16.msra.mxu0 %v1061
      %1095 = vmatprep.subr.bf16.mxu0 0
      %1096 = vmatpush1.bf16.msra.mxu0 %v1062
      %1097 = vmatprep.subr.bf16.mxu0 0
      %1098 = vmatpush1.bf16.msra.mxu0 %v1063
      %1099 = vmatprep.subr.bf16.mxu0 0
      %1100 = vmatpush1.bf16.msra.mxu0 %v1064
      %1101 = vmatprep.subr.bf16.mxu0 0
      %1102 = vmatpush1.bf16.msra.mxu0 %v1065
      %1103 = vmatprep.subr.bf16.mxu0 0
      %1104 = vmatpush1.bf16.msra.mxu0 %v1066
      %1105 = vmatprep.subr.bf16.mxu0 0
      %1106 = vmatpush1.bf16.msra.mxu0 %v1067
      %1107 = vmatprep.subr.bf16.mxu0 0
      %1108 = vmatpush1.bf16.msra.mxu0 0
      %1109 = vmatprep.subr.bf16.mxu0 0
      %1110 = vmatpush1.bf16.msra.mxu0 0
      %1111 = vmatprep.subr.bf16.mxu0 0
      %1112 = vmatpush1.bf16.msra.mxu0 0
      %1113 = vmatprep.subr.bf16.mxu0 0
      %1114 = vmatpush1.bf16.msra.mxu0 0
      %1115 = vmatprep.mubr.bf16.mxu0 %v1081
      %1116 = vmatmul.mubr.bf16.gmra.mrb[0].mxu0 %v1005
      %v1117 = vpop.f32.mrb[0].mxu0
      %v1118 = vadd.f32 0.0, %v1117
      %v1119 = vpop.f32.mrb[0].mxu0
      %v1120 = vpop.f32.mrb[0].mxu0
      %v1121 = vadd.f32 0.0, %v1120
      %v1122 = vpop.f32.mrb[0].mxu0
      %1123 = vdwg.mxu0
      %v1124 = vadd.f32 %v966, %v1118
      %v1125 = vadd.f32 %v969, %v1121
      %v1126 = vld [vmem:[%s5] sm:$0x1]
      %v1127 = vlaneseq
      %v1128 = vshrl.u32 %v1127, 7
      %v1129 = vsub.s32 0, %v1128
      %v1130 = vrot.slane %v1126, %v1129
      %v1131 = vmul.f32 %v1124, %v1130
      %v1132 = vmul.f32 %v1125, %v1130
      %v1133 = vld [vmem:[%s5 + $0x1] sm:$0x1]
      %v1134 = vlaneseq
      %v1135 = vshrl.u32 %v1134, 7
      %v1136 = vsub.s32 0, %v1135
      %v1137 = vrot.slane %v1133, %v1136
      %v1138 = vadd.f32 %v1131, %v1137
      %v1139 = vadd.f32 %v1132, %v1137
      %v1140 = vmax.f32 %v1138, 0.0
      %v1141 = vmax.f32 %v1139, 0.0
      %v1142 = vpack.c.bf16 %v1141, %v1140
      %v1143 = vld [vmem:[%s6] sm:$0xf]
      %v1144 = vld [vmem:[%s6 + $0x4] sm:$0xf]
      %v1145 = vld [vmem:[%s6 + $0x8] sm:$0xf]
      %v1146 = vld [vmem:[%s6 + $0xc] sm:$0xf]
      %v1147 = vld [vmem:[%s6 + $0x10] sm:$0xf]
      %v1148 = vld [vmem:[%s6 + $0x14] sm:$0xf]
      %v1149 = vld [vmem:[%s6 + $0x18] sm:$0xf]
      %v1150 = vld [vmem:[%s6 + $0x1c] sm:$0xf]
      %v1151 = vld [vmem:[%s7] sm:$0x1]
      %v1153 = vlaneseq
      %v1154 = vshrl.u32 %v1153, 7
      %v1155 = vsub.s32 0, %v1154
      %v1156 = vrot.slane %v1151, %v1155
      %v1166 = vunpack.c.l.b16 %v1143
      %v1167 = vunpack.c.l.b16 %v1144
      %v1168 = vunpack.c.l.b16 %v1145
      %v1169 = vunpack.c.l.b16 %v1146
      %v1170 = vunpack.c.l.b16 %v1147
      %v1171 = vunpack.c.l.b16 %v1148
      %v1172 = vunpack.c.l.b16 %v1149
      %v1173 = vunpack.c.l.b16 %v1150
      %v1174 = vpack.c.b16 %v1167, %v1166
      %v1175 = vpack.c.b16 %v1169, %v1168
      %v1176 = vpack.c.b16 %v1171, %v1170
      %v1177 = vpack.c.b16 %v1173, %v1172
      %v1183 = vsel %vm597, %v1142, 0
      %1185 = vmatprep.subr.bf16.mxu0 0
      %1186 = vmatpush1.bf16.msra.mxu0 %v1174
      %1187 = vmatprep.subr.bf16.mxu0 0
      %1188 = vmatpush1.bf16.msra.mxu0 %v1175
      %1189 = vmatprep.subr.bf16.mxu0 0
      %1190 = vmatpush1.bf16.msra.mxu0 %v1176
      %1191 = vmatprep.subr.bf16.mxu0 0
      %1192 = vmatpush1.bf16.msra.mxu0 %v1177
      %1193 = vmatprep.subr.bf16.mxu0 0
      %1194 = vmatpush1.bf16.msra.mxu0 0
      %1195 = vmatprep.subr.bf16.mxu0 0
      %1196 = vmatpush1.bf16.msra.mxu0 0
      %1197 = vmatprep.subr.bf16.mxu0 0
      %1198 = vmatpush1.bf16.msra.mxu0 0
      %1199 = vmatprep.subr.bf16.mxu0 0
      %1200 = vmatpush1.bf16.msra.mxu0 0
      %1201 = vmatprep.subr.bf16.mxu0 0
      %1202 = vmatpush1.bf16.msra.mxu0 0
      %1203 = vmatprep.subr.bf16.mxu0 0
      %1204 = vmatpush1.bf16.msra.mxu0 0
      %1205 = vmatprep.subr.bf16.mxu0 0
      %1206 = vmatpush1.bf16.msra.mxu0 0
      %1207 = vmatprep.subr.bf16.mxu0 0
      %1208 = vmatpush1.bf16.msra.mxu0 0
      %1209 = vmatprep.subr.bf16.mxu0 0
      %1210 = vmatpush1.bf16.msra.mxu0 0
      %1211 = vmatprep.subr.bf16.mxu0 0
      %1212 = vmatpush1.bf16.msra.mxu0 0
      %1213 = vmatprep.subr.bf16.mxu0 0
      %1214 = vmatpush1.bf16.msra.mxu0 0
      %1215 = vmatprep.subr.bf16.mxu0 0
      %1216 = vmatpush1.bf16.msra.mxu0 0
      %1217 = vmatprep.mubr.bf16.mxu0 0
      %1218 = vmatmul.mubr.bf16.gmra.mrb[0].mxu0 %v1183
      %v1219 = vpop.f32.mrb[0].mxu0
      %v1220 = vadd.f32 %v1156, %v1219
      %v1221 = vpop.f32.mrb[0].mxu0
      %v1222 = vpop.f32.mrb[0].mxu0
      %v1223 = vadd.f32 %v1156, %v1222
      %v1224 = vpop.f32.mrb[0].mxu0
      %1225 = vdwg.mxu0
      %v1226 = vadd.f32 %v1220, %v309
      %v1227 = vadd.f32 %v1223, %v310
      %v1228 = vpack.c.bf16 %v1227, %v1226
      %v1230 = vunpack.c.l.b16 %v1228
      %v1231 = vunpack.c.h.b16 %v1228
      %v1232 = vpack.c.b16 %v1230, %v1230
      %v1233 = vpack.c.b16 %v1231, %v1231
      %1236 = vst [vmem:[%s305] sm:$0xf] %v1232
      %1237 = vst [vmem:[%s305 + $0x4] sm:$0xf] %v1233
      %p1238 = scmp.lt.s32.totalorder %s19, 1
      %s1239 = scalar_select %p1238, %s19, 1
      %s1240 = smul.addr %s1239, 2
      %s1241 = smul.addr %s1240, 4
      %s1242 = scalar_lea.vmem %s8, %s1241
      // Predicated region
      $region53: #{hourglass_forward.6} parent=51 // pred_check
        %p1243 = pneg %p210
      $region54: #{hourglass_forward.6} parent=51 // pred_check_branch
        %1245 = sbr.rel (%p1243) target = $region56
      $region55: #{hourglass_forward.6} parent=51 // pred_region
        _
      $region56: #{hourglass_forward.6} parent=51 // pred_fallthru
        _
    $region52: #{hourglass_forward.6} parent=5 // pred_fallthru
      _
    %p1246 = scmp.le.s32.totalorder 2, %s14
    // Predicated region
    $region57: #{hourglass_forward.6} parent=5 // pred_check
      %p1247 = pneg %p1246
    $region58: #{hourglass_forward.6} parent=5 // pred_check_branch
      %1249 = sbr.rel (%p1247) target = $region60
    $region59: #{hourglass_forward.6} parent=5 // pred_region
      %s1250 = ssub.s32 %s14, 2
      // Predicated region
      $region61: #{hourglass_forward.6} parent=59 // pred_check
        %p1251 = pneg %p216
      $region62: #{hourglass_forward.6} parent=59 // pred_check_branch
        %1253 = sbr.rel (%p1251) target = $region64
      $region63: #{hourglass_forward.6} parent=59 // pred_region
        %p1254 = scmp.lt.s32.totalorder %s20, 1
        %s1255 = scalar_select %p1254, %s20, 1
        %s1256 = smul.addr %s1255, 2
        %s1257 = smul.addr %s1256, 4
        %s1258 = scalar_lea.vmem %s8, %s1257
      $region64: #{hourglass_forward.6} parent=59 // pred_fallthru
        _
    $region60: #{hourglass_forward.6} parent=5 // pred_fallthru
      _
  $region6: #{hourglass_forward.6} parent=0 // loop_footer
    %s18 = sadd.s32 1, %s14
  $region7: #{hourglass_forward.6} parent=0 // loop_footer_branch
    %13 = sbr.rel target = $region3
  $region8: #{hourglass_forward.6} parent=0 // loop_exit
    _

// kernel: hourglass_forward.5
$region0: #{hourglass_forward.5}
  #allocation0 [shape = 'u32[]', space=smem, size = 0x4, offset = 0x4, fixed_abs, tag = 'smem constant byte address 0x4 - core index']
  #allocation1 [shape = 'u32[144,128]{1,0:T(1,128)}', space=vmem, size = 0x12000, scoped, tag = 'internal scratch']
  %s0 = inlined_call_operand.vmem [shape: bf16[2,64,64], index: 0, kind: input, shape index: {}]
  %s1 = inlined_call_operand.vmem [shape: f32[2,64], index: 1, kind: input, shape index: {}]
  %s2 = inlined_call_operand.vmem [shape: bf16[64,64], index: 2, kind: input, shape index: {}]
  %s3 = inlined_call_operand.vmem [shape: f32[2,64], index: 3, kind: input, shape index: {}]
  %s4 = inlined_call_operand.vmem [shape: bf16[3,192,64], index: 4, kind: input, shape index: {}]
  %s5 = inlined_call_operand.vmem [shape: f32[2,64], index: 5, kind: input, shape index: {}]
  %s6 = inlined_call_operand.vmem [shape: bf16[64,128], index: 6, kind: input, shape index: {}]
  %s7 = inlined_call_operand.vmem [shape: f32[1,128], index: 7, kind: input, shape index: {}]
  %s8 = inlined_call_operand.vmem [shape: bf16[64,128], index: 8, kind: input, shape index: {}]
  %s9 = inlined_call_operand.vmem [shape: f32[1,128], index: 9, kind: input, shape index: {}]
  %s10 = inlined_call_operand.vmem [shape: bf16[2,16,128], index: 10, kind: output, shape index: {}]
  %s11 = sld [smem:[#allocation0]]
  $region73: #{hourglass_forward.5} parent=0
    _
  %s13 = ssub.s32 1, %s11
  %s14 = scalar_select 0, %s13, %s11
  loop: start=0, step=1, limit=4
  $region2: #{hourglass_forward.5} parent=0 // loop_pre_header
    _
  $region3: #{hourglass_forward.5} parent=0 // loop_header
    %s16 = sphi 0, %s20
    %p17 = scmp.ge.s32.totalorder %s16, 4
    %s26 = sphi 0, %s28
    %s29 = sphi 0, %s26
    %s30 = sphi 0, %s29
    %s46 = sphi 0, %s30
    %s50 = sphi 0, %s50
    %s52 = sphi 0, %s50
    %s53 = sphi 0, %s52
    %s67 = sphi 0, %s53
    %s71 = sphi 0, %s71
    %s73 = sphi 0, %s71
    %s74 = sphi 0, %s73
    %s88 = sphi 0, %s74
    %s92 = sphi 0, %s92
    %s94 = sphi 0, %s92
    %s95 = sphi 0, %s94
    %s109 = sphi 0, %s95
    %s113 = sphi 0, %s113
    %s115 = sphi 0, %s113
    %s116 = sphi 0, %s115
    %s130 = sphi 0, %s116
    %s134 = sphi 0, %s134
    %s136 = sphi 0, %s134
    %s137 = sphi 0, %s136
    %s151 = sphi 0, %s137
    %s155 = sphi 0, %s155
    %s157 = sphi 0, %s155
    %s158 = sphi 0, %s157
    %s172 = sphi 0, %s158
    %s176 = sphi 0, %s176
    %s178 = sphi 0, %s176
    %s179 = sphi 0, %s178
    %s193 = sphi 0, %s179
    %s197 = sphi 0, %s197
    %s199 = sphi 0, %s197
    %s200 = sphi 0, %s199
    %s214 = sphi 0, %s200
    %s218 = sphi 0, %s218
    %s220 = sphi 0, %s218
    %s221 = sphi 0, %s220
    %s235 = sphi 0, %s221
    %s241 = sphi 0, %s243
    %s244 = sphi 0, %s241
    %s245 = sphi 0, %s244
    %s261 = sphi 0, %s245
  $region4: #{hourglass_forward.5} parent=0 // loop_header_branch
    %19 = sbr.rel (%p17) target = $region8
  $region5: #{hourglass_forward.5} parent=0 // loop_body
    %s21 = ssub.s32 %s16, 1
    %s22 = ssub.s32 %s16, 2
    %s23 = sadd.s32 %s16, 1
    %s24 = ssub.s32 %s16, %s23
    %p25 = scmp.eq.s32.totalorder %s24, 0
    %s27 = sadd.s32 %s26, 1
    %s28 = scalar_select %p25, %s26, %s27
    %p31 = pneg %p25
    %p32 = scmp.eq.s32.totalorder %s16, 1
    %p33 = por %p31, %p32
    %p34 = scmp.ne.s32.totalorder %s26, %s29
    %p35 = scmp.eq.s32.totalorder %s16, 0
    %p36 = por %p34, %p35
    %p37 = scmp.ne.s32.totalorder %s26, %s29
    %p38 = scmp.eq.s32.totalorder %s21, 1
    %p39 = por %p37, %p38
    %p40 = scmp.ne.s32.totalorder %s29, %s30
    %p41 = scmp.eq.s32.totalorder %s21, 0
    %p42 = por %p40, %p41
    %p43 = scmp.ne.s32.totalorder %s29, %s30
    %p44 = scmp.eq.s32.totalorder %s22, 1
    %p45 = por %p43, %p44
    %p47 = scmp.ne.s32.totalorder %s30, %s46
    %p48 = scmp.eq.s32.totalorder %s22, 0
    %p49 = por %p47, %p48
    %s51 = sadd.s32 %s50, 1
    %p54 = scmp.eq.s32.totalorder %s16, 1
    %p55 = scmp.ne.s32.totalorder %s50, %s52
    %p56 = scmp.eq.s32.totalorder %s16, 0
    %p57 = por %p55, %p56
    %p58 = scmp.ne.s32.totalorder %s50, %s52
    %p59 = scmp.eq.s32.totalorder %s21, 1
    %p60 = por %p58, %p59
    %p61 = scmp.ne.s32.totalorder %s52, %s53
    %p62 = scmp.eq.s32.totalorder %s21, 0
    %p63 = por %p61, %p62
    %p64 = scmp.ne.s32.totalorder %s52, %s53
    %p65 = scmp.eq.s32.totalorder %s22, 1
    %p66 = por %p64, %p65
    %p68 = scmp.ne.s32.totalorder %s53, %s67
    %p69 = scmp.eq.s32.totalorder %s22, 0
    %p70 = por %p68, %p69
    %s72 = sadd.s32 %s71, 1
    %p75 = scmp.eq.s32.totalorder %s16, 1
    %p76 = scmp.ne.s32.totalorder %s71, %s73
    %p77 = scmp.eq.s32.totalorder %s16, 0
    %p78 = por %p76, %p77
    %p79 = scmp.ne.s32.totalorder %s71, %s73
    %p80 = scmp.eq.s32.totalorder %s21, 1
    %p81 = por %p79, %p80
    %p82 = scmp.ne.s32.totalorder %s73, %s74
    %p83 = scmp.eq.s32.totalorder %s21, 0
    %p84 = por %p82, %p83
    %p85 = scmp.ne.s32.totalorder %s73, %s74
    %p86 = scmp.eq.s32.totalorder %s22, 1
    %p87 = por %p85, %p86
    %p89 = scmp.ne.s32.totalorder %s74, %s88
    %p90 = scmp.eq.s32.totalorder %s22, 0
    %p91 = por %p89, %p90
    %s93 = sadd.s32 %s92, 1
    %p96 = scmp.eq.s32.totalorder %s16, 1
    %p97 = scmp.ne.s32.totalorder %s92, %s94
    %p98 = scmp.eq.s32.totalorder %s16, 0
    %p99 = por %p97, %p98
    %p100 = scmp.ne.s32.totalorder %s92, %s94
    %p101 = scmp.eq.s32.totalorder %s21, 1
    %p102 = por %p100, %p101
    %p103 = scmp.ne.s32.totalorder %s94, %s95
    %p104 = scmp.eq.s32.totalorder %s21, 0
    %p105 = por %p103, %p104
    %p106 = scmp.ne.s32.totalorder %s94, %s95
    %p107 = scmp.eq.s32.totalorder %s22, 1
    %p108 = por %p106, %p107
    %p110 = scmp.ne.s32.totalorder %s95, %s109
    %p111 = scmp.eq.s32.totalorder %s22, 0
    %p112 = por %p110, %p111
    %s114 = sadd.s32 %s113, 1
    %p117 = scmp.eq.s32.totalorder %s16, 1
    %p118 = scmp.ne.s32.totalorder %s113, %s115
    %p119 = scmp.eq.s32.totalorder %s16, 0
    %p120 = por %p118, %p119
    %p121 = scmp.ne.s32.totalorder %s113, %s115
    %p122 = scmp.eq.s32.totalorder %s21, 1
    %p123 = por %p121, %p122
    %p124 = scmp.ne.s32.totalorder %s115, %s116
    %p125 = scmp.eq.s32.totalorder %s21, 0
    %p126 = por %p124, %p125
    %p127 = scmp.ne.s32.totalorder %s115, %s116
    %p128 = scmp.eq.s32.totalorder %s22, 1
    %p129 = por %p127, %p128
    %p131 = scmp.ne.s32.totalorder %s116, %s130
    %p132 = scmp.eq.s32.totalorder %s22, 0
    %p133 = por %p131, %p132
    %s135 = sadd.s32 %s134, 1
    %p138 = scmp.eq.s32.totalorder %s16, 1
    %p139 = scmp.ne.s32.totalorder %s134, %s136
    %p140 = scmp.eq.s32.totalorder %s16, 0
    %p141 = por %p139, %p140
    %p142 = scmp.ne.s32.totalorder %s134, %s136
    %p143 = scmp.eq.s32.totalorder %s21, 1
    %p144 = por %p142, %p143
    %p145 = scmp.ne.s32.totalorder %s136, %s137
    %p146 = scmp.eq.s32.totalorder %s21, 0
    %p147 = por %p145, %p146
    %p148 = scmp.ne.s32.totalorder %s136, %s137
    %p149 = scmp.eq.s32.totalorder %s22, 1
    %p150 = por %p148, %p149
    %p152 = scmp.ne.s32.totalorder %s137, %s151
    %p153 = scmp.eq.s32.totalorder %s22, 0
    %p154 = por %p152, %p153
    %s156 = sadd.s32 %s155, 1
    %p159 = scmp.eq.s32.totalorder %s16, 1
    %p160 = scmp.ne.s32.totalorder %s155, %s157
    %p161 = scmp.eq.s32.totalorder %s16, 0
    %p162 = por %p160, %p161
    %p163 = scmp.ne.s32.totalorder %s155, %s157
    %p164 = scmp.eq.s32.totalorder %s21, 1
    %p165 = por %p163, %p164
    %p166 = scmp.ne.s32.totalorder %s157, %s158
    %p167 = scmp.eq.s32.totalorder %s21, 0
    %p168 = por %p166, %p167
    %p169 = scmp.ne.s32.totalorder %s157, %s158
    %p170 = scmp.eq.s32.totalorder %s22, 1
    %p171 = por %p169, %p170
    %p173 = scmp.ne.s32.totalorder %s158, %s172
    %p174 = scmp.eq.s32.totalorder %s22, 0
    %p175 = por %p173, %p174
    %s177 = sadd.s32 %s176, 1
    %p180 = scmp.eq.s32.totalorder %s16, 1
    %p181 = scmp.ne.s32.totalorder %s176, %s178
    %p182 = scmp.eq.s32.totalorder %s16, 0
    %p183 = por %p181, %p182
    %p184 = scmp.ne.s32.totalorder %s176, %s178
    %p185 = scmp.eq.s32.totalorder %s21, 1
    %p186 = por %p184, %p185
    %p187 = scmp.ne.s32.totalorder %s178, %s179
    %p188 = scmp.eq.s32.totalorder %s21, 0
    %p189 = por %p187, %p188
    %p190 = scmp.ne.s32.totalorder %s178, %s179
    %p191 = scmp.eq.s32.totalorder %s22, 1
    %p192 = por %p190, %p191
    %p194 = scmp.ne.s32.totalorder %s179, %s193
    %p195 = scmp.eq.s32.totalorder %s22, 0
    %p196 = por %p194, %p195
    %s198 = sadd.s32 %s197, 1
    %p201 = scmp.eq.s32.totalorder %s16, 1
    %p202 = scmp.ne.s32.totalorder %s197, %s199
    %p203 = scmp.eq.s32.totalorder %s16, 0
    %p204 = por %p202, %p203
    %p205 = scmp.ne.s32.totalorder %s197, %s199
    %p206 = scmp.eq.s32.totalorder %s21, 1
    %p207 = por %p205, %p206
    %p208 = scmp.ne.s32.totalorder %s199, %s200
    %p209 = scmp.eq.s32.totalorder %s21, 0
    %p210 = por %p208, %p209
    %p211 = scmp.ne.s32.totalorder %s199, %s200
    %p212 = scmp.eq.s32.totalorder %s22, 1
    %p213 = por %p211, %p212
    %p215 = scmp.ne.s32.totalorder %s200, %s214
    %p216 = scmp.eq.s32.totalorder %s22, 0
    %p217 = por %p215, %p216
    %s219 = sadd.s32 %s218, 1
    %p222 = scmp.eq.s32.totalorder %s16, 1
    %p223 = scmp.ne.s32.totalorder %s218, %s220
    %p224 = scmp.eq.s32.totalorder %s16, 0
    %p225 = por %p223, %p224
    %p226 = scmp.ne.s32.totalorder %s218, %s220
    %p227 = scmp.eq.s32.totalorder %s21, 1
    %p228 = por %p226, %p227
    %p229 = scmp.ne.s32.totalorder %s220, %s221
    %p230 = scmp.eq.s32.totalorder %s21, 0
    %p231 = por %p229, %p230
    %p232 = scmp.ne.s32.totalorder %s220, %s221
    %p233 = scmp.eq.s32.totalorder %s22, 1
    %p234 = por %p232, %p233
    %p236 = scmp.ne.s32.totalorder %s221, %s235
    %p237 = scmp.eq.s32.totalorder %s22, 0
    %p238 = por %p236, %p237
    %s239 = ssub.s32 %s16, %s23
    %p240 = scmp.eq.s32.totalorder %s239, 0
    %s242 = sadd.s32 %s241, 1
    %s243 = scalar_select %p240, %s241, %s242
    %p246 = pneg %p240
    %p247 = scmp.eq.s32.totalorder %s16, 1
    %p248 = por %p246, %p247
    %p249 = scmp.ne.s32.totalorder %s241, %s244
    %p250 = scmp.eq.s32.totalorder %s16, 0
    %p251 = por %p249, %p250
    %p252 = scmp.ne.s32.totalorder %s241, %s244
    %p253 = scmp.eq.s32.totalorder %s21, 1
    %p254 = por %p252, %p253
    %p255 = scmp.ne.s32.totalorder %s244, %s245
    %p256 = scmp.eq.s32.totalorder %s21, 0
    %p257 = por %p255, %p256
    %p258 = scmp.ne.s32.totalorder %s244, %s245
    %p259 = scmp.eq.s32.totalorder %s22, 1
    %p260 = por %p258, %p259
    %p262 = scmp.ne.s32.totalorder %s245, %s261
    %p263 = scmp.eq.s32.totalorder %s22, 0
    %p264 = por %p262, %p263
    %p265 = scmp.le.s32.totalorder 1, %s16
    %p266 = scmp.lt.s32.totalorder %s16, 3
    %p267 = pnand %p265, %p266
    %p268 = pneg %p267
    // Predicated region
    $region9: #{hourglass_forward.5} parent=5 // pred_check
      _
    $region10: #{hourglass_forward.5} parent=5 // pred_check_branch
      %270 = sbr.rel (%p267) target = $region12
    $region11: #{hourglass_forward.5} parent=5 // pred_region
      %s271 = ssub.s32 %s16, 1
      // Predicated region
      $region13: #{hourglass_forward.5} parent=11 // pred_check
        %p272 = pneg %p63
      $region14: #{hourglass_forward.5} parent=11 // pred_check_branch
        %274 = sbr.rel (%p272) target = $region16
      $region15: #{hourglass_forward.5} parent=11 // pred_region
        _
      $region16: #{hourglass_forward.5} parent=11 // pred_fallthru
        _
      // Predicated region
      $region17: #{hourglass_forward.5} parent=11 // pred_check
        %p275 = pneg %p84
      $region18: #{hourglass_forward.5} parent=11 // pred_check_branch
        %277 = sbr.rel (%p275) target = $region20
      $region19: #{hourglass_forward.5} parent=11 // pred_region
        _
      $region20: #{hourglass_forward.5} parent=11 // pred_fallthru
        _
      // Predicated region
      $region21: #{hourglass_forward.5} parent=11 // pred_check
        %p278 = pneg %p105
      $region22: #{hourglass_forward.5} parent=11 // pred_check_branch
        %280 = sbr.rel (%p278) target = $region24
      $region23: #{hourglass_forward.5} parent=11 // pred_region
        _
      $region24: #{hourglass_forward.5} parent=11 // pred_fallthru
        _
      // Predicated region
      $region25: #{hourglass_forward.5} parent=11 // pred_check
        %p281 = pneg %p126
      $region26: #{hourglass_forward.5} parent=11 // pred_check_branch
        %283 = sbr.rel (%p281) target = $region28
      $region27: #{hourglass_forward.5} parent=11 // pred_region
        _
      $region28: #{hourglass_forward.5} parent=11 // pred_fallthru
        _
      // Predicated region
      $region29: #{hourglass_forward.5} parent=11 // pred_check
        %p284 = pneg %p147
      $region30: #{hourglass_forward.5} parent=11 // pred_check_branch
        %286 = sbr.rel (%p284) target = $region32
      $region31: #{hourglass_forward.5} parent=11 // pred_region
        _
      $region32: #{hourglass_forward.5} parent=11 // pred_fallthru
        _
      // Predicated region
      $region33: #{hourglass_forward.5} parent=11 // pred_check
        %p287 = pneg %p168
      $region34: #{hourglass_forward.5} parent=11 // pred_check_branch
        %289 = sbr.rel (%p287) target = $region36
      $region35: #{hourglass_forward.5} parent=11 // pred_region
        _
      $region36: #{hourglass_forward.5} parent=11 // pred_fallthru
        _
      // Predicated region
      $region37: #{hourglass_forward.5} parent=11 // pred_check
        %p290 = pneg %p189
      $region38: #{hourglass_forward.5} parent=11 // pred_check_branch
        %292 = sbr.rel (%p290) target = $region40
      $region39: #{hourglass_forward.5} parent=11 // pred_region
        _
      $region40: #{hourglass_forward.5} parent=11 // pred_fallthru
        _
      // Predicated region
      $region41: #{hourglass_forward.5} parent=11 // pred_check
        %p293 = pneg %p210
      $region42: #{hourglass_forward.5} parent=11 // pred_check_branch
        %295 = sbr.rel (%p293) target = $region44
      $region43: #{hourglass_forward.5} parent=11 // pred_region
        _
      $region44: #{hourglass_forward.5} parent=11 // pred_fallthru
        _
      // Predicated region
      $region45: #{hourglass_forward.5} parent=11 // pred_check
        %p296 = pneg %p231
      $region46: #{hourglass_forward.5} parent=11 // pred_check_branch
        %298 = sbr.rel (%p296) target = $region48
      $region47: #{hourglass_forward.5} parent=11 // pred_region
        _
      $region48: #{hourglass_forward.5} parent=11 // pred_fallthru
        _
    $region12: #{hourglass_forward.5} parent=5 // pred_fallthru
      _
    %p299 = scmp.lt.s32.totalorder %s16, 2
    // Predicated region
    $region49: #{hourglass_forward.5} parent=5 // pred_check
      %p300 = pneg %p299
    $region50: #{hourglass_forward.5} parent=5 // pred_check_branch
      %302 = sbr.rel (%p300) target = $region52
    $region51: #{hourglass_forward.5} parent=5 // pred_region
      // Predicated region
      $region53: #{hourglass_forward.5} parent=51 // pred_check
        %p303 = pneg %p36
      $region54: #{hourglass_forward.5} parent=51 // pred_check_branch
        %305 = sbr.rel (%p303) target = $region56
      $region55: #{hourglass_forward.5} parent=51 // pred_region
        %p306 = scmp.lt.s32.totalorder %s16, 1
        %s307 = scalar_select %p306, %s16, 1
        %s308 = smul.addr %s307, 8
        %s309 = smul.addr %s308, 4
        %s310 = scalar_lea.vmem %s0, %s309
      $region56: #{hourglass_forward.5} parent=51 // pred_fallthru
        _
    $region52: #{hourglass_forward.5} parent=5 // pred_fallthru
      _
    %p311 = scmp.le.s32.totalorder 1, %s16
    %p312 = scmp.lt.s32.totalorder %s16, 3
    %p313 = pnand %p311, %p312
    %p314 = pneg %p313
    // Predicated region
    $region57: #{hourglass_forward.5} parent=5 // pred_check
      _
    $region58: #{hourglass_forward.5} parent=5 // pred_check_branch
      %316 = sbr.rel (%p313) target = $region60
    $region59: #{hourglass_forward.5} parent=5 // pred_region
      %s317 = ssub.s32 %s16, 1
      %p318 = scmp.lt.s32.totalorder %s21, 1
      %s319 = scalar_select %p318, %s21, 1
      %s320 = smul.addr %s319, 8
      %s321 = smul.addr %s320, 4
      %s322 = scalar_lea.vmem %s0, %s321
      %p323 = pneg %p42
      %p324 = pneg %p39
      %p325 = pneg %p63
      %p326 = pneg %p60
      %p327 = pneg %p84
      %p328 = pneg %p81
      %p329 = pneg %p105
      %p330 = pneg %p102
      %p331 = pneg %p126
      %p332 = pneg %p123
      %p333 = pneg %p147
      %p334 = pneg %p144
      %p335 = pneg %p168
      %p336 = pneg %p165
      %p337 = pneg %p189
      %p338 = pneg %p186
      %p339 = pneg %p210
      %p340 = pneg %p207
      %p341 = pneg %p231
      %p342 = pneg %p228
      %p343 = pneg %p257
      %p344 = pneg %p254
      %p345 = scmp.lt.s32.totalorder %s21, 1
      %s346 = scalar_select %p345, %s21, 1
      %s347 = smul.addr %s346, 2
      %s348 = smul.addr %s347, 4
      %s349 = scalar_lea.vmem %s10, %s348
      %p350 = scmp.lt.s32.totalorder %s21, 1
      %s351 = scalar_select %p350, %s21, 1
      %s352 = smul.addr %s351, 8
      %s353 = smul.addr %s352, 4
      %s354 = scalar_lea.vmem %s0, %s353
      %p355 = scmp.lt.s32.totalorder %s21, 1
      %s356 = scalar_select %p355, %s21, 1
      %s357 = smul.addr %s356, 2
      %s358 = smul.addr %s357, 4
      %s359 = scalar_lea.vmem %s10, %s358
      %v361 = vld [vmem:[%s354] sm:$0xf]
      %v362 = vld [vmem:[%s354 + $0x4] sm:$0xf]
      %v363 = vld [vmem:[%s354 + $0x8] sm:$0xf]
      %v364 = vld [vmem:[%s354 + $0xc] sm:$0xf]
      %v365 = vld [vmem:[%s354 + $0x10] sm:$0xf]
      %v366 = vld [vmem:[%s354 + $0x14] sm:$0xf]
      %v367 = vld [vmem:[%s354 + $0x18] sm:$0xf]
      %v368 = vld [vmem:[%s354 + $0x1c] sm:$0xf]
      %v369 = vunpack.c.l.bf16 %v361
      %v370 = vunpack.c.l.bf16 %v362
      %v371 = vunpack.c.l.bf16 %v363
      %v372 = vunpack.c.l.bf16 %v364
      %v373 = vunpack.c.l.bf16 %v365
      %v374 = vunpack.c.l.bf16 %v366
      %v375 = vunpack.c.l.bf16 %v367
      %v376 = vunpack.c.l.bf16 %v368
      %v377 = vld [vmem:[%s1] sm:$0x1]
      %v378 = vlaneseq
      %v379 = vshrl.u32 %v378, 7
      %v380 = vsub.s32 0, %v379
      %v381 = vrot.slane %v377, %v380
      %v382 = vmul.f32 %v369, %v381
      %v383 = vmul.f32 %v370, %v381
      %v384 = vmul.f32 %v371, %v381
      %v385 = vmul.f32 %v372, %v381
      %v386 = vmul.f32 %v373, %v381
      %v387 = vmul.f32 %v374, %v381
      %v388 = vmul.f32 %v375, %v381
      %v389 = vmul.f32 %v376, %v381
      %v390 = vld [vmem:[%s1 + $0x1] sm:$0x1]
      %v391 = vlaneseq
      %v392 = vshrl.u32 %v391, 7
      %v393 = vsub.s32 0, %v392
      %v394 = vrot.slane %v390, %v393
      %v395 = vadd.f32 %v382, %v394
      %v396 = vadd.f32 %v383, %v394
      %v397 = vadd.f32 %v384, %v394
      %v398 = vadd.f32 %v385, %v394
      %v399 = vadd.f32 %v386, %v394
      %v400 = vadd.f32 %v387, %v394
      %v401 = vadd.f32 %v388, %v394
      %v402 = vadd.f32 %v389, %v394
      %v403 = vmax.f32 %v395, 0.0
      %v404 = vmax.f32 %v396, 0.0
      %v405 = vmax.f32 %v397, 0.0
      %v406 = vmax.f32 %v398, 0.0
      %v407 = vmax.f32 %v399, 0.0
      %v408 = vmax.f32 %v400, 0.0
      %v409 = vmax.f32 %v401, 0.0
      %v410 = vmax.f32 %v402, 0.0
      %v411 = vpack.c.bf16 %v404, %v403
      %v412 = vpack.c.bf16 %v406, %v405
      %v413 = vpack.c.bf16 %v408, %v407
      %v414 = vpack.c.bf16 %v410, %v409
      %v415 = vld [vmem:[%s2] sm:$0xf]
      %v416 = vld [vmem:[%s2 + $0x4] sm:$0xf]
      %v417 = vld [vmem:[%s2 + $0x8] sm:$0xf]
      %v418 = vld [vmem:[%s2 + $0xc] sm:$0xf]
      %v419 = vld [vmem:[%s2 + $0x10] sm:$0xf]
      %v420 = vld [vmem:[%s2 + $0x14] sm:$0xf]
      %v421 = vld [vmem:[%s2 + $0x18] sm:$0xf]
      %v422 = vld [vmem:[%s2 + $0x1c] sm:$0xf]
      %v431 = vunpack.c.l.b16 %v415
      %v432 = vunpack.c.l.b16 %v416
      %v433 = vunpack.c.l.b16 %v417
      %v434 = vunpack.c.l.b16 %v418
      %v435 = vunpack.c.l.b16 %v419
      %v436 = vunpack.c.l.b16 %v420
      %v437 = vunpack.c.l.b16 %v421
      %v438 = vunpack.c.l.b16 %v422
      %v439 = vpack.c.b16 %v432, %v431
      %v440 = vpack.c.b16 %v434, %v433
      %v441 = vpack.c.b16 %v436, %v435
      %v442 = vpack.c.b16 %v438, %v437
      %vm447 = vcmask 523264
      %v449 = vsel %vm447, %v411, 0
      %v452 = vsel %vm447, %v412, 0
      %v455 = vsel %vm447, %v413, 0
      %v458 = vsel %vm447, %v414, 0
      %460 = vmatprep.subr.bf16.mxu0 0
      %461 = vmatpush1.bf16.msra.mxu0 %v439
      %462 = vmatprep.subr.bf16.mxu0 0
      %463 = vmatpush1.bf16.msra.mxu0 %v440
      %464 = vmatprep.subr.bf16.mxu0 0
      %465 = vmatpush1.bf16.msra.mxu0 %v441
      %466 = vmatprep.subr.bf16.mxu0 0
      %467 = vmatpush1.bf16.msra.mxu0 %v442
      %468 = vmatprep.subr.bf16.mxu0 0
      %469 = vmatpush1.bf16.msra.mxu0 0
      %470 = vmatprep.subr.bf16.mxu0 0
      %471 = vmatpush1.bf16.msra.mxu0 0
      %472 = vmatprep.subr.bf16.mxu0 0
      %473 = vmatpush1.bf16.msra.mxu0 0
      %474 = vmatprep.subr.bf16.mxu0 0
      %475 = vmatpush1.bf16.msra.mxu0 0
      %476 = vmatprep.subr.bf16.mxu0 0
      %477 = vmatpush1.bf16.msra.mxu0 0
      %478 = vmatprep.subr.bf16.mxu0 0
      %479 = vmatpush1.bf16.msra.mxu0 0
      %480 = vmatprep.subr.bf16.mxu0 0
      %481 = vmatpush1.bf16.msra.mxu0 0
      %482 = vmatprep.subr.bf16.mxu0 0
      %483 = vmatpush1.bf16.msra.mxu0 0
      %484 = vmatprep.subr.bf16.mxu0 0
      %485 = vmatpush1.bf16.msra.mxu0 0
      %486 = vmatprep.subr.bf16.mxu0 0
      %487 = vmatpush1.bf16.msra.mxu0 0
      %488 = vmatprep.subr.bf16.mxu0 0
      %489 = vmatpush1.bf16.msra.mxu0 0
      %490 = vmatprep.subr.bf16.mxu0 0
      %491 = vmatpush1.bf16.msra.mxu0 0
      %492 = vmatprep.mubr.bf16.mxu0 0
      %493 = vmatmul.mubr.bf16.gmra.mrb[0].mxu0 %v449
      %v494 = vpop.f32.mrb[0].mxu0
      %v495 = vadd.f32 0.0, %v494
      %v496 = vpop.f32.mrb[0].mxu0
      %v497 = vpop.f32.mrb[0].mxu0
      %v498 = vadd.f32 0.0, %v497
      %v499 = vpop.f32.mrb[0].mxu0
      %500 = vmatprep.mubr.bf16.mxu0 0
      %501 = vmatmul.mubr.bf16.gmra.mrb[0].mxu0 %v452
      %v502 = vpop.f32.mrb[0].mxu0
      %v503 = vadd.f32 0.0, %v502
      %v504 = vpop.f32.mrb[0].mxu0
      %v505 = vpop.f32.mrb[0].mxu0
      %v506 = vadd.f32 0.0, %v505
      %v507 = vpop.f32.mrb[0].mxu0
      %508 = vmatprep.mubr.bf16.mxu0 0
      %509 = vmatmul.mubr.bf16.gmra.mrb[0].mxu0 %v455
      %v510 = vpop.f32.mrb[0].mxu0
      %v511 = vadd.f32 0.0, %v510
      %v512 = vpop.f32.mrb[0].mxu0
      %v513 = vpop.f32.mrb[0].mxu0
      %v514 = vadd.f32 0.0, %v513
      %v515 = vpop.f32.mrb[0].mxu0
      %516 = vmatprep.mubr.bf16.mxu0 0
      %517 = vmatmul.mubr.bf16.gmra.mrb[0].mxu0 %v458
      %v518 = vpop.f32.mrb[0].mxu0
      %v519 = vadd.f32 0.0, %v518
      %v520 = vpop.f32.mrb[0].mxu0
      %v521 = vpop.f32.mrb[0].mxu0
      %v522 = vadd.f32 0.0, %v521
      %v523 = vpop.f32.mrb[0].mxu0
      %524 = vdwg.mxu0
      %v525 = vld [vmem:[%s3] sm:$0x1]
      %v526 = vlaneseq
      %v527 = vshrl.u32 %v526, 7
      %v528 = vsub.s32 0, %v527
      %v529 = vrot.slane %v525, %v528
      %v530 = vmul.f32 %v495, %v529
      %v531 = vmul.f32 %v498, %v529
      %v532 = vmul.f32 %v503, %v529
      %v533 = vmul.f32 %v506, %v529
      %v534 = vmul.f32 %v511, %v529
      %v535 = vmul.f32 %v514, %v529
      %v536 = vmul.f32 %v519, %v529
      %v537 = vmul.f32 %v522, %v529
      %v538 = vld [vmem:[%s3 + $0x1] sm:$0x1]
      %v539 = vlaneseq
      %v540 = vshrl.u32 %v539, 7
      %v541 = vsub.s32 0, %v540
      %v542 = vrot.slane %v538, %v541
      %v543 = vadd.f32 %v530, %v542
      %v544 = vadd.f32 %v531, %v542
      %v545 = vadd.f32 %v532, %v542
      %v546 = vadd.f32 %v533, %v542
      %v547 = vadd.f32 %v534, %v542
      %v548 = vadd.f32 %v535, %v542
      %v549 = vadd.f32 %v536, %v542
      %v550 = vadd.f32 %v537, %v542
      %v551 = vmax.f32 %v543, 0.0
      %v552 = vmax.f32 %v544, 0.0
      %v553 = vmax.f32 %v545, 0.0
      %v554 = vmax.f32 %v546, 0.0
      %v555 = vmax.f32 %v547, 0.0
      %v556 = vmax.f32 %v548, 0.0
      %v557 = vmax.f32 %v549, 0.0
      %v558 = vmax.f32 %v550, 0.0
      %v559 = vpack.c.bf16 %v552, %v551
      %v560 = vpack.c.bf16 %v554, %v553
      %v561 = vpack.c.bf16 %v556, %v555
      %v562 = vpack.c.bf16 %v558, %v557
      %v567 = vunpack.c.l.b16 %v559
      %v568 = vunpack.c.h.b16 %v559
      %v569 = vunpack.c.l.b16 %v560
      %v570 = vunpack.c.h.b16 %v560
      %v571 = vunpack.c.l.b16 %v561
      %v572 = vunpack.c.h.b16 %v561
      %v573 = vunpack.c.l.b16 %v562
      %v574 = vunpack.c.h.b16 %v562
      %v575 = vpack.c.b16 %v567, %v567
      %v576 = vpack.c.b16 %v568, %v568
      %v577 = vpack.c.b16 %v569, %v569
      %v578 = vpack.c.b16 %v570, %v570
      %v579 = vpack.c.b16 %v571, %v571
      %v580 = vpack.c.b16 %v572, %v572
      %v581 = vpack.c.b16 %v573, %v573
      %v582 = vpack.c.b16 %v574, %v574
      %v584 = vshrl.u32 %v575, 16
      %v586 = vrot.slane %v584, 7
      %v587 = vshll.u32 %v575, 16
      %v589 = vor.u32 %v586, %v587
      %v591 = vshrl.u32 %v576, 16
      %v593 = vrot.slane %v591, 7
      %v594 = vshll.u32 %v576, 16
      %v596 = vor.u32 %v593, %v594
      %v598 = vshrl.u32 %v577, 16
      %v600 = vrot.slane %v598, 7
      %v601 = vshll.u32 %v577, 16
      %v603 = vor.u32 %v600, %v601
      %v605 = vshrl.u32 %v578, 16
      %v607 = vrot.slane %v605, 7
      %v608 = vshll.u32 %v578, 16
      %v610 = vor.u32 %v607, %v608
      %v612 = vshrl.u32 %v579, 16
      %v614 = vrot.slane %v612, 7
      %v615 = vshll.u32 %v579, 16
      %v617 = vor.u32 %v614, %v615
      %v619 = vshrl.u32 %v580, 16
      %v621 = vrot.slane %v619, 7
      %v622 = vshll.u32 %v580, 16
      %v624 = vor.u32 %v621, %v622
      %v626 = vshrl.u32 %v581, 16
      %v628 = vrot.slane %v626, 7
      %v629 = vshll.u32 %v581, 16
      %v631 = vor.u32 %v628, %v629
      %v633 = vshrl.u32 %v582, 16
      %v635 = vrot.slane %v633, 7
      %v636 = vshll.u32 %v582, 16
      %v638 = vor.u32 %v635, %v636
      %vm647 = vcmask 1040384
      %vm648 = vsmask.f32 256
      %vm649 = vmand %vm647, %vm648
      %v650 = vsel %vm649, 0, %v589
      %v651 = vsel %vm649, 0, %v596
      %v652 = vsel %vm649, 0, %v603
      %v653 = vsel %vm649, 0, %v610
      %v654 = vsel %vm649, 0, %v617
      %v655 = vsel %vm649, 0, %v624
      %v656 = vsel %vm649, 0, %v631
      %v657 = vsel %vm649, 0, %v638
      %vm658 = vcmask 1044480
      %vm659 = vsmask.f32 4352
      %vm660 = vmand %vm658, %vm659
      %v661 = vsel %vm660, %v650, 0
      %v662 = vsel %vm660, %v651, 0
      %v663 = vsel %vm660, %v652, 0
      %v664 = vsel %vm660, %v653, 0
      %v665 = vsel %vm660, %v654, 0
      %v666 = vsel %vm660, %v655, 0
      %v667 = vsel %vm660, %v656, 0
      %v668 = vsel %vm660, %v657, 0
      %v670 = vshrl.u32 0, 16
      %v672 = vshll.u32 0, 16
      %v674 = vrot.slane %v672, 1
      %v675 = vor.u32 %v670, %v674
      %v677 = vshrl.u32 %v661, 16
      %v679 = vshll.u32 %v661, 16
      %v681 = vrot.slane %v679, 1
      %v682 = vor.u32 %v677, %v681
      %v684 = vshrl.u32 %v662, 16
      %v686 = vshll.u32 %v662, 16
      %v688 = vrot.slane %v686, 1
      %v689 = vor.u32 %v684, %v688
      %v691 = vshrl.u32 %v663, 16
      %v693 = vshll.u32 %v663, 16
      %v695 = vrot.slane %v693, 1
      %v696 = vor.u32 %v691, %v695
      %v698 = vshrl.u32 %v664, 16
      %v700 = vshll.u32 %v664, 16
      %v702 = vrot.slane %v700, 1
      %v703 = vor.u32 %v698, %v702
      %v705 = vshrl.u32 %v665, 16
      %v707 = vshll.u32 %v665, 16
      %v709 = vrot.slane %v707, 1
      %v710 = vor.u32 %v705, %v709
      %v712 = vshrl.u32 %v666, 16
      %v714 = vshll.u32 %v666, 16
      %v716 = vrot.slane %v714, 1
      %v717 = vor.u32 %v712, %v716
      %v719 = vshrl.u32 %v667, 16
      %v721 = vshll.u32 %v667, 16
      %v723 = vrot.slane %v721, 1
      %v724 = vor.u32 %v719, %v723
      %v726 = vshrl.u32 %v668, 16
      %v728 = vshll.u32 %v668, 16
      %v730 = vrot.slane %v728, 1
      %v731 = vor.u32 %v726, %v730
      %732 = vrot.lane.b32.xlu0 %v675, 64
      %v733 = vpop.permute.xlu0 %732
      %734 = vrot.lane.b32.xlu0 %v682, 64
      %v735 = vpop.permute.xlu0 %734
      %736 = vrot.lane.b32.xlu0 %v689, 64
      %v737 = vpop.permute.xlu0 %736
      %738 = vrot.lane.b32.xlu0 %v696, 64
      %v739 = vpop.permute.xlu0 %738
      %740 = vrot.lane.b32.xlu0 %v703, 64
      %v741 = vpop.permute.xlu0 %740
      %742 = vrot.lane.b32.xlu0 %v710, 64
      %v743 = vpop.permute.xlu0 %742
      %744 = vrot.lane.b32.xlu0 %v717, 64
      %v745 = vpop.permute.xlu0 %744
      %746 = vrot.lane.b32.xlu0 %v724, 64
      %v747 = vpop.permute.xlu0 %746
      %748 = vrot.lane.b32.xlu0 %v731, 64
      %v749 = vpop.permute.xlu0 %748
      %v759 = vrot.slane 0, 1
      %v760 = vrot.slane %v661, 1
      %v761 = vrot.slane %v662, 1
      %v762 = vrot.slane %v663, 1
      %v763 = vrot.slane %v664, 1
      %v764 = vrot.slane %v665, 1
      %v765 = vrot.slane %v666, 1
      %v766 = vrot.slane %v667, 1
      %v767 = vrot.slane %v668, 1
      %v769 = vsel %vm447, 0, %v733
      %v771 = vsel %vm447, %v661, %v735
      %v773 = vsel %vm447, %v662, %v737
      %v775 = vsel %vm447, %v663, %v739
      %v777 = vsel %vm447, %v664, %v741
      %v779 = vsel %vm447, %v665, %v743
      %v781 = vsel %vm447, %v666, %v745
      %v783 = vsel %vm447, %v667, %v747
      %v785 = vsel %vm447, %v668, %v749
      %v794 = vunpack.c.l.b16 %v769
      %v795 = vunpack.c.l.b16 %v759
      %v796 = vunpack.c.l.b16 %v771
      %v797 = vunpack.c.l.b16 %v760
      %v798 = vunpack.c.l.b16 %v773
      %v799 = vunpack.c.l.b16 %v761
      %v800 = vunpack.c.l.b16 %v775
      %v801 = vunpack.c.l.b16 %v762
      %v802 = vunpack.c.l.b16 %v777
      %v803 = vunpack.c.l.b16 %v763
      %v804 = vunpack.c.l.b16 %v779
      %v805 = vunpack.c.l.b16 %v764
      %v806 = vunpack.c.l.b16 %v781
      %v807 = vunpack.c.l.b16 %v765
      %v808 = vunpack.c.l.b16 %v783
      %v809 = vunpack.c.l.b16 %v766
      %v810 = vld [vmem:[%s4] sm:$0xf]
      %v811 = vld [vmem:[%s4 + $0x4] sm:$0xf]
      %v812 = vld [vmem:[%s4 + $0x8] sm:$0xf]
      %v813 = vld [vmem:[%s4 + $0xc] sm:$0xf]
      %v814 = vld [vmem:[%s4 + $0x10] sm:$0xf]
      %v815 = vld [vmem:[%s4 + $0x14] sm:$0xf]
      %v816 = vld [vmem:[%s4 + $0x18] sm:$0xf]
      %v817 = vld [vmem:[%s4 + $0x1c] sm:$0xf]
      %v818 = vld [vmem:[%s4 + $0x20] sm:$0xf]
      %v819 = vld [vmem:[%s4 + $0x24] sm:$0xf]
      %v820 = vld [vmem:[%s4 + $0x28] sm:$0xf]
      %v821 = vld [vmem:[%s4 + $0x2c] sm:$0xf]
      %v822 = vld [vmem:[%s4 + $0x30] sm:$0xf]
      %v823 = vld [vmem:[%s4 + $0x34] sm:$0xf]
      %v824 = vld [vmem:[%s4 + $0x38] sm:$0xf]
      %v825 = vld [vmem:[%s4 + $0x3c] sm:$0xf]
      %v826 = vld [vmem:[%s4 + $0x40] sm:$0xf]
      %v827 = vld [vmem:[%s4 + $0x44] sm:$0xf]
      %v828 = vld [vmem:[%s4 + $0x48] sm:$0xf]
      %v829 = vld [vmem:[%s4 + $0x4c] sm:$0xf]
      %v830 = vld [vmem:[%s4 + $0x50] sm:$0xf]
      %v831 = vld [vmem:[%s4 + $0x54] sm:$0xf]
      %v832 = vld [vmem:[%s4 + $0x58] sm:$0xf]
      %v833 = vld [vmem:[%s4 + $0x5c] sm:$0xf]
      %v835 = vunpack.c.l.b16 %v785
      %v836 = vunpack.c.l.b16 %v767
      %s837 = scalar_lea.vmem %s4, 96
      %v838 = vld [vmem:[%s837] sm:$0xf]
      %v839 = vld [vmem:[%s837 + $0x4] sm:$0xf]
      %v840 = vld [vmem:[%s837 + $0x8] sm:$0xf]
      %v841 = vld [vmem:[%s837 + $0xc] sm:$0xf]
      %v842 = vld [vmem:[%s837 + $0x10] sm:$0xf]
      %v843 = vld [vmem:[%s837 + $0x14] sm:$0xf]
      %v844 = vld [vmem:[%s837 + $0x18] sm:$0xf]
      %v845 = vld [vmem:[%s837 + $0x1c] sm:$0xf]
      %v846 = vld [vmem:[%s837 + $0x20] sm:$0xf]
      %v847 = vld [vmem:[%s837 + $0x24] sm:$0xf]
      %v848 = vld [vmem:[%s837 + $0x28] sm:$0xf]
      %v849 = vld [vmem:[%s837 + $0x2c] sm:$0xf]
      %v850 = vld [vmem:[%s837 + $0x30] sm:$0xf]
      %v851 = vld [vmem:[%s837 + $0x34] sm:$0xf]
      %v852 = vld [vmem:[%s837 + $0x38] sm:$0xf]
      %v853 = vld [vmem:[%s837 + $0x3c] sm:$0xf]
      %v854 = vld [vmem:[%s837 + $0x40] sm:$0xf]
      %v855 = vld [vmem:[%s837 + $0x44] sm:$0xf]
      %v856 = vld [vmem:[%s837 + $0x48] sm:$0xf]
      %v857 = vld [vmem:[%s837 + $0x4c] sm:$0xf]
      %v858 = vld [vmem:[%s837 + $0x50] sm:$0xf]
      %v859 = vld [vmem:[%s837 + $0x54] sm:$0xf]
      %v860 = vld [vmem:[%s837 + $0x58] sm:$0xf]
      %v861 = vld [vmem:[%s837 + $0x5c] sm:$0xf]
      %v862 = vpack.c.b16 %v798, %v796
      %v863 = vpack.c.b16 %v799, %v797
      %v864 = vpack.c.b16 %v802, %v800
      %v865 = vpack.c.b16 %v803, %v801
      %v866 = vpack.c.b16 %v806, %v804
      %v867 = vpack.c.b16 %v807, %v805
      %v868 = vpack.c.b16 %v835, %v808
      %v869 = vpack.c.b16 %v836, %v809
      %v898 = vunpack.c.l.b16 %v838
      %v899 = vunpack.c.l.b16 %v839
      %v900 = vunpack.c.l.b16 %v840
      %v901 = vunpack.c.l.b16 %v841
      %v902 = vunpack.c.l.b16 %v842
      %v903 = vunpack.c.l.b16 %v843
      %v904 = vunpack.c.l.b16 %v844
      %v905 = vunpack.c.l.b16 %v845
      %v906 = vunpack.c.l.b16 %v846
      %v907 = vunpack.c.l.b16 %v847
      %v908 = vunpack.c.l.b16 %v848
      %v909 = vunpack.c.l.b16 %v849
      %v910 = vunpack.c.l.b16 %v850
      %v911 = vunpack.c.l.b16 %v851
      %v912 = vunpack.c.l.b16 %v852
      %v913 = vunpack.c.l.b16 %v853
      %v914 = vunpack.c.l.b16 %v854
      %v915 = vunpack.c.l.b16 %v855
      %v916 = vunpack.c.l.b16 %v856
      %v917 = vunpack.c.l.b16 %v857
      %v918 = vunpack.c.l.b16 %v858
      %v919 = vunpack.c.l.b16 %v859
      %v920 = vunpack.c.l.b16 %v860
      %v921 = vunpack.c.l.b16 %v861
      %v922 = vpack.c.b16 %v899, %v898
      %v923 = vpack.c.b16 %v901, %v900
      %v924 = vpack.c.b16 %v903, %v902
      %v925 = vpack.c.b16 %v905, %v904
      %v926 = vpack.c.b16 %v907, %v906
      %v927 = vpack.c.b16 %v909, %v908
      %v928 = vpack.c.b16 %v911, %v910
      %v929 = vpack.c.b16 %v913, %v912
      %v930 = vpack.c.b16 %v915, %v914
      %v931 = vpack.c.b16 %v917, %v916
      %v932 = vpack.c.b16 %v919, %v918
      %v933 = vpack.c.b16 %v921, %v920
      %v947 = vsel %vm447, %v863, 0
      %v950 = vsel %vm447, %v865, 0
      %v953 = vsel %vm447, %v867, 0
      %v956 = vsel %vm447, %v869, 0
      %958 = vmatprep.subr.bf16.mxu0 0
      %959 = vmatpush1.bf16.msra.mxu0 %v922
      %960 = vmatprep.subr.bf16.mxu0 0
      %961 = vmatpush1.bf16.msra.mxu0 %v923
      %962 = vmatprep.subr.bf16.mxu0 0
      %963 = vmatpush1.bf16.msra.mxu0 %v924
      %964 = vmatprep.subr.bf16.mxu0 0
      %965 = vmatpush1.bf16.msra.mxu0 %v925
      %966 = vmatprep.subr.bf16.mxu0 0
      %967 = vmatpush1.bf16.msra.mxu0 %v926
      %968 = vmatprep.subr.bf16.mxu0 0
      %969 = vmatpush1.bf16.msra.mxu0 %v927
      %970 = vmatprep.subr.bf16.mxu0 0
      %971 = vmatpush1.bf16.msra.mxu0 %v928
      %972 = vmatprep.subr.bf16.mxu0 0
      %973 = vmatpush1.bf16.msra.mxu0 %v929
      %974 = vmatprep.subr.bf16.mxu0 0
      %975 = vmatpush1.bf16.msra.mxu0 %v930
      %976 = vmatprep.subr.bf16.mxu0 0
      %977 = vmatpush1.bf16.msra.mxu0 %v931
      %978 = vmatprep.subr.bf16.mxu0 0
      %979 = vmatpush1.bf16.msra.mxu0 %v932
      %980 = vmatprep.subr.bf16.mxu0 0
      %981 = vmatpush1.bf16.msra.mxu0 %v933
      %982 = vmatprep.subr.bf16.mxu0 0
      %983 = vmatpush1.bf16.msra.mxu0 0
      %984 = vmatprep.subr.bf16.mxu0 0
      %985 = vmatpush1.bf16.msra.mxu0 0
      %986 = vmatprep.subr.bf16.mxu0 0
      %987 = vmatpush1.bf16.msra.mxu0 0
      %988 = vmatprep.subr.bf16.mxu0 0
      %989 = vmatpush1.bf16.msra.mxu0 0
      %990 = vmatprep.mubr.bf16.mxu0 %v947
      %991 = vmatmul.mubr.bf16.gmra.mrb[0].mxu0 %v862
      %v992 = vpop.f32.mrb[0].mxu0
      %v993 = vadd.f32 0.0, %v992
      %v994 = vpop.f32.mrb[0].mxu0
      %v995 = vpop.f32.mrb[0].mxu0
      %v996 = vadd.f32 0.0, %v995
      %v997 = vpop.f32.mrb[0].mxu0
      %998 = vmatprep.mubr.bf16.mxu0 %v950
      %999 = vmatmul.mubr.bf16.gmra.mrb[0].mxu0 %v864
      %v1000 = vpop.f32.mrb[0].mxu0
      %v1001 = vadd.f32 0.0, %v1000
      %v1002 = vpop.f32.mrb[0].mxu0
      %v1003 = vpop.f32.mrb[0].mxu0
      %v1004 = vadd.f32 0.0, %v1003
      %v1005 = vpop.f32.mrb[0].mxu0
      %1006 = vmatprep.mubr.bf16.mxu0 %v953
      %1007 = vmatmul.mubr.bf16.gmra.mrb[0].mxu0 %v866
      %v1008 = vpop.f32.mrb[0].mxu0
      %v1009 = vadd.f32 0.0, %v1008
      %v1010 = vpop.f32.mrb[0].mxu0
      %v1011 = vpop.f32.mrb[0].mxu0
      %v1012 = vadd.f32 0.0, %v1011
      %v1013 = vpop.f32.mrb[0].mxu0
      %1014 = vmatprep.mubr.bf16.mxu0 %v956
      %1015 = vmatmul.mubr.bf16.gmra.mrb[0].mxu0 %v868
      %v1016 = vpop.f32.mrb[0].mxu0
      %v1017 = vadd.f32 0.0, %v1016
      %v1018 = vpop.f32.mrb[0].mxu0
      %v1019 = vpop.f32.mrb[0].mxu0
      %v1020 = vadd.f32 0.0, %v1019
      %v1021 = vpop.f32.mrb[0].mxu0
      %1022 = vdwg.mxu0
      %v1023 = vpack.c.b16 %v796, %v794
      %v1024 = vpack.c.b16 %v797, %v795
      %v1025 = vpack.c.b16 %v800, %v798
      %v1026 = vpack.c.b16 %v801, %v799
      %v1027 = vpack.c.b16 %v804, %v802
      %v1028 = vpack.c.b16 %v805, %v803
      %v1029 = vpack.c.b16 %v808, %v806
      %v1030 = vpack.c.b16 %v809, %v807
      %v1059 = vunpack.c.l.b16 %v810
      %v1060 = vunpack.c.l.b16 %v811
      %v1061 = vunpack.c.l.b16 %v812
      %v1062 = vunpack.c.l.b16 %v813
      %v1063 = vunpack.c.l.b16 %v814
      %v1064 = vunpack.c.l.b16 %v815
      %v1065 = vunpack.c.l.b16 %v816
      %v1066 = vunpack.c.l.b16 %v817
      %v1067 = vunpack.c.l.b16 %v818
      %v1068 = vunpack.c.l.b16 %v819
      %v1069 = vunpack.c.l.b16 %v820
      %v1070 = vunpack.c.l.b16 %v821
      %v1071 = vunpack.c.l.b16 %v822
      %v1072 = vunpack.c.l.b16 %v823
      %v1073 = vunpack.c.l.b16 %v824
      %v1074 = vunpack.c.l.b16 %v825
      %v1075 = vunpack.c.l.b16 %v826
      %v1076 = vunpack.c.l.b16 %v827
      %v1077 = vunpack.c.l.b16 %v828
      %v1078 = vunpack.c.l.b16 %v829
      %v1079 = vunpack.c.l.b16 %v830
      %v1080 = vunpack.c.l.b16 %v831
      %v1081 = vunpack.c.l.b16 %v832
      %v1082 = vunpack.c.l.b16 %v833
      %v1083 = vpack.c.b16 %v1060, %v1059
      %v1084 = vpack.c.b16 %v1062, %v1061
      %v1085 = vpack.c.b16 %v1064, %v1063
      %v1086 = vpack.c.b16 %v1066, %v1065
      %v1087 = vpack.c.b16 %v1068, %v1067
      %v1088 = vpack.c.b16 %v1070, %v1069
      %v1089 = vpack.c.b16 %v1072, %v1071
      %v1090 = vpack.c.b16 %v1074, %v1073
      %v1091 = vpack.c.b16 %v1076, %v1075
      %v1092 = vpack.c.b16 %v1078, %v1077
      %v1093 = vpack.c.b16 %v1080, %v1079
      %v1094 = vpack.c.b16 %v1082, %v1081
      %v1108 = vsel %vm447, %v1024, 0
      %v1111 = vsel %vm447, %v1026, 0
      %v1114 = vsel %vm447, %v1028, 0
      %v1117 = vsel %vm447, %v1030, 0
      %1119 = vmatprep.subr.bf16.mxu0 0
      %1120 = vmatpush1.bf16.msra.mxu0 %v1083
      %1121 = vmatprep.subr.bf16.mxu0 0
      %1122 = vmatpush1.bf16.msra.mxu0 %v1084
      %1123 = vmatprep.subr.bf16.mxu0 0
      %1124 = vmatpush1.bf16.msra.mxu0 %v1085
      %1125 = vmatprep.subr.bf16.mxu0 0
      %1126 = vmatpush1.bf16.msra.mxu0 %v1086
      %1127 = vmatprep.subr.bf16.mxu0 0
      %1128 = vmatpush1.bf16.msra.mxu0 %v1087
      %1129 = vmatprep.subr.bf16.mxu0 0
      %1130 = vmatpush1.bf16.msra.mxu0 %v1088
      %1131 = vmatprep.subr.bf16.mxu0 0
      %1132 = vmatpush1.bf16.msra.mxu0 %v1089
      %1133 = vmatprep.subr.bf16.mxu0 0
      %1134 = vmatpush1.bf16.msra.mxu0 %v1090
      %1135 = vmatprep.subr.bf16.mxu0 0
      %1136 = vmatpush1.bf16.msra.mxu0 %v1091
      %1137 = vmatprep.subr.bf16.mxu0 0
      %1138 = vmatpush1.bf16.msra.mxu0 %v1092
      %1139 = vmatprep.subr.bf16.mxu0 0
      %1140 = vmatpush1.bf16.msra.mxu0 %v1093
      %1141 = vmatprep.subr.bf16.mxu0 0
      %1142 = vmatpush1.bf16.msra.mxu0 %v1094
      %1143 = vmatprep.subr.bf16.mxu0 0
      %1144 = vmatpush1.bf16.msra.mxu0 0
      %1145 = vmatprep.subr.bf16.mxu0 0
      %1146 = vmatpush1.bf16.msra.mxu0 0
      %1147 = vmatprep.subr.bf16.mxu0 0
      %1148 = vmatpush1.bf16.msra.mxu0 0
      %1149 = vmatprep.subr.bf16.mxu0 0
      %1150 = vmatpush1.bf16.msra.mxu0 0
      %1151 = vmatprep.mubr.bf16.mxu0 %v1108
      %1152 = vmatmul.mubr.bf16.gmra.mrb[0].mxu0 %v1023
      %v1153 = vpop.f32.mrb[0].mxu0
      %v1154 = vadd.f32 %v993, %v1153
      %v1155 = vpop.f32.mrb[0].mxu0
      %v1156 = vpop.f32.mrb[0].mxu0
      %v1157 = vadd.f32 %v996, %v1156
      %v1158 = vpop.f32.mrb[0].mxu0
      %1159 = vmatprep.mubr.bf16.mxu0 %v1111
      %1160 = vmatmul.mubr.bf16.gmra.mrb[0].mxu0 %v1025
      %v1161 = vpop.f32.mrb[0].mxu0
      %v1162 = vadd.f32 %v1001, %v1161
      %v1163 = vpop.f32.mrb[0].mxu0
      %v1164 = vpop.f32.mrb[0].mxu0
      %v1165 = vadd.f32 %v1004, %v1164
      %v1166 = vpop.f32.mrb[0].mxu0
      %1167 = vmatprep.mubr.bf16.mxu0 %v1114
      %1168 = vmatmul.mubr.bf16.gmra.mrb[0].mxu0 %v1027
      %v1169 = vpop.f32.mrb[0].mxu0
      %v1170 = vadd.f32 %v1009, %v1169
      %v1171 = vpop.f32.mrb[0].mxu0
      %v1172 = vpop.f32.mrb[0].mxu0
      %v1173 = vadd.f32 %v1012, %v1172
      %v1174 = vpop.f32.mrb[0].mxu0
      %1175 = vmatprep.mubr.bf16.mxu0 %v1117
      %1176 = vmatmul.mubr.bf16.gmra.mrb[0].mxu0 %v1029
      %v1177 = vpop.f32.mrb[0].mxu0
      %v1178 = vadd.f32 %v1017, %v1177
      %v1179 = vpop.f32.mrb[0].mxu0
      %v1180 = vpop.f32.mrb[0].mxu0
      %v1181 = vadd.f32 %v1020, %v1180
      %v1182 = vpop.f32.mrb[0].mxu0
      %1183 = vdwg.mxu0
      %s1184 = scalar_lea.vmem %s4, 192
      %v1185 = vld [vmem:[%s1184] sm:$0xf]
      %v1186 = vld [vmem:[%s1184 + $0x4] sm:$0xf]
      %v1187 = vld [vmem:[%s1184 + $0x8] sm:$0xf]
      %v1188 = vld [vmem:[%s1184 + $0xc] sm:$0xf]
      %v1189 = vld [vmem:[%s1184 + $0x10] sm:$0xf]
      %v1190 = vld [vmem:[%s1184 + $0x14] sm:$0xf]
      %v1191 = vld [vmem:[%s1184 + $0x18] sm:$0xf]
      %v1192 = vld [vmem:[%s1184 + $0x1c] sm:$0xf]
      %v1193 = vld [vmem:[%s1184 + $0x20] sm:$0xf]
      %v1194 = vld [vmem:[%s1184 + $0x24] sm:$0xf]
      %v1195 = vld [vmem:[%s1184 + $0x28] sm:$0xf]
      %v1196 = vld [vmem:[%s1184 + $0x2c] sm:$0xf]
      %v1197 = vld [vmem:[%s1184 + $0x30] sm:$0xf]
      %v1198 = vld [vmem:[%s1184 + $0x34] sm:$0xf]
      %v1199 = vld [vmem:[%s1184 + $0x38] sm:$0xf]
      %v1200 = vld [vmem:[%s1184 + $0x3c] sm:$0xf]
      %v1201 = vld [vmem:[%s1184 + $0x40] sm:$0xf]
      %v1202 = vld [vmem:[%s1184 + $0x44] sm:$0xf]
      %v1203 = vld [vmem:[%s1184 + $0x48] sm:$0xf]
      %v1204 = vld [vmem:[%s1184 + $0x4c] sm:$0xf]
      %v1205 = vld [vmem:[%s1184 + $0x50] sm:$0xf]
      %v1206 = vld [vmem:[%s1184 + $0x54] sm:$0xf]
      %v1207 = vld [vmem:[%s1184 + $0x58] sm:$0xf]
      %v1208 = vld [vmem:[%s1184 + $0x5c] sm:$0xf]
      %v1209 = vpack.c.b16 %v794, %v835
      %v1210 = vpack.c.b16 %v795, %v836
      %v1236 = vunpack.c.l.b16 %v1185
      %v1237 = vunpack.c.l.b16 %v1186
      %v1238 = vunpack.c.l.b16 %v1187
      %v1239 = vunpack.c.l.b16 %v1188
      %v1240 = vunpack.c.l.b16 %v1189
      %v1241 = vunpack.c.l.b16 %v1190
      %v1242 = vunpack.c.l.b16 %v1191
      %v1243 = vunpack.c.l.b16 %v1192
      %v1244 = vunpack.c.l.b16 %v1193
      %v1245 = vunpack.c.l.b16 %v1194
      %v1246 = vunpack.c.l.b16 %v1195
      %v1247 = vunpack.c.l.b16 %v1196
      %v1248 = vunpack.c.l.b16 %v1197
      %v1249 = vunpack.c.l.b16 %v1198
      %v1250 = vunpack.c.l.b16 %v1199
      %v1251 = vunpack.c.l.b16 %v1200
      %v1252 = vunpack.c.l.b16 %v1201
      %v1253 = vunpack.c.l.b16 %v1202
      %v1254 = vunpack.c.l.b16 %v1203
      %v1255 = vunpack.c.l.b16 %v1204
      %v1256 = vunpack.c.l.b16 %v1205
      %v1257 = vunpack.c.l.b16 %v1206
      %v1258 = vunpack.c.l.b16 %v1207
      %v1259 = vunpack.c.l.b16 %v1208
      %v1260 = vpack.c.b16 %v1237, %v1236
      %v1261 = vpack.c.b16 %v1239, %v1238
      %v1262 = vpack.c.b16 %v1241, %v1240
      %v1263 = vpack.c.b16 %v1243, %v1242
      %v1264 = vpack.c.b16 %v1245, %v1244
      %v1265 = vpack.c.b16 %v1247, %v1246
      %v1266 = vpack.c.b16 %v1249, %v1248
      %v1267 = vpack.c.b16 %v1251, %v1250
      %v1268 = vpack.c.b16 %v1253, %v1252
      %v1269 = vpack.c.b16 %v1255, %v1254
      %v1270 = vpack.c.b16 %v1257, %v1256
      %v1271 = vpack.c.b16 %v1259, %v1258
      %v1285 = vsel %vm447, %v1210, 0
      %1287 = vmatprep.subr.bf16.mxu0 0
      %1288 = vmatpush1.bf16.msra.mxu0 %v1260
      %1289 = vmatprep.subr.bf16.mxu0 0
      %1290 = vmatpush1.bf16.msra.mxu0 %v1261
      %1291 = vmatprep.subr.bf16.mxu0 0
      %1292 = vmatpush1.bf16.msra.mxu0 %v1262
      %1293 = vmatprep.subr.bf16.mxu0 0
      %1294 = vmatpush1.bf16.msra.mxu0 %v1263
      %1295 = vmatprep.subr.bf16.mxu0 0
      %1296 = vmatpush1.bf16.msra.mxu0 %v1264
      %1297 = vmatprep.subr.bf16.mxu0 0
      %1298 = vmatpush1.bf16.msra.mxu0 %v1265
      %1299 = vmatprep.subr.bf16.mxu0 0
      %1300 = vmatpush1.bf16.msra.mxu0 %v1266
      %1301 = vmatprep.subr.bf16.mxu0 0
      %1302 = vmatpush1.bf16.msra.mxu0 %v1267
      %1303 = vmatprep.subr.bf16.mxu0 0
      %1304 = vmatpush1.bf16.msra.mxu0 %v1268
      %1305 = vmatprep.subr.bf16.mxu0 0
      %1306 = vmatpush1.bf16.msra.mxu0 %v1269
      %1307 = vmatprep.subr.bf16.mxu0 0
      %1308 = vmatpush1.bf16.msra.mxu0 %v1270
      %1309 = vmatprep.subr.bf16.mxu0 0
      %1310 = vmatpush1.bf16.msra.mxu0 %v1271
      %1311 = vmatprep.subr.bf16.mxu0 0
      %1312 = vmatpush1.bf16.msra.mxu0 0
      %1313 = vmatprep.subr.bf16.mxu0 0
      %1314 = vmatpush1.bf16.msra.mxu0 0
      %1315 = vmatprep.subr.bf16.mxu0 0
      %1316 = vmatpush1.bf16.msra.mxu0 0
      %1317 = vmatprep.subr.bf16.mxu0 0
      %1318 = vmatpush1.bf16.msra.mxu0 0
      %1319 = vmatprep.mubr.bf16.mxu0 %v1111
      %1320 = vmatmul.mubr.bf16.gmra.mrb[0].mxu0 %v1025
      %v1321 = vpop.f32.mrb[0].mxu0
      %v1322 = vadd.f32 0.0, %v1321
      %v1323 = vpop.f32.mrb[0].mxu0
      %v1324 = vpop.f32.mrb[0].mxu0
      %v1325 = vadd.f32 0.0, %v1324
      %v1326 = vpop.f32.mrb[0].mxu0
      %1327 = vmatprep.mubr.bf16.mxu0 %v1114
      %1328 = vmatmul.mubr.bf16.gmra.mrb[0].mxu0 %v1027
      %v1329 = vpop.f32.mrb[0].mxu0
      %v1330 = vadd.f32 0.0, %v1329
      %v1331 = vpop.f32.mrb[0].mxu0
      %v1332 = vpop.f32.mrb[0].mxu0
      %v1333 = vadd.f32 0.0, %v1332
      %v1334 = vpop.f32.mrb[0].mxu0
      %1335 = vmatprep.mubr.bf16.mxu0 %v1117
      %1336 = vmatmul.mubr.bf16.gmra.mrb[0].mxu0 %v1029
      %v1337 = vpop.f32.mrb[0].mxu0
      %v1338 = vadd.f32 0.0, %v1337
      %v1339 = vpop.f32.mrb[0].mxu0
      %v1340 = vpop.f32.mrb[0].mxu0
      %v1341 = vadd.f32 0.0, %v1340
      %v1342 = vpop.f32.mrb[0].mxu0
      %1343 = vmatprep.mubr.bf16.mxu0 %v1285
      %1344 = vmatmul.mubr.bf16.gmra.mrb[0].mxu0 %v1209
      %v1345 = vpop.f32.mrb[0].mxu0
      %v1346 = vadd.f32 0.0, %v1345
      %v1347 = vpop.f32.mrb[0].mxu0
      %v1348 = vpop.f32.mrb[0].mxu0
      %v1349 = vadd.f32 0.0, %v1348
      %v1350 = vpop.f32.mrb[0].mxu0
      %1351 = vdwg.mxu0
      %v1352 = vadd.f32 %v1154, %v1322
      %v1353 = vadd.f32 %v1157, %v1325
      %v1354 = vadd.f32 %v1162, %v1330
      %v1355 = vadd.f32 %v1165, %v1333
      %v1356 = vadd.f32 %v1170, %v1338
      %v1357 = vadd.f32 %v1173, %v1341
      %v1358 = vadd.f32 %v1178, %v1346
      %v1359 = vadd.f32 %v1181, %v1349
      %v1360 = vld [vmem:[%s5] sm:$0x1]
      %v1361 = vlaneseq
      %v1362 = vshrl.u32 %v1361, 7
      %v1363 = vsub.s32 0, %v1362
      %v1364 = vrot.slane %v1360, %v1363
      %v1365 = vmul.f32 %v1352, %v1364
      %v1366 = vmul.f32 %v1353, %v1364
      %v1367 = vmul.f32 %v1354, %v1364
      %v1368 = vmul.f32 %v1355, %v1364
      %v1369 = vmul.f32 %v1356, %v1364
      %v1370 = vmul.f32 %v1357, %v1364
      %v1371 = vmul.f32 %v1358, %v1364
      %v1372 = vmul.f32 %v1359, %v1364
      %v1373 = vld [vmem:[%s5 + $0x1] sm:$0x1]
      %v1374 = vlaneseq
      %v1375 = vshrl.u32 %v1374, 7
      %v1376 = vsub.s32 0, %v1375
      %v1377 = vrot.slane %v1373, %v1376
      %v1378 = vadd.f32 %v1365, %v1377
      %v1379 = vadd.f32 %v1366, %v1377
      %v1380 = vadd.f32 %v1367, %v1377
      %v1381 = vadd.f32 %v1368, %v1377
      %v1382 = vadd.f32 %v1369, %v1377
      %v1383 = vadd.f32 %v1370, %v1377
      %v1384 = vadd.f32 %v1371, %v1377
      %v1385 = vadd.f32 %v1372, %v1377
      %v1386 = vmax.f32 %v1378, 0.0
      %v1387 = vmax.f32 %v1379, 0.0
      %v1388 = vmax.f32 %v1380, 0.0
      %v1389 = vmax.f32 %v1381, 0.0
      %v1390 = vmax.f32 %v1382, 0.0
      %v1391 = vmax.f32 %v1383, 0.0
      %v1392 = vmax.f32 %v1384, 0.0
      %v1393 = vmax.f32 %v1385, 0.0
      %v1394 = vpack.c.bf16 %v1387, %v1386
      %v1395 = vpack.c.bf16 %v1389, %v1388
      %v1396 = vpack.c.bf16 %v1391, %v1390
      %v1397 = vpack.c.bf16 %v1393, %v1392
      %v1398 = vld [vmem:[%s6] sm:$0xf]
      %v1399 = vld [vmem:[%s6 + $0x4] sm:$0xf]
      %v1400 = vld [vmem:[%s6 + $0x8] sm:$0xf]
      %v1401 = vld [vmem:[%s6 + $0xc] sm:$0xf]
      %v1402 = vld [vmem:[%s6 + $0x10] sm:$0xf]
      %v1403 = vld [vmem:[%s6 + $0x14] sm:$0xf]
      %v1404 = vld [vmem:[%s6 + $0x18] sm:$0xf]
      %v1405 = vld [vmem:[%s6 + $0x1c] sm:$0xf]
      %v1406 = vld [vmem:[%s7] sm:$0x1]
      %v1408 = vlaneseq
      %v1409 = vshrl.u32 %v1408, 7
      %v1410 = vsub.s32 0, %v1409
      %v1411 = vrot.slane %v1406, %v1410
      %v1421 = vunpack.c.l.b16 %v1398
      %v1422 = vunpack.c.l.b16 %v1399
      %v1423 = vunpack.c.l.b16 %v1400
      %v1424 = vunpack.c.l.b16 %v1401
      %v1425 = vunpack.c.l.b16 %v1402
      %v1426 = vunpack.c.l.b16 %v1403
      %v1427 = vunpack.c.l.b16 %v1404
      %v1428 = vunpack.c.l.b16 %v1405
      %v1429 = vpack.c.b16 %v1422, %v1421
      %v1430 = vpack.c.b16 %v1424, %v1423
      %v1431 = vpack.c.b16 %v1426, %v1425
      %v1432 = vpack.c.b16 %v1428, %v1427
      %v1438 = vsel %vm447, %v1394, 0
      %v1441 = vsel %vm447, %v1395, 0
      %v1444 = vsel %vm447, %v1396, 0
      %v1447 = vsel %vm447, %v1397, 0
      %1449 = vmatprep.subr.bf16.mxu0 0
      %1450 = vmatpush1.bf16.msra.mxu0 %v1429
      %1451 = vmatprep.subr.bf16.mxu0 0
      %1452 = vmatpush1.bf16.msra.mxu0 %v1430
      %1453 = vmatprep.subr.bf16.mxu0 0
      %1454 = vmatpush1.bf16.msra.mxu0 %v1431
      %1455 = vmatprep.subr.bf16.mxu0 0
      %1456 = vmatpush1.bf16.msra.mxu0 %v1432
      %1457 = vmatprep.subr.bf16.mxu0 0
      %1458 = vmatpush1.bf16.msra.mxu0 0
      %1459 = vmatprep.subr.bf16.mxu0 0
      %1460 = vmatpush1.bf16.msra.mxu0 0
      %1461 = vmatprep.subr.bf16.mxu0 0
      %1462 = vmatpush1.bf16.msra.mxu0 0
      %1463 = vmatprep.subr.bf16.mxu0 0
      %1464 = vmatpush1.bf16.msra.mxu0 0
      %1465 = vmatprep.subr.bf16.mxu0 0
      %1466 = vmatpush1.bf16.msra.mxu0 0
      %1467 = vmatprep.subr.bf16.mxu0 0
      %1468 = vmatpush1.bf16.msra.mxu0 0
      %1469 = vmatprep.subr.bf16.mxu0 0
      %1470 = vmatpush1.bf16.msra.mxu0 0
      %1471 = vmatprep.subr.bf16.mxu0 0
      %1472 = vmatpush1.bf16.msra.mxu0 0
      %1473 = vmatprep.subr.bf16.mxu0 0
      %1474 = vmatpush1.bf16.msra.mxu0 0
      %1475 = vmatprep.subr.bf16.mxu0 0
      %1476 = vmatpush1.bf16.msra.mxu0 0
      %1477 = vmatprep.subr.bf16.mxu0 0
      %1478 = vmatpush1.bf16.msra.mxu0 0
      %1479 = vmatprep.subr.bf16.mxu0 0
      %1480 = vmatpush1.bf16.msra.mxu0 0
      %1481 = vmatprep.mubr.bf16.mxu0 0
      %1482 = vmatmul.mubr.bf16.gmra.mrb[0].mxu0 %v1438
      %v1483 = vpop.f32.mrb[0].mxu0
      %v1484 = vadd.f32 %v1411, %v1483
      %v1485 = vpop.f32.mrb[0].mxu0
      %v1486 = vpop.f32.mrb[0].mxu0
      %v1487 = vadd.f32 %v1411, %v1486
      %v1488 = vpop.f32.mrb[0].mxu0
      %1489 = vmatprep.mubr.bf16.mxu0 0
      %1490 = vmatmul.mubr.bf16.gmra.mrb[0].mxu0 %v1441
      %v1491 = vpop.f32.mrb[0].mxu0
      %v1492 = vadd.f32 %v1411, %v1491
      %v1493 = vpop.f32.mrb[0].mxu0
      %v1494 = vpop.f32.mrb[0].mxu0
      %v1495 = vadd.f32 %v1411, %v1494
      %v1496 = vpop.f32.mrb[0].mxu0
      %1497 = vmatprep.mubr.bf16.mxu0 0
      %1498 = vmatmul.mubr.bf16.gmra.mrb[0].mxu0 %v1444
      %v1499 = vpop.f32.mrb[0].mxu0
      %v1500 = vadd.f32 %v1411, %v1499
      %v1501 = vpop.f32.mrb[0].mxu0
      %v1502 = vpop.f32.mrb[0].mxu0
      %v1503 = vadd.f32 %v1411, %v1502
      %v1504 = vpop.f32.mrb[0].mxu0
      %1505 = vmatprep.mubr.bf16.mxu0 0
      %1506 = vmatmul.mubr.bf16.gmra.mrb[0].mxu0 %v1447
      %v1507 = vpop.f32.mrb[0].mxu0
      %v1508 = vadd.f32 %v1411, %v1507
      %v1509 = vpop.f32.mrb[0].mxu0
      %v1510 = vpop.f32.mrb[0].mxu0
      %v1511 = vadd.f32 %v1411, %v1510
      %v1512 = vpop.f32.mrb[0].mxu0
      %1513 = vdwg.mxu0
      %v1514 = vld [vmem:[%s8] sm:$0xf]
      %v1515 = vld [vmem:[%s8 + $0x4] sm:$0xf]
      %v1516 = vld [vmem:[%s8 + $0x8] sm:$0xf]
      %v1517 = vld [vmem:[%s8 + $0xc] sm:$0xf]
      %v1518 = vld [vmem:[%s8 + $0x10] sm:$0xf]
      %v1519 = vld [vmem:[%s8 + $0x14] sm:$0xf]
      %v1520 = vld [vmem:[%s8 + $0x18] sm:$0xf]
      %v1521 = vld [vmem:[%s8 + $0x1c] sm:$0xf]
      %v1522 = vld [vmem:[%s9] sm:$0x1]
      %v1524 = vlaneseq
      %v1525 = vshrl.u32 %v1524, 7
      %v1526 = vsub.s32 0, %v1525
      %v1527 = vrot.slane %v1522, %v1526
      %v1537 = vunpack.c.l.b16 %v361
      %v1538 = vunpack.c.l.b16 %v362
      %v1539 = vunpack.c.l.b16 %v363
      %v1540 = vunpack.c.l.b16 %v364
      %v1541 = vunpack.c.l.b16 %v365
      %v1542 = vunpack.c.l.b16 %v366
      %v1543 = vunpack.c.l.b16 %v367
      %v1544 = vunpack.c.l.b16 %v368
      %v1545 = vpack.c.b16 %v1538, %v1537
      %v1546 = vpack.c.b16 %v1540, %v1539
      %v1547 = vpack.c.b16 %v1542, %v1541
      %v1548 = vpack.c.b16 %v1544, %v1543
      %v1557 = vunpack.c.l.b16 %v1514
      %v1558 = vunpack.c.l.b16 %v1515
      %v1559 = vunpack.c.l.b16 %v1516
      %v1560 = vunpack.c.l.b16 %v1517
      %v1561 = vunpack.c.l.b16 %v1518
      %v1562 = vunpack.c.l.b16 %v1519
      %v1563 = vunpack.c.l.b16 %v1520
      %v1564 = vunpack.c.l.b16 %v1521
      %v1565 = vpack.c.b16 %v1558, %v1557
      %v1566 = vpack.c.b16 %v1560, %v1559
      %v1567 = vpack.c.b16 %v1562, %v1561
      %v1568 = vpack.c.b16 %v1564, %v1563
      %v1574 = vsel %vm447, %v1545, 0
      %v1577 = vsel %vm447, %v1546, 0
      %v1580 = vsel %vm447, %v1547, 0
      %v1583 = vsel %vm447, %v1548, 0
      %1585 = vmatprep.subr.bf16.mxu0 0
      %1586 = vmatpush1.bf16.msra.mxu0 %v1565
      %1587 = vmatprep.subr.bf16.mxu0 0
      %1588 = vmatpush1.bf16.msra.mxu0 %v1566
      %1589 = vmatprep.subr.bf16.mxu0 0
      %1590 = vmatpush1.bf16.msra.mxu0 %v1567
      %1591 = vmatprep.subr.bf16.mxu0 0
      %1592 = vmatpush1.bf16.msra.mxu0 %v1568
      %1593 = vmatprep.subr.bf16.mxu0 0
      %1594 = vmatpush1.bf16.msra.mxu0 0
      %1595 = vmatprep.subr.bf16.mxu0 0
      %1596 = vmatpush1.bf16.msra.mxu0 0
      %1597 = vmatprep.subr.bf16.mxu0 0
      %1598 = vmatpush1.bf16.msra.mxu0 0
      %1599 = vmatprep.subr.bf16.mxu0 0
      %1600 = vmatpush1.bf16.msra.mxu0 0
      %1601 = vmatprep.subr.bf16.mxu0 0
      %1602 = vmatpush1.bf16.msra.mxu0 0
      %1603 = vmatprep.subr.bf16.mxu0 0
      %1604 = vmatpush1.bf16.msra.mxu0 0
      %1605 = vmatprep.subr.bf16.mxu0 0
      %1606 = vmatpush1.bf16.msra.mxu0 0
      %1607 = vmatprep.subr.bf16.mxu0 0
      %1608 = vmatpush1.bf16.msra.mxu0 0
      %1609 = vmatprep.subr.bf16.mxu0 0
      %1610 = vmatpush1.bf16.msra.mxu0 0
      %1611 = vmatprep.subr.bf16.mxu0 0
      %1612 = vmatpush1.bf16.msra.mxu0 0
      %1613 = vmatprep.subr.bf16.mxu0 0
      %1614 = vmatpush1.bf16.msra.mxu0 0
      %1615 = vmatprep.subr.bf16.mxu0 0
      %1616 = vmatpush1.bf16.msra.mxu0 0
      %1617 = vmatprep.mubr.bf16.mxu0 0
      %1618 = vmatmul.mubr.bf16.gmra.mrb[0].mxu0 %v1574
      %v1619 = vpop.f32.mrb[0].mxu0
      %v1620 = vadd.f32 %v1527, %v1619
      %v1621 = vpop.f32.mrb[0].mxu0
      %v1622 = vpop.f32.mrb[0].mxu0
      %v1623 = vadd.f32 %v1527, %v1622
      %v1624 = vpop.f32.mrb[0].mxu0
      %1625 = vmatprep.mubr.bf16.mxu0 0
      %1626 = vmatmul.mubr.bf16.gmra.mrb[0].mxu0 %v1577
      %v1627 = vpop.f32.mrb[0].mxu0
      %v1628 = vadd.f32 %v1527, %v1627
      %v1629 = vpop.f32.mrb[0].mxu0
      %v1630 = vpop.f32.mrb[0].mxu0
      %v1631 = vadd.f32 %v1527, %v1630
      %v1632 = vpop.f32.mrb[0].mxu0
      %1633 = vmatprep.mubr.bf16.mxu0 0
      %1634 = vmatmul.mubr.bf16.gmra.mrb[0].mxu0 %v1580
      %v1635 = vpop.f32.mrb[0].mxu0
      %v1636 = vadd.f32 %v1527, %v1635
      %v1637 = vpop.f32.mrb[0].mxu0
      %v1638 = vpop.f32.mrb[0].mxu0
      %v1639 = vadd.f32 %v1527, %v1638
      %v1640 = vpop.f32.mrb[0].mxu0
      %1641 = vmatprep.mubr.bf16.mxu0 0
      %1642 = vmatmul.mubr.bf16.gmra.mrb[0].mxu0 %v1583
      %v1643 = vpop.f32.mrb[0].mxu0
      %v1644 = vadd.f32 %v1527, %v1643
      %v1645 = vpop.f32.mrb[0].mxu0
      %v1646 = vpop.f32.mrb[0].mxu0
      %v1647 = vadd.f32 %v1527, %v1646
      %v1648 = vpop.f32.mrb[0].mxu0
      %1649 = vdwg.mxu0
      %v1650 = vadd.f32 %v1484, %v1620
      %v1651 = vadd.f32 %v1487, %v1623
      %v1652 = vadd.f32 %v1492, %v1628
      %v1653 = vadd.f32 %v1495, %v1631
      %v1654 = vadd.f32 %v1500, %v1636
      %v1655 = vadd.f32 %v1503, %v1639
      %v1656 = vadd.f32 %v1508, %v1644
      %v1657 = vadd.f32 %v1511, %v1647
      %v1666 = vcombine.high %v1650, %v1650
      %v1668 = vunpack.c.l.s4 1983009808
      %v1669 = vunpack.c.0.s8 %v1668
      %v1670 = vlaneseq
      %v1671 = vshrl.u32 %v1670, 7
      %v1672 = vsub.s32 %v1669, %v1671
      %v1673 = vrot.slane %v1650, %v1672
      %v1675 = vunpack.c.l.s4 1983009808
      %v1676 = vunpack.c.0.s8 %v1675
      %v1677 = vlaneseq
      %v1678 = vshrl.u32 %v1677, 7
      %v1679 = vsub.s32 %v1676, %v1678
      %v1680 = vrot.slane %v1666, %v1679
      %v1681 = vcombine.high %v1673, %v1673
      %v1682 = vcombine.high %v1680, %v1680
      %v1683 = vcombine.high %v1651, %v1651
      %v1685 = vunpack.c.l.s4 1983009808
      %v1686 = vunpack.c.0.s8 %v1685
      %v1687 = vlaneseq
      %v1688 = vshrl.u32 %v1687, 7
      %v1689 = vsub.s32 %v1686, %v1688
      %v1690 = vrot.slane %v1651, %v1689
      %v1692 = vunpack.c.l.s4 1983009808
      %v1693 = vunpack.c.0.s8 %v1692
      %v1694 = vlaneseq
      %v1695 = vshrl.u32 %v1694, 7
      %v1696 = vsub.s32 %v1693, %v1695
      %v1697 = vrot.slane %v1683, %v1696
      %v1698 = vcombine.high %v1690, %v1690
      %v1699 = vcombine.high %v1697, %v1697
      %v1700 = vcombine.high %v1652, %v1652
      %v1702 = vunpack.c.l.s4 1983009808
      %v1703 = vunpack.c.0.s8 %v1702
      %v1704 = vlaneseq
      %v1705 = vshrl.u32 %v1704, 7
      %v1706 = vsub.s32 %v1703, %v1705
      %v1707 = vrot.slane %v1652, %v1706
      %v1709 = vunpack.c.l.s4 1983009808
      %v1710 = vunpack.c.0.s8 %v1709
      %v1711 = vlaneseq
      %v1712 = vshrl.u32 %v1711, 7
      %v1713 = vsub.s32 %v1710, %v1712
      %v1714 = vrot.slane %v1700, %v1713
      %v1715 = vcombine.high %v1707, %v1707
      %v1716 = vcombine.high %v1714, %v1714
      %v1717 = vcombine.high %v1653, %v1653
      %v1719 = vunpack.c.l.s4 1983009808
      %v1720 = vunpack.c.0.s8 %v1719
      %v1721 = vlaneseq
      %v1722 = vshrl.u32 %v1721, 7
      %v1723 = vsub.s32 %v1720, %v1722
      %v1724 = vrot.slane %v1653, %v1723
      %v1726 = vunpack.c.l.s4 1983009808
      %v1727 = vunpack.c.0.s8 %v1726
      %v1728 = vlaneseq
      %v1729 = vshrl.u32 %v1728, 7
      %v1730 = vsub.s32 %v1727, %v1729
      %v1731 = vrot.slane %v1717, %v1730
      %v1732 = vcombine.high %v1724, %v1724
      %v1733 = vcombine.high %v1731, %v1731
      %v1734 = vcombine.high %v1654, %v1654
      %v1736 = vunpack.c.l.s4 1983009808
      %v1737 = vunpack.c.0.s8 %v1736
      %v1738 = vlaneseq
      %v1739 = vshrl.u32 %v1738, 7
      %v1740 = vsub.s32 %v1737, %v1739
      %v1741 = vrot.slane %v1654, %v1740
      %v1743 = vunpack.c.l.s4 1983009808
      %v1744 = vunpack.c.0.s8 %v1743
      %v1745 = vlaneseq
      %v1746 = vshrl.u32 %v1745, 7
      %v1747 = vsub.s32 %v1744, %v1746
      %v1748 = vrot.slane %v1734, %v1747
      %v1749 = vcombine.high %v1741, %v1741
      %v1750 = vcombine.high %v1748, %v1748
      %v1751 = vcombine.high %v1655, %v1655
      %v1753 = vunpack.c.l.s4 1983009808
      %v1754 = vunpack.c.0.s8 %v1753
      %v1755 = vlaneseq
      %v1756 = vshrl.u32 %v1755, 7
      %v1757 = vsub.s32 %v1754, %v1756
      %v1758 = vrot.slane %v1655, %v1757
      %v1760 = vunpack.c.l.s4 1983009808
      %v1761 = vunpack.c.0.s8 %v1760
      %v1762 = vlaneseq
      %v1763 = vshrl.u32 %v1762, 7
      %v1764 = vsub.s32 %v1761, %v1763
      %v1765 = vrot.slane %v1751, %v1764
      %v1766 = vcombine.high %v1758, %v1758
      %v1767 = vcombine.high %v1765, %v1765
      %v1768 = vcombine.high %v1656, %v1656
      %v1770 = vunpack.c.l.s4 1983009808
      %v1771 = vunpack.c.0.s8 %v1770
      %v1772 = vlaneseq
      %v1773 = vshrl.u32 %v1772, 7
      %v1774 = vsub.s32 %v1771, %v1773
      %v1775 = vrot.slane %v1656, %v1774
      %v1777 = vunpack.c.l.s4 1983009808
      %v1778 = vunpack.c.0.s8 %v1777
      %v1779 = vlaneseq
      %v1780 = vshrl.u32 %v1779, 7
      %v1781 = vsub.s32 %v1778, %v1780
      %v1782 = vrot.slane %v1768, %v1781
      %v1783 = vcombine.high %v1775, %v1775
      %v1784 = vcombine.high %v1782, %v1782
      %v1785 = vcombine.high %v1657, %v1657
      %v1787 = vunpack.c.l.s4 1983009808
      %v1788 = vunpack.c.0.s8 %v1787
      %v1789 = vlaneseq
      %v1790 = vshrl.u32 %v1789, 7
      %v1791 = vsub.s32 %v1788, %v1790
      %v1792 = vrot.slane %v1657, %v1791
      %v1794 = vunpack.c.l.s4 1983009808
      %v1795 = vunpack.c.0.s8 %v1794
      %v1796 = vlaneseq
      %v1797 = vshrl.u32 %v1796, 7
      %v1798 = vsub.s32 %v1795, %v1797
      %v1799 = vrot.slane %v1785, %v1798
      %v1800 = vcombine.high %v1792, %v1792
      %v1801 = vcombine.high %v1799, %v1799
      %v1834 = vrot.slane %v1673, 7
      %v1835 = vrot.slane %v1834, 2
      %v1836 = vrot.slane %v1681, 7
      %v1837 = vrot.slane %v1836, 2
      %v1838 = vrot.slane %v1680, 7
      %v1839 = vrot.slane %v1838, 2
      %v1840 = vrot.slane %v1682, 7
      %v1841 = vrot.slane %v1840, 2
      %v1842 = vrot.slane %v1690, 7
      %v1843 = vrot.slane %v1842, 2
      %v1844 = vrot.slane %v1698, 7
      %v1845 = vrot.slane %v1844, 2
      %v1846 = vrot.slane %v1697, 7
      %v1847 = vrot.slane %v1846, 2
      %v1848 = vrot.slane %v1699, 7
      %v1849 = vrot.slane %v1848, 2
      %v1850 = vrot.slane %v1707, 7
      %v1851 = vrot.slane %v1850, 2
      %v1852 = vrot.slane %v1715, 7
      %v1853 = vrot.slane %v1852, 2
      %v1854 = vrot.slane %v1714, 7
      %v1855 = vrot.slane %v1854, 2
      %v1856 = vrot.slane %v1716, 7
      %v1857 = vrot.slane %v1856, 2
      %v1858 = vrot.slane %v1724, 7
      %v1859 = vrot.slane %v1858, 2
      %v1860 = vrot.slane %v1732, 7
      %v1861 = vrot.slane %v1860, 2
      %v1862 = vrot.slane %v1731, 7
      %v1863 = vrot.slane %v1862, 2
      %v1864 = vrot.slane %v1733, 7
      %v1865 = vrot.slane %v1864, 2
      %v1866 = vrot.slane %v1741, 7
      %v1867 = vrot.slane %v1866, 2
      %v1868 = vrot.slane %v1749, 7
      %v1869 = vrot.slane %v1868, 2
      %v1870 = vrot.slane %v1748, 7
      %v1871 = vrot.slane %v1870, 2
      %v1872 = vrot.slane %v1750, 7
      %v1873 = vrot.slane %v1872, 2
      %v1874 = vrot.slane %v1758, 7
      %v1875 = vrot.slane %v1874, 2
      %v1876 = vrot.slane %v1766, 7
      %v1877 = vrot.slane %v1876, 2
      %v1878 = vrot.slane %v1765, 7
      %v1879 = vrot.slane %v1878, 2
      %v1880 = vrot.slane %v1767, 7
      %v1881 = vrot.slane %v1880, 2
      %v1882 = vrot.slane %v1775, 7
      %v1883 = vrot.slane %v1882, 2
      %v1884 = vrot.slane %v1783, 7
      %v1885 = vrot.slane %v1884, 2
      %v1886 = vrot.slane %v1782, 7
      %v1887 = vrot.slane %v1886, 2
      %v1888 = vrot.slane %v1784, 7
      %v1889 = vrot.slane %v1888, 2
      %v1890 = vrot.slane %v1792, 7
      %v1891 = vrot.slane %v1890, 2
      %v1892 = vrot.slane %v1800, 7
      %v1893 = vrot.slane %v1892, 2
      %v1894 = vrot.slane %v1799, 7
      %v1895 = vrot.slane %v1894, 2
      %v1896 = vrot.slane %v1801, 7
      %v1897 = vrot.slane %v1896, 2
      %v1930 = vmax.f32 %v1673, %v1835
      %v1931 = vmax.f32 %v1681, %v1837
      %v1932 = vmax.f32 %v1680, %v1839
      %v1933 = vmax.f32 %v1682, %v1841
      %v1934 = vmax.f32 %v1690, %v1843
      %v1935 = vmax.f32 %v1698, %v1845
      %v1936 = vmax.f32 %v1697, %v1847
      %v1937 = vmax.f32 %v1699, %v1849
      %v1938 = vmax.f32 %v1707, %v1851
      %v1939 = vmax.f32 %v1715, %v1853
      %v1940 = vmax.f32 %v1714, %v1855
      %v1941 = vmax.f32 %v1716, %v1857
      %v1942 = vmax.f32 %v1724, %v1859
      %v1943 = vmax.f32 %v1732, %v1861
      %v1944 = vmax.f32 %v1731, %v1863
      %v1945 = vmax.f32 %v1733, %v1865
      %v1946 = vmax.f32 %v1741, %v1867
      %v1947 = vmax.f32 %v1749, %v1869
      %v1948 = vmax.f32 %v1748, %v1871
      %v1949 = vmax.f32 %v1750, %v1873
      %v1950 = vmax.f32 %v1758, %v1875
      %v1951 = vmax.f32 %v1766, %v1877
      %v1952 = vmax.f32 %v1765, %v1879
      %v1953 = vmax.f32 %v1767, %v1881
      %v1954 = vmax.f32 %v1775, %v1883
      %v1955 = vmax.f32 %v1783, %v1885
      %v1956 = vmax.f32 %v1782, %v1887
      %v1957 = vmax.f32 %v1784, %v1889
      %v1958 = vmax.f32 %v1792, %v1891
      %v1959 = vmax.f32 %v1800, %v1893
      %v1960 = vmax.f32 %v1799, %v1895
      %v1961 = vmax.f32 %v1801, %v1897
      %v1962 = vmax.f32 %v1930, %v1934
      %v1963 = vmax.f32 %v1931, %v1935
      %v1964 = vmax.f32 %v1932, %v1936
      %v1965 = vmax.f32 %v1933, %v1937
      %v1966 = vmax.f32 %v1938, %v1942
      %v1967 = vmax.f32 %v1939, %v1943
      %v1968 = vmax.f32 %v1940, %v1944
      %v1969 = vmax.f32 %v1941, %v1945
      %v1970 = vmax.f32 %v1946, %v1950
      %v1971 = vmax.f32 %v1947, %v1951
      %v1972 = vmax.f32 %v1948, %v1952
      %v1973 = vmax.f32 %v1949, %v1953
      %v1974 = vmax.f32 %v1954, %v1958
      %v1975 = vmax.f32 %v1955, %v1959
      %v1976 = vmax.f32 %v1956, %v1960
      %v1977 = vmax.f32 %v1957, %v1961
      %v1978 = vpack.c.bf16 %v1962, %v1962
      %v1979 = vpack.c.bf16 %v1963, %v1963
      %v1980 = vpack.c.bf16 %v1964, %v1964
      %v1981 = vpack.c.bf16 %v1965, %v1965
      %v1982 = vpack.c.bf16 %v1966, %v1966
      %v1983 = vpack.c.bf16 %v1967, %v1967
      %v1984 = vpack.c.bf16 %v1968, %v1968
      %v1985 = vpack.c.bf16 %v1969, %v1969
      %v1986 = vpack.c.bf16 %v1970, %v1970
      %v1987 = vpack.c.bf16 %v1971, %v1971
      %v1988 = vpack.c.bf16 %v1972, %v1972
      %v1989 = vpack.c.bf16 %v1973, %v1973
      %v1990 = vpack.c.bf16 %v1974, %v1974
      %v1991 = vpack.c.bf16 %v1975, %v1975
      %v1992 = vpack.c.bf16 %v1976, %v1976
      %v1993 = vpack.c.bf16 %v1977, %v1977
      %v2010 = vunpack.c.l.b16 %v1978
      %v2011 = vunpack.c.l.b16 %v1979
      %v2012 = vunpack.c.l.b16 %v1980
      %v2013 = vunpack.c.l.b16 %v1981
      %v2014 = vunpack.c.l.b16 %v1982
      %v2015 = vunpack.c.l.b16 %v1983
      %v2016 = vunpack.c.l.b16 %v1984
      %v2017 = vunpack.c.l.b16 %v1985
      %v2018 = vunpack.c.l.b16 %v1986
      %v2019 = vunpack.c.l.b16 %v1987
      %v2020 = vunpack.c.l.b16 %v1988
      %v2021 = vunpack.c.l.b16 %v1989
      %v2022 = vunpack.c.l.b16 %v1990
      %v2023 = vunpack.c.l.b16 %v1991
      %v2024 = vunpack.c.l.b16 %v1992
      %v2025 = vunpack.c.l.b16 %v1993
      %v2026 = vpack.c.b16 %v2010, %v2010
      %v2027 = vpack.c.b16 %v2011, %v2011
      %v2028 = vpack.c.b16 %v2012, %v2012
      %v2029 = vpack.c.b16 %v2013, %v2013
      %v2030 = vpack.c.b16 %v2014, %v2014
      %v2031 = vpack.c.b16 %v2015, %v2015
      %v2032 = vpack.c.b16 %v2016, %v2016
      %v2033 = vpack.c.b16 %v2017, %v2017
      %v2034 = vpack.c.b16 %v2018, %v2018
      %v2035 = vpack.c.b16 %v2019, %v2019
      %v2036 = vpack.c.b16 %v2020, %v2020
      %v2037 = vpack.c.b16 %v2021, %v2021
      %v2038 = vpack.c.b16 %v2022, %v2022
      %v2039 = vpack.c.b16 %v2023, %v2023
      %v2040 = vpack.c.b16 %v2024, %v2024
      %v2041 = vpack.c.b16 %v2025, %v2025
      %v2042 = vunpack.c.l.b16 %v2026
      %v2043 = vunpack.c.l.b16 %v2027
      %v2044 = vunpack.c.l.b16 %v2028
      %v2045 = vunpack.c.l.b16 %v2029
      %v2046 = vunpack.c.l.b16 %v2030
      %v2047 = vunpack.c.l.b16 %v2031
      %v2048 = vunpack.c.l.b16 %v2032
      %v2049 = vunpack.c.l.b16 %v2033
      %v2050 = vunpack.c.l.b16 %v2034
      %v2051 = vunpack.c.l.b16 %v2035
      %v2052 = vunpack.c.l.b16 %v2036
      %v2053 = vunpack.c.l.b16 %v2037
      %v2054 = vunpack.c.l.b16 %v2038
      %v2055 = vunpack.c.l.b16 %v2039
      %v2056 = vunpack.c.l.b16 %v2040
      %v2057 = vunpack.c.l.b16 %v2041
      %v2058 = vrot.slane %v2043, 7
      %vm2059 = vcmask 1041409
      %v2060 = vsel %vm2059, %v2058, %v2042
      %v2061 = vrot.slane %v2044, 6
      %vm2062 = vcmask 1042434
      %v2063 = vsel %vm2062, %v2061, %v2060
      %v2064 = vrot.slane %v2045, 5
      %vm2065 = vcmask 1043459
      %v2066 = vsel %vm2065, %v2064, %v2063
      %v2067 = vrot.slane %v2046, 4
      %vm2068 = vcmask 1044484
      %v2069 = vsel %vm2068, %v2067, %v2066
      %v2070 = vrot.slane %v2047, 3
      %vm2071 = vcmask 1045509
      %v2072 = vsel %vm2071, %v2070, %v2069
      %v2073 = vrot.slane %v2048, 2
      %vm2074 = vcmask 1046534
      %v2075 = vsel %vm2074, %v2073, %v2072
      %v2076 = vrot.slane %v2049, 1
      %vm2077 = vcmask 1047559
      %v2078 = vsel %vm2077, %v2076, %v2075
      %v2079 = vrot.slane %v2051, 7
      %v2080 = vsel %vm2059, %v2079, %v2050
      %v2081 = vrot.slane %v2052, 6
      %v2082 = vsel %vm2062, %v2081, %v2080
      %v2083 = vrot.slane %v2053, 5
      %v2084 = vsel %vm2065, %v2083, %v2082
      %v2085 = vrot.slane %v2054, 4
      %v2086 = vsel %vm2068, %v2085, %v2084
      %v2087 = vrot.slane %v2055, 3
      %v2088 = vsel %vm2071, %v2087, %v2086
      %v2089 = vrot.slane %v2056, 2
      %v2090 = vsel %vm2074, %v2089, %v2088
      %v2091 = vrot.slane %v2057, 1
      %v2092 = vsel %vm2077, %v2091, %v2090
      %v2093 = vpack.c.b16 %v2078, %v2078
      %v2094 = vpack.c.b16 %v2092, %v2092
      %2097 = vst [vmem:[%s359] sm:$0xf] %v2093
      %2098 = vst [vmem:[%s359 + $0x4] sm:$0xf] %v2094
      %p2099 = scmp.lt.s32.totalorder %s21, 1
      %s2100 = scalar_select %p2099, %s21, 1
      %s2101 = smul.addr %s2100, 2
      %s2102 = smul.addr %s2101, 4
      %s2103 = scalar_lea.vmem %s10, %s2102
      // Predicated region
      $region61: #{hourglass_forward.5} parent=59 // pred_check
        %p2104 = pneg %p254
      $region62: #{hourglass_forward.5} parent=59 // pred_check_branch
        %2106 = sbr.rel (%p2104) target = $region64
      $region63: #{hourglass_forward.5} parent=59 // pred_region
        _
      $region64: #{hourglass_forward.5} parent=59 // pred_fallthru
        _
    $region60: #{hourglass_forward.5} parent=5 // pred_fallthru
      _
    %p2107 = scmp.le.s32.totalorder 2, %s16
    // Predicated region
    $region65: #{hourglass_forward.5} parent=5 // pred_check
      %p2108 = pneg %p2107
    $region66: #{hourglass_forward.5} parent=5 // pred_check_branch
      %2110 = sbr.rel (%p2108) target = $region68
    $region67: #{hourglass_forward.5} parent=5 // pred_region
      %s2111 = ssub.s32 %s16, 2
      // Predicated region
      $region69: #{hourglass_forward.5} parent=67 // pred_check
        %p2112 = pneg %p260
      $region70: #{hourglass_forward.5} parent=67 // pred_check_branch
        %2114 = sbr.rel (%p2112) target = $region72
      $region71: #{hourglass_forward.5} parent=67 // pred_region
        %p2115 = scmp.lt.s32.totalorder %s22, 1
        %s2116 = scalar_select %p2115, %s22, 1
        %s2117 = smul.addr %s2116, 2
        %s2118 = smul.addr %s2117, 4
        %s2119 = scalar_lea.vmem %s10, %s2118
      $region72: #{hourglass_forward.5} parent=67 // pred_fallthru
        _
    $region68: #{hourglass_forward.5} parent=5 // pred_fallthru
      _
  $region6: #{hourglass_forward.5} parent=0 // loop_footer
    %s20 = sadd.s32 1, %s16
  $region7: #{hourglass_forward.5} parent=0 // loop_footer_branch
    %15 = sbr.rel target = $region3
  $region8: #{hourglass_forward.5} parent=0 // loop_exit
    _

// kernel: hourglass_forward.4
$region0: #{hourglass_forward.4}
  #allocation0 [shape = 'u32[]', space=smem, size = 0x4, offset = 0x4, fixed_abs, tag = 'smem constant byte address 0x4 - core index']
  #allocation1 [shape = 'u32[144,128]{1,0:T(1,128)}', space=vmem, size = 0x12000, scoped, tag = 'internal scratch']
  %s0 = inlined_call_operand.vmem [shape: bf16[2,11,11,4], index: 0, kind: input, shape index: {}]
  %s1 = inlined_call_operand.vmem [shape: bf16[2,11,11,4], index: 1, kind: input, shape index: {}]
  %s2 = inlined_call_operand.vmem [shape: bf16[2,11,11,4], index: 2, kind: input, shape index: {}]
  %s3 = inlined_call_operand.vmem [shape: bf16[2,11,11,4], index: 3, kind: input, shape index: {}]
  %s4 = inlined_call_operand.vmem [shape: bf16[196,64], index: 4, kind: input, shape index: {}]
  %s5 = inlined_call_operand.vmem [shape: f32[2,64], index: 5, kind: input, shape index: {}]
  %s6 = inlined_call_operand.vmem [shape: bf16[2,64,64], index: 6, kind: output, shape index: {}]
  %s7 = sld [smem:[#allocation0]]
  $region57: #{hourglass_forward.4} parent=0
    _
  %s9 = ssub.s32 1, %s7
  %s10 = scalar_select 0, %s9, %s7
  loop: start=0, step=1, limit=4
  $region2: #{hourglass_forward.4} parent=0 // loop_pre_header
    _
  $region3: #{hourglass_forward.4} parent=0 // loop_header
    %s12 = sphi 0, %s16
    %p13 = scmp.ge.s32.totalorder %s12, 4
    %s22 = sphi 0, %s24
    %s25 = sphi 0, %s22
    %s26 = sphi 0, %s25
    %s42 = sphi 0, %s26
    %s48 = sphi 0, %s50
    %s51 = sphi 0, %s48
    %s52 = sphi 0, %s51
    %s68 = sphi 0, %s52
    %s74 = sphi 0, %s76
    %s77 = sphi 0, %s74
    %s78 = sphi 0, %s77
    %s94 = sphi 0, %s78
    %s100 = sphi 0, %s102
    %s103 = sphi 0, %s100
    %s104 = sphi 0, %s103
    %s120 = sphi 0, %s104
    %s124 = sphi 0, %s124
    %s126 = sphi 0, %s124
    %s127 = sphi 0, %s126
    %s141 = sphi 0, %s127
    %s145 = sphi 0, %s145
    %s147 = sphi 0, %s145
    %s148 = sphi 0, %s147
    %s162 = sphi 0, %s148
    %s168 = sphi 0, %s170
    %s171 = sphi 0, %s168
    %s172 = sphi 0, %s171
    %s188 = sphi 0, %s172
  $region4: #{hourglass_forward.4} parent=0 // loop_header_branch
    %15 = sbr.rel (%p13) target = $region8
  $region5: #{hourglass_forward.4} parent=0 // loop_body
    %s17 = ssub.s32 %s12, 1
    %s18 = ssub.s32 %s12, 2
    %s19 = sadd.s32 %s12, 1
    %s20 = ssub.s32 %s12, %s19
    %p21 = scmp.eq.s32.totalorder %s20, 0
    %s23 = sadd.s32 %s22, 1
    %s24 = scalar_select %p21, %s22, %s23
    %p27 = pneg %p21
    %p28 = scmp.eq.s32.totalorder %s12, 1
    %p29 = por %p27, %p28
    %p30 = scmp.ne.s32.totalorder %s22, %s25
    %p31 = scmp.eq.s32.totalorder %s12, 0
    %p32 = por %p30, %p31
    %p33 = scmp.ne.s32.totalorder %s22, %s25
    %p34 = scmp.eq.s32.totalorder %s17, 1
    %p35 = por %p33, %p34
    %p36 = scmp.ne.s32.totalorder %s25, %s26
    %p37 = scmp.eq.s32.totalorder %s17, 0
    %p38 = por %p36, %p37
    %p39 = scmp.ne.s32.totalorder %s25, %s26
    %p40 = scmp.eq.s32.totalorder %s18, 1
    %p41 = por %p39, %p40
    %p43 = scmp.ne.s32.totalorder %s26, %s42
    %p44 = scmp.eq.s32.totalorder %s18, 0
    %p45 = por %p43, %p44
    %s46 = ssub.s32 %s12, %s19
    %p47 = scmp.eq.s32.totalorder %s46, 0
    %s49 = sadd.s32 %s48, 1
    %s50 = scalar_select %p47, %s48, %s49
    %p53 = pneg %p47
    %p54 = scmp.eq.s32.totalorder %s12, 1
    %p55 = por %p53, %p54
    %p56 = scmp.ne.s32.totalorder %s48, %s51
    %p57 = scmp.eq.s32.totalorder %s12, 0
    %p58 = por %p56, %p57
    %p59 = scmp.ne.s32.totalorder %s48, %s51
    %p60 = scmp.eq.s32.totalorder %s17, 1
    %p61 = por %p59, %p60
    %p62 = scmp.ne.s32.totalorder %s51, %s52
    %p63 = scmp.eq.s32.totalorder %s17, 0
    %p64 = por %p62, %p63
    %p65 = scmp.ne.s32.totalorder %s51, %s52
    %p66 = scmp.eq.s32.totalorder %s18, 1
    %p67 = por %p65, %p66
    %p69 = scmp.ne.s32.totalorder %s52, %s68
    %p70 = scmp.eq.s32.totalorder %s18, 0
    %p71 = por %p69, %p70
    %s72 = ssub.s32 %s12, %s19
    %p73 = scmp.eq.s32.totalorder %s72, 0
    %s75 = sadd.s32 %s74, 1
    %s76 = scalar_select %p73, %s74, %s75
    %p79 = pneg %p73
    %p80 = scmp.eq.s32.totalorder %s12, 1
    %p81 = por %p79, %p80
    %p82 = scmp.ne.s32.totalorder %s74, %s77
    %p83 = scmp.eq.s32.totalorder %s12, 0
    %p84 = por %p82, %p83
    %p85 = scmp.ne.s32.totalorder %s74, %s77
    %p86 = scmp.eq.s32.totalorder %s17, 1
    %p87 = por %p85, %p86
    %p88 = scmp.ne.s32.totalorder %s77, %s78
    %p89 = scmp.eq.s32.totalorder %s17, 0
    %p90 = por %p88, %p89
    %p91 = scmp.ne.s32.totalorder %s77, %s78
    %p92 = scmp.eq.s32.totalorder %s18, 1
    %p93 = por %p91, %p92
    %p95 = scmp.ne.s32.totalorder %s78, %s94
    %p96 = scmp.eq.s32.totalorder %s18, 0
    %p97 = por %p95, %p96
    %s98 = ssub.s32 %s12, %s19
    %p99 = scmp.eq.s32.totalorder %s98, 0
    %s101 = sadd.s32 %s100, 1
    %s102 = scalar_select %p99, %s100, %s101
    %p105 = pneg %p99
    %p106 = scmp.eq.s32.totalorder %s12, 1
    %p107 = por %p105, %p106
    %p108 = scmp.ne.s32.totalorder %s100, %s103
    %p109 = scmp.eq.s32.totalorder %s12, 0
    %p110 = por %p108, %p109
    %p111 = scmp.ne.s32.totalorder %s100, %s103
    %p112 = scmp.eq.s32.totalorder %s17, 1
    %p113 = por %p111, %p112
    %p114 = scmp.ne.s32.totalorder %s103, %s104
    %p115 = scmp.eq.s32.totalorder %s17, 0
    %p116 = por %p114, %p115
    %p117 = scmp.ne.s32.totalorder %s103, %s104
    %p118 = scmp.eq.s32.totalorder %s18, 1
    %p119 = por %p117, %p118
    %p121 = scmp.ne.s32.totalorder %s104, %s120
    %p122 = scmp.eq.s32.totalorder %s18, 0
    %p123 = por %p121, %p122
    %s125 = sadd.s32 %s124, 1
    %p128 = scmp.eq.s32.totalorder %s12, 1
    %p129 = scmp.ne.s32.totalorder %s124, %s126
    %p130 = scmp.eq.s32.totalorder %s12, 0
    %p131 = por %p129, %p130
    %p132 = scmp.ne.s32.totalorder %s124, %s126
    %p133 = scmp.eq.s32.totalorder %s17, 1
    %p134 = por %p132, %p133
    %p135 = scmp.ne.s32.totalorder %s126, %s127
    %p136 = scmp.eq.s32.totalorder %s17, 0
    %p137 = por %p135, %p136
    %p138 = scmp.ne.s32.totalorder %s126, %s127
    %p139 = scmp.eq.s32.totalorder %s18, 1
    %p140 = por %p138, %p139
    %p142 = scmp.ne.s32.totalorder %s127, %s141
    %p143 = scmp.eq.s32.totalorder %s18, 0
    %p144 = por %p142, %p143
    %s146 = sadd.s32 %s145, 1
    %p149 = scmp.eq.s32.totalorder %s12, 1
    %p150 = scmp.ne.s32.totalorder %s145, %s147
    %p151 = scmp.eq.s32.totalorder %s12, 0
    %p152 = por %p150, %p151
    %p153 = scmp.ne.s32.totalorder %s145, %s147
    %p154 = scmp.eq.s32.totalorder %s17, 1
    %p155 = por %p153, %p154
    %p156 = scmp.ne.s32.totalorder %s147, %s148
    %p157 = scmp.eq.s32.totalorder %s17, 0
    %p158 = por %p156, %p157
    %p159 = scmp.ne.s32.totalorder %s147, %s148
    %p160 = scmp.eq.s32.totalorder %s18, 1
    %p161 = por %p159, %p160
    %p163 = scmp.ne.s32.totalorder %s148, %s162
    %p164 = scmp.eq.s32.totalorder %s18, 0
    %p165 = por %p163, %p164
    %s166 = ssub.s32 %s12, %s19
    %p167 = scmp.eq.s32.totalorder %s166, 0
    %s169 = sadd.s32 %s168, 1
    %s170 = scalar_select %p167, %s168, %s169
    %p173 = pneg %p167
    %p174 = scmp.eq.s32.totalorder %s12, 1
    %p175 = por %p173, %p174
    %p176 = scmp.ne.s32.totalorder %s168, %s171
    %p177 = scmp.eq.s32.totalorder %s12, 0
    %p178 = por %p176, %p177
    %p179 = scmp.ne.s32.totalorder %s168, %s171
    %p180 = scmp.eq.s32.totalorder %s17, 1
    %p181 = por %p179, %p180
    %p182 = scmp.ne.s32.totalorder %s171, %s172
    %p183 = scmp.eq.s32.totalorder %s17, 0
    %p184 = por %p182, %p183
    %p185 = scmp.ne.s32.totalorder %s171, %s172
    %p186 = scmp.eq.s32.totalorder %s18, 1
    %p187 = por %p185, %p186
    %p189 = scmp.ne.s32.totalorder %s172, %s188
    %p190 = scmp.eq.s32.totalorder %s18, 0
    %p191 = por %p189, %p190
    %p192 = scmp.le.s32.totalorder 1, %s12
    %p193 = scmp.lt.s32.totalorder %s12, 3
    %p194 = pnand %p192, %p193
    %p195 = pneg %p194
    // Predicated region
    $region9: #{hourglass_forward.4} parent=5 // pred_check
      _
    $region10: #{hourglass_forward.4} parent=5 // pred_check_branch
      %197 = sbr.rel (%p194) target = $region12
    $region11: #{hourglass_forward.4} parent=5 // pred_region
      %s198 = ssub.s32 %s12, 1
      // Predicated region
      $region13: #{hourglass_forward.4} parent=11 // pred_check
        %p199 = pneg %p137
      $region14: #{hourglass_forward.4} parent=11 // pred_check_branch
        %201 = sbr.rel (%p199) target = $region16
      $region15: #{hourglass_forward.4} parent=11 // pred_region
        _
      $region16: #{hourglass_forward.4} parent=11 // pred_fallthru
        _
      // Predicated region
      $region17: #{hourglass_forward.4} parent=11 // pred_check
        %p202 = pneg %p158
      $region18: #{hourglass_forward.4} parent=11 // pred_check_branch
        %204 = sbr.rel (%p202) target = $region20
      $region19: #{hourglass_forward.4} parent=11 // pred_region
        _
      $region20: #{hourglass_forward.4} parent=11 // pred_fallthru
        _
    $region12: #{hourglass_forward.4} parent=5 // pred_fallthru
      _
    %p205 = scmp.lt.s32.totalorder %s12, 2
    // Predicated region
    $region21: #{hourglass_forward.4} parent=5 // pred_check
      %p206 = pneg %p205
    $region22: #{hourglass_forward.4} parent=5 // pred_check_branch
      %208 = sbr.rel (%p206) target = $region24
    $region23: #{hourglass_forward.4} parent=5 // pred_region
      // Predicated region
      $region25: #{hourglass_forward.4} parent=23 // pred_check
        %p209 = pneg %p32
      $region26: #{hourglass_forward.4} parent=23 // pred_check_branch
        %211 = sbr.rel (%p209) target = $region28
      $region27: #{hourglass_forward.4} parent=23 // pred_region
        %p212 = scmp.lt.s32.totalorder %s12, 1
        %s213 = scalar_select %p212, %s12, 1
        %s214 = smul.addr %s213, 22
        %s215 = smul.addr %s214, 4
        %s216 = scalar_lea.vmem %s0, %s215
      $region28: #{hourglass_forward.4} parent=23 // pred_fallthru
        _
      // Predicated region
      $region29: #{hourglass_forward.4} parent=23 // pred_check
        %p217 = pneg %p58
      $region30: #{hourglass_forward.4} parent=23 // pred_check_branch
        %219 = sbr.rel (%p217) target = $region32
      $region31: #{hourglass_forward.4} parent=23 // pred_region
        %p220 = scmp.lt.s32.totalorder %s12, 1
        %s221 = scalar_select %p220, %s12, 1
        %s222 = smul.addr %s221, 22
        %s223 = smul.addr %s222, 4
        %s224 = scalar_lea.vmem %s1, %s223
      $region32: #{hourglass_forward.4} parent=23 // pred_fallthru
        _
      // Predicated region
      $region33: #{hourglass_forward.4} parent=23 // pred_check
        %p225 = pneg %p84
      $region34: #{hourglass_forward.4} parent=23 // pred_check_branch
        %227 = sbr.rel (%p225) target = $region36
      $region35: #{hourglass_forward.4} parent=23 // pred_region
        %p228 = scmp.lt.s32.totalorder %s12, 1
        %s229 = scalar_select %p228, %s12, 1
        %s230 = smul.addr %s229, 22
        %s231 = smul.addr %s230, 4
        %s232 = scalar_lea.vmem %s2, %s231
      $region36: #{hourglass_forward.4} parent=23 // pred_fallthru
        _
      // Predicated region
      $region37: #{hourglass_forward.4} parent=23 // pred_check
        %p233 = pneg %p110
      $region38: #{hourglass_forward.4} parent=23 // pred_check_branch
        %235 = sbr.rel (%p233) target = $region40
      $region39: #{hourglass_forward.4} parent=23 // pred_region
        %p236 = scmp.lt.s32.totalorder %s12, 1
        %s237 = scalar_select %p236, %s12, 1
        %s238 = smul.addr %s237, 22
        %s239 = smul.addr %s238, 4
        %s240 = scalar_lea.vmem %s3, %s239
      $region40: #{hourglass_forward.4} parent=23 // pred_fallthru
        _
    $region24: #{hourglass_forward.4} parent=5 // pred_fallthru
      _
    %p241 = scmp.le.s32.totalorder 1, %s12
    %p242 = scmp.lt.s32.totalorder %s12, 3
    %p243 = pnand %p241, %p242
    %p244 = pneg %p243
    // Predicated region
    $region41: #{hourglass_forward.4} parent=5 // pred_check
      _
    $region42: #{hourglass_forward.4} parent=5 // pred_check_branch
      %246 = sbr.rel (%p243) target = $region44
    $region43: #{hourglass_forward.4} parent=5 // pred_region
      %s247 = ssub.s32 %s12, 1
      %p248 = scmp.lt.s32.totalorder %s17, 1
      %s249 = scalar_select %p248, %s17, 1
      %s250 = smul.addr %s249, 22
      %s251 = smul.addr %s250, 4
      %s252 = scalar_lea.vmem %s0, %s251
      %p253 = pneg %p38
      %p254 = pneg %p35
      %p255 = scmp.lt.s32.totalorder %s17, 1
      %s256 = scalar_select %p255, %s17, 1
      %s257 = smul.addr %s256, 22
      %s258 = smul.addr %s257, 4
      %s259 = scalar_lea.vmem %s1, %s258
      %p260 = pneg %p64
      %p261 = pneg %p61
      %p262 = scmp.lt.s32.totalorder %s17, 1
      %s263 = scalar_select %p262, %s17, 1
      %s264 = smul.addr %s263, 22
      %s265 = smul.addr %s264, 4
      %s266 = scalar_lea.vmem %s2, %s265
      %p267 = pneg %p90
      %p268 = pneg %p87
      %p269 = scmp.lt.s32.totalorder %s17, 1
      %s270 = scalar_select %p269, %s17, 1
      %s271 = smul.addr %s270, 22
      %s272 = smul.addr %s271, 4
      %s273 = scalar_lea.vmem %s3, %s272
      %p274 = pneg %p116
      %p275 = pneg %p113
      %p276 = pneg %p137
      %p277 = pneg %p134
      %p278 = pneg %p158
      %p279 = pneg %p155
      %p280 = pneg %p184
      %p281 = pneg %p181
      %p282 = scmp.lt.s32.totalorder %s17, 1
      %s283 = scalar_select %p282, %s17, 1
      %s284 = smul.addr %s283, 8
      %s285 = smul.addr %s284, 4
      %s286 = scalar_lea.vmem %s6, %s285
      %p287 = scmp.lt.s32.totalorder %s17, 1
      %s288 = scalar_select %p287, %s17, 1
      %s289 = smul.addr %s288, 22
      %s290 = smul.addr %s289, 4
      %s291 = scalar_lea.vmem %s0, %s290
      %p292 = scmp.lt.s32.totalorder %s17, 1
      %s293 = scalar_select %p292, %s17, 1
      %s294 = smul.addr %s293, 22
      %s295 = smul.addr %s294, 4
      %s296 = scalar_lea.vmem %s1, %s295
      %p297 = scmp.lt.s32.totalorder %s17, 1
      %s298 = scalar_select %p297, %s17, 1
      %s299 = smul.addr %s298, 22
      %s300 = smul.addr %s299, 4
      %s301 = scalar_lea.vmem %s2, %s300
      %p302 = scmp.lt.s32.totalorder %s17, 1
      %s303 = scalar_select %p302, %s17, 1
      %s304 = smul.addr %s303, 22
      %s305 = smul.addr %s304, 4
      %s306 = scalar_lea.vmem %s3, %s305
      %p307 = scmp.lt.s32.totalorder %s17, 1
      %s308 = scalar_select %p307, %s17, 1
      %s309 = smul.addr %s308, 8
      %s310 = smul.addr %s309, 4
      %s311 = scalar_lea.vmem %s6, %s310
      %v313 = vld [vmem:[%s291] sm:$0xf]
      %v314 = vld [vmem:[%s291 + $0x4] sm:$0x3]
      %v315 = vld [vmem:[%s291 + $0x8] sm:$0xf]
      %v316 = vld [vmem:[%s291 + $0xc] sm:$0x3]
      %v317 = vld [vmem:[%s291 + $0x10] sm:$0xf]
      %v318 = vld [vmem:[%s291 + $0x14] sm:$0x3]
      %v319 = vld [vmem:[%s291 + $0x18] sm:$0xf]
      %v320 = vld [vmem:[%s291 + $0x1c] sm:$0x3]
      %v321 = vld [vmem:[%s291 + $0x20] sm:$0xf]
      %v322 = vld [vmem:[%s291 + $0x24] sm:$0x3]
      %v323 = vld [vmem:[%s291 + $0x28] sm:$0xf]
      %v324 = vld [vmem:[%s291 + $0x2c] sm:$0x3]
      %v325 = vld [vmem:[%s291 + $0x30] sm:$0xf]
      %v326 = vld [vmem:[%s291 + $0x34] sm:$0x3]
      %v327 = vld [vmem:[%s291 + $0x38] sm:$0xf]
      %v328 = vld [vmem:[%s291 + $0x3c] sm:$0x3]
      %v329 = vld [vmem:[%s291 + $0x40] sm:$0xf]
      %v330 = vld [vmem:[%s291 + $0x44] sm:$0x3]
      %v331 = vld [vmem:[%s291 + $0x48] sm:$0xf]
      %v332 = vld [vmem:[%s291 + $0x4c] sm:$0x3]
      %v333 = vld [vmem:[%s291 + $0x50] sm:$0xf]
      %v334 = vld [vmem:[%s291 + $0x54] sm:$0x3]
      %v335 = vld [vmem:[%s296] sm:$0xf]
      %v336 = vld [vmem:[%s296 + $0x4] sm:$0x3]
      %v337 = vld [vmem:[%s296 + $0x8] sm:$0xf]
      %v338 = vld [vmem:[%s296 + $0xc] sm:$0x3]
      %v339 = vld [vmem:[%s296 + $0x10] sm:$0xf]
      %v340 = vld [vmem:[%s296 + $0x14] sm:$0x3]
      %v341 = vld [vmem:[%s296 + $0x18] sm:$0xf]
      %v342 = vld [vmem:[%s296 + $0x1c] sm:$0x3]
      %v343 = vld [vmem:[%s296 + $0x20] sm:$0xf]
      %v344 = vld [vmem:[%s296 + $0x24] sm:$0x3]
      %v345 = vld [vmem:[%s296 + $0x28] sm:$0xf]
      %v346 = vld [vmem:[%s296 + $0x2c] sm:$0x3]
      %v347 = vld [vmem:[%s296 + $0x30] sm:$0xf]
      %v348 = vld [vmem:[%s296 + $0x34] sm:$0x3]
      %v349 = vld [vmem:[%s296 + $0x38] sm:$0xf]
      %v350 = vld [vmem:[%s296 + $0x3c] sm:$0x3]
      %v351 = vld [vmem:[%s296 + $0x40] sm:$0xf]
      %v352 = vld [vmem:[%s296 + $0x44] sm:$0x3]
      %v353 = vld [vmem:[%s296 + $0x48] sm:$0xf]
      %v354 = vld [vmem:[%s296 + $0x4c] sm:$0x3]
      %v355 = vld [vmem:[%s296 + $0x50] sm:$0xf]
      %v356 = vld [vmem:[%s296 + $0x54] sm:$0x3]
      %v357 = vld [vmem:[%s301] sm:$0xf]
      %v358 = vld [vmem:[%s301 + $0x4] sm:$0x3]
      %v359 = vld [vmem:[%s301 + $0x8] sm:$0xf]
      %v360 = vld [vmem:[%s301 + $0xc] sm:$0x3]
      %v361 = vld [vmem:[%s301 + $0x10] sm:$0xf]
      %v362 = vld [vmem:[%s301 + $0x14] sm:$0x3]
      %v363 = vld [vmem:[%s301 + $0x18] sm:$0xf]
      %v364 = vld [vmem:[%s301 + $0x1c] sm:$0x3]
      %v365 = vld [vmem:[%s301 + $0x20] sm:$0xf]
      %v366 = vld [vmem:[%s301 + $0x24] sm:$0x3]
      %v367 = vld [vmem:[%s301 + $0x28] sm:$0xf]
      %v368 = vld [vmem:[%s301 + $0x2c] sm:$0x3]
      %v369 = vld [vmem:[%s301 + $0x30] sm:$0xf]
      %v370 = vld [vmem:[%s301 + $0x34] sm:$0x3]
      %v371 = vld [vmem:[%s301 + $0x38] sm:$0xf]
      %v372 = vld [vmem:[%s301 + $0x3c] sm:$0x3]
      %v373 = vld [vmem:[%s301 + $0x40] sm:$0xf]
      %v374 = vld [vmem:[%s301 + $0x44] sm:$0x3]
      %v375 = vld [vmem:[%s301 + $0x48] sm:$0xf]
      %v376 = vld [vmem:[%s301 + $0x4c] sm:$0x3]
      %v377 = vld [vmem:[%s306] sm:$0xf]
      %v378 = vld [vmem:[%s306 + $0x4] sm:$0x3]
      %v379 = vld [vmem:[%s306 + $0x8] sm:$0xf]
      %v380 = vld [vmem:[%s306 + $0xc] sm:$0x3]
      %v381 = vld [vmem:[%s306 + $0x10] sm:$0xf]
      %v382 = vld [vmem:[%s306 + $0x14] sm:$0x3]
      %v383 = vld [vmem:[%s306 + $0x18] sm:$0xf]
      %v384 = vld [vmem:[%s306 + $0x1c] sm:$0x3]
      %v385 = vld [vmem:[%s306 + $0x20] sm:$0xf]
      %v386 = vld [vmem:[%s306 + $0x24] sm:$0x3]
      %v387 = vld [vmem:[%s306 + $0x28] sm:$0xf]
      %v388 = vld [vmem:[%s306 + $0x2c] sm:$0x3]
      %v389 = vld [vmem:[%s306 + $0x30] sm:$0xf]
      %v390 = vld [vmem:[%s306 + $0x34] sm:$0x3]
      %v391 = vld [vmem:[%s306 + $0x38] sm:$0xf]
      %v392 = vld [vmem:[%s306 + $0x3c] sm:$0x3]
      %v393 = vld [vmem:[%s306 + $0x40] sm:$0xf]
      %v394 = vld [vmem:[%s306 + $0x44] sm:$0x3]
      %v395 = vld [vmem:[%s306 + $0x48] sm:$0xf]
      %v396 = vld [vmem:[%s306 + $0x4c] sm:$0x3]
      %v405 = vunpack.c.l.b16 %v335
      %v406 = vunpack.c.l.b16 %v337
      %v407 = vunpack.c.l.b16 %v339
      %v408 = vunpack.c.l.b16 %v341
      %v409 = vunpack.c.l.b16 %v343
      %v410 = vunpack.c.l.b16 %v345
      %v411 = vunpack.c.l.b16 %v347
      %v412 = vunpack.c.l.b16 %v349
      %v413 = vpack.c.b16 %v405, %v405
      %v414 = vpack.c.b16 %v406, %v406
      %v415 = vpack.c.b16 %v407, %v407
      %v416 = vpack.c.b16 %v408, %v408
      %v417 = vpack.c.b16 %v409, %v409
      %v418 = vpack.c.b16 %v410, %v410
      %v419 = vpack.c.b16 %v411, %v411
      %v420 = vpack.c.b16 %v412, %v412
      %421 = vrot.lane.b32.xlu0 %v413, 4
      %v422 = vpop.permute.xlu0 %421
      %423 = vrot.lane.b32.xlu0 %v414, 4
      %v424 = vpop.permute.xlu0 %423
      %425 = vrot.lane.b32.xlu0 %v415, 4
      %v426 = vpop.permute.xlu0 %425
      %427 = vrot.lane.b32.xlu0 %v416, 4
      %v428 = vpop.permute.xlu0 %427
      %429 = vrot.lane.b32.xlu0 %v417, 4
      %v430 = vpop.permute.xlu0 %429
      %431 = vrot.lane.b32.xlu0 %v418, 4
      %v432 = vpop.permute.xlu0 %431
      %433 = vrot.lane.b32.xlu0 %v419, 4
      %v434 = vpop.permute.xlu0 %433
      %435 = vrot.lane.b32.xlu0 %v420, 4
      %v436 = vpop.permute.xlu0 %435
      %v453 = vunpack.c.l.b16 %v313
      %v454 = vunpack.c.l.b16 %v314
      %v455 = vunpack.c.l.b16 %v315
      %v456 = vunpack.c.l.b16 %v316
      %v457 = vunpack.c.l.b16 %v317
      %v458 = vunpack.c.l.b16 %v318
      %v459 = vunpack.c.l.b16 %v319
      %v460 = vunpack.c.l.b16 %v320
      %v461 = vunpack.c.l.b16 %v321
      %v462 = vunpack.c.l.b16 %v322
      %v463 = vunpack.c.l.b16 %v323
      %v464 = vunpack.c.l.b16 %v324
      %v465 = vunpack.c.l.b16 %v325
      %v466 = vunpack.c.l.b16 %v326
      %v467 = vunpack.c.l.b16 %v327
      %v468 = vunpack.c.l.b16 %v328
      %v469 = vpack.c.b16 %v454, %v453
      %v470 = vpack.c.b16 %v456, %v455
      %v471 = vpack.c.b16 %v458, %v457
      %v472 = vpack.c.b16 %v460, %v459
      %v473 = vpack.c.b16 %v462, %v461
      %v474 = vpack.c.b16 %v464, %v463
      %v475 = vpack.c.b16 %v466, %v465
      %v476 = vpack.c.b16 %v468, %v467
      %v478 = vshrl.u32 %v469, 16
      %v480 = vshll.u32 %v469, 16
      %v482 = vrot.slane %v480, 1
      %v483 = vor.u32 %v478, %v482
      %v485 = vshrl.u32 %v470, 16
      %v487 = vshll.u32 %v470, 16
      %v489 = vrot.slane %v487, 1
      %v490 = vor.u32 %v485, %v489
      %v492 = vshrl.u32 %v471, 16
      %v494 = vshll.u32 %v471, 16
      %v496 = vrot.slane %v494, 1
      %v497 = vor.u32 %v492, %v496
      %v499 = vshrl.u32 %v472, 16
      %v501 = vshll.u32 %v472, 16
      %v503 = vrot.slane %v501, 1
      %v504 = vor.u32 %v499, %v503
      %v506 = vshrl.u32 %v473, 16
      %v508 = vshll.u32 %v473, 16
      %v510 = vrot.slane %v508, 1
      %v511 = vor.u32 %v506, %v510
      %v513 = vshrl.u32 %v474, 16
      %v515 = vshll.u32 %v474, 16
      %v517 = vrot.slane %v515, 1
      %v518 = vor.u32 %v513, %v517
      %v520 = vshrl.u32 %v475, 16
      %v522 = vshll.u32 %v475, 16
      %v524 = vrot.slane %v522, 1
      %v525 = vor.u32 %v520, %v524
      %v527 = vshrl.u32 %v476, 16
      %v529 = vshll.u32 %v476, 16
      %v531 = vrot.slane %v529, 1
      %v532 = vor.u32 %v527, %v531
      %533 = vrot.lane.b32.xlu0 %v483, 8
      %v534 = vpop.permute.xlu0 %533
      %535 = vrot.lane.b32.xlu0 %v490, 8
      %v536 = vpop.permute.xlu0 %535
      %537 = vrot.lane.b32.xlu0 %v497, 8
      %v538 = vpop.permute.xlu0 %537
      %539 = vrot.lane.b32.xlu0 %v504, 8
      %v540 = vpop.permute.xlu0 %539
      %541 = vrot.lane.b32.xlu0 %v511, 8
      %v542 = vpop.permute.xlu0 %541
      %543 = vrot.lane.b32.xlu0 %v518, 8
      %v544 = vpop.permute.xlu0 %543
      %545 = vrot.lane.b32.xlu0 %v525, 8
      %v546 = vpop.permute.xlu0 %545
      %547 = vrot.lane.b32.xlu0 %v532, 8
      %v548 = vpop.permute.xlu0 %547
      %v557 = vunpack.c.l.b16 %v336
      %v558 = vunpack.c.l.b16 %v338
      %v559 = vunpack.c.l.b16 %v340
      %v560 = vunpack.c.l.b16 %v342
      %v561 = vunpack.c.l.b16 %v344
      %v562 = vunpack.c.l.b16 %v346
      %v563 = vunpack.c.l.b16 %v348
      %v564 = vunpack.c.l.b16 %v350
      %v565 = vpack.c.b16 %v557, %v405
      %v566 = vpack.c.b16 %v558, %v406
      %v567 = vpack.c.b16 %v559, %v407
      %v568 = vpack.c.b16 %v560, %v408
      %v569 = vpack.c.b16 %v561, %v409
      %v570 = vpack.c.b16 %v562, %v410
      %v571 = vpack.c.b16 %v563, %v411
      %v572 = vpack.c.b16 %v564, %v412
      %v574 = vshrl.u32 %v565, 16
      %v576 = vshll.u32 %v565, 16
      %v578 = vrot.slane %v576, 1
      %v579 = vor.u32 %v574, %v578
      %v581 = vshrl.u32 %v566, 16
      %v583 = vshll.u32 %v566, 16
      %v585 = vrot.slane %v583, 1
      %v586 = vor.u32 %v581, %v585
      %v588 = vshrl.u32 %v567, 16
      %v590 = vshll.u32 %v567, 16
      %v592 = vrot.slane %v590, 1
      %v593 = vor.u32 %v588, %v592
      %v595 = vshrl.u32 %v568, 16
      %v597 = vshll.u32 %v568, 16
      %v599 = vrot.slane %v597, 1
      %v600 = vor.u32 %v595, %v599
      %v602 = vshrl.u32 %v569, 16
      %v604 = vshll.u32 %v569, 16
      %v606 = vrot.slane %v604, 1
      %v607 = vor.u32 %v602, %v606
      %v609 = vshrl.u32 %v570, 16
      %v611 = vshll.u32 %v570, 16
      %v613 = vrot.slane %v611, 1
      %v614 = vor.u32 %v609, %v613
      %v616 = vshrl.u32 %v571, 16
      %v618 = vshll.u32 %v571, 16
      %v620 = vrot.slane %v618, 1
      %v621 = vor.u32 %v616, %v620
      %v623 = vshrl.u32 %v572, 16
      %v625 = vshll.u32 %v572, 16
      %v627 = vrot.slane %v625, 1
      %v628 = vor.u32 %v623, %v627
      %629 = vrot.lane.b32.xlu0 %v579, 12
      %v630 = vpop.permute.xlu0 %629
      %631 = vrot.lane.b32.xlu0 %v586, 12
      %v632 = vpop.permute.xlu0 %631
      %633 = vrot.lane.b32.xlu0 %v593, 12
      %v634 = vpop.permute.xlu0 %633
      %635 = vrot.lane.b32.xlu0 %v600, 12
      %v636 = vpop.permute.xlu0 %635
      %637 = vrot.lane.b32.xlu0 %v607, 12
      %v638 = vpop.permute.xlu0 %637
      %639 = vrot.lane.b32.xlu0 %v614, 12
      %v640 = vpop.permute.xlu0 %639
      %641 = vrot.lane.b32.xlu0 %v621, 12
      %v642 = vpop.permute.xlu0 %641
      %643 = vrot.lane.b32.xlu0 %v628, 12
      %v644 = vpop.permute.xlu0 %643
      %v645 = vrot.slane %v469, 1
      %v646 = vrot.slane %v470, 1
      %v647 = vrot.slane %v471, 1
      %v648 = vrot.slane %v472, 1
      %v649 = vrot.slane %v473, 1
      %v650 = vrot.slane %v474, 1
      %v651 = vrot.slane %v475, 1
      %v652 = vrot.slane %v476, 1
      %653 = vrot.lane.b32.xlu0 %v645, 16
      %v654 = vpop.permute.xlu0 %653
      %655 = vrot.lane.b32.xlu0 %v646, 16
      %v656 = vpop.permute.xlu0 %655
      %657 = vrot.lane.b32.xlu0 %v647, 16
      %v658 = vpop.permute.xlu0 %657
      %659 = vrot.lane.b32.xlu0 %v648, 16
      %v660 = vpop.permute.xlu0 %659
      %661 = vrot.lane.b32.xlu0 %v649, 16
      %v662 = vpop.permute.xlu0 %661
      %663 = vrot.lane.b32.xlu0 %v650, 16
      %v664 = vpop.permute.xlu0 %663
      %665 = vrot.lane.b32.xlu0 %v651, 16
      %v666 = vpop.permute.xlu0 %665
      %667 = vrot.lane.b32.xlu0 %v652, 16
      %v668 = vpop.permute.xlu0 %667
      %v669 = vrot.slane %v565, 1
      %v670 = vrot.slane %v566, 1
      %v671 = vrot.slane %v567, 1
      %v672 = vrot.slane %v568, 1
      %v673 = vrot.slane %v569, 1
      %v674 = vrot.slane %v570, 1
      %v675 = vrot.slane %v571, 1
      %v676 = vrot.slane %v572, 1
      %677 = vrot.lane.b32.xlu0 %v669, 20
      %v678 = vpop.permute.xlu0 %677
      %679 = vrot.lane.b32.xlu0 %v670, 20
      %v680 = vpop.permute.xlu0 %679
      %681 = vrot.lane.b32.xlu0 %v671, 20
      %v682 = vpop.permute.xlu0 %681
      %683 = vrot.lane.b32.xlu0 %v672, 20
      %v684 = vpop.permute.xlu0 %683
      %685 = vrot.lane.b32.xlu0 %v673, 20
      %v686 = vpop.permute.xlu0 %685
      %687 = vrot.lane.b32.xlu0 %v674, 20
      %v688 = vpop.permute.xlu0 %687
      %689 = vrot.lane.b32.xlu0 %v675, 20
      %v690 = vpop.permute.xlu0 %689
      %691 = vrot.lane.b32.xlu0 %v676, 20
      %v692 = vpop.permute.xlu0 %691
      %v693 = vrot.slane %v478, 1
      %v694 = vrot.slane %v480, 2
      %v695 = vor.u32 %v693, %v694
      %v696 = vrot.slane %v485, 1
      %v697 = vrot.slane %v487, 2
      %v698 = vor.u32 %v696, %v697
      %v699 = vrot.slane %v492, 1
      %v700 = vrot.slane %v494, 2
      %v701 = vor.u32 %v699, %v700
      %v702 = vrot.slane %v499, 1
      %v703 = vrot.slane %v501, 2
      %v704 = vor.u32 %v702, %v703
      %v705 = vrot.slane %v506, 1
      %v706 = vrot.slane %v508, 2
      %v707 = vor.u32 %v705, %v706
      %v708 = vrot.slane %v513, 1
      %v709 = vrot.slane %v515, 2
      %v710 = vor.u32 %v708, %v709
      %v711 = vrot.slane %v520, 1
      %v712 = vrot.slane %v522, 2
      %v713 = vor.u32 %v711, %v712
      %v714 = vrot.slane %v527, 1
      %v715 = vrot.slane %v529, 2
      %v716 = vor.u32 %v714, %v715
      %717 = vrot.lane.b32.xlu0 %v695, 24
      %v718 = vpop.permute.xlu0 %717
      %719 = vrot.lane.b32.xlu0 %v698, 24
      %v720 = vpop.permute.xlu0 %719
      %721 = vrot.lane.b32.xlu0 %v701, 24
      %v722 = vpop.permute.xlu0 %721
      %723 = vrot.lane.b32.xlu0 %v704, 24
      %v724 = vpop.permute.xlu0 %723
      %725 = vrot.lane.b32.xlu0 %v707, 24
      %v726 = vpop.permute.xlu0 %725
      %727 = vrot.lane.b32.xlu0 %v710, 24
      %v728 = vpop.permute.xlu0 %727
      %729 = vrot.lane.b32.xlu0 %v713, 24
      %v730 = vpop.permute.xlu0 %729
      %731 = vrot.lane.b32.xlu0 %v716, 24
      %v732 = vpop.permute.xlu0 %731
      %vm733 = vcmask 31744
      %v736 = vsel %vm733, %v313, %v422
      %v739 = vsel %vm733, %v315, %v424
      %v742 = vsel %vm733, %v317, %v426
      %v745 = vsel %vm733, %v319, %v428
      %v748 = vsel %vm733, %v321, %v430
      %v751 = vsel %vm733, %v323, %v432
      %v754 = vsel %vm733, %v325, %v434
      %v757 = vsel %vm733, %v327, %v436
      %vm758 = vcmask 64512
      %v760 = vsel %vm758, %v736, %v534
      %v762 = vsel %vm758, %v739, %v536
      %v764 = vsel %vm758, %v742, %v538
      %v766 = vsel %vm758, %v745, %v540
      %v768 = vsel %vm758, %v748, %v542
      %v770 = vsel %vm758, %v751, %v544
      %v772 = vsel %vm758, %v754, %v546
      %v774 = vsel %vm758, %v757, %v548
      %vm775 = vcmask 97280
      %v777 = vsel %vm775, %v760, %v630
      %v779 = vsel %vm775, %v762, %v632
      %v781 = vsel %vm775, %v764, %v634
      %v783 = vsel %vm775, %v766, %v636
      %v785 = vsel %vm775, %v768, %v638
      %v787 = vsel %vm775, %v770, %v640
      %v789 = vsel %vm775, %v772, %v642
      %v791 = vsel %vm775, %v774, %v644
      %vm792 = vcmask 130048
      %v794 = vsel %vm792, %v777, %v654
      %v796 = vsel %vm792, %v779, %v656
      %v798 = vsel %vm792, %v781, %v658
      %v800 = vsel %vm792, %v783, %v660
      %v802 = vsel %vm792, %v785, %v662
      %v804 = vsel %vm792, %v787, %v664
      %v806 = vsel %vm792, %v789, %v666
      %v808 = vsel %vm792, %v791, %v668
      %vm809 = vcmask 162816
      %v811 = vsel %vm809, %v794, %v678
      %v813 = vsel %vm809, %v796, %v680
      %v815 = vsel %vm809, %v798, %v682
      %v817 = vsel %vm809, %v800, %v684
      %v819 = vsel %vm809, %v802, %v686
      %v821 = vsel %vm809, %v804, %v688
      %v823 = vsel %vm809, %v806, %v690
      %v825 = vsel %vm809, %v808, %v692
      %vm826 = vcmask 195584
      %v828 = vsel %vm826, %v811, %v718
      %v830 = vsel %vm826, %v813, %v720
      %v832 = vsel %vm826, %v815, %v722
      %v834 = vsel %vm826, %v817, %v724
      %v836 = vsel %vm826, %v819, %v726
      %v838 = vsel %vm826, %v821, %v728
      %v840 = vsel %vm826, %v823, %v730
      %v842 = vsel %vm826, %v825, %v732
      %v851 = vunpack.c.l.b16 %v377
      %v852 = vunpack.c.l.b16 %v379
      %v853 = vunpack.c.l.b16 %v381
      %v854 = vunpack.c.l.b16 %v383
      %v855 = vunpack.c.l.b16 %v385
      %v856 = vunpack.c.l.b16 %v387
      %v857 = vunpack.c.l.b16 %v389
      %v858 = vunpack.c.l.b16 %v391
      %v859 = vpack.c.b16 %v851, %v851
      %v860 = vpack.c.b16 %v852, %v852
      %v861 = vpack.c.b16 %v853, %v853
      %v862 = vpack.c.b16 %v854, %v854
      %v863 = vpack.c.b16 %v855, %v855
      %v864 = vpack.c.b16 %v856, %v856
      %v865 = vpack.c.b16 %v857, %v857
      %v866 = vpack.c.b16 %v858, %v858
      %867 = vrot.lane.b32.xlu0 %v859, 4
      %v868 = vpop.permute.xlu0 %867
      %869 = vrot.lane.b32.xlu0 %v860, 4
      %v870 = vpop.permute.xlu0 %869
      %871 = vrot.lane.b32.xlu0 %v861, 4
      %v872 = vpop.permute.xlu0 %871
      %873 = vrot.lane.b32.xlu0 %v862, 4
      %v874 = vpop.permute.xlu0 %873
      %875 = vrot.lane.b32.xlu0 %v863, 4
      %v876 = vpop.permute.xlu0 %875
      %877 = vrot.lane.b32.xlu0 %v864, 4
      %v878 = vpop.permute.xlu0 %877
      %879 = vrot.lane.b32.xlu0 %v865, 4
      %v880 = vpop.permute.xlu0 %879
      %881 = vrot.lane.b32.xlu0 %v866, 4
      %v882 = vpop.permute.xlu0 %881
      %v899 = vunpack.c.l.b16 %v357
      %v900 = vunpack.c.l.b16 %v358
      %v901 = vunpack.c.l.b16 %v359
      %v902 = vunpack.c.l.b16 %v360
      %v903 = vunpack.c.l.b16 %v361
      %v904 = vunpack.c.l.b16 %v362
      %v905 = vunpack.c.l.b16 %v363
      %v906 = vunpack.c.l.b16 %v364
      %v907 = vunpack.c.l.b16 %v365
      %v908 = vunpack.c.l.b16 %v366
      %v909 = vunpack.c.l.b16 %v367
      %v910 = vunpack.c.l.b16 %v368
      %v911 = vunpack.c.l.b16 %v369
      %v912 = vunpack.c.l.b16 %v370
      %v913 = vunpack.c.l.b16 %v371
      %v914 = vunpack.c.l.b16 %v372
      %v915 = vpack.c.b16 %v900, %v899
      %v916 = vpack.c.b16 %v902, %v901
      %v917 = vpack.c.b16 %v904, %v903
      %v918 = vpack.c.b16 %v906, %v905
      %v919 = vpack.c.b16 %v908, %v907
      %v920 = vpack.c.b16 %v910, %v909
      %v921 = vpack.c.b16 %v912, %v911
      %v922 = vpack.c.b16 %v914, %v913
      %v924 = vshrl.u32 %v915, 16
      %v926 = vshll.u32 %v915, 16
      %v928 = vrot.slane %v926, 1
      %v929 = vor.u32 %v924, %v928
      %v931 = vshrl.u32 %v916, 16
      %v933 = vshll.u32 %v916, 16
      %v935 = vrot.slane %v933, 1
      %v936 = vor.u32 %v931, %v935
      %v938 = vshrl.u32 %v917, 16
      %v940 = vshll.u32 %v917, 16
      %v942 = vrot.slane %v940, 1
      %v943 = vor.u32 %v938, %v942
      %v945 = vshrl.u32 %v918, 16
      %v947 = vshll.u32 %v918, 16
      %v949 = vrot.slane %v947, 1
      %v950 = vor.u32 %v945, %v949
      %v952 = vshrl.u32 %v919, 16
      %v954 = vshll.u32 %v919, 16
      %v956 = vrot.slane %v954, 1
      %v957 = vor.u32 %v952, %v956
      %v959 = vshrl.u32 %v920, 16
      %v961 = vshll.u32 %v920, 16
      %v963 = vrot.slane %v961, 1
      %v964 = vor.u32 %v959, %v963
      %v966 = vshrl.u32 %v921, 16
      %v968 = vshll.u32 %v921, 16
      %v970 = vrot.slane %v968, 1
      %v971 = vor.u32 %v966, %v970
      %v973 = vshrl.u32 %v922, 16
      %v975 = vshll.u32 %v922, 16
      %v977 = vrot.slane %v975, 1
      %v978 = vor.u32 %v973, %v977
      %979 = vrot.lane.b32.xlu0 %v929, 8
      %v980 = vpop.permute.xlu0 %979
      %981 = vrot.lane.b32.xlu0 %v936, 8
      %v982 = vpop.permute.xlu0 %981
      %983 = vrot.lane.b32.xlu0 %v943, 8
      %v984 = vpop.permute.xlu0 %983
      %985 = vrot.lane.b32.xlu0 %v950, 8
      %v986 = vpop.permute.xlu0 %985
      %987 = vrot.lane.b32.xlu0 %v957, 8
      %v988 = vpop.permute.xlu0 %987
      %989 = vrot.lane.b32.xlu0 %v964, 8
      %v990 = vpop.permute.xlu0 %989
      %991 = vrot.lane.b32.xlu0 %v971, 8
      %v992 = vpop.permute.xlu0 %991
      %993 = vrot.lane.b32.xlu0 %v978, 8
      %v994 = vpop.permute.xlu0 %993
      %v1003 = vunpack.c.l.b16 %v378
      %v1004 = vunpack.c.l.b16 %v380
      %v1005 = vunpack.c.l.b16 %v382
      %v1006 = vunpack.c.l.b16 %v384
      %v1007 = vunpack.c.l.b16 %v386
      %v1008 = vunpack.c.l.b16 %v388
      %v1009 = vunpack.c.l.b16 %v390
      %v1010 = vunpack.c.l.b16 %v392
      %v1011 = vpack.c.b16 %v1003, %v851
      %v1012 = vpack.c.b16 %v1004, %v852
      %v1013 = vpack.c.b16 %v1005, %v853
      %v1014 = vpack.c.b16 %v1006, %v854
      %v1015 = vpack.c.b16 %v1007, %v855
      %v1016 = vpack.c.b16 %v1008, %v856
      %v1017 = vpack.c.b16 %v1009, %v857
      %v1018 = vpack.c.b16 %v1010, %v858
      %v1020 = vshrl.u32 %v1011, 16
      %v1022 = vshll.u32 %v1011, 16
      %v1024 = vrot.slane %v1022, 1
      %v1025 = vor.u32 %v1020, %v1024
      %v1027 = vshrl.u32 %v1012, 16
      %v1029 = vshll.u32 %v1012, 16
      %v1031 = vrot.slane %v1029, 1
      %v1032 = vor.u32 %v1027, %v1031
      %v1034 = vshrl.u32 %v1013, 16
      %v1036 = vshll.u32 %v1013, 16
      %v1038 = vrot.slane %v1036, 1
      %v1039 = vor.u32 %v1034, %v1038
      %v1041 = vshrl.u32 %v1014, 16
      %v1043 = vshll.u32 %v1014, 16
      %v1045 = vrot.slane %v1043, 1
      %v1046 = vor.u32 %v1041, %v1045
      %v1048 = vshrl.u32 %v1015, 16
      %v1050 = vshll.u32 %v1015, 16
      %v1052 = vrot.slane %v1050, 1
      %v1053 = vor.u32 %v1048, %v1052
      %v1055 = vshrl.u32 %v1016, 16
      %v1057 = vshll.u32 %v1016, 16
      %v1059 = vrot.slane %v1057, 1
      %v1060 = vor.u32 %v1055, %v1059
      %v1062 = vshrl.u32 %v1017, 16
      %v1064 = vshll.u32 %v1017, 16
      %v1066 = vrot.slane %v1064, 1
      %v1067 = vor.u32 %v1062, %v1066
      %v1069 = vshrl.u32 %v1018, 16
      %v1071 = vshll.u32 %v1018, 16
      %v1073 = vrot.slane %v1071, 1
      %v1074 = vor.u32 %v1069, %v1073
      %1075 = vrot.lane.b32.xlu0 %v1025, 12
      %v1076 = vpop.permute.xlu0 %1075
      %1077 = vrot.lane.b32.xlu0 %v1032, 12
      %v1078 = vpop.permute.xlu0 %1077
      %1079 = vrot.lane.b32.xlu0 %v1039, 12
      %v1080 = vpop.permute.xlu0 %1079
      %1081 = vrot.lane.b32.xlu0 %v1046, 12
      %v1082 = vpop.permute.xlu0 %1081
      %1083 = vrot.lane.b32.xlu0 %v1053, 12
      %v1084 = vpop.permute.xlu0 %1083
      %1085 = vrot.lane.b32.xlu0 %v1060, 12
      %v1086 = vpop.permute.xlu0 %1085
      %1087 = vrot.lane.b32.xlu0 %v1067, 12
      %v1088 = vpop.permute.xlu0 %1087
      %1089 = vrot.lane.b32.xlu0 %v1074, 12
      %v1090 = vpop.permute.xlu0 %1089
      %v1091 = vrot.slane %v915, 1
      %v1092 = vrot.slane %v916, 1
      %v1093 = vrot.slane %v917, 1
      %v1094 = vrot.slane %v918, 1
      %v1095 = vrot.slane %v919, 1
      %v1096 = vrot.slane %v920, 1
      %v1097 = vrot.slane %v921, 1
      %v1098 = vrot.slane %v922, 1
      %1099 = vrot.lane.b32.xlu0 %v1091, 16
      %v1100 = vpop.permute.xlu0 %1099
      %1101 = vrot.lane.b32.xlu0 %v1092, 16
      %v1102 = vpop.permute.xlu0 %1101
      %1103 = vrot.lane.b32.xlu0 %v1093, 16
      %v1104 = vpop.permute.xlu0 %1103
      %1105 = vrot.lane.b32.xlu0 %v1094, 16
      %v1106 = vpop.permute.xlu0 %1105
      %1107 = vrot.lane.b32.xlu0 %v1095, 16
      %v1108 = vpop.permute.xlu0 %1107
      %1109 = vrot.lane.b32.xlu0 %v1096, 16
      %v1110 = vpop.permute.xlu0 %1109
      %1111 = vrot.lane.b32.xlu0 %v1097, 16
      %v1112 = vpop.permute.xlu0 %1111
      %1113 = vrot.lane.b32.xlu0 %v1098, 16
      %v1114 = vpop.permute.xlu0 %1113
      %v1115 = vrot.slane %v1011, 1
      %v1116 = vrot.slane %v1012, 1
      %v1117 = vrot.slane %v1013, 1
      %v1118 = vrot.slane %v1014, 1
      %v1119 = vrot.slane %v1015, 1
      %v1120 = vrot.slane %v1016, 1
      %v1121 = vrot.slane %v1017, 1
      %v1122 = vrot.slane %v1018, 1
      %1123 = vrot.lane.b32.xlu0 %v1115, 20
      %v1124 = vpop.permute.xlu0 %1123
      %1125 = vrot.lane.b32.xlu0 %v1116, 20
      %v1126 = vpop.permute.xlu0 %1125
      %1127 = vrot.lane.b32.xlu0 %v1117, 20
      %v1128 = vpop.permute.xlu0 %1127
      %1129 = vrot.lane.b32.xlu0 %v1118, 20
      %v1130 = vpop.permute.xlu0 %1129
      %1131 = vrot.lane.b32.xlu0 %v1119, 20
      %v1132 = vpop.permute.xlu0 %1131
      %1133 = vrot.lane.b32.xlu0 %v1120, 20
      %v1134 = vpop.permute.xlu0 %1133
      %1135 = vrot.lane.b32.xlu0 %v1121, 20
      %v1136 = vpop.permute.xlu0 %1135
      %1137 = vrot.lane.b32.xlu0 %v1122, 20
      %v1138 = vpop.permute.xlu0 %1137
      %v1139 = vrot.slane %v924, 1
      %v1140 = vrot.slane %v926, 2
      %v1141 = vor.u32 %v1139, %v1140
      %v1142 = vrot.slane %v931, 1
      %v1143 = vrot.slane %v933, 2
      %v1144 = vor.u32 %v1142, %v1143
      %v1145 = vrot.slane %v938, 1
      %v1146 = vrot.slane %v940, 2
      %v1147 = vor.u32 %v1145, %v1146
      %v1148 = vrot.slane %v945, 1
      %v1149 = vrot.slane %v947, 2
      %v1150 = vor.u32 %v1148, %v1149
      %v1151 = vrot.slane %v952, 1
      %v1152 = vrot.slane %v954, 2
      %v1153 = vor.u32 %v1151, %v1152
      %v1154 = vrot.slane %v959, 1
      %v1155 = vrot.slane %v961, 2
      %v1156 = vor.u32 %v1154, %v1155
      %v1157 = vrot.slane %v966, 1
      %v1158 = vrot.slane %v968, 2
      %v1159 = vor.u32 %v1157, %v1158
      %v1160 = vrot.slane %v973, 1
      %v1161 = vrot.slane %v975, 2
      %v1162 = vor.u32 %v1160, %v1161
      %1163 = vrot.lane.b32.xlu0 %v1141, 24
      %v1164 = vpop.permute.xlu0 %1163
      %1165 = vrot.lane.b32.xlu0 %v1144, 24
      %v1166 = vpop.permute.xlu0 %1165
      %1167 = vrot.lane.b32.xlu0 %v1147, 24
      %v1168 = vpop.permute.xlu0 %1167
      %1169 = vrot.lane.b32.xlu0 %v1150, 24
      %v1170 = vpop.permute.xlu0 %1169
      %1171 = vrot.lane.b32.xlu0 %v1153, 24
      %v1172 = vpop.permute.xlu0 %1171
      %1173 = vrot.lane.b32.xlu0 %v1156, 24
      %v1174 = vpop.permute.xlu0 %1173
      %1175 = vrot.lane.b32.xlu0 %v1159, 24
      %v1176 = vpop.permute.xlu0 %1175
      %1177 = vrot.lane.b32.xlu0 %v1162, 24
      %v1178 = vpop.permute.xlu0 %1177
      %v1181 = vsel %vm733, %v357, %v868
      %v1184 = vsel %vm733, %v359, %v870
      %v1187 = vsel %vm733, %v361, %v872
      %v1190 = vsel %vm733, %v363, %v874
      %v1193 = vsel %vm733, %v365, %v876
      %v1196 = vsel %vm733, %v367, %v878
      %v1199 = vsel %vm733, %v369, %v880
      %v1202 = vsel %vm733, %v371, %v882
      %v1204 = vsel %vm758, %v1181, %v980
      %v1206 = vsel %vm758, %v1184, %v982
      %v1208 = vsel %vm758, %v1187, %v984
      %v1210 = vsel %vm758, %v1190, %v986
      %v1212 = vsel %vm758, %v1193, %v988
      %v1214 = vsel %vm758, %v1196, %v990
      %v1216 = vsel %vm758, %v1199, %v992
      %v1218 = vsel %vm758, %v1202, %v994
      %v1220 = vsel %vm775, %v1204, %v1076
      %v1222 = vsel %vm775, %v1206, %v1078
      %v1224 = vsel %vm775, %v1208, %v1080
      %v1226 = vsel %vm775, %v1210, %v1082
      %v1228 = vsel %vm775, %v1212, %v1084
      %v1230 = vsel %vm775, %v1214, %v1086
      %v1232 = vsel %vm775, %v1216, %v1088
      %v1234 = vsel %vm775, %v1218, %v1090
      %v1236 = vsel %vm792, %v1220, %v1100
      %v1238 = vsel %vm792, %v1222, %v1102
      %v1240 = vsel %vm792, %v1224, %v1104
      %v1242 = vsel %vm792, %v1226, %v1106
      %v1244 = vsel %vm792, %v1228, %v1108
      %v1246 = vsel %vm792, %v1230, %v1110
      %v1248 = vsel %vm792, %v1232, %v1112
      %v1250 = vsel %vm792, %v1234, %v1114
      %v1252 = vsel %vm809, %v1236, %v1124
      %v1254 = vsel %vm809, %v1238, %v1126
      %v1256 = vsel %vm809, %v1240, %v1128
      %v1258 = vsel %vm809, %v1242, %v1130
      %v1260 = vsel %vm809, %v1244, %v1132
      %v1262 = vsel %vm809, %v1246, %v1134
      %v1264 = vsel %vm809, %v1248, %v1136
      %v1266 = vsel %vm809, %v1250, %v1138
      %v1268 = vsel %vm826, %v1252, %v1164
      %v1270 = vsel %vm826, %v1254, %v1166
      %v1272 = vsel %vm826, %v1256, %v1168
      %v1274 = vsel %vm826, %v1258, %v1170
      %v1276 = vsel %vm826, %v1260, %v1172
      %v1278 = vsel %vm826, %v1262, %v1174
      %v1280 = vsel %vm826, %v1264, %v1176
      %v1282 = vsel %vm826, %v1266, %v1178
      %v1284 = vunpack.c.l.b16 %v351
      %v1285 = vpack.c.b16 %v1284, %v1284
      %1286 = vrot.lane.b32.xlu0 %v1285, 4
      %v1287 = vpop.permute.xlu0 %1286
      %v1290 = vunpack.c.l.b16 %v329
      %v1291 = vunpack.c.l.b16 %v330
      %v1292 = vpack.c.b16 %v1291, %v1290
      %v1294 = vshrl.u32 %v1292, 16
      %v1296 = vshll.u32 %v1292, 16
      %v1298 = vrot.slane %v1296, 1
      %v1299 = vor.u32 %v1294, %v1298
      %1300 = vrot.lane.b32.xlu0 %v1299, 8
      %v1301 = vpop.permute.xlu0 %1300
      %v1303 = vunpack.c.l.b16 %v352
      %v1304 = vpack.c.b16 %v1303, %v1284
      %v1306 = vshrl.u32 %v1304, 16
      %v1308 = vshll.u32 %v1304, 16
      %v1310 = vrot.slane %v1308, 1
      %v1311 = vor.u32 %v1306, %v1310
      %1312 = vrot.lane.b32.xlu0 %v1311, 12
      %v1313 = vpop.permute.xlu0 %1312
      %v1314 = vrot.slane %v1292, 1
      %1315 = vrot.lane.b32.xlu0 %v1314, 16
      %v1316 = vpop.permute.xlu0 %1315
      %v1317 = vrot.slane %v1304, 1
      %1318 = vrot.lane.b32.xlu0 %v1317, 20
      %v1319 = vpop.permute.xlu0 %1318
      %v1320 = vrot.slane %v1294, 1
      %v1321 = vrot.slane %v1296, 2
      %v1322 = vor.u32 %v1320, %v1321
      %1323 = vrot.lane.b32.xlu0 %v1322, 24
      %v1324 = vpop.permute.xlu0 %1323
      %v1327 = vsel %vm733, %v329, %v1287
      %v1329 = vsel %vm758, %v1327, %v1301
      %v1331 = vsel %vm775, %v1329, %v1313
      %v1333 = vsel %vm792, %v1331, %v1316
      %v1335 = vsel %vm809, %v1333, %v1319
      %v1337 = vsel %vm826, %v1335, %v1324
      %v1339 = vunpack.c.l.b16 %v393
      %v1340 = vpack.c.b16 %v1339, %v1339
      %1341 = vrot.lane.b32.xlu0 %v1340, 4
      %v1342 = vpop.permute.xlu0 %1341
      %v1345 = vunpack.c.l.b16 %v373
      %v1346 = vunpack.c.l.b16 %v374
      %v1347 = vpack.c.b16 %v1346, %v1345
      %v1349 = vshrl.u32 %v1347, 16
      %v1351 = vshll.u32 %v1347, 16
      %v1353 = vrot.slane %v1351, 1
      %v1354 = vor.u32 %v1349, %v1353
      %1355 = vrot.lane.b32.xlu0 %v1354, 8
      %v1356 = vpop.permute.xlu0 %1355
      %v1358 = vunpack.c.l.b16 %v394
      %v1359 = vpack.c.b16 %v1358, %v1339
      %v1361 = vshrl.u32 %v1359, 16
      %v1363 = vshll.u32 %v1359, 16
      %v1365 = vrot.slane %v1363, 1
      %v1366 = vor.u32 %v1361, %v1365
      %1367 = vrot.lane.b32.xlu0 %v1366, 12
      %v1368 = vpop.permute.xlu0 %1367
      %v1369 = vrot.slane %v1347, 1
      %1370 = vrot.lane.b32.xlu0 %v1369, 16
      %v1371 = vpop.permute.xlu0 %1370
      %v1372 = vrot.slane %v1359, 1
      %1373 = vrot.lane.b32.xlu0 %v1372, 20
      %v1374 = vpop.permute.xlu0 %1373
      %v1375 = vrot.slane %v1349, 1
      %v1376 = vrot.slane %v1351, 2
      %v1377 = vor.u32 %v1375, %v1376
      %1378 = vrot.lane.b32.xlu0 %v1377, 24
      %v1379 = vpop.permute.xlu0 %1378
      %v1382 = vsel %vm733, %v373, %v1342
      %v1384 = vsel %vm758, %v1382, %v1356
      %v1386 = vsel %vm775, %v1384, %v1368
      %v1388 = vsel %vm792, %v1386, %v1371
      %v1390 = vsel %vm809, %v1388, %v1374
      %v1392 = vsel %vm826, %v1390, %v1379
      %v1394 = vunpack.c.l.b16 %v353
      %v1395 = vpack.c.b16 %v1394, %v1394
      %1396 = vrot.lane.b32.xlu0 %v1395, 4
      %v1397 = vpop.permute.xlu0 %1396
      %v1400 = vunpack.c.l.b16 %v331
      %v1401 = vunpack.c.l.b16 %v332
      %v1402 = vpack.c.b16 %v1401, %v1400
      %v1404 = vshrl.u32 %v1402, 16
      %v1406 = vshll.u32 %v1402, 16
      %v1408 = vrot.slane %v1406, 1
      %v1409 = vor.u32 %v1404, %v1408
      %1410 = vrot.lane.b32.xlu0 %v1409, 8
      %v1411 = vpop.permute.xlu0 %1410
      %v1413 = vunpack.c.l.b16 %v354
      %v1414 = vpack.c.b16 %v1413, %v1394
      %v1416 = vshrl.u32 %v1414, 16
      %v1418 = vshll.u32 %v1414, 16
      %v1420 = vrot.slane %v1418, 1
      %v1421 = vor.u32 %v1416, %v1420
      %1422 = vrot.lane.b32.xlu0 %v1421, 12
      %v1423 = vpop.permute.xlu0 %1422
      %v1424 = vrot.slane %v1402, 1
      %1425 = vrot.lane.b32.xlu0 %v1424, 16
      %v1426 = vpop.permute.xlu0 %1425
      %v1427 = vrot.slane %v1414, 1
      %1428 = vrot.lane.b32.xlu0 %v1427, 20
      %v1429 = vpop.permute.xlu0 %1428
      %v1430 = vrot.slane %v1404, 1
      %v1431 = vrot.slane %v1406, 2
      %v1432 = vor.u32 %v1430, %v1431
      %1433 = vrot.lane.b32.xlu0 %v1432, 24
      %v1434 = vpop.permute.xlu0 %1433
      %v1437 = vsel %vm733, %v331, %v1397
      %v1439 = vsel %vm758, %v1437, %v1411
      %v1441 = vsel %vm775, %v1439, %v1423
      %v1443 = vsel %vm792, %v1441, %v1426
      %v1445 = vsel %vm809, %v1443, %v1429
      %v1447 = vsel %vm826, %v1445, %v1434
      %v1449 = vunpack.c.l.b16 %v395
      %v1450 = vpack.c.b16 %v1449, %v1449
      %1451 = vrot.lane.b32.xlu0 %v1450, 4
      %v1452 = vpop.permute.xlu0 %1451
      %v1455 = vunpack.c.l.b16 %v375
      %v1456 = vunpack.c.l.b16 %v376
      %v1457 = vpack.c.b16 %v1456, %v1455
      %v1459 = vshrl.u32 %v1457, 16
      %v1461 = vshll.u32 %v1457, 16
      %v1463 = vrot.slane %v1461, 1
      %v1464 = vor.u32 %v1459, %v1463
      %1465 = vrot.lane.b32.xlu0 %v1464, 8
      %v1466 = vpop.permute.xlu0 %1465
      %v1468 = vunpack.c.l.b16 %v396
      %v1469 = vpack.c.b16 %v1468, %v1449
      %v1471 = vshrl.u32 %v1469, 16
      %v1473 = vshll.u32 %v1469, 16
      %v1475 = vrot.slane %v1473, 1
      %v1476 = vor.u32 %v1471, %v1475
      %1477 = vrot.lane.b32.xlu0 %v1476, 12
      %v1478 = vpop.permute.xlu0 %1477
      %v1479 = vrot.slane %v1457, 1
      %1480 = vrot.lane.b32.xlu0 %v1479, 16
      %v1481 = vpop.permute.xlu0 %1480
      %v1482 = vrot.slane %v1469, 1
      %1483 = vrot.lane.b32.xlu0 %v1482, 20
      %v1484 = vpop.permute.xlu0 %1483
      %v1485 = vrot.slane %v1459, 1
      %v1486 = vrot.slane %v1461, 2
      %v1487 = vor.u32 %v1485, %v1486
      %1488 = vrot.lane.b32.xlu0 %v1487, 24
      %v1489 = vpop.permute.xlu0 %1488
      %v1492 = vsel %vm733, %v375, %v1452
      %v1494 = vsel %vm758, %v1492, %v1466
      %v1496 = vsel %vm775, %v1494, %v1478
      %v1498 = vsel %vm792, %v1496, %v1481
      %v1500 = vsel %vm809, %v1498, %v1484
      %v1502 = vsel %vm826, %v1500, %v1489
      %v1504 = vunpack.c.l.b16 %v355
      %v1505 = vpack.c.b16 %v1504, %v1504
      %1506 = vrot.lane.b32.xlu0 %v1505, 4
      %v1507 = vpop.permute.xlu0 %1506
      %v1510 = vunpack.c.l.b16 %v333
      %v1511 = vunpack.c.l.b16 %v334
      %v1512 = vpack.c.b16 %v1511, %v1510
      %v1514 = vshrl.u32 %v1512, 16
      %v1516 = vshll.u32 %v1512, 16
      %v1518 = vrot.slane %v1516, 1
      %v1519 = vor.u32 %v1514, %v1518
      %1520 = vrot.lane.b32.xlu0 %v1519, 8
      %v1521 = vpop.permute.xlu0 %1520
      %v1523 = vunpack.c.l.b16 %v356
      %v1524 = vpack.c.b16 %v1523, %v1504
      %v1526 = vshrl.u32 %v1524, 16
      %v1528 = vshll.u32 %v1524, 16
      %v1530 = vrot.slane %v1528, 1
      %v1531 = vor.u32 %v1526, %v1530
      %1532 = vrot.lane.b32.xlu0 %v1531, 12
      %v1533 = vpop.permute.xlu0 %1532
      %v1534 = vrot.slane %v1512, 1
      %1535 = vrot.lane.b32.xlu0 %v1534, 16
      %v1536 = vpop.permute.xlu0 %1535
      %v1537 = vrot.slane %v1524, 1
      %1538 = vrot.lane.b32.xlu0 %v1537, 20
      %v1539 = vpop.permute.xlu0 %1538
      %v1540 = vrot.slane %v1514, 1
      %v1541 = vrot.slane %v1516, 2
      %v1542 = vor.u32 %v1540, %v1541
      %1543 = vrot.lane.b32.xlu0 %v1542, 24
      %v1544 = vpop.permute.xlu0 %1543
      %v1547 = vsel %vm733, %v333, %v1507
      %v1549 = vsel %vm758, %v1547, %v1521
      %v1551 = vsel %vm775, %v1549, %v1533
      %v1553 = vsel %vm792, %v1551, %v1536
      %v1555 = vsel %vm809, %v1553, %v1539
      %v1557 = vsel %vm826, %v1555, %v1544
      %1566 = vrot.lane.b32.xlu0 %v1268, 28
      %v1567 = vpop.permute.xlu0 %1566
      %1568 = vrot.lane.b32.xlu0 %v1270, 28
      %v1569 = vpop.permute.xlu0 %1568
      %1570 = vrot.lane.b32.xlu0 %v1272, 28
      %v1571 = vpop.permute.xlu0 %1570
      %1572 = vrot.lane.b32.xlu0 %v1274, 28
      %v1573 = vpop.permute.xlu0 %1572
      %1574 = vrot.lane.b32.xlu0 %v1276, 28
      %v1575 = vpop.permute.xlu0 %1574
      %1576 = vrot.lane.b32.xlu0 %v1278, 28
      %v1577 = vpop.permute.xlu0 %1576
      %1578 = vrot.lane.b32.xlu0 %v1280, 28
      %v1579 = vpop.permute.xlu0 %1578
      %1580 = vrot.lane.b32.xlu0 %v1282, 28
      %v1581 = vpop.permute.xlu0 %1580
      %1590 = vrot.lane.b32.xlu0 %v830, 56
      %v1591 = vpop.permute.xlu0 %1590
      %1592 = vrot.lane.b32.xlu0 %v832, 56
      %v1593 = vpop.permute.xlu0 %1592
      %1594 = vrot.lane.b32.xlu0 %v834, 56
      %v1595 = vpop.permute.xlu0 %1594
      %1596 = vrot.lane.b32.xlu0 %v836, 56
      %v1597 = vpop.permute.xlu0 %1596
      %1598 = vrot.lane.b32.xlu0 %v838, 56
      %v1599 = vpop.permute.xlu0 %1598
      %1600 = vrot.lane.b32.xlu0 %v840, 56
      %v1601 = vpop.permute.xlu0 %1600
      %1602 = vrot.lane.b32.xlu0 %v842, 56
      %v1603 = vpop.permute.xlu0 %1602
      %1604 = vrot.lane.b32.xlu0 %v1337, 56
      %v1605 = vpop.permute.xlu0 %1604
      %1607 = vrot.lane.b32.xlu0 %v1270, 84
      %v1608 = vpop.permute.xlu0 %1607
      %1609 = vrot.lane.b32.xlu0 %v1272, 84
      %v1610 = vpop.permute.xlu0 %1609
      %1611 = vrot.lane.b32.xlu0 %v1274, 84
      %v1612 = vpop.permute.xlu0 %1611
      %1613 = vrot.lane.b32.xlu0 %v1276, 84
      %v1614 = vpop.permute.xlu0 %1613
      %1615 = vrot.lane.b32.xlu0 %v1278, 84
      %v1616 = vpop.permute.xlu0 %1615
      %1617 = vrot.lane.b32.xlu0 %v1280, 84
      %v1618 = vpop.permute.xlu0 %1617
      %1619 = vrot.lane.b32.xlu0 %v1282, 84
      %v1620 = vpop.permute.xlu0 %1619
      %1621 = vrot.lane.b32.xlu0 %v1392, 84
      %v1622 = vpop.permute.xlu0 %1621
      %1624 = vrot.lane.b32.xlu0 %v832, 112
      %v1625 = vpop.permute.xlu0 %1624
      %1626 = vrot.lane.b32.xlu0 %v834, 112
      %v1627 = vpop.permute.xlu0 %1626
      %1628 = vrot.lane.b32.xlu0 %v836, 112
      %v1629 = vpop.permute.xlu0 %1628
      %1630 = vrot.lane.b32.xlu0 %v838, 112
      %v1631 = vpop.permute.xlu0 %1630
      %1632 = vrot.lane.b32.xlu0 %v840, 112
      %v1633 = vpop.permute.xlu0 %1632
      %1634 = vrot.lane.b32.xlu0 %v842, 112
      %v1635 = vpop.permute.xlu0 %1634
      %1636 = vrot.lane.b32.xlu0 %v1337, 112
      %v1637 = vpop.permute.xlu0 %1636
      %1638 = vrot.lane.b32.xlu0 %v1447, 112
      %v1639 = vpop.permute.xlu0 %1638
      %1641 = vrot.lane.b32.xlu0 %v1272, 12
      %v1642 = vpop.permute.xlu0 %1641
      %1643 = vrot.lane.b32.xlu0 %v1274, 12
      %v1644 = vpop.permute.xlu0 %1643
      %1645 = vrot.lane.b32.xlu0 %v1276, 12
      %v1646 = vpop.permute.xlu0 %1645
      %1647 = vrot.lane.b32.xlu0 %v1278, 12
      %v1648 = vpop.permute.xlu0 %1647
      %1649 = vrot.lane.b32.xlu0 %v1280, 12
      %v1650 = vpop.permute.xlu0 %1649
      %1651 = vrot.lane.b32.xlu0 %v1282, 12
      %v1652 = vpop.permute.xlu0 %1651
      %1653 = vrot.lane.b32.xlu0 %v1392, 12
      %v1654 = vpop.permute.xlu0 %1653
      %1655 = vrot.lane.b32.xlu0 %v1502, 12
      %v1656 = vpop.permute.xlu0 %1655
      %1658 = vrot.lane.b32.xlu0 %v834, 40
      %v1659 = vpop.permute.xlu0 %1658
      %1660 = vrot.lane.b32.xlu0 %v836, 40
      %v1661 = vpop.permute.xlu0 %1660
      %1662 = vrot.lane.b32.xlu0 %v838, 40
      %v1663 = vpop.permute.xlu0 %1662
      %1664 = vrot.lane.b32.xlu0 %v840, 40
      %v1665 = vpop.permute.xlu0 %1664
      %1666 = vrot.lane.b32.xlu0 %v842, 40
      %v1667 = vpop.permute.xlu0 %1666
      %1668 = vrot.lane.b32.xlu0 %v1337, 40
      %v1669 = vpop.permute.xlu0 %1668
      %1670 = vrot.lane.b32.xlu0 %v1447, 40
      %v1671 = vpop.permute.xlu0 %1670
      %1672 = vrot.lane.b32.xlu0 %v1557, 40
      %v1673 = vpop.permute.xlu0 %1672
      %vm1674 = vcmask 228352
      %v1676 = vsel %vm1674, %v828, %v1567
      %v1678 = vsel %vm1674, %v830, %v1569
      %v1680 = vsel %vm1674, %v832, %v1571
      %v1682 = vsel %vm1674, %v834, %v1573
      %v1684 = vsel %vm1674, %v836, %v1575
      %v1686 = vsel %vm1674, %v838, %v1577
      %v1688 = vsel %vm1674, %v840, %v1579
      %v1690 = vsel %vm1674, %v842, %v1581
      %vm1691 = vcmask 457728
      %v1693 = vsel %vm1691, %v1676, %v1591
      %v1695 = vsel %vm1691, %v1678, %v1593
      %v1697 = vsel %vm1691, %v1680, %v1595
      %v1699 = vsel %vm1691, %v1682, %v1597
      %v1701 = vsel %vm1691, %v1684, %v1599
      %v1703 = vsel %vm1691, %v1686, %v1601
      %v1705 = vsel %vm1691, %v1688, %v1603
      %v1707 = vsel %vm1691, %v1690, %v1605
      %vm1708 = vcmask 687104
      %v1710 = vsel %vm1708, %v1693, %v1608
      %v1712 = vsel %vm1708, %v1695, %v1610
      %v1714 = vsel %vm1708, %v1697, %v1612
      %v1716 = vsel %vm1708, %v1699, %v1614
      %v1718 = vsel %vm1708, %v1701, %v1616
      %v1720 = vsel %vm1708, %v1703, %v1618
      %v1722 = vsel %vm1708, %v1705, %v1620
      %v1724 = vsel %vm1708, %v1707, %v1622
      %vm1725 = vcmask 916480
      %v1727 = vsel %vm1725, %v1710, %v1625
      %v1729 = vsel %vm1725, %v1712, %v1627
      %v1731 = vsel %vm1725, %v1714, %v1629
      %v1733 = vsel %vm1725, %v1716, %v1631
      %v1735 = vsel %vm1725, %v1718, %v1633
      %v1737 = vsel %vm1725, %v1720, %v1635
      %v1739 = vsel %vm1725, %v1722, %v1637
      %v1741 = vsel %vm1725, %v1724, %v1639
      %v1743 = vsel %vm775, %v1625, %v1642
      %v1745 = vsel %vm775, %v1627, %v1644
      %v1747 = vsel %vm775, %v1629, %v1646
      %v1749 = vsel %vm775, %v1631, %v1648
      %v1751 = vsel %vm775, %v1633, %v1650
      %v1753 = vsel %vm775, %v1635, %v1652
      %v1755 = vsel %vm775, %v1637, %v1654
      %v1757 = vsel %vm775, %v1639, %v1656
      %vm1758 = vcmask 326656
      %v1760 = vsel %vm1758, %v1743, %v1659
      %v1762 = vsel %vm1758, %v1745, %v1661
      %v1764 = vsel %vm1758, %v1747, %v1663
      %v1766 = vsel %vm1758, %v1749, %v1665
      %v1768 = vsel %vm1758, %v1751, %v1667
      %v1770 = vsel %vm1758, %v1753, %v1669
      %v1772 = vsel %vm1758, %v1755, %v1671
      %v1774 = vsel %vm1758, %v1757, %v1673
      %v1791 = vunpack.c.l.b16 %v1727
      %v1792 = vunpack.c.l.b16 %v1760
      %v1793 = vunpack.c.l.b16 %v1729
      %v1794 = vunpack.c.l.b16 %v1762
      %v1795 = vunpack.c.l.b16 %v1731
      %v1796 = vunpack.c.l.b16 %v1764
      %v1797 = vunpack.c.l.b16 %v1733
      %v1798 = vunpack.c.l.b16 %v1766
      %v1799 = vunpack.c.l.b16 %v1735
      %v1800 = vunpack.c.l.b16 %v1768
      %v1801 = vunpack.c.l.b16 %v1737
      %v1802 = vunpack.c.l.b16 %v1770
      %v1803 = vunpack.c.l.b16 %v1739
      %v1804 = vunpack.c.l.b16 %v1772
      %v1805 = vunpack.c.l.b16 %v1741
      %v1806 = vunpack.c.l.b16 %v1774
      %v1807 = vld [vmem:[%s4] sm:$0xf]
      %v1808 = vld [vmem:[%s4 + $0x4] sm:$0xf]
      %v1809 = vld [vmem:[%s4 + $0x8] sm:$0xf]
      %v1810 = vld [vmem:[%s4 + $0xc] sm:$0xf]
      %v1811 = vld [vmem:[%s4 + $0x10] sm:$0xf]
      %v1812 = vld [vmem:[%s4 + $0x14] sm:$0xf]
      %v1813 = vld [vmem:[%s4 + $0x18] sm:$0xf]
      %v1814 = vld [vmem:[%s4 + $0x1c] sm:$0xf]
      %v1815 = vld [vmem:[%s4 + $0x20] sm:$0xf]
      %v1816 = vld [vmem:[%s4 + $0x24] sm:$0xf]
      %v1817 = vld [vmem:[%s4 + $0x28] sm:$0xf]
      %v1818 = vld [vmem:[%s4 + $0x2c] sm:$0xf]
      %v1819 = vld [vmem:[%s4 + $0x30] sm:$0xf]
      %v1820 = vld [vmem:[%s4 + $0x34] sm:$0xf]
      %v1821 = vld [vmem:[%s4 + $0x38] sm:$0xf]
      %v1822 = vld [vmem:[%s4 + $0x3c] sm:$0xf]
      %v1823 = vld [vmem:[%s4 + $0x40] sm:$0xf]
      %v1824 = vld [vmem:[%s4 + $0x44] sm:$0xf]
      %v1825 = vld [vmem:[%s4 + $0x48] sm:$0xf]
      %v1826 = vld [vmem:[%s4 + $0x4c] sm:$0xf]
      %v1827 = vld [vmem:[%s4 + $0x50] sm:$0xf]
      %v1828 = vld [vmem:[%s4 + $0x54] sm:$0xf]
      %v1829 = vld [vmem:[%s4 + $0x58] sm:$0xf]
      %v1830 = vld [vmem:[%s4 + $0x5c] sm:$0xf]
      %v1831 = vld [vmem:[%s4 + $0x60] sm:$0x3]
      %v1832 = vpack.c.b16 %v1793, %v1791
      %v1833 = vpack.c.b16 %v1794, %v1792
      %v1834 = vpack.c.b16 %v1797, %v1795
      %v1835 = vpack.c.b16 %v1798, %v1796
      %v1836 = vpack.c.b16 %v1801, %v1799
      %v1837 = vpack.c.b16 %v1802, %v1800
      %v1838 = vpack.c.b16 %v1805, %v1803
      %v1839 = vpack.c.b16 %v1806, %v1804
      %v1869 = vunpack.c.l.b16 %v1807
      %v1870 = vunpack.c.l.b16 %v1808
      %v1871 = vunpack.c.l.b16 %v1809
      %v1872 = vunpack.c.l.b16 %v1810
      %v1873 = vunpack.c.l.b16 %v1811
      %v1874 = vunpack.c.l.b16 %v1812
      %v1875 = vunpack.c.l.b16 %v1813
      %v1876 = vunpack.c.l.b16 %v1814
      %v1877 = vunpack.c.l.b16 %v1815
      %v1878 = vunpack.c.l.b16 %v1816
      %v1879 = vunpack.c.l.b16 %v1817
      %v1880 = vunpack.c.l.b16 %v1818
      %v1881 = vunpack.c.l.b16 %v1819
      %v1882 = vunpack.c.l.b16 %v1820
      %v1883 = vunpack.c.l.b16 %v1821
      %v1884 = vunpack.c.l.b16 %v1822
      %v1885 = vunpack.c.l.b16 %v1823
      %v1886 = vunpack.c.l.b16 %v1824
      %v1887 = vunpack.c.l.b16 %v1825
      %v1888 = vunpack.c.l.b16 %v1826
      %v1889 = vunpack.c.l.b16 %v1827
      %v1890 = vunpack.c.l.b16 %v1828
      %v1891 = vunpack.c.l.b16 %v1829
      %v1892 = vunpack.c.l.b16 %v1830
      %v1893 = vunpack.c.l.b16 %v1831
      %v1894 = vpack.c.b16 %v1870, %v1869
      %v1895 = vpack.c.b16 %v1872, %v1871
      %v1896 = vpack.c.b16 %v1874, %v1873
      %v1897 = vpack.c.b16 %v1876, %v1875
      %v1898 = vpack.c.b16 %v1878, %v1877
      %v1899 = vpack.c.b16 %v1880, %v1879
      %v1900 = vpack.c.b16 %v1882, %v1881
      %v1901 = vpack.c.b16 %v1884, %v1883
      %v1902 = vpack.c.b16 %v1886, %v1885
      %v1903 = vpack.c.b16 %v1888, %v1887
      %v1904 = vpack.c.b16 %v1890, %v1889
      %v1905 = vpack.c.b16 %v1892, %v1891
      %v1906 = vpack.c.b16 %v1893, %v1893
      %vm1919 = vcmask 556032
      %v1921 = vsel %vm1919, %v1833, 0
      %v1924 = vsel %vm1919, %v1835, 0
      %v1927 = vsel %vm1919, %v1837, 0
      %v1930 = vsel %vm1919, %v1839, 0
      %vm1932 = vcmask 1041408
      %v1934 = vsel %vm1932, %v1906, 0
      %1936 = vmatprep.subr.bf16.mxu0 0
      %1937 = vmatpush1.bf16.msra.mxu0 %v1894
      %1938 = vmatprep.subr.bf16.mxu0 0
      %1939 = vmatpush1.bf16.msra.mxu0 %v1895
      %1940 = vmatprep.subr.bf16.mxu0 0
      %1941 = vmatpush1.bf16.msra.mxu0 %v1896
      %1942 = vmatprep.subr.bf16.mxu0 0
      %1943 = vmatpush1.bf16.msra.mxu0 %v1897
      %1944 = vmatprep.subr.bf16.mxu0 0
      %1945 = vmatpush1.bf16.msra.mxu0 %v1898
      %1946 = vmatprep.subr.bf16.mxu0 0
      %1947 = vmatpush1.bf16.msra.mxu0 %v1899
      %1948 = vmatprep.subr.bf16.mxu0 0
      %1949 = vmatpush1.bf16.msra.mxu0 %v1900
      %1950 = vmatprep.subr.bf16.mxu0 0
      %1951 = vmatpush1.bf16.msra.mxu0 %v1901
      %1952 = vmatprep.subr.bf16.mxu0 0
      %1953 = vmatpush1.bf16.msra.mxu0 %v1902
      %1954 = vmatprep.subr.bf16.mxu0 0
      %1955 = vmatpush1.bf16.msra.mxu0 %v1903
      %1956 = vmatprep.subr.bf16.mxu0 0
      %1957 = vmatpush1.bf16.msra.mxu0 %v1904
      %1958 = vmatprep.subr.bf16.mxu0 0
      %1959 = vmatpush1.bf16.msra.mxu0 %v1905
      %1960 = vmatprep.subr.bf16.mxu0 0
      %1961 = vmatpush1.bf16.msra.mxu0 %v1934
      %1962 = vmatprep.subr.bf16.mxu0 0
      %1963 = vmatpush1.bf16.msra.mxu0 0
      %1964 = vmatprep.subr.bf16.mxu0 0
      %1965 = vmatpush1.bf16.msra.mxu0 0
      %1966 = vmatprep.subr.bf16.mxu0 0
      %1967 = vmatpush1.bf16.msra.mxu0 0
      %1968 = vmatprep.mubr.bf16.mxu0 %v1921
      %1969 = vmatmul.mubr.bf16.gmra.mrb[0].mxu0 %v1832
      %v1970 = vpop.f32.mrb[0].mxu0
      %v1971 = vadd.f32 0.0, %v1970
      %v1972 = vpop.f32.mrb[0].mxu0
      %v1973 = vpop.f32.mrb[0].mxu0
      %v1974 = vadd.f32 0.0, %v1973
      %v1975 = vpop.f32.mrb[0].mxu0
      %1976 = vmatprep.mubr.bf16.mxu0 %v1924
      %1977 = vmatmul.mubr.bf16.gmra.mrb[0].mxu0 %v1834
      %v1978 = vpop.f32.mrb[0].mxu0
      %v1979 = vadd.f32 0.0, %v1978
      %v1980 = vpop.f32.mrb[0].mxu0
      %v1981 = vpop.f32.mrb[0].mxu0
      %v1982 = vadd.f32 0.0, %v1981
      %v1983 = vpop.f32.mrb[0].mxu0
      %1984 = vmatprep.mubr.bf16.mxu0 %v1927
      %1985 = vmatmul.mubr.bf16.gmra.mrb[0].mxu0 %v1836
      %v1986 = vpop.f32.mrb[0].mxu0
      %v1987 = vadd.f32 0.0, %v1986
      %v1988 = vpop.f32.mrb[0].mxu0
      %v1989 = vpop.f32.mrb[0].mxu0
      %v1990 = vadd.f32 0.0, %v1989
      %v1991 = vpop.f32.mrb[0].mxu0
      %1992 = vmatprep.mubr.bf16.mxu0 %v1930
      %1993 = vmatmul.mubr.bf16.gmra.mrb[0].mxu0 %v1838
      %v1994 = vpop.f32.mrb[0].mxu0
      %v1995 = vadd.f32 0.0, %v1994
      %v1996 = vpop.f32.mrb[0].mxu0
      %v1997 = vpop.f32.mrb[0].mxu0
      %v1998 = vadd.f32 0.0, %v1997
      %v1999 = vpop.f32.mrb[0].mxu0
      %2000 = vdwg.mxu0
      %v2001 = vld [vmem:[%s5] sm:$0x1]
      %v2002 = vlaneseq
      %v2003 = vshrl.u32 %v2002, 7
      %v2004 = vsub.s32 0, %v2003
      %v2005 = vrot.slane %v2001, %v2004
      %v2006 = vmul.f32 %v1971, %v2005
      %v2007 = vmul.f32 %v1974, %v2005
      %v2008 = vmul.f32 %v1979, %v2005
      %v2009 = vmul.f32 %v1982, %v2005
      %v2010 = vmul.f32 %v1987, %v2005
      %v2011 = vmul.f32 %v1990, %v2005
      %v2012 = vmul.f32 %v1995, %v2005
      %v2013 = vmul.f32 %v1998, %v2005
      %v2014 = vld [vmem:[%s5 + $0x1] sm:$0x1]
      %v2015 = vlaneseq
      %v2016 = vshrl.u32 %v2015, 7
      %v2017 = vsub.s32 0, %v2016
      %v2018 = vrot.slane %v2014, %v2017
      %v2019 = vadd.f32 %v2006, %v2018
      %v2020 = vadd.f32 %v2007, %v2018
      %v2021 = vadd.f32 %v2008, %v2018
      %v2022 = vadd.f32 %v2009, %v2018
      %v2023 = vadd.f32 %v2010, %v2018
      %v2024 = vadd.f32 %v2011, %v2018
      %v2025 = vadd.f32 %v2012, %v2018
      %v2026 = vadd.f32 %v2013, %v2018
      %v2027 = vmax.f32 %v2019, 0.0
      %v2028 = vmax.f32 %v2020, 0.0
      %v2029 = vmax.f32 %v2021, 0.0
      %v2030 = vmax.f32 %v2022, 0.0
      %v2031 = vmax.f32 %v2023, 0.0
      %v2032 = vmax.f32 %v2024, 0.0
      %v2033 = vmax.f32 %v2025, 0.0
      %v2034 = vmax.f32 %v2026, 0.0
      %v2035 = vpack.c.bf16 %v2028, %v2027
      %v2036 = vpack.c.bf16 %v2030, %v2029
      %v2037 = vpack.c.bf16 %v2032, %v2031
      %v2038 = vpack.c.bf16 %v2034, %v2033
      %v2043 = vunpack.c.l.b16 %v2035
      %v2044 = vunpack.c.h.b16 %v2035
      %v2045 = vunpack.c.l.b16 %v2036
      %v2046 = vunpack.c.h.b16 %v2036
      %v2047 = vunpack.c.l.b16 %v2037
      %v2048 = vunpack.c.h.b16 %v2037
      %v2049 = vunpack.c.l.b16 %v2038
      %v2050 = vunpack.c.h.b16 %v2038
      %v2051 = vpack.c.b16 %v2043, %v2043
      %v2052 = vpack.c.b16 %v2044, %v2044
      %v2053 = vpack.c.b16 %v2045, %v2045
      %v2054 = vpack.c.b16 %v2046, %v2046
      %v2055 = vpack.c.b16 %v2047, %v2047
      %v2056 = vpack.c.b16 %v2048, %v2048
      %v2057 = vpack.c.b16 %v2049, %v2049
      %v2058 = vpack.c.b16 %v2050, %v2050
      %vm2067 = vcmask 519168
      %2068 = vst.msk [vmem:[%s311] sm:$0xf] %vm2067, %v2051
      %2069 = vst.msk [vmem:[%s311 + $0x4] sm:$0xf] %vm2067, %v2052
      %2070 = vst.msk [vmem:[%s311 + $0x8] sm:$0xf] %vm2067, %v2053
      %2071 = vst.msk [vmem:[%s311 + $0xc] sm:$0xf] %vm2067, %v2054
      %2072 = vst.msk [vmem:[%s311 + $0x10] sm:$0xf] %vm2067, %v2055
      %2073 = vst.msk [vmem:[%s311 + $0x14] sm:$0xf] %vm2067, %v2056
      %2074 = vst.msk [vmem:[%s311 + $0x18] sm:$0xf] %vm2067, %v2057
      %2075 = vst.msk [vmem:[%s311 + $0x1c] sm:$0xf] %vm2067, %v2058
      %p2076 = scmp.lt.s32.totalorder %s17, 1
      %s2077 = scalar_select %p2076, %s17, 1
      %s2078 = smul.addr %s2077, 8
      %s2079 = smul.addr %s2078, 4
      %s2080 = scalar_lea.vmem %s6, %s2079
      // Predicated region
      $region45: #{hourglass_forward.4} parent=43 // pred_check
        %p2081 = pneg %p181
      $region46: #{hourglass_forward.4} parent=43 // pred_check_branch
        %2083 = sbr.rel (%p2081) target = $region48
      $region47: #{hourglass_forward.4} parent=43 // pred_region
        _
      $region48: #{hourglass_forward.4} parent=43 // pred_fallthru
        _
    $region44: #{hourglass_forward.4} parent=5 // pred_fallthru
      _
    %p2084 = scmp.le.s32.totalorder 2, %s12
    // Predicated region
    $region49: #{hourglass_forward.4} parent=5 // pred_check
      %p2085 = pneg %p2084
    $region50: #{hourglass_forward.4} parent=5 // pred_check_branch
      %2087 = sbr.rel (%p2085) target = $region52
    $region51: #{hourglass_forward.4} parent=5 // pred_region
      %s2088 = ssub.s32 %s12, 2
      // Predicated region
      $region53: #{hourglass_forward.4} parent=51 // pred_check
        %p2089 = pneg %p187
      $region54: #{hourglass_forward.4} parent=51 // pred_check_branch
        %2091 = sbr.rel (%p2089) target = $region56
      $region55: #{hourglass_forward.4} parent=51 // pred_region
        %p2092 = scmp.lt.s32.totalorder %s18, 1
        %s2093 = scalar_select %p2092, %s18, 1
        %s2094 = smul.addr %s2093, 8
        %s2095 = smul.addr %s2094, 4
        %s2096 = scalar_lea.vmem %s6, %s2095
      $region56: #{hourglass_forward.4} parent=51 // pred_fallthru
        _
    $region52: #{hourglass_forward.4} parent=5 // pred_fallthru
      _
  $region6: #{hourglass_forward.4} parent=0 // loop_footer
    %s16 = sadd.s32 1, %s12
  $region7: #{hourglass_forward.4} parent=0 // loop_footer_branch
    %11 = sbr.rel target = $region3
  $region8: #{hourglass_forward.4} parent=0 // loop_exit
    _

</llo_original>
